<compile_context>
chip_gen: v7x
topology: tpu7x:2x2x1
jax: 0.10.0
libtpu: 0.0.40
codegen_flags: <defaults>
</compile_context>

<pallas_src>
import jax
import jax.numpy as jnp
import numpy as np
from jax.experimental import pallas as pl
from jax.experimental.pallas import tpu as pltpu


# ----------------------------------------------------------------------------
# Fused Bottleneck kernel
# ----------------------------------------------------------------------------
def _bottleneck_kernel(xc_ref, xu_ref, xd_ref,
                       w1_ref, s1_ref, b1_ref,
                       w2_ref, s2_ref, b2_ref,
                       w3_ref, s3_ref, b3_ref,
                       o_ref,
                       h1_ref):
    """One (batch, depth-block) grid step of the fused Bottleneck."""
    db = pl.program_id(1)          # depth-block index
    nd = pl.num_programs(1)

    _, d_blk, H, W, cout = o_ref.shape
    cin = xc_ref.shape[-1]
    planes = w1_ref.shape[1]
    hw = H * W
    ch = h1_ref.shape[-1]          # (d_blk + 2) * planes
    f32 = jnp.float32
    cdt = w1_ref.dtype             # matmul compute dtype (bf16 in production, f32 for checks)

    w1 = w1_ref[...]
    s1 = s1_ref[...]
    b1 = b1_ref[...]

    def conv1_bn_relu(x2d):        # (rows, cin) -> (rows, planes), f32
        y = jnp.dot(x2d.astype(cdt), w1, preferred_element_type=f32)
        return jnp.maximum(y * s1 + b1, 0.0)

    # ---- zero only what is needed (no full-scratch fill) --------------------
    # H/W border ring = physical SAME padding for conv2.
    h1_ref[0:1, :, :] = jnp.zeros((1, W + 2, ch), f32)
    h1_ref[H + 1:H + 2, :, :] = jnp.zeros((1, W + 2, ch), f32)
    h1_ref[:, 0:1, :] = jnp.zeros((H + 2, 1, ch), f32)
    h1_ref[:, W + 1:W + 2, :] = jnp.zeros((H + 2, 1, ch), f32)

    # ---- stage 1: conv1 (1x1x1) + bn1 + relu into the haloed scratch --------
    # Scratch channel layout: group g in [0, d_blk+2) holds conv1 output of
    # absolute depth (db*d_blk + g - 1); group 0 / group d_blk+1 are depth halos.
    xc = xc_ref[...]                                          # (1, d_blk, H, W, cin)
    y1 = conv1_bn_relu(xc.reshape(d_blk * hw, cin))           # (m, planes) f32
    y1 = y1.reshape(d_blk, H, W, planes)
    for dd in range(d_blk):                                   # main depth slices
        h1_ref[1:H + 1, 1:W + 1, (dd + 1) * planes:(dd + 2) * planes] = y1[dd]

    # Depth halo above: conv1 of neighbouring slice, or zeros at the global
    # boundary (scratch persists across grid steps, so it must be re-zeroed).
    @pl.when(db > 0)
    def _():
        h1_ref[1:H + 1, 1:W + 1, 0:planes] = conv1_bn_relu(
            xu_ref[...].reshape(hw, cin)).reshape(H, W, planes)

    @pl.when(db == 0)
    def _():
        h1_ref[:, :, 0:planes] = jnp.zeros((H + 2, W + 2, planes), f32)

    # Depth halo below.
    @pl.when(db < nd - 1)
    def _():
        h1_ref[1:H + 1, 1:W + 1, (d_blk + 1) * planes:] = conv1_bn_relu(
            xd_ref[...].reshape(hw, cin)).reshape(H, W, planes)

    @pl.when(db == nd - 1)
    def _():
        h1_ref[:, :, (d_blk + 1) * planes:] = jnp.zeros((H + 2, W + 2, planes), f32)

    # ---- stages 2+3, per output depth slice ----------------------------------
    # conv2 (3x3x3, stride=1, pad=1): for each (kh, kw) the three kd taps are one
    # contiguous (hw, 3*planes) window matmul'd against the pre-stacked weight.
    # No masking (H/W padding is physical, depth padding is zeroed halo groups);
    # accumulation is register-level.
    s2 = s2_ref[...]
    b2 = b2_ref[...]
    w3 = w3_ref[...]
    s3 = s3_ref[...]
    b3 = b3_ref[...]

    for od in range(d_blk):
        cs = od * planes
        acc = None
        for kh in range(3):
            for kw in range(3):
                patch = h1_ref[kh:kh + H, kw:kw + W, cs:cs + 3 * planes]
                patch = patch.reshape(hw, 3 * planes).astype(cdt)
                part = jnp.dot(patch, w2_ref[kh, kw], preferred_element_type=f32)
                acc = part if acc is None else acc + part
        h2 = jnp.maximum(acc * s2 + b2, 0.0)                        # bn2 + relu, f32

        # conv3 (1x1x1) + bn3 + identity residual + relu
        y = jnp.dot(h2.astype(cdt), w3, preferred_element_type=f32)
        y = y * s3 + b3
        resid = xc[0, od].reshape(hw, cout).astype(f32)             # cin == cout
        y = jnp.maximum(y + resid, 0.0)
        o_ref[0:1, od:od + 1, :, :, :] = (
            y.reshape(1, 1, H, W, cout).astype(o_ref.dtype))


# ----------------------------------------------------------------------------
# Wrapper helpers
# ----------------------------------------------------------------------------
def fold_bn(gamma, beta, mean, var, eps=1e-5):
    scale = (gamma / jnp.sqrt(var + eps)).astype(jnp.float32)
    shift = (beta - mean * scale).astype(jnp.float32)
    return scale.reshape(1, -1), shift.reshape(1, -1)


def _pick_d_block(D, N, target):
    """Largest divisor of D <= target; keep >= 2 grid steps when N == 1 (megacore)."""
    cands = [d for d in range(1, D + 1) if D % d == 0 and d <= max(1, target)]
    best = max(cands)
    if N == 1 and best == D and D > 1:
        smaller = [d for d in cands if d < D]
        if smaller:
            best = max(smaller)
    return best


def _vmem_limit_bytes(H, W, C, planes, out_c, d_blk, x_itemsize, w_itemsize):
    xb = d_blk * H * W * C * x_itemsize            # x block
    hb = H * W * C * x_itemsize                    # one depth-halo slice
    ob = d_blk * H * W * out_c * x_itemsize        # output block
    h1 = (H + 2) * (W + 2) * (d_blk + 2) * planes * 4
    wts = (C * planes + 27 * planes * planes + planes * out_c) * w_itemsize
    bn = 2 * (2 * planes + out_c) * 4
    # inputs/outputs (and currently weights) are double-buffered by the pipeline
    total = 2 * (xb + 2 * hb + ob) + h1 + 2 * (wts + bn)
    limit = int(total * 1.5) + (8 << 20)           # headroom + compiler scratch
    return max(16 << 20, min(limit, 64 << 20))     # stay valid on v7x (64 MiB VMEM)


# ----------------------------------------------------------------------------
# Forward
# ----------------------------------------------------------------------------
def bottleneck_forward(x, params, *, data_format="NDHWC", d_block_target=4,
                       compute_dtype=jnp.bfloat16, eps=1e-5):
    """Fused Bottleneck forward. BN in inference (eval) mode, stride=1, identity residual.

    Preferred layout is NDHWC (channels-last) so no whole-tensor HBM transpose
    passes are needed; "NCDHW" (PyTorch layout) is accepted and transposed once.
    """
    if data_format == "NCDHW":
        x = jnp.transpose(x, (0, 2, 3, 4, 1))
    elif data_format != "NDHWC":
        raise ValueError(f"unknown data_format {data_format}")

    N, D, H, W, C = x.shape
    planes = params["w1"].shape[1]
    out_c = params["w3"].shape[1]
    assert out_c == C, "identity residual requires inplanes == planes * expansion"

    s1, b1 = fold_bn(*params["bn1"], eps=eps)
    s2, b2 = fold_bn(*params["bn2"], eps=eps)
    s3, b3 = fold_bn(*params["bn3"], eps=eps)

    # Matmul operands in compute_dtype (bf16 -> 2x MXU throughput, f32 accumulate).
    w1 = params["w1"].astype(compute_dtype)
    w3 = params["w3"].astype(compute_dtype)
    # Stack the 3 kd taps along the contraction dim: (kh, kw, 3*planes, planes),
    # row index kd*planes + ci, matching the scratch channel layout.
    w2 = jnp.transpose(params["w2"], (1, 2, 0, 3, 4)).reshape(
        3, 3, 3 * planes, planes).astype(compute_dtype)

    d_blk = _pick_d_block(D, N, d_block_target)
    nd = D // d_blk

    const2 = lambda n, d: (0, 0)
    vmem_limit = _vmem_limit_bytes(H, W, C, planes, out_c, d_blk,
                                   x.dtype.itemsize,
                                   jnp.dtype(compute_dtype).itemsize)

    out = pl.pallas_call(
        _bottleneck_kernel,
        out_shape=jax.ShapeDtypeStruct((N, D, H, W, out_c), x.dtype),
        grid_spec=pltpu.PrefetchScalarGridSpec(
            num_scalar_prefetch=0,
            grid=(N, nd),
            in_specs=[
                # x: current depth block + two 1-slice depth halos (index clamped
                # at the global boundary; the kernel zeroes those halo channel
                # groups there instead of using the clamped data).
                pl.BlockSpec((1, d_blk, H, W, C),
                             lambda n, d: (n, d, 0, 0, 0)),
                pl.BlockSpec((1, 1, H, W, C),
                             lambda n, d: (n, jnp.maximum(d * d_blk - 1, 0),
                                           0, 0, 0)),
                pl.BlockSpec((1, 1, H, W, C),
                             lambda n, d: (n, jnp.minimum((d + 1) * d_blk, D - 1),
                                           0, 0, 0)),
                # Weights / folded BN params: constant index maps -> DMA'd once,
                # kept VMEM-resident across grid steps.
                pl.BlockSpec((C, planes), const2),
                pl.BlockSpec((1, planes), const2),
                pl.BlockSpec((1, planes), const2),
                pl.BlockSpec((3, 3, 3 * planes, planes),
                             lambda n, d: (0, 0, 0, 0)),
                pl.BlockSpec((1, planes), const2),
                pl.BlockSpec((1, planes), const2),
                pl.BlockSpec((planes, out_c), const2),
                pl.BlockSpec((1, out_c), const2),
                pl.BlockSpec((1, out_c), const2),
            ],
            out_specs=pl.BlockSpec((1, d_blk, H, W, out_c),
                                   lambda n, d: (n, d, 0, 0, 0)),
            scratch_shapes=[
                # conv1 output: physically zero-padded in H/W (border ring) and
                # depth-haloed along the channel axis.
                pltpu.VMEM((H + 2, W + 2, (d_blk + 2) * planes), jnp.float32),
            ],
        ),
        compiler_params=pltpu.CompilerParams(
            dimension_semantics=("parallel", "parallel"),
            vmem_limit_bytes=vmem_limit),
    )(x, x, x, w1, s1, b1, w2, s2, b2, w3, s3, b3)

    if data_format == "NCDHW":
        out = jnp.transpose(out, (0, 4, 1, 2, 3))
    return out


# ----------------------------------------------------------------------------
# Pure-JAX reference (NDHWC) for correctness check
# ----------------------------------------------------------------------------
def bottleneck_reference(x_ndhwc, params, eps=1e-5):
    def bn(y, p):
        g, b, mu, v = p
        return (y - mu) / jnp.sqrt(v + eps) * g + b

    x = x_ndhwc
    out = jnp.einsum("ndhwc,co->ndhwo", x, params["w1"])
    out = jax.nn.relu(bn(out, params["bn1"]))
    out = jax.lax.conv_general_dilated(
        out, params["w2"], window_strides=(1, 1, 1), padding="SAME",
        dimension_numbers=("NDHWC", "DHWIO", "NDHWC"))
    out = jax.nn.relu(bn(out, params["bn2"]))
    out = jnp.einsum("ndhwc,co->ndhwo", out, params["w3"])
    out = jax.nn.relu(bn(out, params["bn3"]) + x)
    return out


# ----------------------------------------------------------------------------
if __name__ == "__main__":
    key = jax.random.PRNGKey(0)
    keys = jax.random.split(key, 8)

    # Small Bottleneck: inplanes = planes * expansion so the identity residual is
    # valid (stride=1, downsample=None).
    planes = 4
    expansion = 4
    inplanes = planes * expansion          # 16
    N, D, H, W = 2, 8, 8, 8

    x = jax.random.normal(keys[0], (N, D, H, W, inplanes), jnp.float32)   # NDHWC

    def bn_params(k, c):
        k1, k2, k3, k4 = jax.random.split(k, 4)
        gamma = 1.0 + 0.1 * jax.random.normal(k1, (c,), jnp.float32)
        beta = 0.1 * jax.random.normal(k2, (c,), jnp.float32)
        mean = 0.1 * jax.random.normal(k3, (c,), jnp.float32)
        var = jnp.abs(1.0 + 0.1 * jax.random.normal(k4, (c,), jnp.float32))
        return (gamma, beta, mean, var)

    params = dict(
        # conv weights stored channels-last: (Cin, Cout) and (kD, kH, kW, Cin, Cout)
        w1=0.1 * jax.random.normal(keys[1], (inplanes, planes), jnp.float32),
        w2=0.1 * jax.random.normal(keys[2], (3, 3, 3, planes, planes), jnp.float32),
        w3=0.1 * jax.random.normal(keys[3], (planes, planes * expansion), jnp.float32),
        bn1=bn_params(keys[4], planes),
        bn2=bn_params(keys[5], planes),
        bn3=bn_params(keys[6], planes * expansion),
    )

    ref = bottleneck_reference(x, params)

    # f32 matmul path: exact structural check (folded BN, haloed-scratch conv2).
    out_f32 = bottleneck_forward(x, params, d_block_target=4,
                                 compute_dtype=jnp.float32)
    jax.block_until_ready(out_f32)
    np.testing.assert_allclose(np.asarray(out_f32), np.asarray(ref),
                               rtol=1e-4, atol=1e-4)

    # bf16 matmul operands with f32 accumulation: production configuration.
    out_bf16 = bottleneck_forward(x, params, d_block_target=4,
                                  compute_dtype=jnp.bfloat16)
    jax.block_until_ready(out_bf16)
    np.testing.assert_allclose(np.asarray(out_bf16), np.asarray(ref),
                               rtol=2e-2, atol=2e-2)

    print("KERNEL_OK")
</pallas_src>

<mosaic_0001>
module attributes {stable_mosaic.version = 11 : i64} {
  func.func @_bottleneck_kernel(%arg0: i32, %arg1: i32, %arg2: memref<1x4x8x8x16xf32, #tpu.memory_space<vmem>>, %arg3: memref<1x1x8x8x16xf32, #tpu.memory_space<vmem>>, %arg4: memref<1x1x8x8x16xf32, #tpu.memory_space<vmem>>, %arg5: memref<16x4xf32, #tpu.memory_space<vmem>>, %arg6: memref<1x4xf32, #tpu.memory_space<vmem>>, %arg7: memref<1x4xf32, #tpu.memory_space<vmem>>, %arg8: memref<3x3x12x4xf32, #tpu.memory_space<vmem>>, %arg9: memref<1x4xf32, #tpu.memory_space<vmem>>, %arg10: memref<1x4xf32, #tpu.memory_space<vmem>>, %arg11: memref<4x16xf32, #tpu.memory_space<vmem>>, %arg12: memref<1x16xf32, #tpu.memory_space<vmem>>, %arg13: memref<1x16xf32, #tpu.memory_space<vmem>>, %arg14: memref<1x4x8x8x16xf32, #tpu.memory_space<vmem>>, %arg15: memref<10x10x24xf32, #tpu.memory_space<vmem>>) attributes {dimension_semantics = [#tpu.dimension_semantics<parallel>, #tpu.dimension_semantics<parallel>], iteration_bounds = array<i64: 2, 2>, scalar_prefetch = 0 : i64, scratch_operands = 1 : i64, tpu.core_type = #tpu.core_type<tc>, window_params = [{transform_indices = @transform_0, window_bounds = array<i64: 1, 4, 8, 8, 16>}, {transform_indices = @transform_1, window_bounds = array<i64: 1, 1, 8, 8, 16>}, {transform_indices = @transform_2, window_bounds = array<i64: 1, 1, 8, 8, 16>}, {pipeline_mode = #tpu.pipeline_mode<synchronous>, transform_indices = @transform_3, window_bounds = array<i64: 16, 4>}, {pipeline_mode = #tpu.pipeline_mode<synchronous>, transform_indices = @transform_4, window_bounds = array<i64: 1, 4>}, {pipeline_mode = #tpu.pipeline_mode<synchronous>, transform_indices = @transform_5, window_bounds = array<i64: 1, 4>}, {pipeline_mode = #tpu.pipeline_mode<synchronous>, transform_indices = @transform_6, window_bounds = array<i64: 3, 3, 12, 4>}, {pipeline_mode = #tpu.pipeline_mode<synchronous>, transform_indices = @transform_7, window_bounds = array<i64: 1, 4>}, {pipeline_mode = #tpu.pipeline_mode<synchronous>, transform_indices = @transform_8, window_bounds = array<i64: 1, 4>}, {pipeline_mode = #tpu.pipeline_mode<synchronous>, transform_indices = @transform_9, window_bounds = array<i64: 4, 16>}, {pipeline_mode = #tpu.pipeline_mode<synchronous>, transform_indices = @transform_10, window_bounds = array<i64: 1, 16>}, {pipeline_mode = #tpu.pipeline_mode<synchronous>, transform_indices = @transform_11, window_bounds = array<i64: 1, 16>}, {transform_indices = @transform_12, window_bounds = array<i64: 1, 4, 8, 8, 16>}]} {
    %c0 = arith.constant 0 : index
    %c0_0 = arith.constant 0 : index
    %0 = vector.load %arg5[%c0, %c0_0] : memref<16x4xf32, #tpu.memory_space<vmem>>, vector<16x4xf32>
    %c0_1 = arith.constant 0 : index
    %c0_2 = arith.constant 0 : index
    %1 = vector.load %arg6[%c0_1, %c0_2] : memref<1x4xf32, #tpu.memory_space<vmem>>, vector<1x4xf32>
    %c0_3 = arith.constant 0 : index
    %c0_4 = arith.constant 0 : index
    %2 = vector.load %arg7[%c0_3, %c0_4] : memref<1x4xf32, #tpu.memory_space<vmem>>, vector<1x4xf32>
    %cst = arith.constant 0.000000e+00 : f32
    %3 = vector.broadcast %cst : f32 to vector<1x10x24xf32>
    %c0_5 = arith.constant 0 : index
    %c0_6 = arith.constant 0 : index
    %c0_7 = arith.constant 0 : index
    %4 = vector.load %arg15[%c0_5, %c0_6, %c0_7] : memref<10x10x24xf32, #tpu.memory_space<vmem>>, vector<1x10x24xf32>
    tpu.vector_store %arg15[%c0_5, %c0_6, %c0_7], %3 {strides = array<i32>} : memref<10x10x24xf32, #tpu.memory_space<vmem>>, vector<1x10x24xf32>,
    %cst_8 = arith.constant 0.000000e+00 : f32
    %5 = vector.broadcast %cst_8 : f32 to vector<1x10x24xf32>
    %c9 = arith.constant 9 : index
    %c0_9 = arith.constant 0 : index
    %c0_10 = arith.constant 0 : index
    %6 = vector.load %arg15[%c9, %c0_9, %c0_10] : memref<10x10x24xf32, #tpu.memory_space<vmem>>, vector<1x10x24xf32>
    tpu.vector_store %arg15[%c9, %c0_9, %c0_10], %5 {strides = array<i32>} : memref<10x10x24xf32, #tpu.memory_space<vmem>>, vector<1x10x24xf32>,
    %cst_11 = arith.constant 0.000000e+00 : f32
    %7 = vector.broadcast %cst_11 : f32 to vector<10x1x24xf32>
    %c0_12 = arith.constant 0 : index
    %c0_13 = arith.constant 0 : index
    %c0_14 = arith.constant 0 : index
    %8 = vector.load %arg15[%c0_12, %c0_13, %c0_14] : memref<10x10x24xf32, #tpu.memory_space<vmem>>, vector<10x1x24xf32>
    tpu.vector_store %arg15[%c0_12, %c0_13, %c0_14], %7 {strides = array<i32>} : memref<10x10x24xf32, #tpu.memory_space<vmem>>, vector<10x1x24xf32>,
    %cst_15 = arith.constant 0.000000e+00 : f32
    %9 = vector.broadcast %cst_15 : f32 to vector<10x1x24xf32>
    %c0_16 = arith.constant 0 : index
    %c9_17 = arith.constant 9 : index
    %c0_18 = arith.constant 0 : index
    %10 = vector.load %arg15[%c0_16, %c9_17, %c0_18] : memref<10x10x24xf32, #tpu.memory_space<vmem>>, vector<10x1x24xf32>
    tpu.vector_store %arg15[%c0_16, %c9_17, %c0_18], %9 {strides = array<i32>} : memref<10x10x24xf32, #tpu.memory_space<vmem>>, vector<10x1x24xf32>,
    %c0_19 = arith.constant 0 : index
    %c0_20 = arith.constant 0 : index
    %c0_21 = arith.constant 0 : index
    %c0_22 = arith.constant 0 : index
    %c0_23 = arith.constant 0 : index
    %11 = vector.load %arg2[%c0_19, %c0_20, %c0_21, %c0_22, %c0_23] : memref<1x4x8x8x16xf32, #tpu.memory_space<vmem>>, vector<1x4x8x8x16xf32>
    %12 = vector.shape_cast %11 : vector<1x4x8x8x16xf32> to vector<256x16xf32>
    %cst_24 = arith.constant dense<0.000000e+00> : vector<256x4xf32>
    %13 = tpu.matmul %12, %0, %cst_24 {dimension_numbers = #tpu.dot_dimension_numbers<[1], [0], [0], [1], [0, 0, 1, 1], [], []>} : vector<256x16xf32>, vector<16x4xf32>, vector<256x4xf32> -> vector<256x4xf32>
    %14 = vector.broadcast %1 : vector<1x4xf32> to vector<256x4xf32>
    %15 = arith.mulf %13, %14 : vector<256x4xf32>
    %16 = vector.broadcast %2 : vector<1x4xf32> to vector<256x4xf32>
    %17 = arith.addf %15, %16 : vector<256x4xf32>
    %cst_25 = arith.constant 0.000000e+00 : f32
    %18 = vector.broadcast %cst_25 : f32 to vector<256x4xf32>
    %19 = arith.maximumf %17, %18 : vector<256x4xf32>
    %20 = vector.shape_cast %19 : vector<256x4xf32> to vector<4x8x8x4xf32>
    %21 = vector.extract_strided_slice %20 {offsets = [0, 0, 0, 0], sizes = [1, 8, 8, 4], strides = [1, 1, 1, 1]} : vector<4x8x8x4xf32> to vector<1x8x8x4xf32>
    %22 = vector.shape_cast %21 : vector<1x8x8x4xf32> to vector<8x8x4xf32>
    %c1 = arith.constant 1 : index
    %c1_26 = arith.constant 1 : index
    %c4 = arith.constant 4 : index
    %23 = vector.load %arg15[%c1, %c1_26, %c4] : memref<10x10x24xf32, #tpu.memory_space<vmem>>, vector<8x8x4xf32>
    tpu.vector_store %arg15[%c1, %c1_26, %c4], %22 {strides = array<i32>} : memref<10x10x24xf32, #tpu.memory_space<vmem>>, vector<8x8x4xf32>,
    %24 = vector.extract_strided_slice %20 {offsets = [1, 0, 0, 0], sizes = [1, 8, 8, 4], strides = [1, 1, 1, 1]} : vector<4x8x8x4xf32> to vector<1x8x8x4xf32>
    %25 = vector.shape_cast %24 : vector<1x8x8x4xf32> to vector<8x8x4xf32>
    %c1_27 = arith.constant 1 : index
    %c1_28 = arith.constant 1 : index
    %c8 = arith.constant 8 : index
    %26 = vector.load %arg15[%c1_27, %c1_28, %c8] : memref<10x10x24xf32, #tpu.memory_space<vmem>>, vector<8x8x4xf32>
    tpu.vector_store %arg15[%c1_27, %c1_28, %c8], %25 {strides = array<i32>} : memref<10x10x24xf32, #tpu.memory_space<vmem>>, vector<8x8x4xf32>,
    %27 = vector.extract_strided_slice %20 {offsets = [2, 0, 0, 0], sizes = [1, 8, 8, 4], strides = [1, 1, 1, 1]} : vector<4x8x8x4xf32> to vector<1x8x8x4xf32>
    %28 = vector.shape_cast %27 : vector<1x8x8x4xf32> to vector<8x8x4xf32>
    %c1_29 = arith.constant 1 : index
    %c1_30 = arith.constant 1 : index
    %c12 = arith.constant 12 : index
    %29 = vector.load %arg15[%c1_29, %c1_30, %c12] : memref<10x10x24xf32, #tpu.memory_space<vmem>>, vector<8x8x4xf32>
    tpu.vector_store %arg15[%c1_29, %c1_30, %c12], %28 {strides = array<i32>} : memref<10x10x24xf32, #tpu.memory_space<vmem>>, vector<8x8x4xf32>,
    %30 = vector.extract_strided_slice %20 {offsets = [3, 0, 0, 0], sizes = [1, 8, 8, 4], strides = [1, 1, 1, 1]} : vector<4x8x8x4xf32> to vector<1x8x8x4xf32>
    %31 = vector.shape_cast %30 : vector<1x8x8x4xf32> to vector<8x8x4xf32>
    %c1_31 = arith.constant 1 : index
    %c1_32 = arith.constant 1 : index
    %c16 = arith.constant 16 : index
    %32 = vector.load %arg15[%c1_31, %c1_32, %c16] : memref<10x10x24xf32, #tpu.memory_space<vmem>>, vector<8x8x4xf32>
    tpu.vector_store %arg15[%c1_31, %c1_32, %c16], %31 {strides = array<i32>} : memref<10x10x24xf32, #tpu.memory_space<vmem>>, vector<8x8x4xf32>,
    %c0_i32 = arith.constant 0 : i32
    %33 = arith.cmpi sgt, %arg1, %c0_i32 : i32
    %34 = arith.extui %33 : i1 to i32
    %c0_i32_33 = arith.constant 0 : i32
    %35 = arith.cmpi ne, %34, %c0_i32_33 : i32
    scf.if %35 {
      %c0_367 = arith.constant 0 : index
      %c0_368 = arith.constant 0 : index
      %c0_369 = arith.constant 0 : index
      %c0_370 = arith.constant 0 : index
      %c0_371 = arith.constant 0 : index
      %338 = vector.load %arg3[%c0_367, %c0_368, %c0_369, %c0_370, %c0_371] : memref<1x1x8x8x16xf32, #tpu.memory_space<vmem>>, vector<1x1x8x8x16xf32>
      %339 = vector.shape_cast %338 : vector<1x1x8x8x16xf32> to vector<64x16xf32>
      %cst_372 = arith.constant dense<0.000000e+00> : vector<64x4xf32>
      %340 = tpu.matmul %339, %0, %cst_372 {dimension_numbers = #tpu.dot_dimension_numbers<[1], [0], [0], [1], [0, 0, 1, 1], [], []>} : vector<64x16xf32>, vector<16x4xf32>, vector<64x4xf32> -> vector<64x4xf32>
      %341 = vector.broadcast %1 : vector<1x4xf32> to vector<64x4xf32>
      %342 = arith.mulf %340, %341 : vector<64x4xf32>
      %343 = vector.broadcast %2 : vector<1x4xf32> to vector<64x4xf32>
      %344 = arith.addf %342, %343 : vector<64x4xf32>
      %cst_373 = arith.constant 0.000000e+00 : f32
      %345 = vector.broadcast %cst_373 : f32 to vector<64x4xf32>
      %346 = arith.maximumf %344, %345 : vector<64x4xf32>
      %347 = vector.shape_cast %346 : vector<64x4xf32> to vector<8x8x4xf32>
      %c1_374 = arith.constant 1 : index
      %c1_375 = arith.constant 1 : index
      %c0_376 = arith.constant 0 : index
      %348 = vector.load %arg15[%c1_374, %c1_375, %c0_376] : memref<10x10x24xf32, #tpu.memory_space<vmem>>, vector<8x8x4xf32>
      tpu.vector_store %arg15[%c1_374, %c1_375, %c0_376], %347 {strides = array<i32>} : memref<10x10x24xf32, #tpu.memory_space<vmem>>, vector<8x8x4xf32>,
    } else {
    }
    %c0_i32_34 = arith.constant 0 : i32
    %36 = arith.cmpi eq, %arg1, %c0_i32_34 : i32
    %37 = arith.extui %36 : i1 to i32
    %c0_i32_35 = arith.constant 0 : i32
    %38 = arith.cmpi ne, %37, %c0_i32_35 : i32
    scf.if %38 {
      %cst_367 = arith.constant 0.000000e+00 : f32
      %338 = vector.broadcast %cst_367 : f32 to vector<10x10x4xf32>
      %c0_368 = arith.constant 0 : index
      %c0_369 = arith.constant 0 : index
      %c0_370 = arith.constant 0 : index
      %339 = vector.load %arg15[%c0_368, %c0_369, %c0_370] : memref<10x10x24xf32, #tpu.memory_space<vmem>>, vector<10x10x4xf32>
      tpu.vector_store %arg15[%c0_368, %c0_369, %c0_370], %338 {strides = array<i32>} : memref<10x10x24xf32, #tpu.memory_space<vmem>>, vector<10x10x4xf32>,
    } else {
    }
    %c1_i32 = arith.constant 1 : i32
    %39 = arith.cmpi slt, %arg1, %c1_i32 : i32
    %40 = arith.extui %39 : i1 to i32
    %c0_i32_36 = arith.constant 0 : i32
    %41 = arith.cmpi ne, %40, %c0_i32_36 : i32
    scf.if %41 {
      %c0_367 = arith.constant 0 : index
      %c0_368 = arith.constant 0 : index
      %c0_369 = arith.constant 0 : index
      %c0_370 = arith.constant 0 : index
      %c0_371 = arith.constant 0 : index
      %338 = vector.load %arg4[%c0_367, %c0_368, %c0_369, %c0_370, %c0_371] : memref<1x1x8x8x16xf32, #tpu.memory_space<vmem>>, vector<1x1x8x8x16xf32>
      %339 = vector.shape_cast %338 : vector<1x1x8x8x16xf32> to vector<64x16xf32>
      %cst_372 = arith.constant dense<0.000000e+00> : vector<64x4xf32>
      %340 = tpu.matmul %339, %0, %cst_372 {dimension_numbers = #tpu.dot_dimension_numbers<[1], [0], [0], [1], [0, 0, 1, 1], [], []>} : vector<64x16xf32>, vector<16x4xf32>, vector<64x4xf32> -> vector<64x4xf32>
      %341 = vector.broadcast %1 : vector<1x4xf32> to vector<64x4xf32>
      %342 = arith.mulf %340, %341 : vector<64x4xf32>
      %343 = vector.broadcast %2 : vector<1x4xf32> to vector<64x4xf32>
      %344 = arith.addf %342, %343 : vector<64x4xf32>
      %cst_373 = arith.constant 0.000000e+00 : f32
      %345 = vector.broadcast %cst_373 : f32 to vector<64x4xf32>
      %346 = arith.maximumf %344, %345 : vector<64x4xf32>
      %347 = vector.shape_cast %346 : vector<64x4xf32> to vector<8x8x4xf32>
      %c1_374 = arith.constant 1 : index
      %c1_375 = arith.constant 1 : index
      %c20 = arith.constant 20 : index
      %348 = vector.load %arg15[%c1_374, %c1_375, %c20] : memref<10x10x24xf32, #tpu.memory_space<vmem>>, vector<8x8x4xf32>
      tpu.vector_store %arg15[%c1_374, %c1_375, %c20], %347 {strides = array<i32>} : memref<10x10x24xf32, #tpu.memory_space<vmem>>, vector<8x8x4xf32>,
    } else {
    }
    %c1_i32_37 = arith.constant 1 : i32
    %42 = arith.cmpi eq, %arg1, %c1_i32_37 : i32
    %43 = arith.extui %42 : i1 to i32
    %c0_i32_38 = arith.constant 0 : i32
    %44 = arith.cmpi ne, %43, %c0_i32_38 : i32
    scf.if %44 {
      %cst_367 = arith.constant 0.000000e+00 : f32
      %338 = vector.broadcast %cst_367 : f32 to vector<10x10x4xf32>
      %c0_368 = arith.constant 0 : index
      %c0_369 = arith.constant 0 : index
      %c20 = arith.constant 20 : index
      %339 = vector.load %arg15[%c0_368, %c0_369, %c20] : memref<10x10x24xf32, #tpu.memory_space<vmem>>, vector<10x10x4xf32>
      tpu.vector_store %arg15[%c0_368, %c0_369, %c20], %338 {strides = array<i32>} : memref<10x10x24xf32, #tpu.memory_space<vmem>>, vector<10x10x4xf32>,
    } else {
    }
    %c0_39 = arith.constant 0 : index
    %c0_40 = arith.constant 0 : index
    %45 = vector.load %arg9[%c0_39, %c0_40] : memref<1x4xf32, #tpu.memory_space<vmem>>, vector<1x4xf32>
    %c0_41 = arith.constant 0 : index
    %c0_42 = arith.constant 0 : index
    %46 = vector.load %arg10[%c0_41, %c0_42] : memref<1x4xf32, #tpu.memory_space<vmem>>, vector<1x4xf32>
    %c0_43 = arith.constant 0 : index
    %c0_44 = arith.constant 0 : index
    %47 = vector.load %arg11[%c0_43, %c0_44] : memref<4x16xf32, #tpu.memory_space<vmem>>, vector<4x16xf32>
    %c0_45 = arith.constant 0 : index
    %c0_46 = arith.constant 0 : index
    %48 = vector.load %arg12[%c0_45, %c0_46] : memref<1x16xf32, #tpu.memory_space<vmem>>, vector<1x16xf32>
    %c0_47 = arith.constant 0 : index
    %c0_48 = arith.constant 0 : index
    %49 = vector.load %arg13[%c0_47, %c0_48] : memref<1x16xf32, #tpu.memory_space<vmem>>, vector<1x16xf32>
    %c0_49 = arith.constant 0 : index
    %c0_50 = arith.constant 0 : index
    %c0_51 = arith.constant 0 : index
    %50 = vector.load %arg15[%c0_49, %c0_50, %c0_51] : memref<10x10x24xf32, #tpu.memory_space<vmem>>, vector<8x8x12xf32>
    %51 = vector.shape_cast %50 : vector<8x8x12xf32> to vector<64x12xf32>
    %c0_52 = arith.constant 0 : index
    %c0_53 = arith.constant 0 : index
    %c0_54 = arith.constant 0 : index
    %c0_55 = arith.constant 0 : index
    %52 = vector.load %arg8[%c0_52, %c0_53, %c0_54, %c0_55] : memref<3x3x12x4xf32, #tpu.memory_space<vmem>>, vector<1x1x12x4xf32>
    %53 = vector.shape_cast %52 : vector<1x1x12x4xf32> to vector<12x4xf32>
    %cst_56 = arith.constant dense<0.000000e+00> : vector<64x4xf32>
    %54 = tpu.matmul %51, %53, %cst_56 {dimension_numbers = #tpu.dot_dimension_numbers<[1], [0], [0], [1], [0, 0, 1, 1], [], []>} : vector<64x12xf32>, vector<12x4xf32>, vector<64x4xf32> -> vector<64x4xf32>
    %c0_57 = arith.constant 0 : index
    %c1_58 = arith.constant 1 : index
    %c0_59 = arith.constant 0 : index
    %55 = vector.load %arg15[%c0_57, %c1_58, %c0_59] : memref<10x10x24xf32, #tpu.memory_space<vmem>>, vector<8x8x12xf32>
    %56 = vector.shape_cast %55 : vector<8x8x12xf32> to vector<64x12xf32>
    %c0_60 = arith.constant 0 : index
    %c1_61 = arith.constant 1 : index
    %c0_62 = arith.constant 0 : index
    %c0_63 = arith.constant 0 : index
    %57 = vector.load %arg8[%c0_60, %c1_61, %c0_62, %c0_63] : memref<3x3x12x4xf32, #tpu.memory_space<vmem>>, vector<1x1x12x4xf32>
    %58 = vector.shape_cast %57 : vector<1x1x12x4xf32> to vector<12x4xf32>
    %cst_64 = arith.constant dense<0.000000e+00> : vector<64x4xf32>
    %59 = tpu.matmul %56, %58, %cst_64 {dimension_numbers = #tpu.dot_dimension_numbers<[1], [0], [0], [1], [0, 0, 1, 1], [], []>} : vector<64x12xf32>, vector<12x4xf32>, vector<64x4xf32> -> vector<64x4xf32>
    %60 = arith.addf %54, %59 : vector<64x4xf32>
    %c0_65 = arith.constant 0 : index
    %c2 = arith.constant 2 : index
    %c0_66 = arith.constant 0 : index
    %61 = vector.load %arg15[%c0_65, %c2, %c0_66] : memref<10x10x24xf32, #tpu.memory_space<vmem>>, vector<8x8x12xf32>
    %62 = vector.shape_cast %61 : vector<8x8x12xf32> to vector<64x12xf32>
    %c0_67 = arith.constant 0 : index
    %c2_68 = arith.constant 2 : index
    %c0_69 = arith.constant 0 : index
    %c0_70 = arith.constant 0 : index
    %63 = vector.load %arg8[%c0_67, %c2_68, %c0_69, %c0_70] : memref<3x3x12x4xf32, #tpu.memory_space<vmem>>, vector<1x1x12x4xf32>
    %64 = vector.shape_cast %63 : vector<1x1x12x4xf32> to vector<12x4xf32>
    %cst_71 = arith.constant dense<0.000000e+00> : vector<64x4xf32>
    %65 = tpu.matmul %62, %64, %cst_71 {dimension_numbers = #tpu.dot_dimension_numbers<[1], [0], [0], [1], [0, 0, 1, 1], [], []>} : vector<64x12xf32>, vector<12x4xf32>, vector<64x4xf32> -> vector<64x4xf32>
    %66 = arith.addf %60, %65 : vector<64x4xf32>
    %c1_72 = arith.constant 1 : index
    %c0_73 = arith.constant 0 : index
    %c0_74 = arith.constant 0 : index
    %67 = vector.load %arg15[%c1_72, %c0_73, %c0_74] : memref<10x10x24xf32, #tpu.memory_space<vmem>>, vector<8x8x12xf32>
    %68 = vector.shape_cast %67 : vector<8x8x12xf32> to vector<64x12xf32>
    %c1_75 = arith.constant 1 : index
    %c0_76 = arith.constant 0 : index
    %c0_77 = arith.constant 0 : index
    %c0_78 = arith.constant 0 : index
    %69 = vector.load %arg8[%c1_75, %c0_76, %c0_77, %c0_78] : memref<3x3x12x4xf32, #tpu.memory_space<vmem>>, vector<1x1x12x4xf32>
    %70 = vector.shape_cast %69 : vector<1x1x12x4xf32> to vector<12x4xf32>
    %cst_79 = arith.constant dense<0.000000e+00> : vector<64x4xf32>
    %71 = tpu.matmul %68, %70, %cst_79 {dimension_numbers = #tpu.dot_dimension_numbers<[1], [0], [0], [1], [0, 0, 1, 1], [], []>} : vector<64x12xf32>, vector<12x4xf32>, vector<64x4xf32> -> vector<64x4xf32>
    %72 = arith.addf %66, %71 : vector<64x4xf32>
    %c1_80 = arith.constant 1 : index
    %c1_81 = arith.constant 1 : index
    %c0_82 = arith.constant 0 : index
    %73 = vector.load %arg15[%c1_80, %c1_81, %c0_82] : memref<10x10x24xf32, #tpu.memory_space<vmem>>, vector<8x8x12xf32>
    %74 = vector.shape_cast %73 : vector<8x8x12xf32> to vector<64x12xf32>
    %c1_83 = arith.constant 1 : index
    %c1_84 = arith.constant 1 : index
    %c0_85 = arith.constant 0 : index
    %c0_86 = arith.constant 0 : index
    %75 = vector.load %arg8[%c1_83, %c1_84, %c0_85, %c0_86] : memref<3x3x12x4xf32, #tpu.memory_space<vmem>>, vector<1x1x12x4xf32>
    %76 = vector.shape_cast %75 : vector<1x1x12x4xf32> to vector<12x4xf32>
    %cst_87 = arith.constant dense<0.000000e+00> : vector<64x4xf32>
    %77 = tpu.matmul %74, %76, %cst_87 {dimension_numbers = #tpu.dot_dimension_numbers<[1], [0], [0], [1], [0, 0, 1, 1], [], []>} : vector<64x12xf32>, vector<12x4xf32>, vector<64x4xf32> -> vector<64x4xf32>
    %78 = arith.addf %72, %77 : vector<64x4xf32>
    %c1_88 = arith.constant 1 : index
    %c2_89 = arith.constant 2 : index
    %c0_90 = arith.constant 0 : index
    %79 = vector.load %arg15[%c1_88, %c2_89, %c0_90] : memref<10x10x24xf32, #tpu.memory_space<vmem>>, vector<8x8x12xf32>
    %80 = vector.shape_cast %79 : vector<8x8x12xf32> to vector<64x12xf32>
    %c1_91 = arith.constant 1 : index
    %c2_92 = arith.constant 2 : index
    %c0_93 = arith.constant 0 : index
    %c0_94 = arith.constant 0 : index
    %81 = vector.load %arg8[%c1_91, %c2_92, %c0_93, %c0_94] : memref<3x3x12x4xf32, #tpu.memory_space<vmem>>, vector<1x1x12x4xf32>
    %82 = vector.shape_cast %81 : vector<1x1x12x4xf32> to vector<12x4xf32>
    %cst_95 = arith.constant dense<0.000000e+00> : vector<64x4xf32>
    %83 = tpu.matmul %80, %82, %cst_95 {dimension_numbers = #tpu.dot_dimension_numbers<[1], [0], [0], [1], [0, 0, 1, 1], [], []>} : vector<64x12xf32>, vector<12x4xf32>, vector<64x4xf32> -> vector<64x4xf32>
    %84 = arith.addf %78, %83 : vector<64x4xf32>
    %c2_96 = arith.constant 2 : index
    %c0_97 = arith.constant 0 : index
    %c0_98 = arith.constant 0 : index
    %85 = vector.load %arg15[%c2_96, %c0_97, %c0_98] : memref<10x10x24xf32, #tpu.memory_space<vmem>>, vector<8x8x12xf32>
    %86 = vector.shape_cast %85 : vector<8x8x12xf32> to vector<64x12xf32>
    %c2_99 = arith.constant 2 : index
    %c0_100 = arith.constant 0 : index
    %c0_101 = arith.constant 0 : index
    %c0_102 = arith.constant 0 : index
    %87 = vector.load %arg8[%c2_99, %c0_100, %c0_101, %c0_102] : memref<3x3x12x4xf32, #tpu.memory_space<vmem>>, vector<1x1x12x4xf32>
    %88 = vector.shape_cast %87 : vector<1x1x12x4xf32> to vector<12x4xf32>
    %cst_103 = arith.constant dense<0.000000e+00> : vector<64x4xf32>
    %89 = tpu.matmul %86, %88, %cst_103 {dimension_numbers = #tpu.dot_dimension_numbers<[1], [0], [0], [1], [0, 0, 1, 1], [], []>} : vector<64x12xf32>, vector<12x4xf32>, vector<64x4xf32> -> vector<64x4xf32>
    %90 = arith.addf %84, %89 : vector<64x4xf32>
    %c2_104 = arith.constant 2 : index
    %c1_105 = arith.constant 1 : index
    %c0_106 = arith.constant 0 : index
    %91 = vector.load %arg15[%c2_104, %c1_105, %c0_106] : memref<10x10x24xf32, #tpu.memory_space<vmem>>, vector<8x8x12xf32>
    %92 = vector.shape_cast %91 : vector<8x8x12xf32> to vector<64x12xf32>
    %c2_107 = arith.constant 2 : index
    %c1_108 = arith.constant 1 : index
    %c0_109 = arith.constant 0 : index
    %c0_110 = arith.constant 0 : index
    %93 = vector.load %arg8[%c2_107, %c1_108, %c0_109, %c0_110] : memref<3x3x12x4xf32, #tpu.memory_space<vmem>>, vector<1x1x12x4xf32>
    %94 = vector.shape_cast %93 : vector<1x1x12x4xf32> to vector<12x4xf32>
    %cst_111 = arith.constant dense<0.000000e+00> : vector<64x4xf32>
    %95 = tpu.matmul %92, %94, %cst_111 {dimension_numbers = #tpu.dot_dimension_numbers<[1], [0], [0], [1], [0, 0, 1, 1], [], []>} : vector<64x12xf32>, vector<12x4xf32>, vector<64x4xf32> -> vector<64x4xf32>
    %96 = arith.addf %90, %95 : vector<64x4xf32>
    %c2_112 = arith.constant 2 : index
    %c2_113 = arith.constant 2 : index
    %c0_114 = arith.constant 0 : index
    %97 = vector.load %arg15[%c2_112, %c2_113, %c0_114] : memref<10x10x24xf32, #tpu.memory_space<vmem>>, vector<8x8x12xf32>
    %98 = vector.shape_cast %97 : vector<8x8x12xf32> to vector<64x12xf32>
    %c2_115 = arith.constant 2 : index
    %c2_116 = arith.constant 2 : index
    %c0_117 = arith.constant 0 : index
    %c0_118 = arith.constant 0 : index
    %99 = vector.load %arg8[%c2_115, %c2_116, %c0_117, %c0_118] : memref<3x3x12x4xf32, #tpu.memory_space<vmem>>, vector<1x1x12x4xf32>
    %100 = vector.shape_cast %99 : vector<1x1x12x4xf32> to vector<12x4xf32>
    %cst_119 = arith.constant dense<0.000000e+00> : vector<64x4xf32>
    %101 = tpu.matmul %98, %100, %cst_119 {dimension_numbers = #tpu.dot_dimension_numbers<[1], [0], [0], [1], [0, 0, 1, 1], [], []>} : vector<64x12xf32>, vector<12x4xf32>, vector<64x4xf32> -> vector<64x4xf32>
    %102 = arith.addf %96, %101 : vector<64x4xf32>
    %103 = vector.broadcast %45 : vector<1x4xf32> to vector<64x4xf32>
    %104 = arith.mulf %102, %103 : vector<64x4xf32>
    %105 = vector.broadcast %46 : vector<1x4xf32> to vector<64x4xf32>
    %106 = arith.addf %104, %105 : vector<64x4xf32>
    %cst_120 = arith.constant 0.000000e+00 : f32
    %107 = vector.broadcast %cst_120 : f32 to vector<64x4xf32>
    %108 = arith.maximumf %106, %107 : vector<64x4xf32>
    %cst_121 = arith.constant dense<0.000000e+00> : vector<64x16xf32>
    %109 = tpu.matmul %108, %47, %cst_121 {dimension_numbers = #tpu.dot_dimension_numbers<[1], [0], [0], [1], [0, 0, 1, 1], [], []>} : vector<64x4xf32>, vector<4x16xf32>, vector<64x16xf32> -> vector<64x16xf32>
    %110 = vector.broadcast %48 : vector<1x16xf32> to vector<64x16xf32>
    %111 = arith.mulf %109, %110 : vector<64x16xf32>
    %112 = vector.broadcast %49 : vector<1x16xf32> to vector<64x16xf32>
    %113 = arith.addf %111, %112 : vector<64x16xf32>
    %114 = vector.extract_strided_slice %11 {offsets = [0, 0, 0, 0, 0], sizes = [1, 1, 8, 8, 16], strides = [1, 1, 1, 1, 1]} : vector<1x4x8x8x16xf32> to vector<1x1x8x8x16xf32>
    %115 = vector.shape_cast %114 : vector<1x1x8x8x16xf32> to vector<8x8x16xf32>
    %116 = vector.shape_cast %115 : vector<8x8x16xf32> to vector<64x16xf32>
    %117 = arith.addf %113, %116 : vector<64x16xf32>
    %cst_122 = arith.constant 0.000000e+00 : f32
    %118 = vector.broadcast %cst_122 : f32 to vector<64x16xf32>
    %119 = arith.maximumf %117, %118 : vector<64x16xf32>
    %120 = vector.shape_cast %119 : vector<64x16xf32> to vector<1x1x8x8x16xf32>
    %c0_123 = arith.constant 0 : index
    %c0_124 = arith.constant 0 : index
    %c0_125 = arith.constant 0 : index
    %c0_126 = arith.constant 0 : index
    %c0_127 = arith.constant 0 : index
    %121 = vector.load %arg14[%c0_123, %c0_124, %c0_125, %c0_126, %c0_127] : memref<1x4x8x8x16xf32, #tpu.memory_space<vmem>>, vector<1x1x8x8x16xf32>
    tpu.vector_store %arg14[%c0_123, %c0_124, %c0_125, %c0_126, %c0_127], %120 {strides = array<i32>} : memref<1x4x8x8x16xf32, #tpu.memory_space<vmem>>, vector<1x1x8x8x16xf32>,
    %c0_128 = arith.constant 0 : index
    %c0_129 = arith.constant 0 : index
    %c4_130 = arith.constant 4 : index
    %122 = vector.load %arg15[%c0_128, %c0_129, %c4_130] : memref<10x10x24xf32, #tpu.memory_space<vmem>>, vector<8x8x12xf32>
    %123 = vector.shape_cast %122 : vector<8x8x12xf32> to vector<64x12xf32>
    %c0_131 = arith.constant 0 : index
    %c0_132 = arith.constant 0 : index
    %c0_133 = arith.constant 0 : index
    %c0_134 = arith.constant 0 : index
    %124 = vector.load %arg8[%c0_131, %c0_132, %c0_133, %c0_134] : memref<3x3x12x4xf32, #tpu.memory_space<vmem>>, vector<1x1x12x4xf32>
    %125 = vector.shape_cast %124 : vector<1x1x12x4xf32> to vector<12x4xf32>
    %cst_135 = arith.constant dense<0.000000e+00> : vector<64x4xf32>
    %126 = tpu.matmul %123, %125, %cst_135 {dimension_numbers = #tpu.dot_dimension_numbers<[1], [0], [0], [1], [0, 0, 1, 1], [], []>} : vector<64x12xf32>, vector<12x4xf32>, vector<64x4xf32> -> vector<64x4xf32>
    %c0_136 = arith.constant 0 : index
    %c1_137 = arith.constant 1 : index
    %c4_138 = arith.constant 4 : index
    %127 = vector.load %arg15[%c0_136, %c1_137, %c4_138] : memref<10x10x24xf32, #tpu.memory_space<vmem>>, vector<8x8x12xf32>
    %128 = vector.shape_cast %127 : vector<8x8x12xf32> to vector<64x12xf32>
    %c0_139 = arith.constant 0 : index
    %c1_140 = arith.constant 1 : index
    %c0_141 = arith.constant 0 : index
    %c0_142 = arith.constant 0 : index
    %129 = vector.load %arg8[%c0_139, %c1_140, %c0_141, %c0_142] : memref<3x3x12x4xf32, #tpu.memory_space<vmem>>, vector<1x1x12x4xf32>
    %130 = vector.shape_cast %129 : vector<1x1x12x4xf32> to vector<12x4xf32>
    %cst_143 = arith.constant dense<0.000000e+00> : vector<64x4xf32>
    %131 = tpu.matmul %128, %130, %cst_143 {dimension_numbers = #tpu.dot_dimension_numbers<[1], [0], [0], [1], [0, 0, 1, 1], [], []>} : vector<64x12xf32>, vector<12x4xf32>, vector<64x4xf32> -> vector<64x4xf32>
    %132 = arith.addf %126, %131 : vector<64x4xf32>
    %c0_144 = arith.constant 0 : index
    %c2_145 = arith.constant 2 : index
    %c4_146 = arith.constant 4 : index
    %133 = vector.load %arg15[%c0_144, %c2_145, %c4_146] : memref<10x10x24xf32, #tpu.memory_space<vmem>>, vector<8x8x12xf32>
    %134 = vector.shape_cast %133 : vector<8x8x12xf32> to vector<64x12xf32>
    %c0_147 = arith.constant 0 : index
    %c2_148 = arith.constant 2 : index
    %c0_149 = arith.constant 0 : index
    %c0_150 = arith.constant 0 : index
    %135 = vector.load %arg8[%c0_147, %c2_148, %c0_149, %c0_150] : memref<3x3x12x4xf32, #tpu.memory_space<vmem>>, vector<1x1x12x4xf32>
    %136 = vector.shape_cast %135 : vector<1x1x12x4xf32> to vector<12x4xf32>
    %cst_151 = arith.constant dense<0.000000e+00> : vector<64x4xf32>
    %137 = tpu.matmul %134, %136, %cst_151 {dimension_numbers = #tpu.dot_dimension_numbers<[1], [0], [0], [1], [0, 0, 1, 1], [], []>} : vector<64x12xf32>, vector<12x4xf32>, vector<64x4xf32> -> vector<64x4xf32>
    %138 = arith.addf %132, %137 : vector<64x4xf32>
    %c1_152 = arith.constant 1 : index
    %c0_153 = arith.constant 0 : index
    %c4_154 = arith.constant 4 : index
    %139 = vector.load %arg15[%c1_152, %c0_153, %c4_154] : memref<10x10x24xf32, #tpu.memory_space<vmem>>, vector<8x8x12xf32>
    %140 = vector.shape_cast %139 : vector<8x8x12xf32> to vector<64x12xf32>
    %c1_155 = arith.constant 1 : index
    %c0_156 = arith.constant 0 : index
    %c0_157 = arith.constant 0 : index
    %c0_158 = arith.constant 0 : index
    %141 = vector.load %arg8[%c1_155, %c0_156, %c0_157, %c0_158] : memref<3x3x12x4xf32, #tpu.memory_space<vmem>>, vector<1x1x12x4xf32>
    %142 = vector.shape_cast %141 : vector<1x1x12x4xf32> to vector<12x4xf32>
    %cst_159 = arith.constant dense<0.000000e+00> : vector<64x4xf32>
    %143 = tpu.matmul %140, %142, %cst_159 {dimension_numbers = #tpu.dot_dimension_numbers<[1], [0], [0], [1], [0, 0, 1, 1], [], []>} : vector<64x12xf32>, vector<12x4xf32>, vector<64x4xf32> -> vector<64x4xf32>
    %144 = arith.addf %138, %143 : vector<64x4xf32>
    %c1_160 = arith.constant 1 : index
    %c1_161 = arith.constant 1 : index
    %c4_162 = arith.constant 4 : index
    %145 = vector.load %arg15[%c1_160, %c1_161, %c4_162] : memref<10x10x24xf32, #tpu.memory_space<vmem>>, vector<8x8x12xf32>
    %146 = vector.shape_cast %145 : vector<8x8x12xf32> to vector<64x12xf32>
    %c1_163 = arith.constant 1 : index
    %c1_164 = arith.constant 1 : index
    %c0_165 = arith.constant 0 : index
    %c0_166 = arith.constant 0 : index
    %147 = vector.load %arg8[%c1_163, %c1_164, %c0_165, %c0_166] : memref<3x3x12x4xf32, #tpu.memory_space<vmem>>, vector<1x1x12x4xf32>
    %148 = vector.shape_cast %147 : vector<1x1x12x4xf32> to vector<12x4xf32>
    %cst_167 = arith.constant dense<0.000000e+00> : vector<64x4xf32>
    %149 = tpu.matmul %146, %148, %cst_167 {dimension_numbers = #tpu.dot_dimension_numbers<[1], [0], [0], [1], [0, 0, 1, 1], [], []>} : vector<64x12xf32>, vector<12x4xf32>, vector<64x4xf32> -> vector<64x4xf32>
    %150 = arith.addf %144, %149 : vector<64x4xf32>
    %c1_168 = arith.constant 1 : index
    %c2_169 = arith.constant 2 : index
    %c4_170 = arith.constant 4 : index
    %151 = vector.load %arg15[%c1_168, %c2_169, %c4_170] : memref<10x10x24xf32, #tpu.memory_space<vmem>>, vector<8x8x12xf32>
    %152 = vector.shape_cast %151 : vector<8x8x12xf32> to vector<64x12xf32>
    %c1_171 = arith.constant 1 : index
    %c2_172 = arith.constant 2 : index
    %c0_173 = arith.constant 0 : index
    %c0_174 = arith.constant 0 : index
    %153 = vector.load %arg8[%c1_171, %c2_172, %c0_173, %c0_174] : memref<3x3x12x4xf32, #tpu.memory_space<vmem>>, vector<1x1x12x4xf32>
    %154 = vector.shape_cast %153 : vector<1x1x12x4xf32> to vector<12x4xf32>
    %cst_175 = arith.constant dense<0.000000e+00> : vector<64x4xf32>
    %155 = tpu.matmul %152, %154, %cst_175 {dimension_numbers = #tpu.dot_dimension_numbers<[1], [0], [0], [1], [0, 0, 1, 1], [], []>} : vector<64x12xf32>, vector<12x4xf32>, vector<64x4xf32> -> vector<64x4xf32>
    %156 = arith.addf %150, %155 : vector<64x4xf32>
    %c2_176 = arith.constant 2 : index
    %c0_177 = arith.constant 0 : index
    %c4_178 = arith.constant 4 : index
    %157 = vector.load %arg15[%c2_176, %c0_177, %c4_178] : memref<10x10x24xf32, #tpu.memory_space<vmem>>, vector<8x8x12xf32>
    %158 = vector.shape_cast %157 : vector<8x8x12xf32> to vector<64x12xf32>
    %c2_179 = arith.constant 2 : index
    %c0_180 = arith.constant 0 : index
    %c0_181 = arith.constant 0 : index
    %c0_182 = arith.constant 0 : index
    %159 = vector.load %arg8[%c2_179, %c0_180, %c0_181, %c0_182] : memref<3x3x12x4xf32, #tpu.memory_space<vmem>>, vector<1x1x12x4xf32>
    %160 = vector.shape_cast %159 : vector<1x1x12x4xf32> to vector<12x4xf32>
    %cst_183 = arith.constant dense<0.000000e+00> : vector<64x4xf32>
    %161 = tpu.matmul %158, %160, %cst_183 {dimension_numbers = #tpu.dot_dimension_numbers<[1], [0], [0], [1], [0, 0, 1, 1], [], []>} : vector<64x12xf32>, vector<12x4xf32>, vector<64x4xf32> -> vector<64x4xf32>
    %162 = arith.addf %156, %161 : vector<64x4xf32>
    %c2_184 = arith.constant 2 : index
    %c1_185 = arith.constant 1 : index
    %c4_186 = arith.constant 4 : index
    %163 = vector.load %arg15[%c2_184, %c1_185, %c4_186] : memref<10x10x24xf32, #tpu.memory_space<vmem>>, vector<8x8x12xf32>
    %164 = vector.shape_cast %163 : vector<8x8x12xf32> to vector<64x12xf32>
    %c2_187 = arith.constant 2 : index
    %c1_188 = arith.constant 1 : index
    %c0_189 = arith.constant 0 : index
    %c0_190 = arith.constant 0 : index
    %165 = vector.load %arg8[%c2_187, %c1_188, %c0_189, %c0_190] : memref<3x3x12x4xf32, #tpu.memory_space<vmem>>, vector<1x1x12x4xf32>
    %166 = vector.shape_cast %165 : vector<1x1x12x4xf32> to vector<12x4xf32>
    %cst_191 = arith.constant dense<0.000000e+00> : vector<64x4xf32>
    %167 = tpu.matmul %164, %166, %cst_191 {dimension_numbers = #tpu.dot_dimension_numbers<[1], [0], [0], [1], [0, 0, 1, 1], [], []>} : vector<64x12xf32>, vector<12x4xf32>, vector<64x4xf32> -> vector<64x4xf32>
    %168 = arith.addf %162, %167 : vector<64x4xf32>
    %c2_192 = arith.constant 2 : index
    %c2_193 = arith.constant 2 : index
    %c4_194 = arith.constant 4 : index
    %169 = vector.load %arg15[%c2_192, %c2_193, %c4_194] : memref<10x10x24xf32, #tpu.memory_space<vmem>>, vector<8x8x12xf32>
    %170 = vector.shape_cast %169 : vector<8x8x12xf32> to vector<64x12xf32>
    %c2_195 = arith.constant 2 : index
    %c2_196 = arith.constant 2 : index
    %c0_197 = arith.constant 0 : index
    %c0_198 = arith.constant 0 : index
    %171 = vector.load %arg8[%c2_195, %c2_196, %c0_197, %c0_198] : memref<3x3x12x4xf32, #tpu.memory_space<vmem>>, vector<1x1x12x4xf32>
    %172 = vector.shape_cast %171 : vector<1x1x12x4xf32> to vector<12x4xf32>
    %cst_199 = arith.constant dense<0.000000e+00> : vector<64x4xf32>
    %173 = tpu.matmul %170, %172, %cst_199 {dimension_numbers = #tpu.dot_dimension_numbers<[1], [0], [0], [1], [0, 0, 1, 1], [], []>} : vector<64x12xf32>, vector<12x4xf32>, vector<64x4xf32> -> vector<64x4xf32>
    %174 = arith.addf %168, %173 : vector<64x4xf32>
    %175 = vector.broadcast %45 : vector<1x4xf32> to vector<64x4xf32>
    %176 = arith.mulf %174, %175 : vector<64x4xf32>
    %177 = vector.broadcast %46 : vector<1x4xf32> to vector<64x4xf32>
    %178 = arith.addf %176, %177 : vector<64x4xf32>
    %cst_200 = arith.constant 0.000000e+00 : f32
    %179 = vector.broadcast %cst_200 : f32 to vector<64x4xf32>
    %180 = arith.maximumf %178, %179 : vector<64x4xf32>
    %cst_201 = arith.constant dense<0.000000e+00> : vector<64x16xf32>
    %181 = tpu.matmul %180, %47, %cst_201 {dimension_numbers = #tpu.dot_dimension_numbers<[1], [0], [0], [1], [0, 0, 1, 1], [], []>} : vector<64x4xf32>, vector<4x16xf32>, vector<64x16xf32> -> vector<64x16xf32>
    %182 = vector.broadcast %48 : vector<1x16xf32> to vector<64x16xf32>
    %183 = arith.mulf %181, %182 : vector<64x16xf32>
    %184 = vector.broadcast %49 : vector<1x16xf32> to vector<64x16xf32>
    %185 = arith.addf %183, %184 : vector<64x16xf32>
    %186 = vector.extract_strided_slice %11 {offsets = [0, 1, 0, 0, 0], sizes = [1, 1, 8, 8, 16], strides = [1, 1, 1, 1, 1]} : vector<1x4x8x8x16xf32> to vector<1x1x8x8x16xf32>
    %187 = vector.shape_cast %186 : vector<1x1x8x8x16xf32> to vector<8x8x16xf32>
    %188 = vector.shape_cast %187 : vector<8x8x16xf32> to vector<64x16xf32>
    %189 = arith.addf %185, %188 : vector<64x16xf32>
    %cst_202 = arith.constant 0.000000e+00 : f32
    %190 = vector.broadcast %cst_202 : f32 to vector<64x16xf32>
    %191 = arith.maximumf %189, %190 : vector<64x16xf32>
    %192 = vector.shape_cast %191 : vector<64x16xf32> to vector<1x1x8x8x16xf32>
    %c0_203 = arith.constant 0 : index
    %c1_204 = arith.constant 1 : index
    %c0_205 = arith.constant 0 : index
    %c0_206 = arith.constant 0 : index
    %c0_207 = arith.constant 0 : index
    %193 = vector.load %arg14[%c0_203, %c1_204, %c0_205, %c0_206, %c0_207] : memref<1x4x8x8x16xf32, #tpu.memory_space<vmem>>, vector<1x1x8x8x16xf32>
    tpu.vector_store %arg14[%c0_203, %c1_204, %c0_205, %c0_206, %c0_207], %192 {strides = array<i32>} : memref<1x4x8x8x16xf32, #tpu.memory_space<vmem>>, vector<1x1x8x8x16xf32>,
    %c0_208 = arith.constant 0 : index
    %c0_209 = arith.constant 0 : index
    %c8_210 = arith.constant 8 : index
    %194 = vector.load %arg15[%c0_208, %c0_209, %c8_210] : memref<10x10x24xf32, #tpu.memory_space<vmem>>, vector<8x8x12xf32>
    %195 = vector.shape_cast %194 : vector<8x8x12xf32> to vector<64x12xf32>
    %c0_211 = arith.constant 0 : index
    %c0_212 = arith.constant 0 : index
    %c0_213 = arith.constant 0 : index
    %c0_214 = arith.constant 0 : index
    %196 = vector.load %arg8[%c0_211, %c0_212, %c0_213, %c0_214] : memref<3x3x12x4xf32, #tpu.memory_space<vmem>>, vector<1x1x12x4xf32>
    %197 = vector.shape_cast %196 : vector<1x1x12x4xf32> to vector<12x4xf32>
    %cst_215 = arith.constant dense<0.000000e+00> : vector<64x4xf32>
    %198 = tpu.matmul %195, %197, %cst_215 {dimension_numbers = #tpu.dot_dimension_numbers<[1], [0], [0], [1], [0, 0, 1, 1], [], []>} : vector<64x12xf32>, vector<12x4xf32>, vector<64x4xf32> -> vector<64x4xf32>
    %c0_216 = arith.constant 0 : index
    %c1_217 = arith.constant 1 : index
    %c8_218 = arith.constant 8 : index
    %199 = vector.load %arg15[%c0_216, %c1_217, %c8_218] : memref<10x10x24xf32, #tpu.memory_space<vmem>>, vector<8x8x12xf32>
    %200 = vector.shape_cast %199 : vector<8x8x12xf32> to vector<64x12xf32>
    %c0_219 = arith.constant 0 : index
    %c1_220 = arith.constant 1 : index
    %c0_221 = arith.constant 0 : index
    %c0_222 = arith.constant 0 : index
    %201 = vector.load %arg8[%c0_219, %c1_220, %c0_221, %c0_222] : memref<3x3x12x4xf32, #tpu.memory_space<vmem>>, vector<1x1x12x4xf32>
    %202 = vector.shape_cast %201 : vector<1x1x12x4xf32> to vector<12x4xf32>
    %cst_223 = arith.constant dense<0.000000e+00> : vector<64x4xf32>
    %203 = tpu.matmul %200, %202, %cst_223 {dimension_numbers = #tpu.dot_dimension_numbers<[1], [0], [0], [1], [0, 0, 1, 1], [], []>} : vector<64x12xf32>, vector<12x4xf32>, vector<64x4xf32> -> vector<64x4xf32>
    %204 = arith.addf %198, %203 : vector<64x4xf32>
    %c0_224 = arith.constant 0 : index
    %c2_225 = arith.constant 2 : index
    %c8_226 = arith.constant 8 : index
    %205 = vector.load %arg15[%c0_224, %c2_225, %c8_226] : memref<10x10x24xf32, #tpu.memory_space<vmem>>, vector<8x8x12xf32>
    %206 = vector.shape_cast %205 : vector<8x8x12xf32> to vector<64x12xf32>
    %c0_227 = arith.constant 0 : index
    %c2_228 = arith.constant 2 : index
    %c0_229 = arith.constant 0 : index
    %c0_230 = arith.constant 0 : index
    %207 = vector.load %arg8[%c0_227, %c2_228, %c0_229, %c0_230] : memref<3x3x12x4xf32, #tpu.memory_space<vmem>>, vector<1x1x12x4xf32>
    %208 = vector.shape_cast %207 : vector<1x1x12x4xf32> to vector<12x4xf32>
    %cst_231 = arith.constant dense<0.000000e+00> : vector<64x4xf32>
    %209 = tpu.matmul %206, %208, %cst_231 {dimension_numbers = #tpu.dot_dimension_numbers<[1], [0], [0], [1], [0, 0, 1, 1], [], []>} : vector<64x12xf32>, vector<12x4xf32>, vector<64x4xf32> -> vector<64x4xf32>
    %210 = arith.addf %204, %209 : vector<64x4xf32>
    %c1_232 = arith.constant 1 : index
    %c0_233 = arith.constant 0 : index
    %c8_234 = arith.constant 8 : index
    %211 = vector.load %arg15[%c1_232, %c0_233, %c8_234] : memref<10x10x24xf32, #tpu.memory_space<vmem>>, vector<8x8x12xf32>
    %212 = vector.shape_cast %211 : vector<8x8x12xf32> to vector<64x12xf32>
    %c1_235 = arith.constant 1 : index
    %c0_236 = arith.constant 0 : index
    %c0_237 = arith.constant 0 : index
    %c0_238 = arith.constant 0 : index
    %213 = vector.load %arg8[%c1_235, %c0_236, %c0_237, %c0_238] : memref<3x3x12x4xf32, #tpu.memory_space<vmem>>, vector<1x1x12x4xf32>
    %214 = vector.shape_cast %213 : vector<1x1x12x4xf32> to vector<12x4xf32>
    %cst_239 = arith.constant dense<0.000000e+00> : vector<64x4xf32>
    %215 = tpu.matmul %212, %214, %cst_239 {dimension_numbers = #tpu.dot_dimension_numbers<[1], [0], [0], [1], [0, 0, 1, 1], [], []>} : vector<64x12xf32>, vector<12x4xf32>, vector<64x4xf32> -> vector<64x4xf32>
    %216 = arith.addf %210, %215 : vector<64x4xf32>
    %c1_240 = arith.constant 1 : index
    %c1_241 = arith.constant 1 : index
    %c8_242 = arith.constant 8 : index
    %217 = vector.load %arg15[%c1_240, %c1_241, %c8_242] : memref<10x10x24xf32, #tpu.memory_space<vmem>>, vector<8x8x12xf32>
    %218 = vector.shape_cast %217 : vector<8x8x12xf32> to vector<64x12xf32>
    %c1_243 = arith.constant 1 : index
    %c1_244 = arith.constant 1 : index
    %c0_245 = arith.constant 0 : index
    %c0_246 = arith.constant 0 : index
    %219 = vector.load %arg8[%c1_243, %c1_244, %c0_245, %c0_246] : memref<3x3x12x4xf32, #tpu.memory_space<vmem>>, vector<1x1x12x4xf32>
    %220 = vector.shape_cast %219 : vector<1x1x12x4xf32> to vector<12x4xf32>
    %cst_247 = arith.constant dense<0.000000e+00> : vector<64x4xf32>
    %221 = tpu.matmul %218, %220, %cst_247 {dimension_numbers = #tpu.dot_dimension_numbers<[1], [0], [0], [1], [0, 0, 1, 1], [], []>} : vector<64x12xf32>, vector<12x4xf32>, vector<64x4xf32> -> vector<64x4xf32>
    %222 = arith.addf %216, %221 : vector<64x4xf32>
    %c1_248 = arith.constant 1 : index
    %c2_249 = arith.constant 2 : index
    %c8_250 = arith.constant 8 : index
    %223 = vector.load %arg15[%c1_248, %c2_249, %c8_250] : memref<10x10x24xf32, #tpu.memory_space<vmem>>, vector<8x8x12xf32>
    %224 = vector.shape_cast %223 : vector<8x8x12xf32> to vector<64x12xf32>
    %c1_251 = arith.constant 1 : index
    %c2_252 = arith.constant 2 : index
    %c0_253 = arith.constant 0 : index
    %c0_254 = arith.constant 0 : index
    %225 = vector.load %arg8[%c1_251, %c2_252, %c0_253, %c0_254] : memref<3x3x12x4xf32, #tpu.memory_space<vmem>>, vector<1x1x12x4xf32>
    %226 = vector.shape_cast %225 : vector<1x1x12x4xf32> to vector<12x4xf32>
    %cst_255 = arith.constant dense<0.000000e+00> : vector<64x4xf32>
    %227 = tpu.matmul %224, %226, %cst_255 {dimension_numbers = #tpu.dot_dimension_numbers<[1], [0], [0], [1], [0, 0, 1, 1], [], []>} : vector<64x12xf32>, vector<12x4xf32>, vector<64x4xf32> -> vector<64x4xf32>
    %228 = arith.addf %222, %227 : vector<64x4xf32>
    %c2_256 = arith.constant 2 : index
    %c0_257 = arith.constant 0 : index
    %c8_258 = arith.constant 8 : index
    %229 = vector.load %arg15[%c2_256, %c0_257, %c8_258] : memref<10x10x24xf32, #tpu.memory_space<vmem>>, vector<8x8x12xf32>
    %230 = vector.shape_cast %229 : vector<8x8x12xf32> to vector<64x12xf32>
    %c2_259 = arith.constant 2 : index
    %c0_260 = arith.constant 0 : index
    %c0_261 = arith.constant 0 : index
    %c0_262 = arith.constant 0 : index
    %231 = vector.load %arg8[%c2_259, %c0_260, %c0_261, %c0_262] : memref<3x3x12x4xf32, #tpu.memory_space<vmem>>, vector<1x1x12x4xf32>
    %232 = vector.shape_cast %231 : vector<1x1x12x4xf32> to vector<12x4xf32>
    %cst_263 = arith.constant dense<0.000000e+00> : vector<64x4xf32>
    %233 = tpu.matmul %230, %232, %cst_263 {dimension_numbers = #tpu.dot_dimension_numbers<[1], [0], [0], [1], [0, 0, 1, 1], [], []>} : vector<64x12xf32>, vector<12x4xf32>, vector<64x4xf32> -> vector<64x4xf32>
    %234 = arith.addf %228, %233 : vector<64x4xf32>
    %c2_264 = arith.constant 2 : index
    %c1_265 = arith.constant 1 : index
    %c8_266 = arith.constant 8 : index
    %235 = vector.load %arg15[%c2_264, %c1_265, %c8_266] : memref<10x10x24xf32, #tpu.memory_space<vmem>>, vector<8x8x12xf32>
    %236 = vector.shape_cast %235 : vector<8x8x12xf32> to vector<64x12xf32>
    %c2_267 = arith.constant 2 : index
    %c1_268 = arith.constant 1 : index
    %c0_269 = arith.constant 0 : index
    %c0_270 = arith.constant 0 : index
    %237 = vector.load %arg8[%c2_267, %c1_268, %c0_269, %c0_270] : memref<3x3x12x4xf32, #tpu.memory_space<vmem>>, vector<1x1x12x4xf32>
    %238 = vector.shape_cast %237 : vector<1x1x12x4xf32> to vector<12x4xf32>
    %cst_271 = arith.constant dense<0.000000e+00> : vector<64x4xf32>
    %239 = tpu.matmul %236, %238, %cst_271 {dimension_numbers = #tpu.dot_dimension_numbers<[1], [0], [0], [1], [0, 0, 1, 1], [], []>} : vector<64x12xf32>, vector<12x4xf32>, vector<64x4xf32> -> vector<64x4xf32>
    %240 = arith.addf %234, %239 : vector<64x4xf32>
    %c2_272 = arith.constant 2 : index
    %c2_273 = arith.constant 2 : index
    %c8_274 = arith.constant 8 : index
    %241 = vector.load %arg15[%c2_272, %c2_273, %c8_274] : memref<10x10x24xf32, #tpu.memory_space<vmem>>, vector<8x8x12xf32>
    %242 = vector.shape_cast %241 : vector<8x8x12xf32> to vector<64x12xf32>
    %c2_275 = arith.constant 2 : index
    %c2_276 = arith.constant 2 : index
    %c0_277 = arith.constant 0 : index
    %c0_278 = arith.constant 0 : index
    %243 = vector.load %arg8[%c2_275, %c2_276, %c0_277, %c0_278] : memref<3x3x12x4xf32, #tpu.memory_space<vmem>>, vector<1x1x12x4xf32>
    %244 = vector.shape_cast %243 : vector<1x1x12x4xf32> to vector<12x4xf32>
    %cst_279 = arith.constant dense<0.000000e+00> : vector<64x4xf32>
    %245 = tpu.matmul %242, %244, %cst_279 {dimension_numbers = #tpu.dot_dimension_numbers<[1], [0], [0], [1], [0, 0, 1, 1], [], []>} : vector<64x12xf32>, vector<12x4xf32>, vector<64x4xf32> -> vector<64x4xf32>
    %246 = arith.addf %240, %245 : vector<64x4xf32>
    %247 = vector.broadcast %45 : vector<1x4xf32> to vector<64x4xf32>
    %248 = arith.mulf %246, %247 : vector<64x4xf32>
    %249 = vector.broadcast %46 : vector<1x4xf32> to vector<64x4xf32>
    %250 = arith.addf %248, %249 : vector<64x4xf32>
    %cst_280 = arith.constant 0.000000e+00 : f32
    %251 = vector.broadcast %cst_280 : f32 to vector<64x4xf32>
    %252 = arith.maximumf %250, %251 : vector<64x4xf32>
    %cst_281 = arith.constant dense<0.000000e+00> : vector<64x16xf32>
    %253 = tpu.matmul %252, %47, %cst_281 {dimension_numbers = #tpu.dot_dimension_numbers<[1], [0], [0], [1], [0, 0, 1, 1], [], []>} : vector<64x4xf32>, vector<4x16xf32>, vector<64x16xf32> -> vector<64x16xf32>
    %254 = vector.broadcast %48 : vector<1x16xf32> to vector<64x16xf32>
    %255 = arith.mulf %253, %254 : vector<64x16xf32>
    %256 = vector.broadcast %49 : vector<1x16xf32> to vector<64x16xf32>
    %257 = arith.addf %255, %256 : vector<64x16xf32>
    %258 = vector.extract_strided_slice %11 {offsets = [0, 2, 0, 0, 0], sizes = [1, 1, 8, 8, 16], strides = [1, 1, 1, 1, 1]} : vector<1x4x8x8x16xf32> to vector<1x1x8x8x16xf32>
    %259 = vector.shape_cast %258 : vector<1x1x8x8x16xf32> to vector<8x8x16xf32>
    %260 = vector.shape_cast %259 : vector<8x8x16xf32> to vector<64x16xf32>
    %261 = arith.addf %257, %260 : vector<64x16xf32>
    %cst_282 = arith.constant 0.000000e+00 : f32
    %262 = vector.broadcast %cst_282 : f32 to vector<64x16xf32>
    %263 = arith.maximumf %261, %262 : vector<64x16xf32>
    %264 = vector.shape_cast %263 : vector<64x16xf32> to vector<1x1x8x8x16xf32>
    %c0_283 = arith.constant 0 : index
    %c2_284 = arith.constant 2 : index
    %c0_285 = arith.constant 0 : index
    %c0_286 = arith.constant 0 : index
    %c0_287 = arith.constant 0 : index
    %265 = vector.load %arg14[%c0_283, %c2_284, %c0_285, %c0_286, %c0_287] : memref<1x4x8x8x16xf32, #tpu.memory_space<vmem>>, vector<1x1x8x8x16xf32>
    tpu.vector_store %arg14[%c0_283, %c2_284, %c0_285, %c0_286, %c0_287], %264 {strides = array<i32>} : memref<1x4x8x8x16xf32, #tpu.memory_space<vmem>>, vector<1x1x8x8x16xf32>,
    %c0_288 = arith.constant 0 : index
    %c0_289 = arith.constant 0 : index
    %c12_290 = arith.constant 12 : index
    %266 = vector.load %arg15[%c0_288, %c0_289, %c12_290] : memref<10x10x24xf32, #tpu.memory_space<vmem>>, vector<8x8x12xf32>
    %267 = vector.shape_cast %266 : vector<8x8x12xf32> to vector<64x12xf32>
    %c0_291 = arith.constant 0 : index
    %c0_292 = arith.constant 0 : index
    %c0_293 = arith.constant 0 : index
    %c0_294 = arith.constant 0 : index
    %268 = vector.load %arg8[%c0_291, %c0_292, %c0_293, %c0_294] : memref<3x3x12x4xf32, #tpu.memory_space<vmem>>, vector<1x1x12x4xf32>
    %269 = vector.shape_cast %268 : vector<1x1x12x4xf32> to vector<12x4xf32>
    %cst_295 = arith.constant dense<0.000000e+00> : vector<64x4xf32>
    %270 = tpu.matmul %267, %269, %cst_295 {dimension_numbers = #tpu.dot_dimension_numbers<[1], [0], [0], [1], [0, 0, 1, 1], [], []>} : vector<64x12xf32>, vector<12x4xf32>, vector<64x4xf32> -> vector<64x4xf32>
    %c0_296 = arith.constant 0 : index
    %c1_297 = arith.constant 1 : index
    %c12_298 = arith.constant 12 : index
    %271 = vector.load %arg15[%c0_296, %c1_297, %c12_298] : memref<10x10x24xf32, #tpu.memory_space<vmem>>, vector<8x8x12xf32>
    %272 = vector.shape_cast %271 : vector<8x8x12xf32> to vector<64x12xf32>
    %c0_299 = arith.constant 0 : index
    %c1_300 = arith.constant 1 : index
    %c0_301 = arith.constant 0 : index
    %c0_302 = arith.constant 0 : index
    %273 = vector.load %arg8[%c0_299, %c1_300, %c0_301, %c0_302] : memref<3x3x12x4xf32, #tpu.memory_space<vmem>>, vector<1x1x12x4xf32>
    %274 = vector.shape_cast %273 : vector<1x1x12x4xf32> to vector<12x4xf32>
    %cst_303 = arith.constant dense<0.000000e+00> : vector<64x4xf32>
    %275 = tpu.matmul %272, %274, %cst_303 {dimension_numbers = #tpu.dot_dimension_numbers<[1], [0], [0], [1], [0, 0, 1, 1], [], []>} : vector<64x12xf32>, vector<12x4xf32>, vector<64x4xf32> -> vector<64x4xf32>
    %276 = arith.addf %270, %275 : vector<64x4xf32>
    %c0_304 = arith.constant 0 : index
    %c2_305 = arith.constant 2 : index
    %c12_306 = arith.constant 12 : index
    %277 = vector.load %arg15[%c0_304, %c2_305, %c12_306] : memref<10x10x24xf32, #tpu.memory_space<vmem>>, vector<8x8x12xf32>
    %278 = vector.shape_cast %277 : vector<8x8x12xf32> to vector<64x12xf32>
    %c0_307 = arith.constant 0 : index
    %c2_308 = arith.constant 2 : index
    %c0_309 = arith.constant 0 : index
    %c0_310 = arith.constant 0 : index
    %279 = vector.load %arg8[%c0_307, %c2_308, %c0_309, %c0_310] : memref<3x3x12x4xf32, #tpu.memory_space<vmem>>, vector<1x1x12x4xf32>
    %280 = vector.shape_cast %279 : vector<1x1x12x4xf32> to vector<12x4xf32>
    %cst_311 = arith.constant dense<0.000000e+00> : vector<64x4xf32>
    %281 = tpu.matmul %278, %280, %cst_311 {dimension_numbers = #tpu.dot_dimension_numbers<[1], [0], [0], [1], [0, 0, 1, 1], [], []>} : vector<64x12xf32>, vector<12x4xf32>, vector<64x4xf32> -> vector<64x4xf32>
    %282 = arith.addf %276, %281 : vector<64x4xf32>
    %c1_312 = arith.constant 1 : index
    %c0_313 = arith.constant 0 : index
    %c12_314 = arith.constant 12 : index
    %283 = vector.load %arg15[%c1_312, %c0_313, %c12_314] : memref<10x10x24xf32, #tpu.memory_space<vmem>>, vector<8x8x12xf32>
    %284 = vector.shape_cast %283 : vector<8x8x12xf32> to vector<64x12xf32>
    %c1_315 = arith.constant 1 : index
    %c0_316 = arith.constant 0 : index
    %c0_317 = arith.constant 0 : index
    %c0_318 = arith.constant 0 : index
    %285 = vector.load %arg8[%c1_315, %c0_316, %c0_317, %c0_318] : memref<3x3x12x4xf32, #tpu.memory_space<vmem>>, vector<1x1x12x4xf32>
    %286 = vector.shape_cast %285 : vector<1x1x12x4xf32> to vector<12x4xf32>
    %cst_319 = arith.constant dense<0.000000e+00> : vector<64x4xf32>
    %287 = tpu.matmul %284, %286, %cst_319 {dimension_numbers = #tpu.dot_dimension_numbers<[1], [0], [0], [1], [0, 0, 1, 1], [], []>} : vector<64x12xf32>, vector<12x4xf32>, vector<64x4xf32> -> vector<64x4xf32>
    %288 = arith.addf %282, %287 : vector<64x4xf32>
    %c1_320 = arith.constant 1 : index
    %c1_321 = arith.constant 1 : index
    %c12_322 = arith.constant 12 : index
    %289 = vector.load %arg15[%c1_320, %c1_321, %c12_322] : memref<10x10x24xf32, #tpu.memory_space<vmem>>, vector<8x8x12xf32>
    %290 = vector.shape_cast %289 : vector<8x8x12xf32> to vector<64x12xf32>
    %c1_323 = arith.constant 1 : index
    %c1_324 = arith.constant 1 : index
    %c0_325 = arith.constant 0 : index
    %c0_326 = arith.constant 0 : index
    %291 = vector.load %arg8[%c1_323, %c1_324, %c0_325, %c0_326] : memref<3x3x12x4xf32, #tpu.memory_space<vmem>>, vector<1x1x12x4xf32>
    %292 = vector.shape_cast %291 : vector<1x1x12x4xf32> to vector<12x4xf32>
    %cst_327 = arith.constant dense<0.000000e+00> : vector<64x4xf32>
    %293 = tpu.matmul %290, %292, %cst_327 {dimension_numbers = #tpu.dot_dimension_numbers<[1], [0], [0], [1], [0, 0, 1, 1], [], []>} : vector<64x12xf32>, vector<12x4xf32>, vector<64x4xf32> -> vector<64x4xf32>
    %294 = arith.addf %288, %293 : vector<64x4xf32>
    %c1_328 = arith.constant 1 : index
    %c2_329 = arith.constant 2 : index
    %c12_330 = arith.constant 12 : index
    %295 = vector.load %arg15[%c1_328, %c2_329, %c12_330] : memref<10x10x24xf32, #tpu.memory_space<vmem>>, vector<8x8x12xf32>
    %296 = vector.shape_cast %295 : vector<8x8x12xf32> to vector<64x12xf32>
    %c1_331 = arith.constant 1 : index
    %c2_332 = arith.constant 2 : index
    %c0_333 = arith.constant 0 : index
    %c0_334 = arith.constant 0 : index
    %297 = vector.load %arg8[%c1_331, %c2_332, %c0_333, %c0_334] : memref<3x3x12x4xf32, #tpu.memory_space<vmem>>, vector<1x1x12x4xf32>
    %298 = vector.shape_cast %297 : vector<1x1x12x4xf32> to vector<12x4xf32>
    %cst_335 = arith.constant dense<0.000000e+00> : vector<64x4xf32>
    %299 = tpu.matmul %296, %298, %cst_335 {dimension_numbers = #tpu.dot_dimension_numbers<[1], [0], [0], [1], [0, 0, 1, 1], [], []>} : vector<64x12xf32>, vector<12x4xf32>, vector<64x4xf32> -> vector<64x4xf32>
    %300 = arith.addf %294, %299 : vector<64x4xf32>
    %c2_336 = arith.constant 2 : index
    %c0_337 = arith.constant 0 : index
    %c12_338 = arith.constant 12 : index
    %301 = vector.load %arg15[%c2_336, %c0_337, %c12_338] : memref<10x10x24xf32, #tpu.memory_space<vmem>>, vector<8x8x12xf32>
    %302 = vector.shape_cast %301 : vector<8x8x12xf32> to vector<64x12xf32>
    %c2_339 = arith.constant 2 : index
    %c0_340 = arith.constant 0 : index
    %c0_341 = arith.constant 0 : index
    %c0_342 = arith.constant 0 : index
    %303 = vector.load %arg8[%c2_339, %c0_340, %c0_341, %c0_342] : memref<3x3x12x4xf32, #tpu.memory_space<vmem>>, vector<1x1x12x4xf32>
    %304 = vector.shape_cast %303 : vector<1x1x12x4xf32> to vector<12x4xf32>
    %cst_343 = arith.constant dense<0.000000e+00> : vector<64x4xf32>
    %305 = tpu.matmul %302, %304, %cst_343 {dimension_numbers = #tpu.dot_dimension_numbers<[1], [0], [0], [1], [0, 0, 1, 1], [], []>} : vector<64x12xf32>, vector<12x4xf32>, vector<64x4xf32> -> vector<64x4xf32>
    %306 = arith.addf %300, %305 : vector<64x4xf32>
    %c2_344 = arith.constant 2 : index
    %c1_345 = arith.constant 1 : index
    %c12_346 = arith.constant 12 : index
    %307 = vector.load %arg15[%c2_344, %c1_345, %c12_346] : memref<10x10x24xf32, #tpu.memory_space<vmem>>, vector<8x8x12xf32>
    %308 = vector.shape_cast %307 : vector<8x8x12xf32> to vector<64x12xf32>
    %c2_347 = arith.constant 2 : index
    %c1_348 = arith.constant 1 : index
    %c0_349 = arith.constant 0 : index
    %c0_350 = arith.constant 0 : index
    %309 = vector.load %arg8[%c2_347, %c1_348, %c0_349, %c0_350] : memref<3x3x12x4xf32, #tpu.memory_space<vmem>>, vector<1x1x12x4xf32>
    %310 = vector.shape_cast %309 : vector<1x1x12x4xf32> to vector<12x4xf32>
    %cst_351 = arith.constant dense<0.000000e+00> : vector<64x4xf32>
    %311 = tpu.matmul %308, %310, %cst_351 {dimension_numbers = #tpu.dot_dimension_numbers<[1], [0], [0], [1], [0, 0, 1, 1], [], []>} : vector<64x12xf32>, vector<12x4xf32>, vector<64x4xf32> -> vector<64x4xf32>
    %312 = arith.addf %306, %311 : vector<64x4xf32>
    %c2_352 = arith.constant 2 : index
    %c2_353 = arith.constant 2 : index
    %c12_354 = arith.constant 12 : index
    %313 = vector.load %arg15[%c2_352, %c2_353, %c12_354] : memref<10x10x24xf32, #tpu.memory_space<vmem>>, vector<8x8x12xf32>
    %314 = vector.shape_cast %313 : vector<8x8x12xf32> to vector<64x12xf32>
    %c2_355 = arith.constant 2 : index
    %c2_356 = arith.constant 2 : index
    %c0_357 = arith.constant 0 : index
    %c0_358 = arith.constant 0 : index
    %315 = vector.load %arg8[%c2_355, %c2_356, %c0_357, %c0_358] : memref<3x3x12x4xf32, #tpu.memory_space<vmem>>, vector<1x1x12x4xf32>
    %316 = vector.shape_cast %315 : vector<1x1x12x4xf32> to vector<12x4xf32>
    %cst_359 = arith.constant dense<0.000000e+00> : vector<64x4xf32>
    %317 = tpu.matmul %314, %316, %cst_359 {dimension_numbers = #tpu.dot_dimension_numbers<[1], [0], [0], [1], [0, 0, 1, 1], [], []>} : vector<64x12xf32>, vector<12x4xf32>, vector<64x4xf32> -> vector<64x4xf32>
    %318 = arith.addf %312, %317 : vector<64x4xf32>
    %319 = vector.broadcast %45 : vector<1x4xf32> to vector<64x4xf32>
    %320 = arith.mulf %318, %319 : vector<64x4xf32>
    %321 = vector.broadcast %46 : vector<1x4xf32> to vector<64x4xf32>
    %322 = arith.addf %320, %321 : vector<64x4xf32>
    %cst_360 = arith.constant 0.000000e+00 : f32
    %323 = vector.broadcast %cst_360 : f32 to vector<64x4xf32>
    %324 = arith.maximumf %322, %323 : vector<64x4xf32>
    %cst_361 = arith.constant dense<0.000000e+00> : vector<64x16xf32>
    %325 = tpu.matmul %324, %47, %cst_361 {dimension_numbers = #tpu.dot_dimension_numbers<[1], [0], [0], [1], [0, 0, 1, 1], [], []>} : vector<64x4xf32>, vector<4x16xf32>, vector<64x16xf32> -> vector<64x16xf32>
    %326 = vector.broadcast %48 : vector<1x16xf32> to vector<64x16xf32>
    %327 = arith.mulf %325, %326 : vector<64x16xf32>
    %328 = vector.broadcast %49 : vector<1x16xf32> to vector<64x16xf32>
    %329 = arith.addf %327, %328 : vector<64x16xf32>
    %330 = vector.extract_strided_slice %11 {offsets = [0, 3, 0, 0, 0], sizes = [1, 1, 8, 8, 16], strides = [1, 1, 1, 1, 1]} : vector<1x4x8x8x16xf32> to vector<1x1x8x8x16xf32>
    %331 = vector.shape_cast %330 : vector<1x1x8x8x16xf32> to vector<8x8x16xf32>
    %332 = vector.shape_cast %331 : vector<8x8x16xf32> to vector<64x16xf32>
    %333 = arith.addf %329, %332 : vector<64x16xf32>
    %cst_362 = arith.constant 0.000000e+00 : f32
    %334 = vector.broadcast %cst_362 : f32 to vector<64x16xf32>
    %335 = arith.maximumf %333, %334 : vector<64x16xf32>
    %336 = vector.shape_cast %335 : vector<64x16xf32> to vector<1x1x8x8x16xf32>
    %c0_363 = arith.constant 0 : index
    %c3 = arith.constant 3 : index
    %c0_364 = arith.constant 0 : index
    %c0_365 = arith.constant 0 : index
    %c0_366 = arith.constant 0 : index
    %337 = vector.load %arg14[%c0_363, %c3, %c0_364, %c0_365, %c0_366] : memref<1x4x8x8x16xf32, #tpu.memory_space<vmem>>, vector<1x1x8x8x16xf32>
    tpu.vector_store %arg14[%c0_363, %c3, %c0_364, %c0_365, %c0_366], %336 {strides = array<i32>} : memref<1x4x8x8x16xf32, #tpu.memory_space<vmem>>, vector<1x1x8x8x16xf32>,
    return
  }
  func.func @transform_0(%arg0: i32, %arg1: i32) -> (i32, i32, i32, i32, i32) {
    %c0_i32 = arith.constant 0 : i32
    %c0_i32_0 = arith.constant 0 : i32
    %c0_i32_1 = arith.constant 0 : i32
    %c0_i32_2 = arith.constant 0 : i32
    return %arg0, %arg1, %c0_i32, %c0_i32_0, %c0_i32_1 : i32, i32, i32, i32, i32
  }
  func.func @transform_1(%arg0: i32, %arg1: i32) -> (i32, i32, i32, i32, i32) {
    %c4_i32 = arith.constant 4 : i32
    %0 = arith.muli %arg1, %c4_i32 : i32
    %c1_i32 = arith.constant 1 : i32
    %1 = arith.subi %0, %c1_i32 : i32
    %c0_i32 = arith.constant 0 : i32
    %2 = arith.maxsi %1, %c0_i32 : i32
    %c0_i32_0 = arith.constant 0 : i32
    %c0_i32_1 = arith.constant 0 : i32
    %c0_i32_2 = arith.constant 0 : i32
    %c0_i32_3 = arith.constant 0 : i32
    return %arg0, %2, %c0_i32_0, %c0_i32_1, %c0_i32_2 : i32, i32, i32, i32, i32
  }
  func.func @transform_2(%arg0: i32, %arg1: i32) -> (i32, i32, i32, i32, i32) {
    %c1_i32 = arith.constant 1 : i32
    %0 = arith.addi %arg1, %c1_i32 : i32
    %c4_i32 = arith.constant 4 : i32
    %1 = arith.muli %0, %c4_i32 : i32
    %c7_i32 = arith.constant 7 : i32
    %2 = arith.minsi %1, %c7_i32 : i32
    %c0_i32 = arith.constant 0 : i32
    %c0_i32_0 = arith.constant 0 : i32
    %c0_i32_1 = arith.constant 0 : i32
    %c0_i32_2 = arith.constant 0 : i32
    return %arg0, %2, %c0_i32, %c0_i32_0, %c0_i32_1 : i32, i32, i32, i32, i32
  }
  func.func @transform_3(%arg0: i32, %arg1: i32) -> (i32, i32) {
    %c0_i32 = arith.constant 0 : i32
    %c0_i32_0 = arith.constant 0 : i32
    %c0_i32_1 = arith.constant 0 : i32
    return %c0_i32, %c0_i32_0 : i32, i32
  }
  func.func @transform_4(%arg0: i32, %arg1: i32) -> (i32, i32) {
    %c0_i32 = arith.constant 0 : i32
    %c0_i32_0 = arith.constant 0 : i32
    %c0_i32_1 = arith.constant 0 : i32
    return %c0_i32, %c0_i32_0 : i32, i32
  }
  func.func @transform_5(%arg0: i32, %arg1: i32) -> (i32, i32) {
    %c0_i32 = arith.constant 0 : i32
    %c0_i32_0 = arith.constant 0 : i32
    %c0_i32_1 = arith.constant 0 : i32
    return %c0_i32, %c0_i32_0 : i32, i32
  }
  func.func @transform_6(%arg0: i32, %arg1: i32) -> (i32, i32, i32, i32) {
    %c0_i32 = arith.constant 0 : i32
    %c0_i32_0 = arith.constant 0 : i32
    %c0_i32_1 = arith.constant 0 : i32
    %c0_i32_2 = arith.constant 0 : i32
    %c0_i32_3 = arith.constant 0 : i32
    return %c0_i32, %c0_i32_0, %c0_i32_1, %c0_i32_2 : i32, i32, i32, i32
  }
  func.func @transform_7(%arg0: i32, %arg1: i32) -> (i32, i32) {
    %c0_i32 = arith.constant 0 : i32
    %c0_i32_0 = arith.constant 0 : i32
    %c0_i32_1 = arith.constant 0 : i32
    return %c0_i32, %c0_i32_0 : i32, i32
  }
  func.func @transform_8(%arg0: i32, %arg1: i32) -> (i32, i32) {
    %c0_i32 = arith.constant 0 : i32
    %c0_i32_0 = arith.constant 0 : i32
    %c0_i32_1 = arith.constant 0 : i32
    return %c0_i32, %c0_i32_0 : i32, i32
  }
  func.func @transform_9(%arg0: i32, %arg1: i32) -> (i32, i32) {
    %c0_i32 = arith.constant 0 : i32
    %c0_i32_0 = arith.constant 0 : i32
    %c0_i32_1 = arith.constant 0 : i32
    return %c0_i32, %c0_i32_0 : i32, i32
  }
  func.func @transform_10(%arg0: i32, %arg1: i32) -> (i32, i32) {
    %c0_i32 = arith.constant 0 : i32
    %c0_i32_0 = arith.constant 0 : i32
    %c0_i32_1 = arith.constant 0 : i32
    return %c0_i32, %c0_i32_0 : i32, i32
  }
  func.func @transform_11(%arg0: i32, %arg1: i32) -> (i32, i32) {
    %c0_i32 = arith.constant 0 : i32
    %c0_i32_0 = arith.constant 0 : i32
    %c0_i32_1 = arith.constant 0 : i32
    return %c0_i32, %c0_i32_0 : i32, i32
  }
  func.func @transform_12(%arg0: i32, %arg1: i32) -> (i32, i32, i32, i32, i32) {
    %c0_i32 = arith.constant 0 : i32
    %c0_i32_0 = arith.constant 0 : i32
    %c0_i32_1 = arith.constant 0 : i32
    %c0_i32_2 = arith.constant 0 : i32
    return %arg0, %arg1, %c0_i32, %c0_i32_0, %c0_i32_1 : i32, i32, i32, i32, i32
  }
}

</mosaic_0001>

<llo_original>
// kernel: tpu_custom_call.1
$region0: #{tpu_custom_call.1}
  #allocation0 [shape = 'u32[]', space=smem, size = 0x4, offset = 0x4, fixed_abs, tag = 'smem constant byte address 0x4 - core index']
  #allocation1 [shape = 'u32[144,128]{1,0:T(1,128)}', space=vmem, size = 0x12000, scoped, tag = 'internal scratch']
  #allocation2 [shape = 'f32[10,10,24]{2,1,0:T(8,128)}', space=vmem, size = 0x14000, scoped, tag = 'scratch operand']
  %s0 = inlined_call_operand.hbm [shape: f32[2,8,8,8,16], index: 0, kind: input, shape index: {}]
  %s1 = inlined_call_operand.hbm [shape: f32[2,8,8,8,16], index: 1, kind: input, shape index: {}]
  %s2 = inlined_call_operand.hbm [shape: f32[2,8,8,8,16], index: 2, kind: input, shape index: {}]
  %s3 = inlined_call_operand.vmem [shape: f32[16,4], index: 3, kind: input, shape index: {}]
  %s4 = inlined_call_operand.vmem [shape: f32[1,4], index: 4, kind: input, shape index: {}]
  %s5 = inlined_call_operand.vmem [shape: f32[1,4], index: 5, kind: input, shape index: {}]
  %s6 = inlined_call_operand.vmem [shape: f32[3,3,12,4], index: 6, kind: input, shape index: {}]
  %s7 = inlined_call_operand.vmem [shape: f32[1,4], index: 7, kind: input, shape index: {}]
  %s8 = inlined_call_operand.vmem [shape: f32[1,4], index: 8, kind: input, shape index: {}]
  %s9 = inlined_call_operand.vmem [shape: f32[4,16], index: 9, kind: input, shape index: {}]
  %s10 = inlined_call_operand.vmem [shape: f32[1,16], index: 10, kind: input, shape index: {}]
  %s11 = inlined_call_operand.vmem [shape: f32[1,16], index: 11, kind: input, shape index: {}]
  %s12 = inlined_call_operand.hbm [shape: f32[2,8,8,8,16], index: 12, kind: output, shape index: {}]
  %s13 = sld [smem:[#allocation0]]
  $region109: #{tpu_custom_call.1} parent=0
    _
  %s15 = ssub.s32 1, %s13
  %s16 = scalar_select 0, %s15, %s13
  $region1: #{tpu_custom_call.1} parent=0
    #allocation3 [shape = 'u8[262144]{0}', space=vmem, size = 0x40000, scoped, tag = 'input window, operand 0']
    #allocation4 [shape = 's32[2]{0}', space=sflag, size = 0x8, scoped, tag = 'scoped memory for tpu_custom_call.1']
    #allocation5 [shape = 's32[2]{0}', space=sflag, size = 0x8, scoped, tag = 'scoped memory for tpu_custom_call.1']
    #allocation6 [shape = 'u8[65536]{0}', space=vmem, size = 0x10000, scoped, tag = 'input window, operand 1']
    #allocation7 [shape = 's32[2]{0}', space=sflag, size = 0x8, scoped, tag = 'scoped memory for tpu_custom_call.1']
    #allocation8 [shape = 'u8[65536]{0}', space=vmem, size = 0x10000, scoped, tag = 'input window, operand 2']
    #allocation9 [shape = 'u8[262144]{0}', space=vmem, size = 0x40000, scoped, tag = 'output window, operand 0']
    %17 = vsyncpa [#allocation4], 0
    %s18 = scalar_lea.sflag [#allocation4], 1
    %19 = vsyncpa %s18, 0
    %20 = vsyncpa [#allocation7], 0
    %s21 = scalar_lea.sflag [#allocation7], 1
    %22 = vsyncpa %s21, 0
    %23 = vsyncpa [#allocation5], 0
    %s24 = scalar_lea.sflag [#allocation5], 1
    %25 = vsyncpa %s24, 0
    loop: start=0, step=1, limit=6
    $region2: #{tpu_custom_call.1} parent=1 // loop_pre_header
      _
    $region3: #{tpu_custom_call.1} parent=1 // loop_header
      %s27 = sphi 0, %s31
      %p28 = scmp.ge.s32.totalorder %s27, 6
      %s34 = sphi 0, %s46
      %s35 = sphi 0, %s42
      %s36 = sphi 0, %s34
      %s37 = sphi 0, %s35
      %s38 = sphi 0, %s36
      %s39 = sphi 0, %s37
      %s51 = sphi 0, %s53
      %s54 = sphi 0, %s51
      %s55 = sphi 0, %s54
      %s71 = sphi 0, %s55
      %s87 = sphi 0, %s89
      %s90 = sphi 0, %s87
      %s91 = sphi 0, %s90
      %s107 = sphi 0, %s91
      %s123 = sphi 0, %s125
      %s126 = sphi 0, %s123
      %s127 = sphi 0, %s126
      %s143 = sphi 0, %s127
      %s147 = sphi 0, %s147
      %s149 = sphi 0, %s147
      %s150 = sphi 0, %s149
      %s164 = sphi 0, %s150
      %s168 = sphi 0, %s168
      %s170 = sphi 0, %s168
      %s171 = sphi 0, %s170
      %s185 = sphi 0, %s171
      %s189 = sphi 0, %s189
      %s191 = sphi 0, %s189
      %s192 = sphi 0, %s191
      %s206 = sphi 0, %s192
      %s210 = sphi 0, %s210
      %s212 = sphi 0, %s210
      %s213 = sphi 0, %s212
      %s227 = sphi 0, %s213
      %s231 = sphi 0, %s231
      %s233 = sphi 0, %s231
      %s234 = sphi 0, %s233
      %s248 = sphi 0, %s234
      %s252 = sphi 0, %s252
      %s254 = sphi 0, %s252
      %s255 = sphi 0, %s254
      %s269 = sphi 0, %s255
      %s273 = sphi 0, %s273
      %s275 = sphi 0, %s273
      %s276 = sphi 0, %s275
      %s290 = sphi 0, %s276
      %s294 = sphi 0, %s294
      %s296 = sphi 0, %s294
      %s297 = sphi 0, %s296
      %s311 = sphi 0, %s297
      %s315 = sphi 0, %s315
      %s317 = sphi 0, %s315
      %s318 = sphi 0, %s317
      %s332 = sphi 0, %s318
      %s340 = sphi 0, %s342
      %s343 = sphi 0, %s340
      %s344 = sphi 0, %s343
      %s360 = sphi 0, %s344
    $region4: #{tpu_custom_call.1} parent=1 // loop_header_branch
      %30 = sbr.rel (%p28) target = $region8
    $region5: #{tpu_custom_call.1} parent=1 // loop_body
      %s32 = ssub.s32 %s27, 1
      %s33 = ssub.s32 %s27, 2
      %s40 = sadd.s32 1, %s35
      %p41 = scmp.ge.s32.totalorder %s40, 2
      %s42 = scalar_select %p41, 0, %s40
      %s43 = sadd.s32 1, %s34
      %s44 = scalar_select %p41, %s43, %s34
      %p45 = scmp.ge.s32.totalorder %s44, 2
      %s46 = scalar_select %p45, 0, %s44
      %s47 = ssub.s32 %s34, %s46
      %s48 = ssub.s32 %s35, %s42
      %s49 = sor.u32 %s47, %s48
      %p50 = scmp.eq.s32.totalorder %s49, 0
      %s52 = sadd.s32 %s51, 1
      %s53 = scalar_select %p50, %s51, %s52
      %p56 = pneg %p50
      %p57 = scmp.eq.s32.totalorder %s27, 3
      %p58 = por %p56, %p57
      %p59 = scmp.ne.s32.totalorder %s51, %s54
      %p60 = scmp.eq.s32.totalorder %s27, 0
      %p61 = por %p59, %p60
      %p62 = scmp.ne.s32.totalorder %s51, %s54
      %p63 = scmp.eq.s32.totalorder %s32, 3
      %p64 = por %p62, %p63
      %p65 = scmp.ne.s32.totalorder %s54, %s55
      %p66 = scmp.eq.s32.totalorder %s32, 0
      %p67 = por %p65, %p66
      %p68 = scmp.ne.s32.totalorder %s54, %s55
      %p69 = scmp.eq.s32.totalorder %s33, 3
      %p70 = por %p68, %p69
      %p72 = scmp.ne.s32.totalorder %s55, %s71
      %p73 = scmp.eq.s32.totalorder %s33, 0
      %p74 = por %p72, %p73
      %s75 = smul.u32 %s35, 4
      %s76 = ssub.s32 %s75, 1
      %p77 = scmp.gt.s32.totalorder %s76, 0
      %s78 = scalar_select %p77, %s76, 0
      %s79 = smul.u32 %s42, 4
      %s80 = ssub.s32 %s79, 1
      %p81 = scmp.gt.s32.totalorder %s80, 0
      %s82 = scalar_select %p81, %s80, 0
      %s83 = ssub.s32 %s34, %s46
      %s84 = ssub.s32 %s78, %s82
      %s85 = sor.u32 %s83, %s84
      %p86 = scmp.eq.s32.totalorder %s85, 0
      %s88 = sadd.s32 %s87, 1
      %s89 = scalar_select %p86, %s87, %s88
      %p92 = pneg %p86
      %p93 = scmp.eq.s32.totalorder %s27, 3
      %p94 = por %p92, %p93
      %p95 = scmp.ne.s32.totalorder %s87, %s90
      %p96 = scmp.eq.s32.totalorder %s27, 0
      %p97 = por %p95, %p96
      %p98 = scmp.ne.s32.totalorder %s87, %s90
      %p99 = scmp.eq.s32.totalorder %s32, 3
      %p100 = por %p98, %p99
      %p101 = scmp.ne.s32.totalorder %s90, %s91
      %p102 = scmp.eq.s32.totalorder %s32, 0
      %p103 = por %p101, %p102
      %p104 = scmp.ne.s32.totalorder %s90, %s91
      %p105 = scmp.eq.s32.totalorder %s33, 3
      %p106 = por %p104, %p105
      %p108 = scmp.ne.s32.totalorder %s91, %s107
      %p109 = scmp.eq.s32.totalorder %s33, 0
      %p110 = por %p108, %p109
      %s111 = sadd.s32 %s35, 1
      %s112 = smul.u32 %s111, 4
      %p113 = scmp.lt.s32.totalorder %s112, 7
      %s114 = scalar_select %p113, %s112, 7
      %s115 = sadd.s32 %s42, 1
      %s116 = smul.u32 %s115, 4
      %p117 = scmp.lt.s32.totalorder %s116, 7
      %s118 = scalar_select %p117, %s116, 7
      %s119 = ssub.s32 %s34, %s46
      %s120 = ssub.s32 %s114, %s118
      %s121 = sor.u32 %s119, %s120
      %p122 = scmp.eq.s32.totalorder %s121, 0
      %s124 = sadd.s32 %s123, 1
      %s125 = scalar_select %p122, %s123, %s124
      %p128 = pneg %p122
      %p129 = scmp.eq.s32.totalorder %s27, 3
      %p130 = por %p128, %p129
      %p131 = scmp.ne.s32.totalorder %s123, %s126
      %p132 = scmp.eq.s32.totalorder %s27, 0
      %p133 = por %p131, %p132
      %p134 = scmp.ne.s32.totalorder %s123, %s126
      %p135 = scmp.eq.s32.totalorder %s32, 3
      %p136 = por %p134, %p135
      %p137 = scmp.ne.s32.totalorder %s126, %s127
      %p138 = scmp.eq.s32.totalorder %s32, 0
      %p139 = por %p137, %p138
      %p140 = scmp.ne.s32.totalorder %s126, %s127
      %p141 = scmp.eq.s32.totalorder %s33, 3
      %p142 = por %p140, %p141
      %p144 = scmp.ne.s32.totalorder %s127, %s143
      %p145 = scmp.eq.s32.totalorder %s33, 0
      %p146 = por %p144, %p145
      %s148 = sadd.s32 %s147, 1
      %p151 = scmp.eq.s32.totalorder %s27, 3
      %p152 = scmp.ne.s32.totalorder %s147, %s149
      %p153 = scmp.eq.s32.totalorder %s27, 0
      %p154 = por %p152, %p153
      %p155 = scmp.ne.s32.totalorder %s147, %s149
      %p156 = scmp.eq.s32.totalorder %s32, 3
      %p157 = por %p155, %p156
      %p158 = scmp.ne.s32.totalorder %s149, %s150
      %p159 = scmp.eq.s32.totalorder %s32, 0
      %p160 = por %p158, %p159
      %p161 = scmp.ne.s32.totalorder %s149, %s150
      %p162 = scmp.eq.s32.totalorder %s33, 3
      %p163 = por %p161, %p162
      %p165 = scmp.ne.s32.totalorder %s150, %s164
      %p166 = scmp.eq.s32.totalorder %s33, 0
      %p167 = por %p165, %p166
      %s169 = sadd.s32 %s168, 1
      %p172 = scmp.eq.s32.totalorder %s27, 3
      %p173 = scmp.ne.s32.totalorder %s168, %s170
      %p174 = scmp.eq.s32.totalorder %s27, 0
      %p175 = por %p173, %p174
      %p176 = scmp.ne.s32.totalorder %s168, %s170
      %p177 = scmp.eq.s32.totalorder %s32, 3
      %p178 = por %p176, %p177
      %p179 = scmp.ne.s32.totalorder %s170, %s171
      %p180 = scmp.eq.s32.totalorder %s32, 0
      %p181 = por %p179, %p180
      %p182 = scmp.ne.s32.totalorder %s170, %s171
      %p183 = scmp.eq.s32.totalorder %s33, 3
      %p184 = por %p182, %p183
      %p186 = scmp.ne.s32.totalorder %s171, %s185
      %p187 = scmp.eq.s32.totalorder %s33, 0
      %p188 = por %p186, %p187
      %s190 = sadd.s32 %s189, 1
      %p193 = scmp.eq.s32.totalorder %s27, 3
      %p194 = scmp.ne.s32.totalorder %s189, %s191
      %p195 = scmp.eq.s32.totalorder %s27, 0
      %p196 = por %p194, %p195
      %p197 = scmp.ne.s32.totalorder %s189, %s191
      %p198 = scmp.eq.s32.totalorder %s32, 3
      %p199 = por %p197, %p198
      %p200 = scmp.ne.s32.totalorder %s191, %s192
      %p201 = scmp.eq.s32.totalorder %s32, 0
      %p202 = por %p200, %p201
      %p203 = scmp.ne.s32.totalorder %s191, %s192
      %p204 = scmp.eq.s32.totalorder %s33, 3
      %p205 = por %p203, %p204
      %p207 = scmp.ne.s32.totalorder %s192, %s206
      %p208 = scmp.eq.s32.totalorder %s33, 0
      %p209 = por %p207, %p208
      %s211 = sadd.s32 %s210, 1
      %p214 = scmp.eq.s32.totalorder %s27, 3
      %p215 = scmp.ne.s32.totalorder %s210, %s212
      %p216 = scmp.eq.s32.totalorder %s27, 0
      %p217 = por %p215, %p216
      %p218 = scmp.ne.s32.totalorder %s210, %s212
      %p219 = scmp.eq.s32.totalorder %s32, 3
      %p220 = por %p218, %p219
      %p221 = scmp.ne.s32.totalorder %s212, %s213
      %p222 = scmp.eq.s32.totalorder %s32, 0
      %p223 = por %p221, %p222
      %p224 = scmp.ne.s32.totalorder %s212, %s213
      %p225 = scmp.eq.s32.totalorder %s33, 3
      %p226 = por %p224, %p225
      %p228 = scmp.ne.s32.totalorder %s213, %s227
      %p229 = scmp.eq.s32.totalorder %s33, 0
      %p230 = por %p228, %p229
      %s232 = sadd.s32 %s231, 1
      %p235 = scmp.eq.s32.totalorder %s27, 3
      %p236 = scmp.ne.s32.totalorder %s231, %s233
      %p237 = scmp.eq.s32.totalorder %s27, 0
      %p238 = por %p236, %p237
      %p239 = scmp.ne.s32.totalorder %s231, %s233
      %p240 = scmp.eq.s32.totalorder %s32, 3
      %p241 = por %p239, %p240
      %p242 = scmp.ne.s32.totalorder %s233, %s234
      %p243 = scmp.eq.s32.totalorder %s32, 0
      %p244 = por %p242, %p243
      %p245 = scmp.ne.s32.totalorder %s233, %s234
      %p246 = scmp.eq.s32.totalorder %s33, 3
      %p247 = por %p245, %p246
      %p249 = scmp.ne.s32.totalorder %s234, %s248
      %p250 = scmp.eq.s32.totalorder %s33, 0
      %p251 = por %p249, %p250
      %s253 = sadd.s32 %s252, 1
      %p256 = scmp.eq.s32.totalorder %s27, 3
      %p257 = scmp.ne.s32.totalorder %s252, %s254
      %p258 = scmp.eq.s32.totalorder %s27, 0
      %p259 = por %p257, %p258
      %p260 = scmp.ne.s32.totalorder %s252, %s254
      %p261 = scmp.eq.s32.totalorder %s32, 3
      %p262 = por %p260, %p261
      %p263 = scmp.ne.s32.totalorder %s254, %s255
      %p264 = scmp.eq.s32.totalorder %s32, 0
      %p265 = por %p263, %p264
      %p266 = scmp.ne.s32.totalorder %s254, %s255
      %p267 = scmp.eq.s32.totalorder %s33, 3
      %p268 = por %p266, %p267
      %p270 = scmp.ne.s32.totalorder %s255, %s269
      %p271 = scmp.eq.s32.totalorder %s33, 0
      %p272 = por %p270, %p271
      %s274 = sadd.s32 %s273, 1
      %p277 = scmp.eq.s32.totalorder %s27, 3
      %p278 = scmp.ne.s32.totalorder %s273, %s275
      %p279 = scmp.eq.s32.totalorder %s27, 0
      %p280 = por %p278, %p279
      %p281 = scmp.ne.s32.totalorder %s273, %s275
      %p282 = scmp.eq.s32.totalorder %s32, 3
      %p283 = por %p281, %p282
      %p284 = scmp.ne.s32.totalorder %s275, %s276
      %p285 = scmp.eq.s32.totalorder %s32, 0
      %p286 = por %p284, %p285
      %p287 = scmp.ne.s32.totalorder %s275, %s276
      %p288 = scmp.eq.s32.totalorder %s33, 3
      %p289 = por %p287, %p288
      %p291 = scmp.ne.s32.totalorder %s276, %s290
      %p292 = scmp.eq.s32.totalorder %s33, 0
      %p293 = por %p291, %p292
      %s295 = sadd.s32 %s294, 1
      %p298 = scmp.eq.s32.totalorder %s27, 3
      %p299 = scmp.ne.s32.totalorder %s294, %s296
      %p300 = scmp.eq.s32.totalorder %s27, 0
      %p301 = por %p299, %p300
      %p302 = scmp.ne.s32.totalorder %s294, %s296
      %p303 = scmp.eq.s32.totalorder %s32, 3
      %p304 = por %p302, %p303
      %p305 = scmp.ne.s32.totalorder %s296, %s297
      %p306 = scmp.eq.s32.totalorder %s32, 0
      %p307 = por %p305, %p306
      %p308 = scmp.ne.s32.totalorder %s296, %s297
      %p309 = scmp.eq.s32.totalorder %s33, 3
      %p310 = por %p308, %p309
      %p312 = scmp.ne.s32.totalorder %s297, %s311
      %p313 = scmp.eq.s32.totalorder %s33, 0
      %p314 = por %p312, %p313
      %s316 = sadd.s32 %s315, 1
      %p319 = scmp.eq.s32.totalorder %s27, 3
      %p320 = scmp.ne.s32.totalorder %s315, %s317
      %p321 = scmp.eq.s32.totalorder %s27, 0
      %p322 = por %p320, %p321
      %p323 = scmp.ne.s32.totalorder %s315, %s317
      %p324 = scmp.eq.s32.totalorder %s32, 3
      %p325 = por %p323, %p324
      %p326 = scmp.ne.s32.totalorder %s317, %s318
      %p327 = scmp.eq.s32.totalorder %s32, 0
      %p328 = por %p326, %p327
      %p329 = scmp.ne.s32.totalorder %s317, %s318
      %p330 = scmp.eq.s32.totalorder %s33, 3
      %p331 = por %p329, %p330
      %p333 = scmp.ne.s32.totalorder %s318, %s332
      %p334 = scmp.eq.s32.totalorder %s33, 0
      %p335 = por %p333, %p334
      %s336 = ssub.s32 %s34, %s46
      %s337 = ssub.s32 %s35, %s42
      %s338 = sor.u32 %s336, %s337
      %p339 = scmp.eq.s32.totalorder %s338, 0
      %s341 = sadd.s32 %s340, 1
      %s342 = scalar_select %p339, %s340, %s341
      %p345 = pneg %p339
      %p346 = scmp.eq.s32.totalorder %s27, 3
      %p347 = por %p345, %p346
      %p348 = scmp.ne.s32.totalorder %s340, %s343
      %p349 = scmp.eq.s32.totalorder %s27, 0
      %p350 = por %p348, %p349
      %p351 = scmp.ne.s32.totalorder %s340, %s343
      %p352 = scmp.eq.s32.totalorder %s32, 3
      %p353 = por %p351, %p352
      %p354 = scmp.ne.s32.totalorder %s343, %s344
      %p355 = scmp.eq.s32.totalorder %s32, 0
      %p356 = por %p354, %p355
      %p357 = scmp.ne.s32.totalorder %s343, %s344
      %p358 = scmp.eq.s32.totalorder %s33, 3
      %p359 = por %p357, %p358
      %p361 = scmp.ne.s32.totalorder %s344, %s360
      %p362 = scmp.eq.s32.totalorder %s33, 0
      %p363 = por %p361, %p362
      %p364 = scmp.le.s32.totalorder 1, %s27
      %p365 = scmp.lt.s32.totalorder %s27, 5
      %p366 = pnand %p364, %p365
      %p367 = pneg %p366
      // Predicated region
      $region9: #{tpu_custom_call.1} parent=5 // pred_check
        _
      $region10: #{tpu_custom_call.1} parent=5 // pred_check_branch
        %369 = sbr.rel (%p366) target = $region12
      $region11: #{tpu_custom_call.1} parent=5 // pred_region
        %s370 = ssub.s32 %s27, 1
        // Predicated region
        $region13: #{tpu_custom_call.1} parent=11 // pred_check
          %p371 = pneg %p160
        $region14: #{tpu_custom_call.1} parent=11 // pred_check_branch
          %373 = sbr.rel (%p371) target = $region16
        $region15: #{tpu_custom_call.1} parent=11 // pred_region
          _
        $region16: #{tpu_custom_call.1} parent=11 // pred_fallthru
          _
        // Predicated region
        $region17: #{tpu_custom_call.1} parent=11 // pred_check
          %p374 = pneg %p181
        $region18: #{tpu_custom_call.1} parent=11 // pred_check_branch
          %376 = sbr.rel (%p374) target = $region20
        $region19: #{tpu_custom_call.1} parent=11 // pred_region
          _
        $region20: #{tpu_custom_call.1} parent=11 // pred_fallthru
          _
        // Predicated region
        $region21: #{tpu_custom_call.1} parent=11 // pred_check
          %p377 = pneg %p202
        $region22: #{tpu_custom_call.1} parent=11 // pred_check_branch
          %379 = sbr.rel (%p377) target = $region24
        $region23: #{tpu_custom_call.1} parent=11 // pred_region
          _
        $region24: #{tpu_custom_call.1} parent=11 // pred_fallthru
          _
        // Predicated region
        $region25: #{tpu_custom_call.1} parent=11 // pred_check
          %p380 = pneg %p223
        $region26: #{tpu_custom_call.1} parent=11 // pred_check_branch
          %382 = sbr.rel (%p380) target = $region28
        $region27: #{tpu_custom_call.1} parent=11 // pred_region
          _
        $region28: #{tpu_custom_call.1} parent=11 // pred_fallthru
          _
        // Predicated region
        $region29: #{tpu_custom_call.1} parent=11 // pred_check
          %p383 = pneg %p244
        $region30: #{tpu_custom_call.1} parent=11 // pred_check_branch
          %385 = sbr.rel (%p383) target = $region32
        $region31: #{tpu_custom_call.1} parent=11 // pred_region
          _
        $region32: #{tpu_custom_call.1} parent=11 // pred_fallthru
          _
        // Predicated region
        $region33: #{tpu_custom_call.1} parent=11 // pred_check
          %p386 = pneg %p265
        $region34: #{tpu_custom_call.1} parent=11 // pred_check_branch
          %388 = sbr.rel (%p386) target = $region36
        $region35: #{tpu_custom_call.1} parent=11 // pred_region
          _
        $region36: #{tpu_custom_call.1} parent=11 // pred_fallthru
          _
        // Predicated region
        $region37: #{tpu_custom_call.1} parent=11 // pred_check
          %p389 = pneg %p286
        $region38: #{tpu_custom_call.1} parent=11 // pred_check_branch
          %391 = sbr.rel (%p389) target = $region40
        $region39: #{tpu_custom_call.1} parent=11 // pred_region
          _
        $region40: #{tpu_custom_call.1} parent=11 // pred_fallthru
          _
        // Predicated region
        $region41: #{tpu_custom_call.1} parent=11 // pred_check
          %p392 = pneg %p307
        $region42: #{tpu_custom_call.1} parent=11 // pred_check_branch
          %394 = sbr.rel (%p392) target = $region44
        $region43: #{tpu_custom_call.1} parent=11 // pred_region
          _
        $region44: #{tpu_custom_call.1} parent=11 // pred_fallthru
          _
        // Predicated region
        $region45: #{tpu_custom_call.1} parent=11 // pred_check
          %p395 = pneg %p328
        $region46: #{tpu_custom_call.1} parent=11 // pred_check_branch
          %397 = sbr.rel (%p395) target = $region48
        $region47: #{tpu_custom_call.1} parent=11 // pred_region
          _
        $region48: #{tpu_custom_call.1} parent=11 // pred_fallthru
          _
      $region12: #{tpu_custom_call.1} parent=5 // pred_fallthru
        _
      %p398 = scmp.lt.s32.totalorder %s27, 4
      // Predicated region
      $region49: #{tpu_custom_call.1} parent=5 // pred_check
        %p399 = pneg %p398
      $region50: #{tpu_custom_call.1} parent=5 // pred_check_branch
        %401 = sbr.rel (%p399) target = $region52
      $region51: #{tpu_custom_call.1} parent=5 // pred_region
        // Predicated region
        $region53: #{tpu_custom_call.1} parent=51 // pred_check
          %p402 = pneg %p61
        $region54: #{tpu_custom_call.1} parent=51 // pred_check_branch
          %404 = sbr.rel (%p402) target = $region56
        $region55: #{tpu_custom_call.1} parent=51 // pred_region
          %s405 = sand.u32 %s51, 1
          %s406 = scalar_lea.sflag [#allocation4], %s405
          %s407 = sand.u32 %s51, 1
          %s408 = smul.addr %s407, 256
          %s409 = scalar_lea.vmem [#allocation3], %s408
          %s410 = smul.u32 4, %s35
          %s412 = ssub.s32 4096, 4096
          %413 = vsyncadd %s406, %s412
          %s414 = smul.addr %s410, 8
          %s415 = smul.addr %s34, 64
          %s416 = sadd.s32 %s414, %s415
          %s417 = smul.addr %s416, 128
          %s418 = scalar_lea.hbm %s0, %s417
          %s419 = sshll.u32 %s409, 4
          %s420 = int_to_ptr.vmem [resolvable:$true] %s419
          %425 = dma.hbm_to_vmem [thread:$0]  %s418, 4096, %s420, %s406, 128, 128, 8
        $region56: #{tpu_custom_call.1} parent=51 // pred_fallthru
          _
        // Predicated region
        $region57: #{tpu_custom_call.1} parent=51 // pred_check
          %p426 = pneg %p97
        $region58: #{tpu_custom_call.1} parent=51 // pred_check_branch
          %428 = sbr.rel (%p426) target = $region60
        $region59: #{tpu_custom_call.1} parent=51 // pred_region
          %s429 = sand.u32 %s27, 1
          %s430 = scalar_lea.sflag [#allocation7], %s429
          %s431 = sand.u32 %s87, 1
          %s432 = smul.addr %s431, 64
          %s433 = scalar_lea.vmem [#allocation6], %s432
          %s434 = smul.u32 %s35, 4
          %s435 = ssub.s32 %s434, 1
          %p436 = scmp.gt.s32.totalorder %s435, 0
          %s437 = scalar_select %p436, %s435, 0
          %s439 = ssub.s32 1024, 1024
          %440 = vsyncadd %s430, %s439
          %s441 = smul.addr %s437, 8
          %s442 = smul.addr %s34, 64
          %s443 = sadd.s32 %s441, %s442
          %s444 = smul.addr %s443, 128
          %s445 = scalar_lea.hbm %s1, %s444
          %s446 = sshll.u32 %s433, 4
          %s447 = int_to_ptr.vmem [resolvable:$true] %s446
          %452 = dma.hbm_to_vmem [thread:$0]  %s445, 1024, %s447, %s430, 128, 128, 8
        $region60: #{tpu_custom_call.1} parent=51 // pred_fallthru
          _
        // Predicated region
        $region61: #{tpu_custom_call.1} parent=51 // pred_check
          %p453 = pneg %p133
        $region62: #{tpu_custom_call.1} parent=51 // pred_check_branch
          %455 = sbr.rel (%p453) target = $region64
        $region63: #{tpu_custom_call.1} parent=51 // pred_region
          %s456 = sand.u32 %s27, 1
          %s457 = scalar_lea.sflag [#allocation7], %s456
          %s458 = sand.u32 %s123, 1
          %s459 = smul.addr %s458, 64
          %s460 = scalar_lea.vmem [#allocation8], %s459
          %s461 = sadd.s32 %s35, 1
          %s462 = smul.u32 %s461, 4
          %p463 = scmp.lt.s32.totalorder %s462, 7
          %s464 = scalar_select %p463, %s462, 7
          %s466 = ssub.s32 1024, 1024
          %467 = vsyncadd %s457, %s466
          %s468 = smul.addr %s464, 8
          %s469 = smul.addr %s34, 64
          %s470 = sadd.s32 %s468, %s469
          %s471 = smul.addr %s470, 128
          %s472 = scalar_lea.hbm %s2, %s471
          %s473 = sshll.u32 %s460, 4
          %s474 = int_to_ptr.vmem [resolvable:$true] %s473
          %479 = dma.hbm_to_vmem [thread:$0]  %s472, 1024, %s474, %s457, 128, 128, 8
        $region64: #{tpu_custom_call.1} parent=51 // pred_fallthru
          _
      $region52: #{tpu_custom_call.1} parent=5 // pred_fallthru
        _
      %p480 = scmp.le.s32.totalorder 1, %s27
      %p481 = scmp.lt.s32.totalorder %s27, 5
      %p482 = pnand %p480, %p481
      %p483 = pneg %p482
      // Predicated region
      $region65: #{tpu_custom_call.1} parent=5 // pred_check
        _
      $region66: #{tpu_custom_call.1} parent=5 // pred_check_branch
        %485 = sbr.rel (%p482) target = $region68
      $region67: #{tpu_custom_call.1} parent=5 // pred_region
        %s486 = ssub.s32 %s27, 1
        %s487 = sand.u32 %s54, 1
        %s488 = scalar_lea.sflag [#allocation4], %s487
        %s489 = sand.u32 %s54, 1
        %s490 = smul.addr %s489, 256
        %s491 = scalar_lea.vmem [#allocation3], %s490
        // Predicated region
        $region69: #{tpu_custom_call.1} parent=67 // pred_check
          %p492 = pneg %p67
        $region70: #{tpu_custom_call.1} parent=67 // pred_check_branch
          %494 = sbr.rel (%p492) target = $region72
        $region71: #{tpu_custom_call.1} parent=67 // pred_region
          %495 = dma.done %s488, 4096
        $region72: #{tpu_custom_call.1} parent=67 // pred_fallthru
          _
        %s496 = sand.u32 %s32, 1
        %s497 = scalar_lea.sflag [#allocation7], %s496
        %s498 = sand.u32 %s90, 1
        %s499 = smul.addr %s498, 64
        %s500 = scalar_lea.vmem [#allocation6], %s499
        // Predicated region
        $region73: #{tpu_custom_call.1} parent=67 // pred_check
          %p501 = pneg %p103
        $region74: #{tpu_custom_call.1} parent=67 // pred_check_branch
          %503 = sbr.rel (%p501) target = $region76
        $region75: #{tpu_custom_call.1} parent=67 // pred_region
          %504 = dma.done %s497, 1024
        $region76: #{tpu_custom_call.1} parent=67 // pred_fallthru
          _
        %s505 = sand.u32 %s32, 1
        %s506 = scalar_lea.sflag [#allocation7], %s505
        %s507 = sand.u32 %s126, 1
        %s508 = smul.addr %s507, 64
        %s509 = scalar_lea.vmem [#allocation8], %s508
        // Predicated region
        $region77: #{tpu_custom_call.1} parent=67 // pred_check
          %p510 = pneg %p139
        $region78: #{tpu_custom_call.1} parent=67 // pred_check_branch
          %512 = sbr.rel (%p510) target = $region80
        $region79: #{tpu_custom_call.1} parent=67 // pred_region
          %513 = dma.done %s506, 1024
        $region80: #{tpu_custom_call.1} parent=67 // pred_fallthru
          _
        %s514 = sand.u32 %s54, 1
        %s515 = scalar_lea.sflag [#allocation4], %s514
        %s516 = sand.u32 %s54, 1
        %s517 = smul.addr %s516, 256
        %s518 = scalar_lea.vmem [#allocation3], %s517
        %p519 = pneg %p67
        %p520 = pneg %p64
        %s521 = sand.u32 %s32, 1
        %s522 = scalar_lea.sflag [#allocation7], %s521
        %s523 = sand.u32 %s90, 1
        %s524 = smul.addr %s523, 64
        %s525 = scalar_lea.vmem [#allocation6], %s524
        %p526 = pneg %p103
        %p527 = pneg %p100
        %s528 = sand.u32 %s32, 1
        %s529 = scalar_lea.sflag [#allocation7], %s528
        %s530 = sand.u32 %s126, 1
        %s531 = smul.addr %s530, 64
        %s532 = scalar_lea.vmem [#allocation8], %s531
        %p533 = pneg %p139
        %p534 = pneg %p136
        %p535 = pneg %p160
        %p536 = pneg %p157
        %p537 = pneg %p181
        %p538 = pneg %p178
        %p539 = pneg %p202
        %p540 = pneg %p199
        %p541 = pneg %p223
        %p542 = pneg %p220
        %p543 = pneg %p244
        %p544 = pneg %p241
        %p545 = pneg %p265
        %p546 = pneg %p262
        %p547 = pneg %p286
        %p548 = pneg %p283
        %p549 = pneg %p307
        %p550 = pneg %p304
        %p551 = pneg %p328
        %p552 = pneg %p325
        %p553 = pneg %p356
        %p554 = pneg %p353
        %s555 = sand.u32 %s343, 1
        %s556 = scalar_lea.sflag [#allocation5], %s555
        %s557 = sand.u32 %s343, 1
        %s558 = smul.addr %s557, 256
        %s559 = scalar_lea.vmem [#allocation9], %s558
        %s560 = smul.u32 4, %s37
        %s561 = smul.u32 %s37, 4
        %s562 = ssub.s32 %s561, 1
        %p563 = scmp.gt.s32.totalorder %s562, 0
        %s564 = scalar_select %p563, %s562, 0
        %s565 = sadd.s32 %s37, 1
        %s566 = smul.u32 %s565, 4
        %p567 = scmp.lt.s32.totalorder %s566, 7
        %s568 = scalar_select %p567, %s566, 7
        %s569 = smul.u32 4, %s37
        %v570 = vld [vmem:[%s3] sm:$0xff]
        %v571 = vld [vmem:[%s3 + $0x8] sm:$0xff]
        %v572 = vld [vmem:[%s4] sm:$0x1]
        %v573 = vld [vmem:[%s5] sm:$0x1]
        %vm574 = vcmask 195584
        %575 = vst.msk [vmem:[#allocation2] sm:$0xff] %vm574, 0.0
        %vm576 = vcmask 189440
        %577 = vst.msk [vmem:[#allocation2 + $0x8] sm:$0x3] %vm576, 0.0
        %s578 = scalar_lea.vmem [#allocation2], 144
        %579 = vst.msk [vmem:[%s578] sm:$0xff] %vm574, 0.0
        %580 = vst.msk [vmem:[%s578 + $0x8] sm:$0x3] %vm576, 0.0
        %vm581 = vcmask 188416
        %582 = vst.msk [vmem:[#allocation2] sm:$0x1] %vm581, 0.0
        %583 = vst.msk [vmem:[#allocation2 + $0x10] sm:$0x1] %vm581, 0.0
        %584 = vst.msk [vmem:[#allocation2 + $0x20] sm:$0x1] %vm581, 0.0
        %585 = vst.msk [vmem:[#allocation2 + $0x30] sm:$0x1] %vm581, 0.0
        %586 = vst.msk [vmem:[#allocation2 + $0x40] sm:$0x1] %vm581, 0.0
        %587 = vst.msk [vmem:[#allocation2 + $0x50] sm:$0x1] %vm581, 0.0
        %588 = vst.msk [vmem:[#allocation2 + $0x60] sm:$0x1] %vm581, 0.0
        %589 = vst.msk [vmem:[#allocation2 + $0x70] sm:$0x1] %vm581, 0.0
        %590 = vst.msk [vmem:[#allocation2 + $0x80] sm:$0x1] %vm581, 0.0
        %591 = vst.msk [vmem:[#allocation2 + $0x90] sm:$0x1] %vm581, 0.0
        %592 = vst.msk [vmem:[#allocation2 + $0x9] sm:$0x1] %vm581, 0.0
        %593 = vst.msk [vmem:[#allocation2 + $0x19] sm:$0x1] %vm581, 0.0
        %594 = vst.msk [vmem:[#allocation2 + $0x29] sm:$0x1] %vm581, 0.0
        %595 = vst.msk [vmem:[#allocation2 + $0x39] sm:$0x1] %vm581, 0.0
        %596 = vst.msk [vmem:[#allocation2 + $0x49] sm:$0x1] %vm581, 0.0
        %597 = vst.msk [vmem:[#allocation2 + $0x59] sm:$0x1] %vm581, 0.0
        %598 = vst.msk [vmem:[#allocation2 + $0x69] sm:$0x1] %vm581, 0.0
        %599 = vst.msk [vmem:[#allocation2 + $0x79] sm:$0x1] %vm581, 0.0
        %600 = vst.msk [vmem:[#allocation2 + $0x89] sm:$0x1] %vm581, 0.0
        %601 = vst.msk [vmem:[#allocation2 + $0x99] sm:$0x1] %vm581, 0.0
        %v602 = vld [vmem:[%s491] sm:$0xff]
        %v603 = vld [vmem:[%s491 + $0x8] sm:$0xff]
        %v604 = vld [vmem:[%s491 + $0x10] sm:$0xff]
        %v605 = vld [vmem:[%s491 + $0x18] sm:$0xff]
        %v606 = vld [vmem:[%s491 + $0x20] sm:$0xff]
        %v607 = vld [vmem:[%s491 + $0x28] sm:$0xff]
        %v608 = vld [vmem:[%s491 + $0x30] sm:$0xff]
        %v609 = vld [vmem:[%s491 + $0x38] sm:$0xff]
        %v610 = vld [vmem:[%s491 + $0x40] sm:$0xff]
        %v611 = vld [vmem:[%s491 + $0x48] sm:$0xff]
        %v612 = vld [vmem:[%s491 + $0x50] sm:$0xff]
        %v613 = vld [vmem:[%s491 + $0x58] sm:$0xff]
        %v614 = vld [vmem:[%s491 + $0x60] sm:$0xff]
        %v615 = vld [vmem:[%s491 + $0x68] sm:$0xff]
        %v616 = vld [vmem:[%s491 + $0x70] sm:$0xff]
        %v617 = vld [vmem:[%s491 + $0x78] sm:$0xff]
        %v618 = vld [vmem:[%s491 + $0x80] sm:$0xff]
        %v619 = vld [vmem:[%s491 + $0x88] sm:$0xff]
        %v620 = vld [vmem:[%s491 + $0x90] sm:$0xff]
        %v621 = vld [vmem:[%s491 + $0x98] sm:$0xff]
        %v622 = vld [vmem:[%s491 + $0xa0] sm:$0xff]
        %v623 = vld [vmem:[%s491 + $0xa8] sm:$0xff]
        %v624 = vld [vmem:[%s491 + $0xb0] sm:$0xff]
        %v625 = vld [vmem:[%s491 + $0xb8] sm:$0xff]
        %v626 = vld [vmem:[%s491 + $0xc0] sm:$0xff]
        %v627 = vld [vmem:[%s491 + $0xc8] sm:$0xff]
        %v628 = vld [vmem:[%s491 + $0xd0] sm:$0xff]
        %v629 = vld [vmem:[%s491 + $0xd8] sm:$0xff]
        %v630 = vld [vmem:[%s491 + $0xe0] sm:$0xff]
        %v631 = vld [vmem:[%s491 + $0xe8] sm:$0xff]
        %v632 = vld [vmem:[%s491 + $0xf0] sm:$0xff]
        %v633 = vld [vmem:[%s491 + $0xf8] sm:$0xff]
        %vm634 = vcmask 130048
        %v636 = vsel %vm634, %v602, 0
        %v639 = vsel %vm634, %v603, 0
        %v642 = vsel %vm634, %v604, 0
        %v645 = vsel %vm634, %v605, 0
        %v648 = vsel %vm634, %v606, 0
        %v651 = vsel %vm634, %v607, 0
        %v654 = vsel %vm634, %v608, 0
        %v657 = vsel %vm634, %v609, 0
        %v660 = vsel %vm634, %v610, 0
        %v663 = vsel %vm634, %v611, 0
        %v666 = vsel %vm634, %v612, 0
        %v669 = vsel %vm634, %v613, 0
        %v672 = vsel %vm634, %v614, 0
        %v675 = vsel %vm634, %v615, 0
        %v678 = vsel %vm634, %v616, 0
        %v681 = vsel %vm634, %v617, 0
        %v684 = vsel %vm634, %v618, 0
        %v687 = vsel %vm634, %v619, 0
        %v690 = vsel %vm634, %v620, 0
        %v693 = vsel %vm634, %v621, 0
        %v696 = vsel %vm634, %v622, 0
        %v699 = vsel %vm634, %v623, 0
        %v702 = vsel %vm634, %v624, 0
        %v705 = vsel %vm634, %v625, 0
        %v708 = vsel %vm634, %v626, 0
        %v711 = vsel %vm634, %v627, 0
        %v714 = vsel %vm634, %v628, 0
        %v717 = vsel %vm634, %v629, 0
        %v720 = vsel %vm634, %v630, 0
        %v723 = vsel %vm634, %v631, 0
        %v726 = vsel %vm634, %v632, 0
        %v729 = vsel %vm634, %v633, 0
        %731 = vmatprep.subr.mxu0 0.0
        %732 = vmatpush1.msra.mxu0 %v570
        %733 = vmatprep.subr.mxu0 0.0
        %734 = vmatpush1.msra.mxu0 %v571
        %735 = vmatprep.subr.mxu0 0.0
        %736 = vmatpush1.msra.mxu0 0.0
        %737 = vmatprep.subr.mxu0 0.0
        %738 = vmatpush1.msra.mxu0 0.0
        %739 = vmatprep.subr.mxu0 0.0
        %740 = vmatpush1.msra.mxu0 0.0
        %741 = vmatprep.subr.mxu0 0.0
        %742 = vmatpush1.msra.mxu0 0.0
        %743 = vmatprep.subr.mxu0 0.0
        %744 = vmatpush1.msra.mxu0 0.0
        %745 = vmatprep.subr.mxu0 0.0
        %746 = vmatpush1.msra.mxu0 0.0
        %747 = vmatprep.subr.mxu0 0.0
        %748 = vmatpush1.msra.mxu0 0.0
        %749 = vmatprep.subr.mxu0 0.0
        %750 = vmatpush1.msra.mxu0 0.0
        %751 = vmatprep.subr.mxu0 0.0
        %752 = vmatpush1.msra.mxu0 0.0
        %753 = vmatprep.subr.mxu0 0.0
        %754 = vmatpush1.msra.mxu0 0.0
        %755 = vmatprep.subr.mxu0 0.0
        %756 = vmatpush1.msra.mxu0 0.0
        %757 = vmatprep.subr.mxu0 0.0
        %758 = vmatpush1.msra.mxu0 0.0
        %759 = vmatprep.subr.mxu0 0.0
        %760 = vmatpush1.msra.mxu0 0.0
        %761 = vmatprep.subr.mxu0 0.0
        %762 = vmatpush1.msra.mxu0 0.0
        %763 = vmatprep.subr.mxu0 0.0
        %764 = vmatpush1.msra.mxu0 0.0
        %765 = vmatprep.subr.mxu0 0.0
        %766 = vmatpush1.msra.mxu0 0.0
        %767 = vmatprep.subr.mxu0 0.0
        %768 = vmatpush1.msra.mxu0 0.0
        %769 = vmatprep.subr.mxu0 0.0
        %770 = vmatpush1.msra.mxu0 0.0
        %771 = vmatprep.subr.mxu0 0.0
        %772 = vmatpush1.msra.mxu0 0.0
        %773 = vmatprep.subr.mxu0 0.0
        %774 = vmatpush1.msra.mxu0 0.0
        %775 = vmatprep.subr.mxu0 0.0
        %776 = vmatpush1.msra.mxu0 0.0
        %777 = vmatprep.subr.mxu0 0.0
        %778 = vmatpush1.msra.mxu0 0.0
        %779 = vmatprep.subr.mxu0 0.0
        %780 = vmatpush1.msra.mxu0 0.0
        %781 = vmatprep.subr.mxu0 0.0
        %782 = vmatpush1.msra.mxu0 0.0
        %783 = vmatprep.subr.mxu0 0.0
        %784 = vmatpush1.msra.mxu0 0.0
        %785 = vmatprep.subr.mxu0 0.0
        %786 = vmatpush1.msra.mxu0 0.0
        %787 = vmatprep.subr.mxu0 0.0
        %788 = vmatpush1.msra.mxu0 0.0
        %789 = vmatprep.subr.mxu0 0.0
        %790 = vmatpush1.msra.mxu0 0.0
        %791 = vmatprep.subr.mxu0 0.0
        %792 = vmatpush1.msra.mxu0 0.0
        %793 = vmatprep.subr.mxu0 0.0
        %794 = vmatpush1.msra.mxu0 0.0
        %795 = vmatprep.mubr.f32.mxu0 0.0
        %796 = vmatmul.mubr.f32.gmra.mrb[0].mxu0 %v636
        %v797 = vpop.f32.mrb[0].mxu0
        %v798 = vadd.f32 0.0, %v797
        %v799 = vpop.f32.mrb[0].mxu0
        %800 = vmatprep.mubr.f32.mxu0 0.0
        %801 = vmatmul.mubr.f32.gmra.mrb[0].mxu0 %v639
        %v802 = vpop.f32.mrb[0].mxu0
        %v803 = vadd.f32 0.0, %v802
        %v804 = vpop.f32.mrb[0].mxu0
        %805 = vmatprep.mubr.f32.mxu0 0.0
        %806 = vmatmul.mubr.f32.gmra.mrb[0].mxu0 %v642
        %v807 = vpop.f32.mrb[0].mxu0
        %v808 = vadd.f32 0.0, %v807
        %v809 = vpop.f32.mrb[0].mxu0
        %810 = vmatprep.mubr.f32.mxu0 0.0
        %811 = vmatmul.mubr.f32.gmra.mrb[0].mxu0 %v645
        %v812 = vpop.f32.mrb[0].mxu0
        %v813 = vadd.f32 0.0, %v812
        %v814 = vpop.f32.mrb[0].mxu0
        %815 = vmatprep.mubr.f32.mxu0 0.0
        %816 = vmatmul.mubr.f32.gmra.mrb[0].mxu0 %v648
        %v817 = vpop.f32.mrb[0].mxu0
        %v818 = vadd.f32 0.0, %v817
        %v819 = vpop.f32.mrb[0].mxu0
        %820 = vmatprep.mubr.f32.mxu0 0.0
        %821 = vmatmul.mubr.f32.gmra.mrb[0].mxu0 %v651
        %v822 = vpop.f32.mrb[0].mxu0
        %v823 = vadd.f32 0.0, %v822
        %v824 = vpop.f32.mrb[0].mxu0
        %825 = vmatprep.mubr.f32.mxu0 0.0
        %826 = vmatmul.mubr.f32.gmra.mrb[0].mxu0 %v654
        %v827 = vpop.f32.mrb[0].mxu0
        %v828 = vadd.f32 0.0, %v827
        %v829 = vpop.f32.mrb[0].mxu0
        %830 = vmatprep.mubr.f32.mxu0 0.0
        %831 = vmatmul.mubr.f32.gmra.mrb[0].mxu0 %v657
        %v832 = vpop.f32.mrb[0].mxu0
        %v833 = vadd.f32 0.0, %v832
        %v834 = vpop.f32.mrb[0].mxu0
        %835 = vmatprep.mubr.f32.mxu0 0.0
        %836 = vmatmul.mubr.f32.gmra.mrb[0].mxu0 %v660
        %v837 = vpop.f32.mrb[0].mxu0
        %v838 = vadd.f32 0.0, %v837
        %v839 = vpop.f32.mrb[0].mxu0
        %840 = vmatprep.mubr.f32.mxu0 0.0
        %841 = vmatmul.mubr.f32.gmra.mrb[0].mxu0 %v663
        %v842 = vpop.f32.mrb[0].mxu0
        %v843 = vadd.f32 0.0, %v842
        %v844 = vpop.f32.mrb[0].mxu0
        %845 = vmatprep.mubr.f32.mxu0 0.0
        %846 = vmatmul.mubr.f32.gmra.mrb[0].mxu0 %v666
        %v847 = vpop.f32.mrb[0].mxu0
        %v848 = vadd.f32 0.0, %v847
        %v849 = vpop.f32.mrb[0].mxu0
        %850 = vmatprep.mubr.f32.mxu0 0.0
        %851 = vmatmul.mubr.f32.gmra.mrb[0].mxu0 %v669
        %v852 = vpop.f32.mrb[0].mxu0
        %v853 = vadd.f32 0.0, %v852
        %v854 = vpop.f32.mrb[0].mxu0
        %855 = vmatprep.mubr.f32.mxu0 0.0
        %856 = vmatmul.mubr.f32.gmra.mrb[0].mxu0 %v672
        %v857 = vpop.f32.mrb[0].mxu0
        %v858 = vadd.f32 0.0, %v857
        %v859 = vpop.f32.mrb[0].mxu0
        %860 = vmatprep.mubr.f32.mxu0 0.0
        %861 = vmatmul.mubr.f32.gmra.mrb[0].mxu0 %v675
        %v862 = vpop.f32.mrb[0].mxu0
        %v863 = vadd.f32 0.0, %v862
        %v864 = vpop.f32.mrb[0].mxu0
        %865 = vmatprep.mubr.f32.mxu0 0.0
        %866 = vmatmul.mubr.f32.gmra.mrb[0].mxu0 %v678
        %v867 = vpop.f32.mrb[0].mxu0
        %v868 = vadd.f32 0.0, %v867
        %v869 = vpop.f32.mrb[0].mxu0
        %870 = vmatprep.mubr.f32.mxu0 0.0
        %871 = vmatmul.mubr.f32.gmra.mrb[0].mxu0 %v681
        %v872 = vpop.f32.mrb[0].mxu0
        %v873 = vadd.f32 0.0, %v872
        %v874 = vpop.f32.mrb[0].mxu0
        %875 = vmatprep.mubr.f32.mxu0 0.0
        %876 = vmatmul.mubr.f32.gmra.mrb[0].mxu0 %v684
        %v877 = vpop.f32.mrb[0].mxu0
        %v878 = vadd.f32 0.0, %v877
        %v879 = vpop.f32.mrb[0].mxu0
        %880 = vmatprep.mubr.f32.mxu0 0.0
        %881 = vmatmul.mubr.f32.gmra.mrb[0].mxu0 %v687
        %v882 = vpop.f32.mrb[0].mxu0
        %v883 = vadd.f32 0.0, %v882
        %v884 = vpop.f32.mrb[0].mxu0
        %885 = vmatprep.mubr.f32.mxu0 0.0
        %886 = vmatmul.mubr.f32.gmra.mrb[0].mxu0 %v690
        %v887 = vpop.f32.mrb[0].mxu0
        %v888 = vadd.f32 0.0, %v887
        %v889 = vpop.f32.mrb[0].mxu0
        %890 = vmatprep.mubr.f32.mxu0 0.0
        %891 = vmatmul.mubr.f32.gmra.mrb[0].mxu0 %v693
        %v892 = vpop.f32.mrb[0].mxu0
        %v893 = vadd.f32 0.0, %v892
        %v894 = vpop.f32.mrb[0].mxu0
        %895 = vmatprep.mubr.f32.mxu0 0.0
        %896 = vmatmul.mubr.f32.gmra.mrb[0].mxu0 %v696
        %v897 = vpop.f32.mrb[0].mxu0
        %v898 = vadd.f32 0.0, %v897
        %v899 = vpop.f32.mrb[0].mxu0
        %900 = vmatprep.mubr.f32.mxu0 0.0
        %901 = vmatmul.mubr.f32.gmra.mrb[0].mxu0 %v699
        %v902 = vpop.f32.mrb[0].mxu0
        %v903 = vadd.f32 0.0, %v902
        %v904 = vpop.f32.mrb[0].mxu0
        %905 = vmatprep.mubr.f32.mxu0 0.0
        %906 = vmatmul.mubr.f32.gmra.mrb[0].mxu0 %v702
        %v907 = vpop.f32.mrb[0].mxu0
        %v908 = vadd.f32 0.0, %v907
        %v909 = vpop.f32.mrb[0].mxu0
        %910 = vmatprep.mubr.f32.mxu0 0.0
        %911 = vmatmul.mubr.f32.gmra.mrb[0].mxu0 %v705
        %v912 = vpop.f32.mrb[0].mxu0
        %v913 = vadd.f32 0.0, %v912
        %v914 = vpop.f32.mrb[0].mxu0
        %915 = vmatprep.mubr.f32.mxu0 0.0
        %916 = vmatmul.mubr.f32.gmra.mrb[0].mxu0 %v708
        %v917 = vpop.f32.mrb[0].mxu0
        %v918 = vadd.f32 0.0, %v917
        %v919 = vpop.f32.mrb[0].mxu0
        %920 = vmatprep.mubr.f32.mxu0 0.0
        %921 = vmatmul.mubr.f32.gmra.mrb[0].mxu0 %v711
        %v922 = vpop.f32.mrb[0].mxu0
        %v923 = vadd.f32 0.0, %v922
        %v924 = vpop.f32.mrb[0].mxu0
        %925 = vmatprep.mubr.f32.mxu0 0.0
        %926 = vmatmul.mubr.f32.gmra.mrb[0].mxu0 %v714
        %v927 = vpop.f32.mrb[0].mxu0
        %v928 = vadd.f32 0.0, %v927
        %v929 = vpop.f32.mrb[0].mxu0
        %930 = vmatprep.mubr.f32.mxu0 0.0
        %931 = vmatmul.mubr.f32.gmra.mrb[0].mxu0 %v717
        %v932 = vpop.f32.mrb[0].mxu0
        %v933 = vadd.f32 0.0, %v932
        %v934 = vpop.f32.mrb[0].mxu0
        %935 = vmatprep.mubr.f32.mxu0 0.0
        %936 = vmatmul.mubr.f32.gmra.mrb[0].mxu0 %v720
        %v937 = vpop.f32.mrb[0].mxu0
        %v938 = vadd.f32 0.0, %v937
        %v939 = vpop.f32.mrb[0].mxu0
        %940 = vmatprep.mubr.f32.mxu0 0.0
        %941 = vmatmul.mubr.f32.gmra.mrb[0].mxu0 %v723
        %v942 = vpop.f32.mrb[0].mxu0
        %v943 = vadd.f32 0.0, %v942
        %v944 = vpop.f32.mrb[0].mxu0
        %945 = vmatprep.mubr.f32.mxu0 0.0
        %946 = vmatmul.mubr.f32.gmra.mrb[0].mxu0 %v726
        %v947 = vpop.f32.mrb[0].mxu0
        %v948 = vadd.f32 0.0, %v947
        %v949 = vpop.f32.mrb[0].mxu0
        %950 = vmatprep.mubr.f32.mxu0 0.0
        %951 = vmatmul.mubr.f32.gmra.mrb[0].mxu0 %v729
        %v952 = vpop.f32.mrb[0].mxu0
        %v953 = vadd.f32 0.0, %v952
        %v954 = vpop.f32.mrb[0].mxu0
        %955 = vdwg.mxu0
        %v957 = vlaneseq
        %v958 = vshrl.u32 %v957, 7
        %v959 = vsub.s32 0, %v958
        %v960 = vrot.slane %v572, %v959
        %v962 = vmul.f32 %v798, %v960
        %v963 = vmul.f32 %v803, %v960
        %v964 = vmul.f32 %v808, %v960
        %v965 = vmul.f32 %v813, %v960
        %v966 = vmul.f32 %v818, %v960
        %v967 = vmul.f32 %v823, %v960
        %v968 = vmul.f32 %v828, %v960
        %v969 = vmul.f32 %v833, %v960
        %v970 = vmul.f32 %v838, %v960
        %v971 = vmul.f32 %v843, %v960
        %v972 = vmul.f32 %v848, %v960
        %v973 = vmul.f32 %v853, %v960
        %v974 = vmul.f32 %v858, %v960
        %v975 = vmul.f32 %v863, %v960
        %v976 = vmul.f32 %v868, %v960
        %v977 = vmul.f32 %v873, %v960
        %v978 = vmul.f32 %v878, %v960
        %v979 = vmul.f32 %v883, %v960
        %v980 = vmul.f32 %v888, %v960
        %v981 = vmul.f32 %v893, %v960
        %v982 = vmul.f32 %v898, %v960
        %v983 = vmul.f32 %v903, %v960
        %v984 = vmul.f32 %v908, %v960
        %v985 = vmul.f32 %v913, %v960
        %v986 = vmul.f32 %v918, %v960
        %v987 = vmul.f32 %v923, %v960
        %v988 = vmul.f32 %v928, %v960
        %v989 = vmul.f32 %v933, %v960
        %v990 = vmul.f32 %v938, %v960
        %v991 = vmul.f32 %v943, %v960
        %v992 = vmul.f32 %v948, %v960
        %v993 = vmul.f32 %v953, %v960
        %v995 = vlaneseq
        %v996 = vshrl.u32 %v995, 7
        %v997 = vsub.s32 0, %v996
        %v998 = vrot.slane %v573, %v997
        %v1000 = vadd.f32 %v962, %v998
        %v1001 = vadd.f32 %v963, %v998
        %v1002 = vadd.f32 %v964, %v998
        %v1003 = vadd.f32 %v965, %v998
        %v1004 = vadd.f32 %v966, %v998
        %v1005 = vadd.f32 %v967, %v998
        %v1006 = vadd.f32 %v968, %v998
        %v1007 = vadd.f32 %v969, %v998
        %v1008 = vadd.f32 %v970, %v998
        %v1009 = vadd.f32 %v971, %v998
        %v1010 = vadd.f32 %v972, %v998
        %v1011 = vadd.f32 %v973, %v998
        %v1012 = vadd.f32 %v974, %v998
        %v1013 = vadd.f32 %v975, %v998
        %v1014 = vadd.f32 %v976, %v998
        %v1015 = vadd.f32 %v977, %v998
        %v1016 = vadd.f32 %v978, %v998
        %v1017 = vadd.f32 %v979, %v998
        %v1018 = vadd.f32 %v980, %v998
        %v1019 = vadd.f32 %v981, %v998
        %v1020 = vadd.f32 %v982, %v998
        %v1021 = vadd.f32 %v983, %v998
        %v1022 = vadd.f32 %v984, %v998
        %v1023 = vadd.f32 %v985, %v998
        %v1024 = vadd.f32 %v986, %v998
        %v1025 = vadd.f32 %v987, %v998
        %v1026 = vadd.f32 %v988, %v998
        %v1027 = vadd.f32 %v989, %v998
        %v1028 = vadd.f32 %v990, %v998
        %v1029 = vadd.f32 %v991, %v998
        %v1030 = vadd.f32 %v992, %v998
        %v1031 = vadd.f32 %v993, %v998
        %v1032 = vmax.f32 %v1000, 0.0
        %v1033 = vmax.f32 %v1001, 0.0
        %v1034 = vmax.f32 %v1002, 0.0
        %v1035 = vmax.f32 %v1003, 0.0
        %v1036 = vmax.f32 %v1004, 0.0
        %v1037 = vmax.f32 %v1005, 0.0
        %v1038 = vmax.f32 %v1006, 0.0
        %v1039 = vmax.f32 %v1007, 0.0
        %v1040 = vmax.f32 %v1008, 0.0
        %v1041 = vmax.f32 %v1009, 0.0
        %v1042 = vmax.f32 %v1010, 0.0
        %v1043 = vmax.f32 %v1011, 0.0
        %v1044 = vmax.f32 %v1012, 0.0
        %v1045 = vmax.f32 %v1013, 0.0
        %v1046 = vmax.f32 %v1014, 0.0
        %v1047 = vmax.f32 %v1015, 0.0
        %v1048 = vmax.f32 %v1016, 0.0
        %v1049 = vmax.f32 %v1017, 0.0
        %v1050 = vmax.f32 %v1018, 0.0
        %v1051 = vmax.f32 %v1019, 0.0
        %v1052 = vmax.f32 %v1020, 0.0
        %v1053 = vmax.f32 %v1021, 0.0
        %v1054 = vmax.f32 %v1022, 0.0
        %v1055 = vmax.f32 %v1023, 0.0
        %v1056 = vmax.f32 %v1024, 0.0
        %v1057 = vmax.f32 %v1025, 0.0
        %v1058 = vmax.f32 %v1026, 0.0
        %v1059 = vmax.f32 %v1027, 0.0
        %v1060 = vmax.f32 %v1028, 0.0
        %v1061 = vmax.f32 %v1029, 0.0
        %v1062 = vmax.f32 %v1030, 0.0
        %v1063 = vmax.f32 %v1031, 0.0
        %1072 = vrot.lane.b32.xlu0 %v1032, 4
        %v1073 = vpop.permute.xlu0 %1072
        %1074 = vrot.lane.b32.xlu0 %v1033, 4
        %v1075 = vpop.permute.xlu0 %1074
        %1076 = vrot.lane.b32.xlu0 %v1034, 4
        %v1077 = vpop.permute.xlu0 %1076
        %1078 = vrot.lane.b32.xlu0 %v1035, 4
        %v1079 = vpop.permute.xlu0 %1078
        %1080 = vrot.lane.b32.xlu0 %v1036, 4
        %v1081 = vpop.permute.xlu0 %1080
        %1082 = vrot.lane.b32.xlu0 %v1037, 4
        %v1083 = vpop.permute.xlu0 %1082
        %1084 = vrot.lane.b32.xlu0 %v1038, 4
        %v1085 = vpop.permute.xlu0 %1084
        %1086 = vrot.lane.b32.xlu0 %v1039, 4
        %v1087 = vpop.permute.xlu0 %1086
        %s1096 = scalar_lea.vmem [#allocation2], 16
        %vm1097 = vcmask 64544
        %1098 = vst.msk [vmem:[%s1096 + $0x1] sm:$0xff] %vm1097, %v1073
        %1099 = vst.msk [vmem:[%s1096 + $0x11] sm:$0xff] %vm1097, %v1075
        %1100 = vst.msk [vmem:[%s1096 + $0x21] sm:$0xff] %vm1097, %v1077
        %1101 = vst.msk [vmem:[%s1096 + $0x31] sm:$0xff] %vm1097, %v1079
        %1102 = vst.msk [vmem:[%s1096 + $0x41] sm:$0xff] %vm1097, %v1081
        %1103 = vst.msk [vmem:[%s1096 + $0x51] sm:$0xff] %vm1097, %v1083
        %1104 = vst.msk [vmem:[%s1096 + $0x61] sm:$0xff] %vm1097, %v1085
        %1105 = vst.msk [vmem:[%s1096 + $0x71] sm:$0xff] %vm1097, %v1087
        %1114 = vrot.lane.b32.xlu0 %v1040, 8
        %v1115 = vpop.permute.xlu0 %1114
        %1116 = vrot.lane.b32.xlu0 %v1041, 8
        %v1117 = vpop.permute.xlu0 %1116
        %1118 = vrot.lane.b32.xlu0 %v1042, 8
        %v1119 = vpop.permute.xlu0 %1118
        %1120 = vrot.lane.b32.xlu0 %v1043, 8
        %v1121 = vpop.permute.xlu0 %1120
        %1122 = vrot.lane.b32.xlu0 %v1044, 8
        %v1123 = vpop.permute.xlu0 %1122
        %1124 = vrot.lane.b32.xlu0 %v1045, 8
        %v1125 = vpop.permute.xlu0 %1124
        %1126 = vrot.lane.b32.xlu0 %v1046, 8
        %v1127 = vpop.permute.xlu0 %1126
        %1128 = vrot.lane.b32.xlu0 %v1047, 8
        %v1129 = vpop.permute.xlu0 %1128
        %vm1138 = vcmask 97344
        %1139 = vst.msk [vmem:[%s1096 + $0x1] sm:$0xff] %vm1138, %v1115
        %1140 = vst.msk [vmem:[%s1096 + $0x11] sm:$0xff] %vm1138, %v1117
        %1141 = vst.msk [vmem:[%s1096 + $0x21] sm:$0xff] %vm1138, %v1119
        %1142 = vst.msk [vmem:[%s1096 + $0x31] sm:$0xff] %vm1138, %v1121
        %1143 = vst.msk [vmem:[%s1096 + $0x41] sm:$0xff] %vm1138, %v1123
        %1144 = vst.msk [vmem:[%s1096 + $0x51] sm:$0xff] %vm1138, %v1125
        %1145 = vst.msk [vmem:[%s1096 + $0x61] sm:$0xff] %vm1138, %v1127
        %1146 = vst.msk [vmem:[%s1096 + $0x71] sm:$0xff] %vm1138, %v1129
        %1155 = vrot.lane.b32.xlu0 %v1048, 12
        %v1156 = vpop.permute.xlu0 %1155
        %1157 = vrot.lane.b32.xlu0 %v1049, 12
        %v1158 = vpop.permute.xlu0 %1157
        %1159 = vrot.lane.b32.xlu0 %v1050, 12
        %v1160 = vpop.permute.xlu0 %1159
        %1161 = vrot.lane.b32.xlu0 %v1051, 12
        %v1162 = vpop.permute.xlu0 %1161
        %1163 = vrot.lane.b32.xlu0 %v1052, 12
        %v1164 = vpop.permute.xlu0 %1163
        %1165 = vrot.lane.b32.xlu0 %v1053, 12
        %v1166 = vpop.permute.xlu0 %1165
        %1167 = vrot.lane.b32.xlu0 %v1054, 12
        %v1168 = vpop.permute.xlu0 %1167
        %1169 = vrot.lane.b32.xlu0 %v1055, 12
        %v1170 = vpop.permute.xlu0 %1169
        %vm1179 = vcmask 130144
        %1180 = vst.msk [vmem:[%s1096 + $0x1] sm:$0xff] %vm1179, %v1156
        %1181 = vst.msk [vmem:[%s1096 + $0x11] sm:$0xff] %vm1179, %v1158
        %1182 = vst.msk [vmem:[%s1096 + $0x21] sm:$0xff] %vm1179, %v1160
        %1183 = vst.msk [vmem:[%s1096 + $0x31] sm:$0xff] %vm1179, %v1162
        %1184 = vst.msk [vmem:[%s1096 + $0x41] sm:$0xff] %vm1179, %v1164
        %1185 = vst.msk [vmem:[%s1096 + $0x51] sm:$0xff] %vm1179, %v1166
        %1186 = vst.msk [vmem:[%s1096 + $0x61] sm:$0xff] %vm1179, %v1168
        %1187 = vst.msk [vmem:[%s1096 + $0x71] sm:$0xff] %vm1179, %v1170
        %1196 = vrot.lane.b32.xlu0 %v1056, 16
        %v1197 = vpop.permute.xlu0 %1196
        %1198 = vrot.lane.b32.xlu0 %v1057, 16
        %v1199 = vpop.permute.xlu0 %1198
        %1200 = vrot.lane.b32.xlu0 %v1058, 16
        %v1201 = vpop.permute.xlu0 %1200
        %1202 = vrot.lane.b32.xlu0 %v1059, 16
        %v1203 = vpop.permute.xlu0 %1202
        %1204 = vrot.lane.b32.xlu0 %v1060, 16
        %v1205 = vpop.permute.xlu0 %1204
        %1206 = vrot.lane.b32.xlu0 %v1061, 16
        %v1207 = vpop.permute.xlu0 %1206
        %1208 = vrot.lane.b32.xlu0 %v1062, 16
        %v1209 = vpop.permute.xlu0 %1208
        %1210 = vrot.lane.b32.xlu0 %v1063, 16
        %v1211 = vpop.permute.xlu0 %1210
        %vm1220 = vcmask 162944
        %1221 = vst.msk [vmem:[%s1096 + $0x1] sm:$0xff] %vm1220, %v1197
        %1222 = vst.msk [vmem:[%s1096 + $0x11] sm:$0xff] %vm1220, %v1199
        %1223 = vst.msk [vmem:[%s1096 + $0x21] sm:$0xff] %vm1220, %v1201
        %1224 = vst.msk [vmem:[%s1096 + $0x31] sm:$0xff] %vm1220, %v1203
        %1225 = vst.msk [vmem:[%s1096 + $0x41] sm:$0xff] %vm1220, %v1205
        %1226 = vst.msk [vmem:[%s1096 + $0x51] sm:$0xff] %vm1220, %v1207
        %1227 = vst.msk [vmem:[%s1096 + $0x61] sm:$0xff] %vm1220, %v1209
        %1228 = vst.msk [vmem:[%s1096 + $0x71] sm:$0xff] %vm1220, %v1211
        %p1229 = scmp.gt.s32.totalorder %s37, 0
        // Predicated region
        $region81: #{tpu_custom_call.1} parent=67 // pred_check
          %p1230 = pneg %p1229
        $region82: #{tpu_custom_call.1} parent=67 // pred_check_branch
          %1232 = sbr.rel (%p1230) target = $region84
        $region83: #{tpu_custom_call.1} parent=67 // pred_region
          %v1233 = vld [vmem:[%s500] sm:$0xff]
          %v1234 = vld [vmem:[%s500 + $0x8] sm:$0xff]
          %v1235 = vld [vmem:[%s500 + $0x10] sm:$0xff]
          %v1236 = vld [vmem:[%s500 + $0x18] sm:$0xff]
          %v1237 = vld [vmem:[%s500 + $0x20] sm:$0xff]
          %v1238 = vld [vmem:[%s500 + $0x28] sm:$0xff]
          %v1239 = vld [vmem:[%s500 + $0x30] sm:$0xff]
          %v1240 = vld [vmem:[%s500 + $0x38] sm:$0xff]
          %v1242 = vsel %vm634, %v1233, 0
          %v1245 = vsel %vm634, %v1234, 0
          %v1248 = vsel %vm634, %v1235, 0
          %v1251 = vsel %vm634, %v1236, 0
          %v1254 = vsel %vm634, %v1237, 0
          %v1257 = vsel %vm634, %v1238, 0
          %v1260 = vsel %vm634, %v1239, 0
          %v1263 = vsel %vm634, %v1240, 0
          %1265 = vmatprep.subr.mxu0 0.0
          %1266 = vmatpush1.msra.mxu0 %v570
          %1267 = vmatprep.subr.mxu0 0.0
          %1268 = vmatpush1.msra.mxu0 %v571
          %1269 = vmatprep.subr.mxu0 0.0
          %1270 = vmatpush1.msra.mxu0 0.0
          %1271 = vmatprep.subr.mxu0 0.0
          %1272 = vmatpush1.msra.mxu0 0.0
          %1273 = vmatprep.subr.mxu0 0.0
          %1274 = vmatpush1.msra.mxu0 0.0
          %1275 = vmatprep.subr.mxu0 0.0
          %1276 = vmatpush1.msra.mxu0 0.0
          %1277 = vmatprep.subr.mxu0 0.0
          %1278 = vmatpush1.msra.mxu0 0.0
          %1279 = vmatprep.subr.mxu0 0.0
          %1280 = vmatpush1.msra.mxu0 0.0
          %1281 = vmatprep.subr.mxu0 0.0
          %1282 = vmatpush1.msra.mxu0 0.0
          %1283 = vmatprep.subr.mxu0 0.0
          %1284 = vmatpush1.msra.mxu0 0.0
          %1285 = vmatprep.subr.mxu0 0.0
          %1286 = vmatpush1.msra.mxu0 0.0
          %1287 = vmatprep.subr.mxu0 0.0
          %1288 = vmatpush1.msra.mxu0 0.0
          %1289 = vmatprep.subr.mxu0 0.0
          %1290 = vmatpush1.msra.mxu0 0.0
          %1291 = vmatprep.subr.mxu0 0.0
          %1292 = vmatpush1.msra.mxu0 0.0
          %1293 = vmatprep.subr.mxu0 0.0
          %1294 = vmatpush1.msra.mxu0 0.0
          %1295 = vmatprep.subr.mxu0 0.0
          %1296 = vmatpush1.msra.mxu0 0.0
          %1297 = vmatprep.subr.mxu0 0.0
          %1298 = vmatpush1.msra.mxu0 0.0
          %1299 = vmatprep.subr.mxu0 0.0
          %1300 = vmatpush1.msra.mxu0 0.0
          %1301 = vmatprep.subr.mxu0 0.0
          %1302 = vmatpush1.msra.mxu0 0.0
          %1303 = vmatprep.subr.mxu0 0.0
          %1304 = vmatpush1.msra.mxu0 0.0
          %1305 = vmatprep.subr.mxu0 0.0
          %1306 = vmatpush1.msra.mxu0 0.0
          %1307 = vmatprep.subr.mxu0 0.0
          %1308 = vmatpush1.msra.mxu0 0.0
          %1309 = vmatprep.subr.mxu0 0.0
          %1310 = vmatpush1.msra.mxu0 0.0
          %1311 = vmatprep.subr.mxu0 0.0
          %1312 = vmatpush1.msra.mxu0 0.0
          %1313 = vmatprep.subr.mxu0 0.0
          %1314 = vmatpush1.msra.mxu0 0.0
          %1315 = vmatprep.subr.mxu0 0.0
          %1316 = vmatpush1.msra.mxu0 0.0
          %1317 = vmatprep.subr.mxu0 0.0
          %1318 = vmatpush1.msra.mxu0 0.0
          %1319 = vmatprep.subr.mxu0 0.0
          %1320 = vmatpush1.msra.mxu0 0.0
          %1321 = vmatprep.subr.mxu0 0.0
          %1322 = vmatpush1.msra.mxu0 0.0
          %1323 = vmatprep.subr.mxu0 0.0
          %1324 = vmatpush1.msra.mxu0 0.0
          %1325 = vmatprep.subr.mxu0 0.0
          %1326 = vmatpush1.msra.mxu0 0.0
          %1327 = vmatprep.subr.mxu0 0.0
          %1328 = vmatpush1.msra.mxu0 0.0
          %1329 = vmatprep.mubr.f32.mxu0 0.0
          %1330 = vmatmul.mubr.f32.gmra.mrb[0].mxu0 %v1242
          %v1331 = vpop.f32.mrb[0].mxu0
          %v1332 = vadd.f32 0.0, %v1331
          %v1333 = vpop.f32.mrb[0].mxu0
          %1334 = vmatprep.mubr.f32.mxu0 0.0
          %1335 = vmatmul.mubr.f32.gmra.mrb[0].mxu0 %v1245
          %v1336 = vpop.f32.mrb[0].mxu0
          %v1337 = vadd.f32 0.0, %v1336
          %v1338 = vpop.f32.mrb[0].mxu0
          %1339 = vmatprep.mubr.f32.mxu0 0.0
          %1340 = vmatmul.mubr.f32.gmra.mrb[0].mxu0 %v1248
          %v1341 = vpop.f32.mrb[0].mxu0
          %v1342 = vadd.f32 0.0, %v1341
          %v1343 = vpop.f32.mrb[0].mxu0
          %1344 = vmatprep.mubr.f32.mxu0 0.0
          %1345 = vmatmul.mubr.f32.gmra.mrb[0].mxu0 %v1251
          %v1346 = vpop.f32.mrb[0].mxu0
          %v1347 = vadd.f32 0.0, %v1346
          %v1348 = vpop.f32.mrb[0].mxu0
          %1349 = vmatprep.mubr.f32.mxu0 0.0
          %1350 = vmatmul.mubr.f32.gmra.mrb[0].mxu0 %v1254
          %v1351 = vpop.f32.mrb[0].mxu0
          %v1352 = vadd.f32 0.0, %v1351
          %v1353 = vpop.f32.mrb[0].mxu0
          %1354 = vmatprep.mubr.f32.mxu0 0.0
          %1355 = vmatmul.mubr.f32.gmra.mrb[0].mxu0 %v1257
          %v1356 = vpop.f32.mrb[0].mxu0
          %v1357 = vadd.f32 0.0, %v1356
          %v1358 = vpop.f32.mrb[0].mxu0
          %1359 = vmatprep.mubr.f32.mxu0 0.0
          %1360 = vmatmul.mubr.f32.gmra.mrb[0].mxu0 %v1260
          %v1361 = vpop.f32.mrb[0].mxu0
          %v1362 = vadd.f32 0.0, %v1361
          %v1363 = vpop.f32.mrb[0].mxu0
          %1364 = vmatprep.mubr.f32.mxu0 0.0
          %1365 = vmatmul.mubr.f32.gmra.mrb[0].mxu0 %v1263
          %v1366 = vpop.f32.mrb[0].mxu0
          %v1367 = vadd.f32 0.0, %v1366
          %v1368 = vpop.f32.mrb[0].mxu0
          %1369 = vdwg.mxu0
          %v1370 = vmul.f32 %v1332, %v960
          %v1371 = vmul.f32 %v1337, %v960
          %v1372 = vmul.f32 %v1342, %v960
          %v1373 = vmul.f32 %v1347, %v960
          %v1374 = vmul.f32 %v1352, %v960
          %v1375 = vmul.f32 %v1357, %v960
          %v1376 = vmul.f32 %v1362, %v960
          %v1377 = vmul.f32 %v1367, %v960
          %v1378 = vadd.f32 %v1370, %v998
          %v1379 = vadd.f32 %v1371, %v998
          %v1380 = vadd.f32 %v1372, %v998
          %v1381 = vadd.f32 %v1373, %v998
          %v1382 = vadd.f32 %v1374, %v998
          %v1383 = vadd.f32 %v1375, %v998
          %v1384 = vadd.f32 %v1376, %v998
          %v1385 = vadd.f32 %v1377, %v998
          %v1386 = vmax.f32 %v1378, 0.0
          %v1387 = vmax.f32 %v1379, 0.0
          %v1388 = vmax.f32 %v1380, 0.0
          %v1389 = vmax.f32 %v1381, 0.0
          %v1390 = vmax.f32 %v1382, 0.0
          %v1391 = vmax.f32 %v1383, 0.0
          %v1392 = vmax.f32 %v1384, 0.0
          %v1393 = vmax.f32 %v1385, 0.0
          %vm1394 = vcmask 31744
          %1395 = vst.msk [vmem:[%s1096 + $0x1] sm:$0xff] %vm1394, %v1386
          %1396 = vst.msk [vmem:[%s1096 + $0x11] sm:$0xff] %vm1394, %v1387
          %1397 = vst.msk [vmem:[%s1096 + $0x21] sm:$0xff] %vm1394, %v1388
          %1398 = vst.msk [vmem:[%s1096 + $0x31] sm:$0xff] %vm1394, %v1389
          %1399 = vst.msk [vmem:[%s1096 + $0x41] sm:$0xff] %vm1394, %v1390
          %1400 = vst.msk [vmem:[%s1096 + $0x51] sm:$0xff] %vm1394, %v1391
          %1401 = vst.msk [vmem:[%s1096 + $0x61] sm:$0xff] %vm1394, %v1392
          %1402 = vst.msk [vmem:[%s1096 + $0x71] sm:$0xff] %vm1394, %v1393
        $region84: #{tpu_custom_call.1} parent=67 // pred_fallthru
          _
        %p1403 = scmp.eq.s32.totalorder %s37, 0
        // Predicated region
        $region85: #{tpu_custom_call.1} parent=67 // pred_check
          %p1404 = pneg %p1403
        $region86: #{tpu_custom_call.1} parent=67 // pred_check_branch
          %1406 = sbr.rel (%p1404) target = $region88
        $region87: #{tpu_custom_call.1} parent=67 // pred_region
          %vm1407 = vcmask 31744
          %1408 = vst.msk [vmem:[#allocation2] sm:$0xff] %vm1407, 0.0
          %vm1409 = vcmask 25600
          %1410 = vst.msk [vmem:[#allocation2 + $0x8] sm:$0x3] %vm1409, 0.0
          %1411 = vst.msk [vmem:[#allocation2 + $0x10] sm:$0xff] %vm1407, 0.0
          %1412 = vst.msk [vmem:[#allocation2 + $0x18] sm:$0x3] %vm1409, 0.0
          %1413 = vst.msk [vmem:[#allocation2 + $0x20] sm:$0xff] %vm1407, 0.0
          %1414 = vst.msk [vmem:[#allocation2 + $0x28] sm:$0x3] %vm1409, 0.0
          %1415 = vst.msk [vmem:[#allocation2 + $0x30] sm:$0xff] %vm1407, 0.0
          %1416 = vst.msk [vmem:[#allocation2 + $0x38] sm:$0x3] %vm1409, 0.0
          %1417 = vst.msk [vmem:[#allocation2 + $0x40] sm:$0xff] %vm1407, 0.0
          %1418 = vst.msk [vmem:[#allocation2 + $0x48] sm:$0x3] %vm1409, 0.0
          %1419 = vst.msk [vmem:[#allocation2 + $0x50] sm:$0xff] %vm1407, 0.0
          %1420 = vst.msk [vmem:[#allocation2 + $0x58] sm:$0x3] %vm1409, 0.0
          %1421 = vst.msk [vmem:[#allocation2 + $0x60] sm:$0xff] %vm1407, 0.0
          %1422 = vst.msk [vmem:[#allocation2 + $0x68] sm:$0x3] %vm1409, 0.0
          %1423 = vst.msk [vmem:[#allocation2 + $0x70] sm:$0xff] %vm1407, 0.0
          %1424 = vst.msk [vmem:[#allocation2 + $0x78] sm:$0x3] %vm1409, 0.0
          %1425 = vst.msk [vmem:[#allocation2 + $0x80] sm:$0xff] %vm1407, 0.0
          %1426 = vst.msk [vmem:[#allocation2 + $0x88] sm:$0x3] %vm1409, 0.0
          %1427 = vst.msk [vmem:[#allocation2 + $0x90] sm:$0xff] %vm1407, 0.0
          %1428 = vst.msk [vmem:[#allocation2 + $0x98] sm:$0x3] %vm1409, 0.0
        $region88: #{tpu_custom_call.1} parent=67 // pred_fallthru
          _
        %p1429 = scmp.lt.s32.totalorder %s37, 1
        // Predicated region
        $region89: #{tpu_custom_call.1} parent=67 // pred_check
          %p1430 = pneg %p1429
        $region90: #{tpu_custom_call.1} parent=67 // pred_check_branch
          %1432 = sbr.rel (%p1430) target = $region92
        $region91: #{tpu_custom_call.1} parent=67 // pred_region
          %v1433 = vld [vmem:[%s509] sm:$0xff]
          %v1434 = vld [vmem:[%s509 + $0x8] sm:$0xff]
          %v1435 = vld [vmem:[%s509 + $0x10] sm:$0xff]
          %v1436 = vld [vmem:[%s509 + $0x18] sm:$0xff]
          %v1437 = vld [vmem:[%s509 + $0x20] sm:$0xff]
          %v1438 = vld [vmem:[%s509 + $0x28] sm:$0xff]
          %v1439 = vld [vmem:[%s509 + $0x30] sm:$0xff]
          %v1440 = vld [vmem:[%s509 + $0x38] sm:$0xff]
          %v1442 = vsel %vm634, %v1433, 0
          %v1445 = vsel %vm634, %v1434, 0
          %v1448 = vsel %vm634, %v1435, 0
          %v1451 = vsel %vm634, %v1436, 0
          %v1454 = vsel %vm634, %v1437, 0
          %v1457 = vsel %vm634, %v1438, 0
          %v1460 = vsel %vm634, %v1439, 0
          %v1463 = vsel %vm634, %v1440, 0
          %1465 = vmatprep.subr.mxu0 0.0
          %1466 = vmatpush1.msra.mxu0 %v570
          %1467 = vmatprep.subr.mxu0 0.0
          %1468 = vmatpush1.msra.mxu0 %v571
          %1469 = vmatprep.subr.mxu0 0.0
          %1470 = vmatpush1.msra.mxu0 0.0
          %1471 = vmatprep.subr.mxu0 0.0
          %1472 = vmatpush1.msra.mxu0 0.0
          %1473 = vmatprep.subr.mxu0 0.0
          %1474 = vmatpush1.msra.mxu0 0.0
          %1475 = vmatprep.subr.mxu0 0.0
          %1476 = vmatpush1.msra.mxu0 0.0
          %1477 = vmatprep.subr.mxu0 0.0
          %1478 = vmatpush1.msra.mxu0 0.0
          %1479 = vmatprep.subr.mxu0 0.0
          %1480 = vmatpush1.msra.mxu0 0.0
          %1481 = vmatprep.subr.mxu0 0.0
          %1482 = vmatpush1.msra.mxu0 0.0
          %1483 = vmatprep.subr.mxu0 0.0
          %1484 = vmatpush1.msra.mxu0 0.0
          %1485 = vmatprep.subr.mxu0 0.0
          %1486 = vmatpush1.msra.mxu0 0.0
          %1487 = vmatprep.subr.mxu0 0.0
          %1488 = vmatpush1.msra.mxu0 0.0
          %1489 = vmatprep.subr.mxu0 0.0
          %1490 = vmatpush1.msra.mxu0 0.0
          %1491 = vmatprep.subr.mxu0 0.0
          %1492 = vmatpush1.msra.mxu0 0.0
          %1493 = vmatprep.subr.mxu0 0.0
          %1494 = vmatpush1.msra.mxu0 0.0
          %1495 = vmatprep.subr.mxu0 0.0
          %1496 = vmatpush1.msra.mxu0 0.0
          %1497 = vmatprep.subr.mxu0 0.0
          %1498 = vmatpush1.msra.mxu0 0.0
          %1499 = vmatprep.subr.mxu0 0.0
          %1500 = vmatpush1.msra.mxu0 0.0
          %1501 = vmatprep.subr.mxu0 0.0
          %1502 = vmatpush1.msra.mxu0 0.0
          %1503 = vmatprep.subr.mxu0 0.0
          %1504 = vmatpush1.msra.mxu0 0.0
          %1505 = vmatprep.subr.mxu0 0.0
          %1506 = vmatpush1.msra.mxu0 0.0
          %1507 = vmatprep.subr.mxu0 0.0
          %1508 = vmatpush1.msra.mxu0 0.0
          %1509 = vmatprep.subr.mxu0 0.0
          %1510 = vmatpush1.msra.mxu0 0.0
          %1511 = vmatprep.subr.mxu0 0.0
          %1512 = vmatpush1.msra.mxu0 0.0
          %1513 = vmatprep.subr.mxu0 0.0
          %1514 = vmatpush1.msra.mxu0 0.0
          %1515 = vmatprep.subr.mxu0 0.0
          %1516 = vmatpush1.msra.mxu0 0.0
          %1517 = vmatprep.subr.mxu0 0.0
          %1518 = vmatpush1.msra.mxu0 0.0
          %1519 = vmatprep.subr.mxu0 0.0
          %1520 = vmatpush1.msra.mxu0 0.0
          %1521 = vmatprep.subr.mxu0 0.0
          %1522 = vmatpush1.msra.mxu0 0.0
          %1523 = vmatprep.subr.mxu0 0.0
          %1524 = vmatpush1.msra.mxu0 0.0
          %1525 = vmatprep.subr.mxu0 0.0
          %1526 = vmatpush1.msra.mxu0 0.0
          %1527 = vmatprep.subr.mxu0 0.0
          %1528 = vmatpush1.msra.mxu0 0.0
          %1529 = vmatprep.mubr.f32.mxu0 0.0
          %1530 = vmatmul.mubr.f32.gmra.mrb[0].mxu0 %v1442
          %v1531 = vpop.f32.mrb[0].mxu0
          %v1532 = vadd.f32 0.0, %v1531
          %v1533 = vpop.f32.mrb[0].mxu0
          %1534 = vmatprep.mubr.f32.mxu0 0.0
          %1535 = vmatmul.mubr.f32.gmra.mrb[0].mxu0 %v1445
          %v1536 = vpop.f32.mrb[0].mxu0
          %v1537 = vadd.f32 0.0, %v1536
          %v1538 = vpop.f32.mrb[0].mxu0
          %1539 = vmatprep.mubr.f32.mxu0 0.0
          %1540 = vmatmul.mubr.f32.gmra.mrb[0].mxu0 %v1448
          %v1541 = vpop.f32.mrb[0].mxu0
          %v1542 = vadd.f32 0.0, %v1541
          %v1543 = vpop.f32.mrb[0].mxu0
          %1544 = vmatprep.mubr.f32.mxu0 0.0
          %1545 = vmatmul.mubr.f32.gmra.mrb[0].mxu0 %v1451
          %v1546 = vpop.f32.mrb[0].mxu0
          %v1547 = vadd.f32 0.0, %v1546
          %v1548 = vpop.f32.mrb[0].mxu0
          %1549 = vmatprep.mubr.f32.mxu0 0.0
          %1550 = vmatmul.mubr.f32.gmra.mrb[0].mxu0 %v1454
          %v1551 = vpop.f32.mrb[0].mxu0
          %v1552 = vadd.f32 0.0, %v1551
          %v1553 = vpop.f32.mrb[0].mxu0
          %1554 = vmatprep.mubr.f32.mxu0 0.0
          %1555 = vmatmul.mubr.f32.gmra.mrb[0].mxu0 %v1457
          %v1556 = vpop.f32.mrb[0].mxu0
          %v1557 = vadd.f32 0.0, %v1556
          %v1558 = vpop.f32.mrb[0].mxu0
          %1559 = vmatprep.mubr.f32.mxu0 0.0
          %1560 = vmatmul.mubr.f32.gmra.mrb[0].mxu0 %v1460
          %v1561 = vpop.f32.mrb[0].mxu0
          %v1562 = vadd.f32 0.0, %v1561
          %v1563 = vpop.f32.mrb[0].mxu0
          %1564 = vmatprep.mubr.f32.mxu0 0.0
          %1565 = vmatmul.mubr.f32.gmra.mrb[0].mxu0 %v1463
          %v1566 = vpop.f32.mrb[0].mxu0
          %v1567 = vadd.f32 0.0, %v1566
          %v1568 = vpop.f32.mrb[0].mxu0
          %1569 = vdwg.mxu0
          %v1570 = vmul.f32 %v1532, %v960
          %v1571 = vmul.f32 %v1537, %v960
          %v1572 = vmul.f32 %v1542, %v960
          %v1573 = vmul.f32 %v1547, %v960
          %v1574 = vmul.f32 %v1552, %v960
          %v1575 = vmul.f32 %v1557, %v960
          %v1576 = vmul.f32 %v1562, %v960
          %v1577 = vmul.f32 %v1567, %v960
          %v1578 = vadd.f32 %v1570, %v998
          %v1579 = vadd.f32 %v1571, %v998
          %v1580 = vadd.f32 %v1572, %v998
          %v1581 = vadd.f32 %v1573, %v998
          %v1582 = vadd.f32 %v1574, %v998
          %v1583 = vadd.f32 %v1575, %v998
          %v1584 = vadd.f32 %v1576, %v998
          %v1585 = vadd.f32 %v1577, %v998
          %v1586 = vmax.f32 %v1578, 0.0
          %v1587 = vmax.f32 %v1579, 0.0
          %v1588 = vmax.f32 %v1580, 0.0
          %v1589 = vmax.f32 %v1581, 0.0
          %v1590 = vmax.f32 %v1582, 0.0
          %v1591 = vmax.f32 %v1583, 0.0
          %v1592 = vmax.f32 %v1584, 0.0
          %v1593 = vmax.f32 %v1585, 0.0
          %1602 = vrot.lane.b32.xlu0 %v1586, 20
          %v1603 = vpop.permute.xlu0 %1602
          %1604 = vrot.lane.b32.xlu0 %v1587, 20
          %v1605 = vpop.permute.xlu0 %1604
          %1606 = vrot.lane.b32.xlu0 %v1588, 20
          %v1607 = vpop.permute.xlu0 %1606
          %1608 = vrot.lane.b32.xlu0 %v1589, 20
          %v1609 = vpop.permute.xlu0 %1608
          %1610 = vrot.lane.b32.xlu0 %v1590, 20
          %v1611 = vpop.permute.xlu0 %1610
          %1612 = vrot.lane.b32.xlu0 %v1591, 20
          %v1613 = vpop.permute.xlu0 %1612
          %1614 = vrot.lane.b32.xlu0 %v1592, 20
          %v1615 = vpop.permute.xlu0 %1614
          %1616 = vrot.lane.b32.xlu0 %v1593, 20
          %v1617 = vpop.permute.xlu0 %1616
          %vm1626 = vcmask 195744
          %1627 = vst.msk [vmem:[%s1096 + $0x1] sm:$0xff] %vm1626, %v1603
          %1628 = vst.msk [vmem:[%s1096 + $0x11] sm:$0xff] %vm1626, %v1605
          %1629 = vst.msk [vmem:[%s1096 + $0x21] sm:$0xff] %vm1626, %v1607
          %1630 = vst.msk [vmem:[%s1096 + $0x31] sm:$0xff] %vm1626, %v1609
          %1631 = vst.msk [vmem:[%s1096 + $0x41] sm:$0xff] %vm1626, %v1611
          %1632 = vst.msk [vmem:[%s1096 + $0x51] sm:$0xff] %vm1626, %v1613
          %1633 = vst.msk [vmem:[%s1096 + $0x61] sm:$0xff] %vm1626, %v1615
          %1634 = vst.msk [vmem:[%s1096 + $0x71] sm:$0xff] %vm1626, %v1617
        $region92: #{tpu_custom_call.1} parent=67 // pred_fallthru
          _
        %p1635 = scmp.eq.s32.totalorder %s37, 1
        // Predicated region
        $region93: #{tpu_custom_call.1} parent=67 // pred_check
          %p1636 = pneg %p1635
        $region94: #{tpu_custom_call.1} parent=67 // pred_check_branch
          %1638 = sbr.rel (%p1636) target = $region96
        $region95: #{tpu_custom_call.1} parent=67 // pred_region
          %vm1639 = vcmask 195744
          %1640 = vst.msk [vmem:[#allocation2] sm:$0xff] %vm1639, 0.0
          %vm1641 = vcmask 189600
          %1642 = vst.msk [vmem:[#allocation2 + $0x8] sm:$0x3] %vm1641, 0.0
          %1643 = vst.msk [vmem:[#allocation2 + $0x10] sm:$0xff] %vm1639, 0.0
          %1644 = vst.msk [vmem:[#allocation2 + $0x18] sm:$0x3] %vm1641, 0.0
          %1645 = vst.msk [vmem:[#allocation2 + $0x20] sm:$0xff] %vm1639, 0.0
          %1646 = vst.msk [vmem:[#allocation2 + $0x28] sm:$0x3] %vm1641, 0.0
          %1647 = vst.msk [vmem:[#allocation2 + $0x30] sm:$0xff] %vm1639, 0.0
          %1648 = vst.msk [vmem:[#allocation2 + $0x38] sm:$0x3] %vm1641, 0.0
          %1649 = vst.msk [vmem:[#allocation2 + $0x40] sm:$0xff] %vm1639, 0.0
          %1650 = vst.msk [vmem:[#allocation2 + $0x48] sm:$0x3] %vm1641, 0.0
          %1651 = vst.msk [vmem:[#allocation2 + $0x50] sm:$0xff] %vm1639, 0.0
          %1652 = vst.msk [vmem:[#allocation2 + $0x58] sm:$0x3] %vm1641, 0.0
          %1653 = vst.msk [vmem:[#allocation2 + $0x60] sm:$0xff] %vm1639, 0.0
          %1654 = vst.msk [vmem:[#allocation2 + $0x68] sm:$0x3] %vm1641, 0.0
          %1655 = vst.msk [vmem:[#allocation2 + $0x70] sm:$0xff] %vm1639, 0.0
          %1656 = vst.msk [vmem:[#allocation2 + $0x78] sm:$0x3] %vm1641, 0.0
          %1657 = vst.msk [vmem:[#allocation2 + $0x80] sm:$0xff] %vm1639, 0.0
          %1658 = vst.msk [vmem:[#allocation2 + $0x88] sm:$0x3] %vm1641, 0.0
          %1659 = vst.msk [vmem:[#allocation2 + $0x90] sm:$0xff] %vm1639, 0.0
          %1660 = vst.msk [vmem:[#allocation2 + $0x98] sm:$0x3] %vm1641, 0.0
        $region96: #{tpu_custom_call.1} parent=67 // pred_fallthru
          _
        %v1661 = vld [vmem:[%s7] sm:$0x1]
        %v1662 = vld [vmem:[%s8] sm:$0x1]
        %v1663 = vld [vmem:[%s9] sm:$0xf]
        %v1664 = vld [vmem:[%s10] sm:$0x1]
        %v1665 = vld [vmem:[%s11] sm:$0x1]
        %v1666 = vld [vmem:[#allocation2] sm:$0xff]
        %v1667 = vld [vmem:[#allocation2 + $0x10] sm:$0xff]
        %v1668 = vld [vmem:[#allocation2 + $0x20] sm:$0xff]
        %v1669 = vld [vmem:[#allocation2 + $0x30] sm:$0xff]
        %v1670 = vld [vmem:[#allocation2 + $0x40] sm:$0xff]
        %v1671 = vld [vmem:[#allocation2 + $0x50] sm:$0xff]
        %v1672 = vld [vmem:[#allocation2 + $0x60] sm:$0xff]
        %v1673 = vld [vmem:[#allocation2 + $0x70] sm:$0xff]
        %v1674 = vld [vmem:[%s6] sm:$0xff]
        %v1675 = vld [vmem:[%s6 + $0x8] sm:$0xf]
        %v1676 = vld [vmem:[#allocation2 + $0x1] sm:$0xff]
        %v1677 = vld [vmem:[#allocation2 + $0x11] sm:$0xff]
        %v1678 = vld [vmem:[#allocation2 + $0x21] sm:$0xff]
        %v1679 = vld [vmem:[#allocation2 + $0x31] sm:$0xff]
        %v1680 = vld [vmem:[#allocation2 + $0x41] sm:$0xff]
        %v1681 = vld [vmem:[#allocation2 + $0x51] sm:$0xff]
        %v1682 = vld [vmem:[#allocation2 + $0x61] sm:$0xff]
        %v1683 = vld [vmem:[#allocation2 + $0x71] sm:$0xff]
        %s1684 = scalar_lea.vmem %s6, 16
        %v1685 = vld [vmem:[%s1684] sm:$0xff]
        %v1686 = vld [vmem:[%s1684 + $0x8] sm:$0xf]
        %vm1687 = vcmask 97280
        %v1689 = vsel %vm1687, %v1676, 0
        %v1692 = vsel %vm1687, %v1677, 0
        %v1695 = vsel %vm1687, %v1678, 0
        %v1698 = vsel %vm1687, %v1679, 0
        %v1701 = vsel %vm1687, %v1680, 0
        %v1704 = vsel %vm1687, %v1681, 0
        %v1707 = vsel %vm1687, %v1682, 0
        %v1710 = vsel %vm1687, %v1683, 0
        %vm1712 = vcmask 1043456
        %v1714 = vsel %vm1712, %v1686, 0
        %1716 = vmatprep.subr.mxu0 0.0
        %1717 = vmatpush1.msra.mxu0 %v1685
        %1718 = vmatprep.subr.mxu0 0.0
        %1719 = vmatpush1.msra.mxu0 %v1714
        %1720 = vmatprep.subr.mxu0 0.0
        %1721 = vmatpush1.msra.mxu0 0.0
        %1722 = vmatprep.subr.mxu0 0.0
        %1723 = vmatpush1.msra.mxu0 0.0
        %1724 = vmatprep.subr.mxu0 0.0
        %1725 = vmatpush1.msra.mxu0 0.0
        %1726 = vmatprep.subr.mxu0 0.0
        %1727 = vmatpush1.msra.mxu0 0.0
        %1728 = vmatprep.subr.mxu0 0.0
        %1729 = vmatpush1.msra.mxu0 0.0
        %1730 = vmatprep.subr.mxu0 0.0
        %1731 = vmatpush1.msra.mxu0 0.0
        %1732 = vmatprep.subr.mxu0 0.0
        %1733 = vmatpush1.msra.mxu0 0.0
        %1734 = vmatprep.subr.mxu0 0.0
        %1735 = vmatpush1.msra.mxu0 0.0
        %1736 = vmatprep.subr.mxu0 0.0
        %1737 = vmatpush1.msra.mxu0 0.0
        %1738 = vmatprep.subr.mxu0 0.0
        %1739 = vmatpush1.msra.mxu0 0.0
        %1740 = vmatprep.subr.mxu0 0.0
        %1741 = vmatpush1.msra.mxu0 0.0
        %1742 = vmatprep.subr.mxu0 0.0
        %1743 = vmatpush1.msra.mxu0 0.0
        %1744 = vmatprep.subr.mxu0 0.0
        %1745 = vmatpush1.msra.mxu0 0.0
        %1746 = vmatprep.subr.mxu0 0.0
        %1747 = vmatpush1.msra.mxu0 0.0
        %1748 = vmatprep.subr.mxu0 0.0
        %1749 = vmatpush1.msra.mxu0 0.0
        %1750 = vmatprep.subr.mxu0 0.0
        %1751 = vmatpush1.msra.mxu0 0.0
        %1752 = vmatprep.subr.mxu0 0.0
        %1753 = vmatpush1.msra.mxu0 0.0
        %1754 = vmatprep.subr.mxu0 0.0
        %1755 = vmatpush1.msra.mxu0 0.0
        %1756 = vmatprep.subr.mxu0 0.0
        %1757 = vmatpush1.msra.mxu0 0.0
        %1758 = vmatprep.subr.mxu0 0.0
        %1759 = vmatpush1.msra.mxu0 0.0
        %1760 = vmatprep.subr.mxu0 0.0
        %1761 = vmatpush1.msra.mxu0 0.0
        %1762 = vmatprep.subr.mxu0 0.0
        %1763 = vmatpush1.msra.mxu0 0.0
        %1764 = vmatprep.subr.mxu0 0.0
        %1765 = vmatpush1.msra.mxu0 0.0
        %1766 = vmatprep.subr.mxu0 0.0
        %1767 = vmatpush1.msra.mxu0 0.0
        %1768 = vmatprep.subr.mxu0 0.0
        %1769 = vmatpush1.msra.mxu0 0.0
        %1770 = vmatprep.subr.mxu0 0.0
        %1771 = vmatpush1.msra.mxu0 0.0
        %1772 = vmatprep.subr.mxu0 0.0
        %1773 = vmatpush1.msra.mxu0 0.0
        %1774 = vmatprep.subr.mxu0 0.0
        %1775 = vmatpush1.msra.mxu0 0.0
        %1776 = vmatprep.subr.mxu0 0.0
        %1777 = vmatpush1.msra.mxu0 0.0
        %1778 = vmatprep.subr.mxu0 0.0
        %1779 = vmatpush1.msra.mxu0 0.0
        %1780 = vmatprep.mubr.f32.mxu0 0.0
        %1781 = vmatmul.mubr.f32.gmra.mrb[0].mxu0 %v1689
        %v1782 = vpop.f32.mrb[0].mxu0
        %v1783 = vadd.f32 0.0, %v1782
        %v1784 = vpop.f32.mrb[0].mxu0
        %1785 = vmatprep.mubr.f32.mxu0 0.0
        %1786 = vmatmul.mubr.f32.gmra.mrb[0].mxu0 %v1692
        %v1787 = vpop.f32.mrb[0].mxu0
        %v1788 = vadd.f32 0.0, %v1787
        %v1789 = vpop.f32.mrb[0].mxu0
        %1790 = vmatprep.mubr.f32.mxu0 0.0
        %1791 = vmatmul.mubr.f32.gmra.mrb[0].mxu0 %v1695
        %v1792 = vpop.f32.mrb[0].mxu0
        %v1793 = vadd.f32 0.0, %v1792
        %v1794 = vpop.f32.mrb[0].mxu0
        %1795 = vmatprep.mubr.f32.mxu0 0.0
        %1796 = vmatmul.mubr.f32.gmra.mrb[0].mxu0 %v1698
        %v1797 = vpop.f32.mrb[0].mxu0
        %v1798 = vadd.f32 0.0, %v1797
        %v1799 = vpop.f32.mrb[0].mxu0
        %1800 = vmatprep.mubr.f32.mxu0 0.0
        %1801 = vmatmul.mubr.f32.gmra.mrb[0].mxu0 %v1701
        %v1802 = vpop.f32.mrb[0].mxu0
        %v1803 = vadd.f32 0.0, %v1802
        %v1804 = vpop.f32.mrb[0].mxu0
        %1805 = vmatprep.mubr.f32.mxu0 0.0
        %1806 = vmatmul.mubr.f32.gmra.mrb[0].mxu0 %v1704
        %v1807 = vpop.f32.mrb[0].mxu0
        %v1808 = vadd.f32 0.0, %v1807
        %v1809 = vpop.f32.mrb[0].mxu0
        %1810 = vmatprep.mubr.f32.mxu0 0.0
        %1811 = vmatmul.mubr.f32.gmra.mrb[0].mxu0 %v1707
        %v1812 = vpop.f32.mrb[0].mxu0
        %v1813 = vadd.f32 0.0, %v1812
        %v1814 = vpop.f32.mrb[0].mxu0
        %1815 = vmatprep.mubr.f32.mxu0 0.0
        %1816 = vmatmul.mubr.f32.gmra.mrb[0].mxu0 %v1710
        %v1817 = vpop.f32.mrb[0].mxu0
        %v1818 = vadd.f32 0.0, %v1817
        %v1819 = vpop.f32.mrb[0].mxu0
        %1820 = vdwg.mxu0
        %v1822 = vsel %vm1687, %v1666, 0
        %v1825 = vsel %vm1687, %v1667, 0
        %v1828 = vsel %vm1687, %v1668, 0
        %v1831 = vsel %vm1687, %v1669, 0
        %v1834 = vsel %vm1687, %v1670, 0
        %v1837 = vsel %vm1687, %v1671, 0
        %v1840 = vsel %vm1687, %v1672, 0
        %v1843 = vsel %vm1687, %v1673, 0
        %v1846 = vsel %vm1712, %v1675, 0
        %1848 = vmatprep.subr.mxu0 0.0
        %1849 = vmatpush1.msra.mxu0 %v1674
        %1850 = vmatprep.subr.mxu0 0.0
        %1851 = vmatpush1.msra.mxu0 %v1846
        %1852 = vmatprep.subr.mxu0 0.0
        %1853 = vmatpush1.msra.mxu0 0.0
        %1854 = vmatprep.subr.mxu0 0.0
        %1855 = vmatpush1.msra.mxu0 0.0
        %1856 = vmatprep.subr.mxu0 0.0
        %1857 = vmatpush1.msra.mxu0 0.0
        %1858 = vmatprep.subr.mxu0 0.0
        %1859 = vmatpush1.msra.mxu0 0.0
        %1860 = vmatprep.subr.mxu0 0.0
        %1861 = vmatpush1.msra.mxu0 0.0
        %1862 = vmatprep.subr.mxu0 0.0
        %1863 = vmatpush1.msra.mxu0 0.0
        %1864 = vmatprep.subr.mxu0 0.0
        %1865 = vmatpush1.msra.mxu0 0.0
        %1866 = vmatprep.subr.mxu0 0.0
        %1867 = vmatpush1.msra.mxu0 0.0
        %1868 = vmatprep.subr.mxu0 0.0
        %1869 = vmatpush1.msra.mxu0 0.0
        %1870 = vmatprep.subr.mxu0 0.0
        %1871 = vmatpush1.msra.mxu0 0.0
        %1872 = vmatprep.subr.mxu0 0.0
        %1873 = vmatpush1.msra.mxu0 0.0
        %1874 = vmatprep.subr.mxu0 0.0
        %1875 = vmatpush1.msra.mxu0 0.0
        %1876 = vmatprep.subr.mxu0 0.0
        %1877 = vmatpush1.msra.mxu0 0.0
        %1878 = vmatprep.subr.mxu0 0.0
        %1879 = vmatpush1.msra.mxu0 0.0
        %1880 = vmatprep.subr.mxu0 0.0
        %1881 = vmatpush1.msra.mxu0 0.0
        %1882 = vmatprep.subr.mxu0 0.0
        %1883 = vmatpush1.msra.mxu0 0.0
        %1884 = vmatprep.subr.mxu0 0.0
        %1885 = vmatpush1.msra.mxu0 0.0
        %1886 = vmatprep.subr.mxu0 0.0
        %1887 = vmatpush1.msra.mxu0 0.0
        %1888 = vmatprep.subr.mxu0 0.0
        %1889 = vmatpush1.msra.mxu0 0.0
        %1890 = vmatprep.subr.mxu0 0.0
        %1891 = vmatpush1.msra.mxu0 0.0
        %1892 = vmatprep.subr.mxu0 0.0
        %1893 = vmatpush1.msra.mxu0 0.0
        %1894 = vmatprep.subr.mxu0 0.0
        %1895 = vmatpush1.msra.mxu0 0.0
        %1896 = vmatprep.subr.mxu0 0.0
        %1897 = vmatpush1.msra.mxu0 0.0
        %1898 = vmatprep.subr.mxu0 0.0
        %1899 = vmatpush1.msra.mxu0 0.0
        %1900 = vmatprep.subr.mxu0 0.0
        %1901 = vmatpush1.msra.mxu0 0.0
        %1902 = vmatprep.subr.mxu0 0.0
        %1903 = vmatpush1.msra.mxu0 0.0
        %1904 = vmatprep.subr.mxu0 0.0
        %1905 = vmatpush1.msra.mxu0 0.0
        %1906 = vmatprep.subr.mxu0 0.0
        %1907 = vmatpush1.msra.mxu0 0.0
        %1908 = vmatprep.subr.mxu0 0.0
        %1909 = vmatpush1.msra.mxu0 0.0
        %1910 = vmatprep.subr.mxu0 0.0
        %1911 = vmatpush1.msra.mxu0 0.0
        %1912 = vmatprep.mubr.f32.mxu0 0.0
        %1913 = vmatmul.mubr.f32.gmra.mrb[0].mxu0 %v1822
        %v1914 = vpop.f32.mrb[0].mxu0
        %v1915 = vadd.f32 %v1783, %v1914
        %v1916 = vpop.f32.mrb[0].mxu0
        %1917 = vmatprep.mubr.f32.mxu0 0.0
        %1918 = vmatmul.mubr.f32.gmra.mrb[0].mxu0 %v1825
        %v1919 = vpop.f32.mrb[0].mxu0
        %v1920 = vadd.f32 %v1788, %v1919
        %v1921 = vpop.f32.mrb[0].mxu0
        %1922 = vmatprep.mubr.f32.mxu0 0.0
        %1923 = vmatmul.mubr.f32.gmra.mrb[0].mxu0 %v1828
        %v1924 = vpop.f32.mrb[0].mxu0
        %v1925 = vadd.f32 %v1793, %v1924
        %v1926 = vpop.f32.mrb[0].mxu0
        %1927 = vmatprep.mubr.f32.mxu0 0.0
        %1928 = vmatmul.mubr.f32.gmra.mrb[0].mxu0 %v1831
        %v1929 = vpop.f32.mrb[0].mxu0
        %v1930 = vadd.f32 %v1798, %v1929
        %v1931 = vpop.f32.mrb[0].mxu0
        %1932 = vmatprep.mubr.f32.mxu0 0.0
        %1933 = vmatmul.mubr.f32.gmra.mrb[0].mxu0 %v1834
        %v1934 = vpop.f32.mrb[0].mxu0
        %v1935 = vadd.f32 %v1803, %v1934
        %v1936 = vpop.f32.mrb[0].mxu0
        %1937 = vmatprep.mubr.f32.mxu0 0.0
        %1938 = vmatmul.mubr.f32.gmra.mrb[0].mxu0 %v1837
        %v1939 = vpop.f32.mrb[0].mxu0
        %v1940 = vadd.f32 %v1808, %v1939
        %v1941 = vpop.f32.mrb[0].mxu0
        %1942 = vmatprep.mubr.f32.mxu0 0.0
        %1943 = vmatmul.mubr.f32.gmra.mrb[0].mxu0 %v1840
        %v1944 = vpop.f32.mrb[0].mxu0
        %v1945 = vadd.f32 %v1813, %v1944
        %v1946 = vpop.f32.mrb[0].mxu0
        %1947 = vmatprep.mubr.f32.mxu0 0.0
        %1948 = vmatmul.mubr.f32.gmra.mrb[0].mxu0 %v1843
        %v1949 = vpop.f32.mrb[0].mxu0
        %v1950 = vadd.f32 %v1818, %v1949
        %v1951 = vpop.f32.mrb[0].mxu0
        %1952 = vdwg.mxu0
        %v1953 = vld [vmem:[#allocation2 + $0x2] sm:$0xff]
        %v1954 = vld [vmem:[#allocation2 + $0x12] sm:$0xff]
        %v1955 = vld [vmem:[#allocation2 + $0x22] sm:$0xff]
        %v1956 = vld [vmem:[#allocation2 + $0x32] sm:$0xff]
        %v1957 = vld [vmem:[#allocation2 + $0x42] sm:$0xff]
        %v1958 = vld [vmem:[#allocation2 + $0x52] sm:$0xff]
        %v1959 = vld [vmem:[#allocation2 + $0x62] sm:$0xff]
        %v1960 = vld [vmem:[#allocation2 + $0x72] sm:$0xff]
        %s1961 = scalar_lea.vmem %s6, 32
        %v1962 = vld [vmem:[%s1961] sm:$0xff]
        %v1963 = vld [vmem:[%s1961 + $0x8] sm:$0xf]
        %v1965 = vsel %vm1687, %v1953, 0
        %v1968 = vsel %vm1687, %v1954, 0
        %v1971 = vsel %vm1687, %v1955, 0
        %v1974 = vsel %vm1687, %v1956, 0
        %v1977 = vsel %vm1687, %v1957, 0
        %v1980 = vsel %vm1687, %v1958, 0
        %v1983 = vsel %vm1687, %v1959, 0
        %v1986 = vsel %vm1687, %v1960, 0
        %v1989 = vsel %vm1712, %v1963, 0
        %1991 = vmatprep.subr.mxu0 0.0
        %1992 = vmatpush1.msra.mxu0 %v1962
        %1993 = vmatprep.subr.mxu0 0.0
        %1994 = vmatpush1.msra.mxu0 %v1989
        %1995 = vmatprep.subr.mxu0 0.0
        %1996 = vmatpush1.msra.mxu0 0.0
        %1997 = vmatprep.subr.mxu0 0.0
        %1998 = vmatpush1.msra.mxu0 0.0
        %1999 = vmatprep.subr.mxu0 0.0
        %2000 = vmatpush1.msra.mxu0 0.0
        %2001 = vmatprep.subr.mxu0 0.0
        %2002 = vmatpush1.msra.mxu0 0.0
        %2003 = vmatprep.subr.mxu0 0.0
        %2004 = vmatpush1.msra.mxu0 0.0
        %2005 = vmatprep.subr.mxu0 0.0
        %2006 = vmatpush1.msra.mxu0 0.0
        %2007 = vmatprep.subr.mxu0 0.0
        %2008 = vmatpush1.msra.mxu0 0.0
        %2009 = vmatprep.subr.mxu0 0.0
        %2010 = vmatpush1.msra.mxu0 0.0
        %2011 = vmatprep.subr.mxu0 0.0
        %2012 = vmatpush1.msra.mxu0 0.0
        %2013 = vmatprep.subr.mxu0 0.0
        %2014 = vmatpush1.msra.mxu0 0.0
        %2015 = vmatprep.subr.mxu0 0.0
        %2016 = vmatpush1.msra.mxu0 0.0
        %2017 = vmatprep.subr.mxu0 0.0
        %2018 = vmatpush1.msra.mxu0 0.0
        %2019 = vmatprep.subr.mxu0 0.0
        %2020 = vmatpush1.msra.mxu0 0.0
        %2021 = vmatprep.subr.mxu0 0.0
        %2022 = vmatpush1.msra.mxu0 0.0
        %2023 = vmatprep.subr.mxu0 0.0
        %2024 = vmatpush1.msra.mxu0 0.0
        %2025 = vmatprep.subr.mxu0 0.0
        %2026 = vmatpush1.msra.mxu0 0.0
        %2027 = vmatprep.subr.mxu0 0.0
        %2028 = vmatpush1.msra.mxu0 0.0
        %2029 = vmatprep.subr.mxu0 0.0
        %2030 = vmatpush1.msra.mxu0 0.0
        %2031 = vmatprep.subr.mxu0 0.0
        %2032 = vmatpush1.msra.mxu0 0.0
        %2033 = vmatprep.subr.mxu0 0.0
        %2034 = vmatpush1.msra.mxu0 0.0
        %2035 = vmatprep.subr.mxu0 0.0
        %2036 = vmatpush1.msra.mxu0 0.0
        %2037 = vmatprep.subr.mxu0 0.0
        %2038 = vmatpush1.msra.mxu0 0.0
        %2039 = vmatprep.subr.mxu0 0.0
        %2040 = vmatpush1.msra.mxu0 0.0
        %2041 = vmatprep.subr.mxu0 0.0
        %2042 = vmatpush1.msra.mxu0 0.0
        %2043 = vmatprep.subr.mxu0 0.0
        %2044 = vmatpush1.msra.mxu0 0.0
        %2045 = vmatprep.subr.mxu0 0.0
        %2046 = vmatpush1.msra.mxu0 0.0
        %2047 = vmatprep.subr.mxu0 0.0
        %2048 = vmatpush1.msra.mxu0 0.0
        %2049 = vmatprep.subr.mxu0 0.0
        %2050 = vmatpush1.msra.mxu0 0.0
        %2051 = vmatprep.subr.mxu0 0.0
        %2052 = vmatpush1.msra.mxu0 0.0
        %2053 = vmatprep.subr.mxu0 0.0
        %2054 = vmatpush1.msra.mxu0 0.0
        %2055 = vmatprep.mubr.f32.mxu0 0.0
        %2056 = vmatmul.mubr.f32.gmra.mrb[0].mxu0 %v1965
        %v2057 = vpop.f32.mrb[0].mxu0
        %v2058 = vadd.f32 0.0, %v2057
        %v2059 = vpop.f32.mrb[0].mxu0
        %2060 = vmatprep.mubr.f32.mxu0 0.0
        %2061 = vmatmul.mubr.f32.gmra.mrb[0].mxu0 %v1968
        %v2062 = vpop.f32.mrb[0].mxu0
        %v2063 = vadd.f32 0.0, %v2062
        %v2064 = vpop.f32.mrb[0].mxu0
        %2065 = vmatprep.mubr.f32.mxu0 0.0
        %2066 = vmatmul.mubr.f32.gmra.mrb[0].mxu0 %v1971
        %v2067 = vpop.f32.mrb[0].mxu0
        %v2068 = vadd.f32 0.0, %v2067
        %v2069 = vpop.f32.mrb[0].mxu0
        %2070 = vmatprep.mubr.f32.mxu0 0.0
        %2071 = vmatmul.mubr.f32.gmra.mrb[0].mxu0 %v1974
        %v2072 = vpop.f32.mrb[0].mxu0
        %v2073 = vadd.f32 0.0, %v2072
        %v2074 = vpop.f32.mrb[0].mxu0
        %2075 = vmatprep.mubr.f32.mxu0 0.0
        %2076 = vmatmul.mubr.f32.gmra.mrb[0].mxu0 %v1977
        %v2077 = vpop.f32.mrb[0].mxu0
        %v2078 = vadd.f32 0.0, %v2077
        %v2079 = vpop.f32.mrb[0].mxu0
        %2080 = vmatprep.mubr.f32.mxu0 0.0
        %2081 = vmatmul.mubr.f32.gmra.mrb[0].mxu0 %v1980
        %v2082 = vpop.f32.mrb[0].mxu0
        %v2083 = vadd.f32 0.0, %v2082
        %v2084 = vpop.f32.mrb[0].mxu0
        %2085 = vmatprep.mubr.f32.mxu0 0.0
        %2086 = vmatmul.mubr.f32.gmra.mrb[0].mxu0 %v1983
        %v2087 = vpop.f32.mrb[0].mxu0
        %v2088 = vadd.f32 0.0, %v2087
        %v2089 = vpop.f32.mrb[0].mxu0
        %2090 = vmatprep.mubr.f32.mxu0 0.0
        %2091 = vmatmul.mubr.f32.gmra.mrb[0].mxu0 %v1986
        %v2092 = vpop.f32.mrb[0].mxu0
        %v2093 = vadd.f32 0.0, %v2092
        %v2094 = vpop.f32.mrb[0].mxu0
        %2095 = vdwg.mxu0
        %v2096 = vadd.f32 %v1915, %v2058
        %v2097 = vadd.f32 %v1920, %v2063
        %v2098 = vadd.f32 %v1925, %v2068
        %v2099 = vadd.f32 %v1930, %v2073
        %v2100 = vadd.f32 %v1935, %v2078
        %v2101 = vadd.f32 %v1940, %v2083
        %v2102 = vadd.f32 %v1945, %v2088
        %v2103 = vadd.f32 %v1950, %v2093
        %v2104 = vld [vmem:[%s1096] sm:$0xff]
        %v2105 = vld [vmem:[%s1096 + $0x10] sm:$0xff]
        %v2106 = vld [vmem:[%s1096 + $0x20] sm:$0xff]
        %v2107 = vld [vmem:[%s1096 + $0x30] sm:$0xff]
        %v2108 = vld [vmem:[%s1096 + $0x40] sm:$0xff]
        %v2109 = vld [vmem:[%s1096 + $0x50] sm:$0xff]
        %v2110 = vld [vmem:[%s1096 + $0x60] sm:$0xff]
        %v2111 = vld [vmem:[%s1096 + $0x70] sm:$0xff]
        %s2112 = scalar_lea.vmem %s6, 48
        %v2113 = vld [vmem:[%s2112] sm:$0xff]
        %v2114 = vld [vmem:[%s2112 + $0x8] sm:$0xf]
        %v2116 = vsel %vm1687, %v2104, 0
        %v2119 = vsel %vm1687, %v2105, 0
        %v2122 = vsel %vm1687, %v2106, 0
        %v2125 = vsel %vm1687, %v2107, 0
        %v2128 = vsel %vm1687, %v2108, 0
        %v2131 = vsel %vm1687, %v2109, 0
        %v2134 = vsel %vm1687, %v2110, 0
        %v2137 = vsel %vm1687, %v2111, 0
        %v2140 = vsel %vm1712, %v2114, 0
        %2142 = vmatprep.subr.mxu0 0.0
        %2143 = vmatpush1.msra.mxu0 %v2113
        %2144 = vmatprep.subr.mxu0 0.0
        %2145 = vmatpush1.msra.mxu0 %v2140
        %2146 = vmatprep.subr.mxu0 0.0
        %2147 = vmatpush1.msra.mxu0 0.0
        %2148 = vmatprep.subr.mxu0 0.0
        %2149 = vmatpush1.msra.mxu0 0.0
        %2150 = vmatprep.subr.mxu0 0.0
        %2151 = vmatpush1.msra.mxu0 0.0
        %2152 = vmatprep.subr.mxu0 0.0
        %2153 = vmatpush1.msra.mxu0 0.0
        %2154 = vmatprep.subr.mxu0 0.0
        %2155 = vmatpush1.msra.mxu0 0.0
        %2156 = vmatprep.subr.mxu0 0.0
        %2157 = vmatpush1.msra.mxu0 0.0
        %2158 = vmatprep.subr.mxu0 0.0
        %2159 = vmatpush1.msra.mxu0 0.0
        %2160 = vmatprep.subr.mxu0 0.0
        %2161 = vmatpush1.msra.mxu0 0.0
        %2162 = vmatprep.subr.mxu0 0.0
        %2163 = vmatpush1.msra.mxu0 0.0
        %2164 = vmatprep.subr.mxu0 0.0
        %2165 = vmatpush1.msra.mxu0 0.0
        %2166 = vmatprep.subr.mxu0 0.0
        %2167 = vmatpush1.msra.mxu0 0.0
        %2168 = vmatprep.subr.mxu0 0.0
        %2169 = vmatpush1.msra.mxu0 0.0
        %2170 = vmatprep.subr.mxu0 0.0
        %2171 = vmatpush1.msra.mxu0 0.0
        %2172 = vmatprep.subr.mxu0 0.0
        %2173 = vmatpush1.msra.mxu0 0.0
        %2174 = vmatprep.subr.mxu0 0.0
        %2175 = vmatpush1.msra.mxu0 0.0
        %2176 = vmatprep.subr.mxu0 0.0
        %2177 = vmatpush1.msra.mxu0 0.0
        %2178 = vmatprep.subr.mxu0 0.0
        %2179 = vmatpush1.msra.mxu0 0.0
        %2180 = vmatprep.subr.mxu0 0.0
        %2181 = vmatpush1.msra.mxu0 0.0
        %2182 = vmatprep.subr.mxu0 0.0
        %2183 = vmatpush1.msra.mxu0 0.0
        %2184 = vmatprep.subr.mxu0 0.0
        %2185 = vmatpush1.msra.mxu0 0.0
        %2186 = vmatprep.subr.mxu0 0.0
        %2187 = vmatpush1.msra.mxu0 0.0
        %2188 = vmatprep.subr.mxu0 0.0
        %2189 = vmatpush1.msra.mxu0 0.0
        %2190 = vmatprep.subr.mxu0 0.0
        %2191 = vmatpush1.msra.mxu0 0.0
        %2192 = vmatprep.subr.mxu0 0.0
        %2193 = vmatpush1.msra.mxu0 0.0
        %2194 = vmatprep.subr.mxu0 0.0
        %2195 = vmatpush1.msra.mxu0 0.0
        %2196 = vmatprep.subr.mxu0 0.0
        %2197 = vmatpush1.msra.mxu0 0.0
        %2198 = vmatprep.subr.mxu0 0.0
        %2199 = vmatpush1.msra.mxu0 0.0
        %2200 = vmatprep.subr.mxu0 0.0
        %2201 = vmatpush1.msra.mxu0 0.0
        %2202 = vmatprep.subr.mxu0 0.0
        %2203 = vmatpush1.msra.mxu0 0.0
        %2204 = vmatprep.subr.mxu0 0.0
        %2205 = vmatpush1.msra.mxu0 0.0
        %2206 = vmatprep.mubr.f32.mxu0 0.0
        %2207 = vmatmul.mubr.f32.gmra.mrb[0].mxu0 %v2116
        %v2208 = vpop.f32.mrb[0].mxu0
        %v2209 = vadd.f32 0.0, %v2208
        %v2210 = vpop.f32.mrb[0].mxu0
        %2211 = vmatprep.mubr.f32.mxu0 0.0
        %2212 = vmatmul.mubr.f32.gmra.mrb[0].mxu0 %v2119
        %v2213 = vpop.f32.mrb[0].mxu0
        %v2214 = vadd.f32 0.0, %v2213
        %v2215 = vpop.f32.mrb[0].mxu0
        %2216 = vmatprep.mubr.f32.mxu0 0.0
        %2217 = vmatmul.mubr.f32.gmra.mrb[0].mxu0 %v2122
        %v2218 = vpop.f32.mrb[0].mxu0
        %v2219 = vadd.f32 0.0, %v2218
        %v2220 = vpop.f32.mrb[0].mxu0
        %2221 = vmatprep.mubr.f32.mxu0 0.0
        %2222 = vmatmul.mubr.f32.gmra.mrb[0].mxu0 %v2125
        %v2223 = vpop.f32.mrb[0].mxu0
        %v2224 = vadd.f32 0.0, %v2223
        %v2225 = vpop.f32.mrb[0].mxu0
        %2226 = vmatprep.mubr.f32.mxu0 0.0
        %2227 = vmatmul.mubr.f32.gmra.mrb[0].mxu0 %v2128
        %v2228 = vpop.f32.mrb[0].mxu0
        %v2229 = vadd.f32 0.0, %v2228
        %v2230 = vpop.f32.mrb[0].mxu0
        %2231 = vmatprep.mubr.f32.mxu0 0.0
        %2232 = vmatmul.mubr.f32.gmra.mrb[0].mxu0 %v2131
        %v2233 = vpop.f32.mrb[0].mxu0
        %v2234 = vadd.f32 0.0, %v2233
        %v2235 = vpop.f32.mrb[0].mxu0
        %2236 = vmatprep.mubr.f32.mxu0 0.0
        %2237 = vmatmul.mubr.f32.gmra.mrb[0].mxu0 %v2134
        %v2238 = vpop.f32.mrb[0].mxu0
        %v2239 = vadd.f32 0.0, %v2238
        %v2240 = vpop.f32.mrb[0].mxu0
        %2241 = vmatprep.mubr.f32.mxu0 0.0
        %2242 = vmatmul.mubr.f32.gmra.mrb[0].mxu0 %v2137
        %v2243 = vpop.f32.mrb[0].mxu0
        %v2244 = vadd.f32 0.0, %v2243
        %v2245 = vpop.f32.mrb[0].mxu0
        %2246 = vdwg.mxu0
        %v2247 = vadd.f32 %v2096, %v2209
        %v2248 = vadd.f32 %v2097, %v2214
        %v2249 = vadd.f32 %v2098, %v2219
        %v2250 = vadd.f32 %v2099, %v2224
        %v2251 = vadd.f32 %v2100, %v2229
        %v2252 = vadd.f32 %v2101, %v2234
        %v2253 = vadd.f32 %v2102, %v2239
        %v2254 = vadd.f32 %v2103, %v2244
        %v2255 = vld [vmem:[%s1096 + $0x1] sm:$0xff]
        %v2256 = vld [vmem:[%s1096 + $0x11] sm:$0xff]
        %v2257 = vld [vmem:[%s1096 + $0x21] sm:$0xff]
        %v2258 = vld [vmem:[%s1096 + $0x31] sm:$0xff]
        %v2259 = vld [vmem:[%s1096 + $0x41] sm:$0xff]
        %v2260 = vld [vmem:[%s1096 + $0x51] sm:$0xff]
        %v2261 = vld [vmem:[%s1096 + $0x61] sm:$0xff]
        %v2262 = vld [vmem:[%s1096 + $0x71] sm:$0xff]
        %s2263 = scalar_lea.vmem %s6, 64
        %v2264 = vld [vmem:[%s2263] sm:$0xff]
        %v2265 = vld [vmem:[%s2263 + $0x8] sm:$0xf]
        %v2267 = vsel %vm1687, %v2255, 0
        %v2270 = vsel %vm1687, %v2256, 0
        %v2273 = vsel %vm1687, %v2257, 0
        %v2276 = vsel %vm1687, %v2258, 0
        %v2279 = vsel %vm1687, %v2259, 0
        %v2282 = vsel %vm1687, %v2260, 0
        %v2285 = vsel %vm1687, %v2261, 0
        %v2288 = vsel %vm1687, %v2262, 0
        %v2291 = vsel %vm1712, %v2265, 0
        %2293 = vmatprep.subr.mxu0 0.0
        %2294 = vmatpush1.msra.mxu0 %v2264
        %2295 = vmatprep.subr.mxu0 0.0
        %2296 = vmatpush1.msra.mxu0 %v2291
        %2297 = vmatprep.subr.mxu0 0.0
        %2298 = vmatpush1.msra.mxu0 0.0
        %2299 = vmatprep.subr.mxu0 0.0
        %2300 = vmatpush1.msra.mxu0 0.0
        %2301 = vmatprep.subr.mxu0 0.0
        %2302 = vmatpush1.msra.mxu0 0.0
        %2303 = vmatprep.subr.mxu0 0.0
        %2304 = vmatpush1.msra.mxu0 0.0
        %2305 = vmatprep.subr.mxu0 0.0
        %2306 = vmatpush1.msra.mxu0 0.0
        %2307 = vmatprep.subr.mxu0 0.0
        %2308 = vmatpush1.msra.mxu0 0.0
        %2309 = vmatprep.subr.mxu0 0.0
        %2310 = vmatpush1.msra.mxu0 0.0
        %2311 = vmatprep.subr.mxu0 0.0
        %2312 = vmatpush1.msra.mxu0 0.0
        %2313 = vmatprep.subr.mxu0 0.0
        %2314 = vmatpush1.msra.mxu0 0.0
        %2315 = vmatprep.subr.mxu0 0.0
        %2316 = vmatpush1.msra.mxu0 0.0
        %2317 = vmatprep.subr.mxu0 0.0
        %2318 = vmatpush1.msra.mxu0 0.0
        %2319 = vmatprep.subr.mxu0 0.0
        %2320 = vmatpush1.msra.mxu0 0.0
        %2321 = vmatprep.subr.mxu0 0.0
        %2322 = vmatpush1.msra.mxu0 0.0
        %2323 = vmatprep.subr.mxu0 0.0
        %2324 = vmatpush1.msra.mxu0 0.0
        %2325 = vmatprep.subr.mxu0 0.0
        %2326 = vmatpush1.msra.mxu0 0.0
        %2327 = vmatprep.subr.mxu0 0.0
        %2328 = vmatpush1.msra.mxu0 0.0
        %2329 = vmatprep.subr.mxu0 0.0
        %2330 = vmatpush1.msra.mxu0 0.0
        %2331 = vmatprep.subr.mxu0 0.0
        %2332 = vmatpush1.msra.mxu0 0.0
        %2333 = vmatprep.subr.mxu0 0.0
        %2334 = vmatpush1.msra.mxu0 0.0
        %2335 = vmatprep.subr.mxu0 0.0
        %2336 = vmatpush1.msra.mxu0 0.0
        %2337 = vmatprep.subr.mxu0 0.0
        %2338 = vmatpush1.msra.mxu0 0.0
        %2339 = vmatprep.subr.mxu0 0.0
        %2340 = vmatpush1.msra.mxu0 0.0
        %2341 = vmatprep.subr.mxu0 0.0
        %2342 = vmatpush1.msra.mxu0 0.0
        %2343 = vmatprep.subr.mxu0 0.0
        %2344 = vmatpush1.msra.mxu0 0.0
        %2345 = vmatprep.subr.mxu0 0.0
        %2346 = vmatpush1.msra.mxu0 0.0
        %2347 = vmatprep.subr.mxu0 0.0
        %2348 = vmatpush1.msra.mxu0 0.0
        %2349 = vmatprep.subr.mxu0 0.0
        %2350 = vmatpush1.msra.mxu0 0.0
        %2351 = vmatprep.subr.mxu0 0.0
        %2352 = vmatpush1.msra.mxu0 0.0
        %2353 = vmatprep.subr.mxu0 0.0
        %2354 = vmatpush1.msra.mxu0 0.0
        %2355 = vmatprep.subr.mxu0 0.0
        %2356 = vmatpush1.msra.mxu0 0.0
        %2357 = vmatprep.mubr.f32.mxu0 0.0
        %2358 = vmatmul.mubr.f32.gmra.mrb[0].mxu0 %v2267
        %v2359 = vpop.f32.mrb[0].mxu0
        %v2360 = vadd.f32 0.0, %v2359
        %v2361 = vpop.f32.mrb[0].mxu0
        %2362 = vmatprep.mubr.f32.mxu0 0.0
        %2363 = vmatmul.mubr.f32.gmra.mrb[0].mxu0 %v2270
        %v2364 = vpop.f32.mrb[0].mxu0
        %v2365 = vadd.f32 0.0, %v2364
        %v2366 = vpop.f32.mrb[0].mxu0
        %2367 = vmatprep.mubr.f32.mxu0 0.0
        %2368 = vmatmul.mubr.f32.gmra.mrb[0].mxu0 %v2273
        %v2369 = vpop.f32.mrb[0].mxu0
        %v2370 = vadd.f32 0.0, %v2369
        %v2371 = vpop.f32.mrb[0].mxu0
        %2372 = vmatprep.mubr.f32.mxu0 0.0
        %2373 = vmatmul.mubr.f32.gmra.mrb[0].mxu0 %v2276
        %v2374 = vpop.f32.mrb[0].mxu0
        %v2375 = vadd.f32 0.0, %v2374
        %v2376 = vpop.f32.mrb[0].mxu0
        %2377 = vmatprep.mubr.f32.mxu0 0.0
        %2378 = vmatmul.mubr.f32.gmra.mrb[0].mxu0 %v2279
        %v2379 = vpop.f32.mrb[0].mxu0
        %v2380 = vadd.f32 0.0, %v2379
        %v2381 = vpop.f32.mrb[0].mxu0
        %2382 = vmatprep.mubr.f32.mxu0 0.0
        %2383 = vmatmul.mubr.f32.gmra.mrb[0].mxu0 %v2282
        %v2384 = vpop.f32.mrb[0].mxu0
        %v2385 = vadd.f32 0.0, %v2384
        %v2386 = vpop.f32.mrb[0].mxu0
        %2387 = vmatprep.mubr.f32.mxu0 0.0
        %2388 = vmatmul.mubr.f32.gmra.mrb[0].mxu0 %v2285
        %v2389 = vpop.f32.mrb[0].mxu0
        %v2390 = vadd.f32 0.0, %v2389
        %v2391 = vpop.f32.mrb[0].mxu0
        %2392 = vmatprep.mubr.f32.mxu0 0.0
        %2393 = vmatmul.mubr.f32.gmra.mrb[0].mxu0 %v2288
        %v2394 = vpop.f32.mrb[0].mxu0
        %v2395 = vadd.f32 0.0, %v2394
        %v2396 = vpop.f32.mrb[0].mxu0
        %2397 = vdwg.mxu0
        %v2398 = vadd.f32 %v2247, %v2360
        %v2399 = vadd.f32 %v2248, %v2365
        %v2400 = vadd.f32 %v2249, %v2370
        %v2401 = vadd.f32 %v2250, %v2375
        %v2402 = vadd.f32 %v2251, %v2380
        %v2403 = vadd.f32 %v2252, %v2385
        %v2404 = vadd.f32 %v2253, %v2390
        %v2405 = vadd.f32 %v2254, %v2395
        %v2406 = vld [vmem:[%s1096 + $0x2] sm:$0xff]
        %v2407 = vld [vmem:[%s1096 + $0x12] sm:$0xff]
        %v2408 = vld [vmem:[%s1096 + $0x22] sm:$0xff]
        %v2409 = vld [vmem:[%s1096 + $0x32] sm:$0xff]
        %v2410 = vld [vmem:[%s1096 + $0x42] sm:$0xff]
        %v2411 = vld [vmem:[%s1096 + $0x52] sm:$0xff]
        %v2412 = vld [vmem:[%s1096 + $0x62] sm:$0xff]
        %v2413 = vld [vmem:[%s1096 + $0x72] sm:$0xff]
        %s2414 = scalar_lea.vmem %s6, 80
        %v2415 = vld [vmem:[%s2414] sm:$0xff]
        %v2416 = vld [vmem:[%s2414 + $0x8] sm:$0xf]
        %v2418 = vsel %vm1687, %v2406, 0
        %v2421 = vsel %vm1687, %v2407, 0
        %v2424 = vsel %vm1687, %v2408, 0
        %v2427 = vsel %vm1687, %v2409, 0
        %v2430 = vsel %vm1687, %v2410, 0
        %v2433 = vsel %vm1687, %v2411, 0
        %v2436 = vsel %vm1687, %v2412, 0
        %v2439 = vsel %vm1687, %v2413, 0
        %v2442 = vsel %vm1712, %v2416, 0
        %2444 = vmatprep.subr.mxu0 0.0
        %2445 = vmatpush1.msra.mxu0 %v2415
        %2446 = vmatprep.subr.mxu0 0.0
        %2447 = vmatpush1.msra.mxu0 %v2442
        %2448 = vmatprep.subr.mxu0 0.0
        %2449 = vmatpush1.msra.mxu0 0.0
        %2450 = vmatprep.subr.mxu0 0.0
        %2451 = vmatpush1.msra.mxu0 0.0
        %2452 = vmatprep.subr.mxu0 0.0
        %2453 = vmatpush1.msra.mxu0 0.0
        %2454 = vmatprep.subr.mxu0 0.0
        %2455 = vmatpush1.msra.mxu0 0.0
        %2456 = vmatprep.subr.mxu0 0.0
        %2457 = vmatpush1.msra.mxu0 0.0
        %2458 = vmatprep.subr.mxu0 0.0
        %2459 = vmatpush1.msra.mxu0 0.0
        %2460 = vmatprep.subr.mxu0 0.0
        %2461 = vmatpush1.msra.mxu0 0.0
        %2462 = vmatprep.subr.mxu0 0.0
        %2463 = vmatpush1.msra.mxu0 0.0
        %2464 = vmatprep.subr.mxu0 0.0
        %2465 = vmatpush1.msra.mxu0 0.0
        %2466 = vmatprep.subr.mxu0 0.0
        %2467 = vmatpush1.msra.mxu0 0.0
        %2468 = vmatprep.subr.mxu0 0.0
        %2469 = vmatpush1.msra.mxu0 0.0
        %2470 = vmatprep.subr.mxu0 0.0
        %2471 = vmatpush1.msra.mxu0 0.0
        %2472 = vmatprep.subr.mxu0 0.0
        %2473 = vmatpush1.msra.mxu0 0.0
        %2474 = vmatprep.subr.mxu0 0.0
        %2475 = vmatpush1.msra.mxu0 0.0
        %2476 = vmatprep.subr.mxu0 0.0
        %2477 = vmatpush1.msra.mxu0 0.0
        %2478 = vmatprep.subr.mxu0 0.0
        %2479 = vmatpush1.msra.mxu0 0.0
        %2480 = vmatprep.subr.mxu0 0.0
        %2481 = vmatpush1.msra.mxu0 0.0
        %2482 = vmatprep.subr.mxu0 0.0
        %2483 = vmatpush1.msra.mxu0 0.0
        %2484 = vmatprep.subr.mxu0 0.0
        %2485 = vmatpush1.msra.mxu0 0.0
        %2486 = vmatprep.subr.mxu0 0.0
        %2487 = vmatpush1.msra.mxu0 0.0
        %2488 = vmatprep.subr.mxu0 0.0
        %2489 = vmatpush1.msra.mxu0 0.0
        %2490 = vmatprep.subr.mxu0 0.0
        %2491 = vmatpush1.msra.mxu0 0.0
        %2492 = vmatprep.subr.mxu0 0.0
        %2493 = vmatpush1.msra.mxu0 0.0
        %2494 = vmatprep.subr.mxu0 0.0
        %2495 = vmatpush1.msra.mxu0 0.0
        %2496 = vmatprep.subr.mxu0 0.0
        %2497 = vmatpush1.msra.mxu0 0.0
        %2498 = vmatprep.subr.mxu0 0.0
        %2499 = vmatpush1.msra.mxu0 0.0
        %2500 = vmatprep.subr.mxu0 0.0
        %2501 = vmatpush1.msra.mxu0 0.0
        %2502 = vmatprep.subr.mxu0 0.0
        %2503 = vmatpush1.msra.mxu0 0.0
        %2504 = vmatprep.subr.mxu0 0.0
        %2505 = vmatpush1.msra.mxu0 0.0
        %2506 = vmatprep.subr.mxu0 0.0
        %2507 = vmatpush1.msra.mxu0 0.0
        %2508 = vmatprep.mubr.f32.mxu0 0.0
        %2509 = vmatmul.mubr.f32.gmra.mrb[0].mxu0 %v2418
        %v2510 = vpop.f32.mrb[0].mxu0
        %v2511 = vadd.f32 0.0, %v2510
        %v2512 = vpop.f32.mrb[0].mxu0
        %2513 = vmatprep.mubr.f32.mxu0 0.0
        %2514 = vmatmul.mubr.f32.gmra.mrb[0].mxu0 %v2421
        %v2515 = vpop.f32.mrb[0].mxu0
        %v2516 = vadd.f32 0.0, %v2515
        %v2517 = vpop.f32.mrb[0].mxu0
        %2518 = vmatprep.mubr.f32.mxu0 0.0
        %2519 = vmatmul.mubr.f32.gmra.mrb[0].mxu0 %v2424
        %v2520 = vpop.f32.mrb[0].mxu0
        %v2521 = vadd.f32 0.0, %v2520
        %v2522 = vpop.f32.mrb[0].mxu0
        %2523 = vmatprep.mubr.f32.mxu0 0.0
        %2524 = vmatmul.mubr.f32.gmra.mrb[0].mxu0 %v2427
        %v2525 = vpop.f32.mrb[0].mxu0
        %v2526 = vadd.f32 0.0, %v2525
        %v2527 = vpop.f32.mrb[0].mxu0
        %2528 = vmatprep.mubr.f32.mxu0 0.0
        %2529 = vmatmul.mubr.f32.gmra.mrb[0].mxu0 %v2430
        %v2530 = vpop.f32.mrb[0].mxu0
        %v2531 = vadd.f32 0.0, %v2530
        %v2532 = vpop.f32.mrb[0].mxu0
        %2533 = vmatprep.mubr.f32.mxu0 0.0
        %2534 = vmatmul.mubr.f32.gmra.mrb[0].mxu0 %v2433
        %v2535 = vpop.f32.mrb[0].mxu0
        %v2536 = vadd.f32 0.0, %v2535
        %v2537 = vpop.f32.mrb[0].mxu0
        %2538 = vmatprep.mubr.f32.mxu0 0.0
        %2539 = vmatmul.mubr.f32.gmra.mrb[0].mxu0 %v2436
        %v2540 = vpop.f32.mrb[0].mxu0
        %v2541 = vadd.f32 0.0, %v2540
        %v2542 = vpop.f32.mrb[0].mxu0
        %2543 = vmatprep.mubr.f32.mxu0 0.0
        %2544 = vmatmul.mubr.f32.gmra.mrb[0].mxu0 %v2439
        %v2545 = vpop.f32.mrb[0].mxu0
        %v2546 = vadd.f32 0.0, %v2545
        %v2547 = vpop.f32.mrb[0].mxu0
        %2548 = vdwg.mxu0
        %v2549 = vadd.f32 %v2398, %v2511
        %v2550 = vadd.f32 %v2399, %v2516
        %v2551 = vadd.f32 %v2400, %v2521
        %v2552 = vadd.f32 %v2401, %v2526
        %v2553 = vadd.f32 %v2402, %v2531
        %v2554 = vadd.f32 %v2403, %v2536
        %v2555 = vadd.f32 %v2404, %v2541
        %v2556 = vadd.f32 %v2405, %v2546
        %s2557 = scalar_lea.vmem [#allocation2], 32
        %v2558 = vld [vmem:[%s2557] sm:$0xff]
        %v2559 = vld [vmem:[%s2557 + $0x10] sm:$0xff]
        %v2560 = vld [vmem:[%s2557 + $0x20] sm:$0xff]
        %v2561 = vld [vmem:[%s2557 + $0x30] sm:$0xff]
        %v2562 = vld [vmem:[%s2557 + $0x40] sm:$0xff]
        %v2563 = vld [vmem:[%s2557 + $0x50] sm:$0xff]
        %v2564 = vld [vmem:[%s2557 + $0x60] sm:$0xff]
        %v2565 = vld [vmem:[%s2557 + $0x70] sm:$0xff]
        %s2566 = scalar_lea.vmem %s6, 96
        %v2567 = vld [vmem:[%s2566] sm:$0xff]
        %v2568 = vld [vmem:[%s2566 + $0x8] sm:$0xf]
        %v2570 = vsel %vm1687, %v2558, 0
        %v2573 = vsel %vm1687, %v2559, 0
        %v2576 = vsel %vm1687, %v2560, 0
        %v2579 = vsel %vm1687, %v2561, 0
        %v2582 = vsel %vm1687, %v2562, 0
        %v2585 = vsel %vm1687, %v2563, 0
        %v2588 = vsel %vm1687, %v2564, 0
        %v2591 = vsel %vm1687, %v2565, 0
        %v2594 = vsel %vm1712, %v2568, 0
        %2596 = vmatprep.subr.mxu0 0.0
        %2597 = vmatpush1.msra.mxu0 %v2567
        %2598 = vmatprep.subr.mxu0 0.0
        %2599 = vmatpush1.msra.mxu0 %v2594
        %2600 = vmatprep.subr.mxu0 0.0
        %2601 = vmatpush1.msra.mxu0 0.0
        %2602 = vmatprep.subr.mxu0 0.0
        %2603 = vmatpush1.msra.mxu0 0.0
        %2604 = vmatprep.subr.mxu0 0.0
        %2605 = vmatpush1.msra.mxu0 0.0
        %2606 = vmatprep.subr.mxu0 0.0
        %2607 = vmatpush1.msra.mxu0 0.0
        %2608 = vmatprep.subr.mxu0 0.0
        %2609 = vmatpush1.msra.mxu0 0.0
        %2610 = vmatprep.subr.mxu0 0.0
        %2611 = vmatpush1.msra.mxu0 0.0
        %2612 = vmatprep.subr.mxu0 0.0
        %2613 = vmatpush1.msra.mxu0 0.0
        %2614 = vmatprep.subr.mxu0 0.0
        %2615 = vmatpush1.msra.mxu0 0.0
        %2616 = vmatprep.subr.mxu0 0.0
        %2617 = vmatpush1.msra.mxu0 0.0
        %2618 = vmatprep.subr.mxu0 0.0
        %2619 = vmatpush1.msra.mxu0 0.0
        %2620 = vmatprep.subr.mxu0 0.0
        %2621 = vmatpush1.msra.mxu0 0.0
        %2622 = vmatprep.subr.mxu0 0.0
        %2623 = vmatpush1.msra.mxu0 0.0
        %2624 = vmatprep.subr.mxu0 0.0
        %2625 = vmatpush1.msra.mxu0 0.0
        %2626 = vmatprep.subr.mxu0 0.0
        %2627 = vmatpush1.msra.mxu0 0.0
        %2628 = vmatprep.subr.mxu0 0.0
        %2629 = vmatpush1.msra.mxu0 0.0
        %2630 = vmatprep.subr.mxu0 0.0
        %2631 = vmatpush1.msra.mxu0 0.0
        %2632 = vmatprep.subr.mxu0 0.0
        %2633 = vmatpush1.msra.mxu0 0.0
        %2634 = vmatprep.subr.mxu0 0.0
        %2635 = vmatpush1.msra.mxu0 0.0
        %2636 = vmatprep.subr.mxu0 0.0
        %2637 = vmatpush1.msra.mxu0 0.0
        %2638 = vmatprep.subr.mxu0 0.0
        %2639 = vmatpush1.msra.mxu0 0.0
        %2640 = vmatprep.subr.mxu0 0.0
        %2641 = vmatpush1.msra.mxu0 0.0
        %2642 = vmatprep.subr.mxu0 0.0
        %2643 = vmatpush1.msra.mxu0 0.0
        %2644 = vmatprep.subr.mxu0 0.0
        %2645 = vmatpush1.msra.mxu0 0.0
        %2646 = vmatprep.subr.mxu0 0.0
        %2647 = vmatpush1.msra.mxu0 0.0
        %2648 = vmatprep.subr.mxu0 0.0
        %2649 = vmatpush1.msra.mxu0 0.0
        %2650 = vmatprep.subr.mxu0 0.0
        %2651 = vmatpush1.msra.mxu0 0.0
        %2652 = vmatprep.subr.mxu0 0.0
        %2653 = vmatpush1.msra.mxu0 0.0
        %2654 = vmatprep.subr.mxu0 0.0
        %2655 = vmatpush1.msra.mxu0 0.0
        %2656 = vmatprep.subr.mxu0 0.0
        %2657 = vmatpush1.msra.mxu0 0.0
        %2658 = vmatprep.subr.mxu0 0.0
        %2659 = vmatpush1.msra.mxu0 0.0
        %2660 = vmatprep.mubr.f32.mxu0 0.0
        %2661 = vmatmul.mubr.f32.gmra.mrb[0].mxu0 %v2570
        %v2662 = vpop.f32.mrb[0].mxu0
        %v2663 = vadd.f32 0.0, %v2662
        %v2664 = vpop.f32.mrb[0].mxu0
        %2665 = vmatprep.mubr.f32.mxu0 0.0
        %2666 = vmatmul.mubr.f32.gmra.mrb[0].mxu0 %v2573
        %v2667 = vpop.f32.mrb[0].mxu0
        %v2668 = vadd.f32 0.0, %v2667
        %v2669 = vpop.f32.mrb[0].mxu0
        %2670 = vmatprep.mubr.f32.mxu0 0.0
        %2671 = vmatmul.mubr.f32.gmra.mrb[0].mxu0 %v2576
        %v2672 = vpop.f32.mrb[0].mxu0
        %v2673 = vadd.f32 0.0, %v2672
        %v2674 = vpop.f32.mrb[0].mxu0
        %2675 = vmatprep.mubr.f32.mxu0 0.0
        %2676 = vmatmul.mubr.f32.gmra.mrb[0].mxu0 %v2579
        %v2677 = vpop.f32.mrb[0].mxu0
        %v2678 = vadd.f32 0.0, %v2677
        %v2679 = vpop.f32.mrb[0].mxu0
        %2680 = vmatprep.mubr.f32.mxu0 0.0
        %2681 = vmatmul.mubr.f32.gmra.mrb[0].mxu0 %v2582
        %v2682 = vpop.f32.mrb[0].mxu0
        %v2683 = vadd.f32 0.0, %v2682
        %v2684 = vpop.f32.mrb[0].mxu0
        %2685 = vmatprep.mubr.f32.mxu0 0.0
        %2686 = vmatmul.mubr.f32.gmra.mrb[0].mxu0 %v2585
        %v2687 = vpop.f32.mrb[0].mxu0
        %v2688 = vadd.f32 0.0, %v2687
        %v2689 = vpop.f32.mrb[0].mxu0
        %2690 = vmatprep.mubr.f32.mxu0 0.0
        %2691 = vmatmul.mubr.f32.gmra.mrb[0].mxu0 %v2588
        %v2692 = vpop.f32.mrb[0].mxu0
        %v2693 = vadd.f32 0.0, %v2692
        %v2694 = vpop.f32.mrb[0].mxu0
        %2695 = vmatprep.mubr.f32.mxu0 0.0
        %2696 = vmatmul.mubr.f32.gmra.mrb[0].mxu0 %v2591
        %v2697 = vpop.f32.mrb[0].mxu0
        %v2698 = vadd.f32 0.0, %v2697
        %v2699 = vpop.f32.mrb[0].mxu0
        %2700 = vdwg.mxu0
        %v2701 = vadd.f32 %v2549, %v2663
        %v2702 = vadd.f32 %v2550, %v2668
        %v2703 = vadd.f32 %v2551, %v2673
        %v2704 = vadd.f32 %v2552, %v2678
        %v2705 = vadd.f32 %v2553, %v2683
        %v2706 = vadd.f32 %v2554, %v2688
        %v2707 = vadd.f32 %v2555, %v2693
        %v2708 = vadd.f32 %v2556, %v2698
        %v2709 = vld [vmem:[%s2557 + $0x1] sm:$0xff]
        %v2710 = vld [vmem:[%s2557 + $0x11] sm:$0xff]
        %v2711 = vld [vmem:[%s2557 + $0x21] sm:$0xff]
        %v2712 = vld [vmem:[%s2557 + $0x31] sm:$0xff]
        %v2713 = vld [vmem:[%s2557 + $0x41] sm:$0xff]
        %v2714 = vld [vmem:[%s2557 + $0x51] sm:$0xff]
        %v2715 = vld [vmem:[%s2557 + $0x61] sm:$0xff]
        %v2716 = vld [vmem:[%s2557 + $0x71] sm:$0xff]
        %s2717 = scalar_lea.vmem %s6, 112
        %v2718 = vld [vmem:[%s2717] sm:$0xff]
        %v2719 = vld [vmem:[%s2717 + $0x8] sm:$0xf]
        %v2721 = vsel %vm1687, %v2709, 0
        %v2724 = vsel %vm1687, %v2710, 0
        %v2727 = vsel %vm1687, %v2711, 0
        %v2730 = vsel %vm1687, %v2712, 0
        %v2733 = vsel %vm1687, %v2713, 0
        %v2736 = vsel %vm1687, %v2714, 0
        %v2739 = vsel %vm1687, %v2715, 0
        %v2742 = vsel %vm1687, %v2716, 0
        %v2745 = vsel %vm1712, %v2719, 0
        %2747 = vmatprep.subr.mxu0 0.0
        %2748 = vmatpush1.msra.mxu0 %v2718
        %2749 = vmatprep.subr.mxu0 0.0
        %2750 = vmatpush1.msra.mxu0 %v2745
        %2751 = vmatprep.subr.mxu0 0.0
        %2752 = vmatpush1.msra.mxu0 0.0
        %2753 = vmatprep.subr.mxu0 0.0
        %2754 = vmatpush1.msra.mxu0 0.0
        %2755 = vmatprep.subr.mxu0 0.0
        %2756 = vmatpush1.msra.mxu0 0.0
        %2757 = vmatprep.subr.mxu0 0.0
        %2758 = vmatpush1.msra.mxu0 0.0
        %2759 = vmatprep.subr.mxu0 0.0
        %2760 = vmatpush1.msra.mxu0 0.0
        %2761 = vmatprep.subr.mxu0 0.0
        %2762 = vmatpush1.msra.mxu0 0.0
        %2763 = vmatprep.subr.mxu0 0.0
        %2764 = vmatpush1.msra.mxu0 0.0
        %2765 = vmatprep.subr.mxu0 0.0
        %2766 = vmatpush1.msra.mxu0 0.0
        %2767 = vmatprep.subr.mxu0 0.0
        %2768 = vmatpush1.msra.mxu0 0.0
        %2769 = vmatprep.subr.mxu0 0.0
        %2770 = vmatpush1.msra.mxu0 0.0
        %2771 = vmatprep.subr.mxu0 0.0
        %2772 = vmatpush1.msra.mxu0 0.0
        %2773 = vmatprep.subr.mxu0 0.0
        %2774 = vmatpush1.msra.mxu0 0.0
        %2775 = vmatprep.subr.mxu0 0.0
        %2776 = vmatpush1.msra.mxu0 0.0
        %2777 = vmatprep.subr.mxu0 0.0
        %2778 = vmatpush1.msra.mxu0 0.0
        %2779 = vmatprep.subr.mxu0 0.0
        %2780 = vmatpush1.msra.mxu0 0.0
        %2781 = vmatprep.subr.mxu0 0.0
        %2782 = vmatpush1.msra.mxu0 0.0
        %2783 = vmatprep.subr.mxu0 0.0
        %2784 = vmatpush1.msra.mxu0 0.0
        %2785 = vmatprep.subr.mxu0 0.0
        %2786 = vmatpush1.msra.mxu0 0.0
        %2787 = vmatprep.subr.mxu0 0.0
        %2788 = vmatpush1.msra.mxu0 0.0
        %2789 = vmatprep.subr.mxu0 0.0
        %2790 = vmatpush1.msra.mxu0 0.0
        %2791 = vmatprep.subr.mxu0 0.0
        %2792 = vmatpush1.msra.mxu0 0.0
        %2793 = vmatprep.subr.mxu0 0.0
        %2794 = vmatpush1.msra.mxu0 0.0
        %2795 = vmatprep.subr.mxu0 0.0
        %2796 = vmatpush1.msra.mxu0 0.0
        %2797 = vmatprep.subr.mxu0 0.0
        %2798 = vmatpush1.msra.mxu0 0.0
        %2799 = vmatprep.subr.mxu0 0.0
        %2800 = vmatpush1.msra.mxu0 0.0
        %2801 = vmatprep.subr.mxu0 0.0
        %2802 = vmatpush1.msra.mxu0 0.0
        %2803 = vmatprep.subr.mxu0 0.0
        %2804 = vmatpush1.msra.mxu0 0.0
        %2805 = vmatprep.subr.mxu0 0.0
        %2806 = vmatpush1.msra.mxu0 0.0
        %2807 = vmatprep.subr.mxu0 0.0
        %2808 = vmatpush1.msra.mxu0 0.0
        %2809 = vmatprep.subr.mxu0 0.0
        %2810 = vmatpush1.msra.mxu0 0.0
        %2811 = vmatprep.mubr.f32.mxu0 0.0
        %2812 = vmatmul.mubr.f32.gmra.mrb[0].mxu0 %v2721
        %v2813 = vpop.f32.mrb[0].mxu0
        %v2814 = vadd.f32 0.0, %v2813
        %v2815 = vpop.f32.mrb[0].mxu0
        %2816 = vmatprep.mubr.f32.mxu0 0.0
        %2817 = vmatmul.mubr.f32.gmra.mrb[0].mxu0 %v2724
        %v2818 = vpop.f32.mrb[0].mxu0
        %v2819 = vadd.f32 0.0, %v2818
        %v2820 = vpop.f32.mrb[0].mxu0
        %2821 = vmatprep.mubr.f32.mxu0 0.0
        %2822 = vmatmul.mubr.f32.gmra.mrb[0].mxu0 %v2727
        %v2823 = vpop.f32.mrb[0].mxu0
        %v2824 = vadd.f32 0.0, %v2823
        %v2825 = vpop.f32.mrb[0].mxu0
        %2826 = vmatprep.mubr.f32.mxu0 0.0
        %2827 = vmatmul.mubr.f32.gmra.mrb[0].mxu0 %v2730
        %v2828 = vpop.f32.mrb[0].mxu0
        %v2829 = vadd.f32 0.0, %v2828
        %v2830 = vpop.f32.mrb[0].mxu0
        %2831 = vmatprep.mubr.f32.mxu0 0.0
        %2832 = vmatmul.mubr.f32.gmra.mrb[0].mxu0 %v2733
        %v2833 = vpop.f32.mrb[0].mxu0
        %v2834 = vadd.f32 0.0, %v2833
        %v2835 = vpop.f32.mrb[0].mxu0
        %2836 = vmatprep.mubr.f32.mxu0 0.0
        %2837 = vmatmul.mubr.f32.gmra.mrb[0].mxu0 %v2736
        %v2838 = vpop.f32.mrb[0].mxu0
        %v2839 = vadd.f32 0.0, %v2838
        %v2840 = vpop.f32.mrb[0].mxu0
        %2841 = vmatprep.mubr.f32.mxu0 0.0
        %2842 = vmatmul.mubr.f32.gmra.mrb[0].mxu0 %v2739
        %v2843 = vpop.f32.mrb[0].mxu0
        %v2844 = vadd.f32 0.0, %v2843
        %v2845 = vpop.f32.mrb[0].mxu0
        %2846 = vmatprep.mubr.f32.mxu0 0.0
        %2847 = vmatmul.mubr.f32.gmra.mrb[0].mxu0 %v2742
        %v2848 = vpop.f32.mrb[0].mxu0
        %v2849 = vadd.f32 0.0, %v2848
        %v2850 = vpop.f32.mrb[0].mxu0
        %2851 = vdwg.mxu0
        %v2852 = vadd.f32 %v2701, %v2814
        %v2853 = vadd.f32 %v2702, %v2819
        %v2854 = vadd.f32 %v2703, %v2824
        %v2855 = vadd.f32 %v2704, %v2829
        %v2856 = vadd.f32 %v2705, %v2834
        %v2857 = vadd.f32 %v2706, %v2839
        %v2858 = vadd.f32 %v2707, %v2844
        %v2859 = vadd.f32 %v2708, %v2849
        %v2860 = vld [vmem:[%s2557 + $0x2] sm:$0xff]
        %v2861 = vld [vmem:[%s2557 + $0x12] sm:$0xff]
        %v2862 = vld [vmem:[%s2557 + $0x22] sm:$0xff]
        %v2863 = vld [vmem:[%s2557 + $0x32] sm:$0xff]
        %v2864 = vld [vmem:[%s2557 + $0x42] sm:$0xff]
        %v2865 = vld [vmem:[%s2557 + $0x52] sm:$0xff]
        %v2866 = vld [vmem:[%s2557 + $0x62] sm:$0xff]
        %v2867 = vld [vmem:[%s2557 + $0x72] sm:$0xff]
        %s2868 = scalar_lea.vmem %s6, 128
        %v2869 = vld [vmem:[%s2868] sm:$0xff]
        %v2870 = vld [vmem:[%s2868 + $0x8] sm:$0xf]
        %v2872 = vsel %vm1687, %v2860, 0
        %v2875 = vsel %vm1687, %v2861, 0
        %v2878 = vsel %vm1687, %v2862, 0
        %v2881 = vsel %vm1687, %v2863, 0
        %v2884 = vsel %vm1687, %v2864, 0
        %v2887 = vsel %vm1687, %v2865, 0
        %v2890 = vsel %vm1687, %v2866, 0
        %v2893 = vsel %vm1687, %v2867, 0
        %v2896 = vsel %vm1712, %v2870, 0
        %2898 = vmatprep.subr.mxu0 0.0
        %2899 = vmatpush1.msra.mxu0 %v2869
        %2900 = vmatprep.subr.mxu0 0.0
        %2901 = vmatpush1.msra.mxu0 %v2896
        %2902 = vmatprep.subr.mxu0 0.0
        %2903 = vmatpush1.msra.mxu0 0.0
        %2904 = vmatprep.subr.mxu0 0.0
        %2905 = vmatpush1.msra.mxu0 0.0
        %2906 = vmatprep.subr.mxu0 0.0
        %2907 = vmatpush1.msra.mxu0 0.0
        %2908 = vmatprep.subr.mxu0 0.0
        %2909 = vmatpush1.msra.mxu0 0.0
        %2910 = vmatprep.subr.mxu0 0.0
        %2911 = vmatpush1.msra.mxu0 0.0
        %2912 = vmatprep.subr.mxu0 0.0
        %2913 = vmatpush1.msra.mxu0 0.0
        %2914 = vmatprep.subr.mxu0 0.0
        %2915 = vmatpush1.msra.mxu0 0.0
        %2916 = vmatprep.subr.mxu0 0.0
        %2917 = vmatpush1.msra.mxu0 0.0
        %2918 = vmatprep.subr.mxu0 0.0
        %2919 = vmatpush1.msra.mxu0 0.0
        %2920 = vmatprep.subr.mxu0 0.0
        %2921 = vmatpush1.msra.mxu0 0.0
        %2922 = vmatprep.subr.mxu0 0.0
        %2923 = vmatpush1.msra.mxu0 0.0
        %2924 = vmatprep.subr.mxu0 0.0
        %2925 = vmatpush1.msra.mxu0 0.0
        %2926 = vmatprep.subr.mxu0 0.0
        %2927 = vmatpush1.msra.mxu0 0.0
        %2928 = vmatprep.subr.mxu0 0.0
        %2929 = vmatpush1.msra.mxu0 0.0
        %2930 = vmatprep.subr.mxu0 0.0
        %2931 = vmatpush1.msra.mxu0 0.0
        %2932 = vmatprep.subr.mxu0 0.0
        %2933 = vmatpush1.msra.mxu0 0.0
        %2934 = vmatprep.subr.mxu0 0.0
        %2935 = vmatpush1.msra.mxu0 0.0
        %2936 = vmatprep.subr.mxu0 0.0
        %2937 = vmatpush1.msra.mxu0 0.0
        %2938 = vmatprep.subr.mxu0 0.0
        %2939 = vmatpush1.msra.mxu0 0.0
        %2940 = vmatprep.subr.mxu0 0.0
        %2941 = vmatpush1.msra.mxu0 0.0
        %2942 = vmatprep.subr.mxu0 0.0
        %2943 = vmatpush1.msra.mxu0 0.0
        %2944 = vmatprep.subr.mxu0 0.0
        %2945 = vmatpush1.msra.mxu0 0.0
        %2946 = vmatprep.subr.mxu0 0.0
        %2947 = vmatpush1.msra.mxu0 0.0
        %2948 = vmatprep.subr.mxu0 0.0
        %2949 = vmatpush1.msra.mxu0 0.0
        %2950 = vmatprep.subr.mxu0 0.0
        %2951 = vmatpush1.msra.mxu0 0.0
        %2952 = vmatprep.subr.mxu0 0.0
        %2953 = vmatpush1.msra.mxu0 0.0
        %2954 = vmatprep.subr.mxu0 0.0
        %2955 = vmatpush1.msra.mxu0 0.0
        %2956 = vmatprep.subr.mxu0 0.0
        %2957 = vmatpush1.msra.mxu0 0.0
        %2958 = vmatprep.subr.mxu0 0.0
        %2959 = vmatpush1.msra.mxu0 0.0
        %2960 = vmatprep.subr.mxu0 0.0
        %2961 = vmatpush1.msra.mxu0 0.0
        %2962 = vmatprep.mubr.f32.mxu0 0.0
        %2963 = vmatmul.mubr.f32.gmra.mrb[0].mxu0 %v2872
        %v2964 = vpop.f32.mrb[0].mxu0
        %v2965 = vadd.f32 0.0, %v2964
        %v2966 = vpop.f32.mrb[0].mxu0
        %2967 = vmatprep.mubr.f32.mxu0 0.0
        %2968 = vmatmul.mubr.f32.gmra.mrb[0].mxu0 %v2875
        %v2969 = vpop.f32.mrb[0].mxu0
        %v2970 = vadd.f32 0.0, %v2969
        %v2971 = vpop.f32.mrb[0].mxu0
        %2972 = vmatprep.mubr.f32.mxu0 0.0
        %2973 = vmatmul.mubr.f32.gmra.mrb[0].mxu0 %v2878
        %v2974 = vpop.f32.mrb[0].mxu0
        %v2975 = vadd.f32 0.0, %v2974
        %v2976 = vpop.f32.mrb[0].mxu0
        %2977 = vmatprep.mubr.f32.mxu0 0.0
        %2978 = vmatmul.mubr.f32.gmra.mrb[0].mxu0 %v2881
        %v2979 = vpop.f32.mrb[0].mxu0
        %v2980 = vadd.f32 0.0, %v2979
        %v2981 = vpop.f32.mrb[0].mxu0
        %2982 = vmatprep.mubr.f32.mxu0 0.0
        %2983 = vmatmul.mubr.f32.gmra.mrb[0].mxu0 %v2884
        %v2984 = vpop.f32.mrb[0].mxu0
        %v2985 = vadd.f32 0.0, %v2984
        %v2986 = vpop.f32.mrb[0].mxu0
        %2987 = vmatprep.mubr.f32.mxu0 0.0
        %2988 = vmatmul.mubr.f32.gmra.mrb[0].mxu0 %v2887
        %v2989 = vpop.f32.mrb[0].mxu0
        %v2990 = vadd.f32 0.0, %v2989
        %v2991 = vpop.f32.mrb[0].mxu0
        %2992 = vmatprep.mubr.f32.mxu0 0.0
        %2993 = vmatmul.mubr.f32.gmra.mrb[0].mxu0 %v2890
        %v2994 = vpop.f32.mrb[0].mxu0
        %v2995 = vadd.f32 0.0, %v2994
        %v2996 = vpop.f32.mrb[0].mxu0
        %2997 = vmatprep.mubr.f32.mxu0 0.0
        %2998 = vmatmul.mubr.f32.gmra.mrb[0].mxu0 %v2893
        %v2999 = vpop.f32.mrb[0].mxu0
        %v3000 = vadd.f32 0.0, %v2999
        %v3001 = vpop.f32.mrb[0].mxu0
        %3002 = vdwg.mxu0
        %v3003 = vadd.f32 %v2852, %v2965
        %v3004 = vadd.f32 %v2853, %v2970
        %v3005 = vadd.f32 %v2854, %v2975
        %v3006 = vadd.f32 %v2855, %v2980
        %v3007 = vadd.f32 %v2856, %v2985
        %v3008 = vadd.f32 %v2857, %v2990
        %v3009 = vadd.f32 %v2858, %v2995
        %v3010 = vadd.f32 %v2859, %v3000
        %v3012 = vlaneseq
        %v3013 = vshrl.u32 %v3012, 7
        %v3014 = vsub.s32 0, %v3013
        %v3015 = vrot.slane %v1661, %v3014
        %v3017 = vmul.f32 %v3003, %v3015
        %v3018 = vmul.f32 %v3004, %v3015
        %v3019 = vmul.f32 %v3005, %v3015
        %v3020 = vmul.f32 %v3006, %v3015
        %v3021 = vmul.f32 %v3007, %v3015
        %v3022 = vmul.f32 %v3008, %v3015
        %v3023 = vmul.f32 %v3009, %v3015
        %v3024 = vmul.f32 %v3010, %v3015
        %v3026 = vlaneseq
        %v3027 = vshrl.u32 %v3026, 7
        %v3028 = vsub.s32 0, %v3027
        %v3029 = vrot.slane %v1662, %v3028
        %v3031 = vadd.f32 %v3017, %v3029
        %v3032 = vadd.f32 %v3018, %v3029
        %v3033 = vadd.f32 %v3019, %v3029
        %v3034 = vadd.f32 %v3020, %v3029
        %v3035 = vadd.f32 %v3021, %v3029
        %v3036 = vadd.f32 %v3022, %v3029
        %v3037 = vadd.f32 %v3023, %v3029
        %v3038 = vadd.f32 %v3024, %v3029
        %v3039 = vmax.f32 %v3031, 0.0
        %v3040 = vmax.f32 %v3032, 0.0
        %v3041 = vmax.f32 %v3033, 0.0
        %v3042 = vmax.f32 %v3034, 0.0
        %v3043 = vmax.f32 %v3035, 0.0
        %v3044 = vmax.f32 %v3036, 0.0
        %v3045 = vmax.f32 %v3037, 0.0
        %v3046 = vmax.f32 %v3038, 0.0
        %vm3047 = vcmask 31744
        %v3049 = vsel %vm3047, %v3039, 0
        %v3052 = vsel %vm3047, %v3040, 0
        %v3055 = vsel %vm3047, %v3041, 0
        %v3058 = vsel %vm3047, %v3042, 0
        %v3061 = vsel %vm3047, %v3043, 0
        %v3064 = vsel %vm3047, %v3044, 0
        %v3067 = vsel %vm3047, %v3045, 0
        %v3070 = vsel %vm3047, %v3046, 0
        %v3073 = vsel %vm1712, %v1663, 0
        %3075 = vmatprep.subr.mxu0 0.0
        %3076 = vmatpush1.msra.mxu0 %v3073
        %3077 = vmatprep.subr.mxu0 0.0
        %3078 = vmatpush1.msra.mxu0 0.0
        %3079 = vmatprep.subr.mxu0 0.0
        %3080 = vmatpush1.msra.mxu0 0.0
        %3081 = vmatprep.subr.mxu0 0.0
        %3082 = vmatpush1.msra.mxu0 0.0
        %3083 = vmatprep.subr.mxu0 0.0
        %3084 = vmatpush1.msra.mxu0 0.0
        %3085 = vmatprep.subr.mxu0 0.0
        %3086 = vmatpush1.msra.mxu0 0.0
        %3087 = vmatprep.subr.mxu0 0.0
        %3088 = vmatpush1.msra.mxu0 0.0
        %3089 = vmatprep.subr.mxu0 0.0
        %3090 = vmatpush1.msra.mxu0 0.0
        %3091 = vmatprep.subr.mxu0 0.0
        %3092 = vmatpush1.msra.mxu0 0.0
        %3093 = vmatprep.subr.mxu0 0.0
        %3094 = vmatpush1.msra.mxu0 0.0
        %3095 = vmatprep.subr.mxu0 0.0
        %3096 = vmatpush1.msra.mxu0 0.0
        %3097 = vmatprep.subr.mxu0 0.0
        %3098 = vmatpush1.msra.mxu0 0.0
        %3099 = vmatprep.subr.mxu0 0.0
        %3100 = vmatpush1.msra.mxu0 0.0
        %3101 = vmatprep.subr.mxu0 0.0
        %3102 = vmatpush1.msra.mxu0 0.0
        %3103 = vmatprep.subr.mxu0 0.0
        %3104 = vmatpush1.msra.mxu0 0.0
        %3105 = vmatprep.subr.mxu0 0.0
        %3106 = vmatpush1.msra.mxu0 0.0
        %3107 = vmatprep.subr.mxu0 0.0
        %3108 = vmatpush1.msra.mxu0 0.0
        %3109 = vmatprep.subr.mxu0 0.0
        %3110 = vmatpush1.msra.mxu0 0.0
        %3111 = vmatprep.subr.mxu0 0.0
        %3112 = vmatpush1.msra.mxu0 0.0
        %3113 = vmatprep.subr.mxu0 0.0
        %3114 = vmatpush1.msra.mxu0 0.0
        %3115 = vmatprep.subr.mxu0 0.0
        %3116 = vmatpush1.msra.mxu0 0.0
        %3117 = vmatprep.subr.mxu0 0.0
        %3118 = vmatpush1.msra.mxu0 0.0
        %3119 = vmatprep.subr.mxu0 0.0
        %3120 = vmatpush1.msra.mxu0 0.0
        %3121 = vmatprep.subr.mxu0 0.0
        %3122 = vmatpush1.msra.mxu0 0.0
        %3123 = vmatprep.subr.mxu0 0.0
        %3124 = vmatpush1.msra.mxu0 0.0
        %3125 = vmatprep.subr.mxu0 0.0
        %3126 = vmatpush1.msra.mxu0 0.0
        %3127 = vmatprep.subr.mxu0 0.0
        %3128 = vmatpush1.msra.mxu0 0.0
        %3129 = vmatprep.subr.mxu0 0.0
        %3130 = vmatpush1.msra.mxu0 0.0
        %3131 = vmatprep.subr.mxu0 0.0
        %3132 = vmatpush1.msra.mxu0 0.0
        %3133 = vmatprep.subr.mxu0 0.0
        %3134 = vmatpush1.msra.mxu0 0.0
        %3135 = vmatprep.subr.mxu0 0.0
        %3136 = vmatpush1.msra.mxu0 0.0
        %3137 = vmatprep.subr.mxu0 0.0
        %3138 = vmatpush1.msra.mxu0 0.0
        %3139 = vmatprep.mubr.f32.mxu0 0.0
        %3140 = vmatmul.mubr.f32.gmra.mrb[0].mxu0 %v3049
        %v3141 = vpop.f32.mrb[0].mxu0
        %v3142 = vadd.f32 0.0, %v3141
        %v3143 = vpop.f32.mrb[0].mxu0
        %3144 = vmatprep.mubr.f32.mxu0 0.0
        %3145 = vmatmul.mubr.f32.gmra.mrb[0].mxu0 %v3052
        %v3146 = vpop.f32.mrb[0].mxu0
        %v3147 = vadd.f32 0.0, %v3146
        %v3148 = vpop.f32.mrb[0].mxu0
        %3149 = vmatprep.mubr.f32.mxu0 0.0
        %3150 = vmatmul.mubr.f32.gmra.mrb[0].mxu0 %v3055
        %v3151 = vpop.f32.mrb[0].mxu0
        %v3152 = vadd.f32 0.0, %v3151
        %v3153 = vpop.f32.mrb[0].mxu0
        %3154 = vmatprep.mubr.f32.mxu0 0.0
        %3155 = vmatmul.mubr.f32.gmra.mrb[0].mxu0 %v3058
        %v3156 = vpop.f32.mrb[0].mxu0
        %v3157 = vadd.f32 0.0, %v3156
        %v3158 = vpop.f32.mrb[0].mxu0
        %3159 = vmatprep.mubr.f32.mxu0 0.0
        %3160 = vmatmul.mubr.f32.gmra.mrb[0].mxu0 %v3061
        %v3161 = vpop.f32.mrb[0].mxu0
        %v3162 = vadd.f32 0.0, %v3161
        %v3163 = vpop.f32.mrb[0].mxu0
        %3164 = vmatprep.mubr.f32.mxu0 0.0
        %3165 = vmatmul.mubr.f32.gmra.mrb[0].mxu0 %v3064
        %v3166 = vpop.f32.mrb[0].mxu0
        %v3167 = vadd.f32 0.0, %v3166
        %v3168 = vpop.f32.mrb[0].mxu0
        %3169 = vmatprep.mubr.f32.mxu0 0.0
        %3170 = vmatmul.mubr.f32.gmra.mrb[0].mxu0 %v3067
        %v3171 = vpop.f32.mrb[0].mxu0
        %v3172 = vadd.f32 0.0, %v3171
        %v3173 = vpop.f32.mrb[0].mxu0
        %3174 = vmatprep.mubr.f32.mxu0 0.0
        %3175 = vmatmul.mubr.f32.gmra.mrb[0].mxu0 %v3070
        %v3176 = vpop.f32.mrb[0].mxu0
        %v3177 = vadd.f32 0.0, %v3176
        %v3178 = vpop.f32.mrb[0].mxu0
        %3179 = vdwg.mxu0
        %v3181 = vlaneseq
        %v3182 = vshrl.u32 %v3181, 7
        %v3183 = vsub.s32 0, %v3182
        %v3184 = vrot.slane %v1664, %v3183
        %v3186 = vmul.f32 %v3142, %v3184
        %v3187 = vmul.f32 %v3147, %v3184
        %v3188 = vmul.f32 %v3152, %v3184
        %v3189 = vmul.f32 %v3157, %v3184
        %v3190 = vmul.f32 %v3162, %v3184
        %v3191 = vmul.f32 %v3167, %v3184
        %v3192 = vmul.f32 %v3172, %v3184
        %v3193 = vmul.f32 %v3177, %v3184
        %v3195 = vlaneseq
        %v3196 = vshrl.u32 %v3195, 7
        %v3197 = vsub.s32 0, %v3196
        %v3198 = vrot.slane %v1665, %v3197
        %v3200 = vadd.f32 %v3186, %v3198
        %v3201 = vadd.f32 %v3187, %v3198
        %v3202 = vadd.f32 %v3188, %v3198
        %v3203 = vadd.f32 %v3189, %v3198
        %v3204 = vadd.f32 %v3190, %v3198
        %v3205 = vadd.f32 %v3191, %v3198
        %v3206 = vadd.f32 %v3192, %v3198
        %v3207 = vadd.f32 %v3193, %v3198
        %v3208 = vadd.f32 %v3200, %v602
        %v3209 = vadd.f32 %v3201, %v603
        %v3210 = vadd.f32 %v3202, %v604
        %v3211 = vadd.f32 %v3203, %v605
        %v3212 = vadd.f32 %v3204, %v606
        %v3213 = vadd.f32 %v3205, %v607
        %v3214 = vadd.f32 %v3206, %v608
        %v3215 = vadd.f32 %v3207, %v609
        %v3216 = vmax.f32 %v3208, 0.0
        %v3217 = vmax.f32 %v3209, 0.0
        %v3218 = vmax.f32 %v3210, 0.0
        %v3219 = vmax.f32 %v3211, 0.0
        %v3220 = vmax.f32 %v3212, 0.0
        %v3221 = vmax.f32 %v3213, 0.0
        %v3222 = vmax.f32 %v3214, 0.0
        %v3223 = vmax.f32 %v3215, 0.0
        %3224 = vst.msk [vmem:[%s559] sm:$0xff] %vm634, %v3216
        %3225 = vst.msk [vmem:[%s559 + $0x8] sm:$0xff] %vm634, %v3217
        %3226 = vst.msk [vmem:[%s559 + $0x10] sm:$0xff] %vm634, %v3218
        %3227 = vst.msk [vmem:[%s559 + $0x18] sm:$0xff] %vm634, %v3219
        %3228 = vst.msk [vmem:[%s559 + $0x20] sm:$0xff] %vm634, %v3220
        %3229 = vst.msk [vmem:[%s559 + $0x28] sm:$0xff] %vm634, %v3221
        %3230 = vst.msk [vmem:[%s559 + $0x30] sm:$0xff] %vm634, %v3222
        %3231 = vst.msk [vmem:[%s559 + $0x38] sm:$0xff] %vm634, %v3223
        %v3232 = vld [vmem:[#allocation2] sm:$0xff]
        %v3233 = vld [vmem:[#allocation2 + $0x10] sm:$0xff]
        %v3234 = vld [vmem:[#allocation2 + $0x20] sm:$0xff]
        %v3235 = vld [vmem:[#allocation2 + $0x30] sm:$0xff]
        %v3236 = vld [vmem:[#allocation2 + $0x40] sm:$0xff]
        %v3237 = vld [vmem:[#allocation2 + $0x50] sm:$0xff]
        %v3238 = vld [vmem:[#allocation2 + $0x60] sm:$0xff]
        %v3239 = vld [vmem:[#allocation2 + $0x70] sm:$0xff]
        %v3240 = vld [vmem:[%s6] sm:$0xff]
        %v3241 = vld [vmem:[%s6 + $0x8] sm:$0xf]
        %v3242 = vld [vmem:[#allocation2 + $0x1] sm:$0xff]
        %v3243 = vld [vmem:[#allocation2 + $0x11] sm:$0xff]
        %v3244 = vld [vmem:[#allocation2 + $0x21] sm:$0xff]
        %v3245 = vld [vmem:[#allocation2 + $0x31] sm:$0xff]
        %v3246 = vld [vmem:[#allocation2 + $0x41] sm:$0xff]
        %v3247 = vld [vmem:[#allocation2 + $0x51] sm:$0xff]
        %v3248 = vld [vmem:[#allocation2 + $0x61] sm:$0xff]
        %v3249 = vld [vmem:[#allocation2 + $0x71] sm:$0xff]
        %v3250 = vld [vmem:[%s1684] sm:$0xff]
        %v3251 = vld [vmem:[%s1684 + $0x8] sm:$0xf]
        %3260 = vrot.lane.b32.xlu0 %v3242, 124
        %v3261 = vpop.permute.xlu0 %3260
        %3262 = vrot.lane.b32.xlu0 %v3243, 124
        %v3263 = vpop.permute.xlu0 %3262
        %3264 = vrot.lane.b32.xlu0 %v3244, 124
        %v3265 = vpop.permute.xlu0 %3264
        %3266 = vrot.lane.b32.xlu0 %v3245, 124
        %v3267 = vpop.permute.xlu0 %3266
        %3268 = vrot.lane.b32.xlu0 %v3246, 124
        %v3269 = vpop.permute.xlu0 %3268
        %3270 = vrot.lane.b32.xlu0 %v3247, 124
        %v3271 = vpop.permute.xlu0 %3270
        %3272 = vrot.lane.b32.xlu0 %v3248, 124
        %v3273 = vpop.permute.xlu0 %3272
        %3274 = vrot.lane.b32.xlu0 %v3249, 124
        %v3275 = vpop.permute.xlu0 %3274
        %v3276 = vsel %vm1687, %v3261, 0
        %v3278 = vsel %vm1687, %v3263, 0
        %v3280 = vsel %vm1687, %v3265, 0
        %v3282 = vsel %vm1687, %v3267, 0
        %v3284 = vsel %vm1687, %v3269, 0
        %v3286 = vsel %vm1687, %v3271, 0
        %v3288 = vsel %vm1687, %v3273, 0
        %v3290 = vsel %vm1687, %v3275, 0
        %v3293 = vsel %vm1712, %v3251, 0
        %3295 = vmatprep.subr.mxu0 0.0
        %3296 = vmatpush1.msra.mxu0 %v3250
        %3297 = vmatprep.subr.mxu0 0.0
        %3298 = vmatpush1.msra.mxu0 %v3293
        %3299 = vmatprep.subr.mxu0 0.0
        %3300 = vmatpush1.msra.mxu0 0.0
        %3301 = vmatprep.subr.mxu0 0.0
        %3302 = vmatpush1.msra.mxu0 0.0
        %3303 = vmatprep.subr.mxu0 0.0
        %3304 = vmatpush1.msra.mxu0 0.0
        %3305 = vmatprep.subr.mxu0 0.0
        %3306 = vmatpush1.msra.mxu0 0.0
        %3307 = vmatprep.subr.mxu0 0.0
        %3308 = vmatpush1.msra.mxu0 0.0
        %3309 = vmatprep.subr.mxu0 0.0
        %3310 = vmatpush1.msra.mxu0 0.0
        %3311 = vmatprep.subr.mxu0 0.0
        %3312 = vmatpush1.msra.mxu0 0.0
        %3313 = vmatprep.subr.mxu0 0.0
        %3314 = vmatpush1.msra.mxu0 0.0
        %3315 = vmatprep.subr.mxu0 0.0
        %3316 = vmatpush1.msra.mxu0 0.0
        %3317 = vmatprep.subr.mxu0 0.0
        %3318 = vmatpush1.msra.mxu0 0.0
        %3319 = vmatprep.subr.mxu0 0.0
        %3320 = vmatpush1.msra.mxu0 0.0
        %3321 = vmatprep.subr.mxu0 0.0
        %3322 = vmatpush1.msra.mxu0 0.0
        %3323 = vmatprep.subr.mxu0 0.0
        %3324 = vmatpush1.msra.mxu0 0.0
        %3325 = vmatprep.subr.mxu0 0.0
        %3326 = vmatpush1.msra.mxu0 0.0
        %3327 = vmatprep.subr.mxu0 0.0
        %3328 = vmatpush1.msra.mxu0 0.0
        %3329 = vmatprep.subr.mxu0 0.0
        %3330 = vmatpush1.msra.mxu0 0.0
        %3331 = vmatprep.subr.mxu0 0.0
        %3332 = vmatpush1.msra.mxu0 0.0
        %3333 = vmatprep.subr.mxu0 0.0
        %3334 = vmatpush1.msra.mxu0 0.0
        %3335 = vmatprep.subr.mxu0 0.0
        %3336 = vmatpush1.msra.mxu0 0.0
        %3337 = vmatprep.subr.mxu0 0.0
        %3338 = vmatpush1.msra.mxu0 0.0
        %3339 = vmatprep.subr.mxu0 0.0
        %3340 = vmatpush1.msra.mxu0 0.0
        %3341 = vmatprep.subr.mxu0 0.0
        %3342 = vmatpush1.msra.mxu0 0.0
        %3343 = vmatprep.subr.mxu0 0.0
        %3344 = vmatpush1.msra.mxu0 0.0
        %3345 = vmatprep.subr.mxu0 0.0
        %3346 = vmatpush1.msra.mxu0 0.0
        %3347 = vmatprep.subr.mxu0 0.0
        %3348 = vmatpush1.msra.mxu0 0.0
        %3349 = vmatprep.subr.mxu0 0.0
        %3350 = vmatpush1.msra.mxu0 0.0
        %3351 = vmatprep.subr.mxu0 0.0
        %3352 = vmatpush1.msra.mxu0 0.0
        %3353 = vmatprep.subr.mxu0 0.0
        %3354 = vmatpush1.msra.mxu0 0.0
        %3355 = vmatprep.subr.mxu0 0.0
        %3356 = vmatpush1.msra.mxu0 0.0
        %3357 = vmatprep.subr.mxu0 0.0
        %3358 = vmatpush1.msra.mxu0 0.0
        %3359 = vmatprep.mubr.f32.mxu0 0.0
        %3360 = vmatmul.mubr.f32.gmra.mrb[0].mxu0 %v3276
        %v3361 = vpop.f32.mrb[0].mxu0
        %v3362 = vadd.f32 0.0, %v3361
        %v3363 = vpop.f32.mrb[0].mxu0
        %3364 = vmatprep.mubr.f32.mxu0 0.0
        %3365 = vmatmul.mubr.f32.gmra.mrb[0].mxu0 %v3278
        %v3366 = vpop.f32.mrb[0].mxu0
        %v3367 = vadd.f32 0.0, %v3366
        %v3368 = vpop.f32.mrb[0].mxu0
        %3369 = vmatprep.mubr.f32.mxu0 0.0
        %3370 = vmatmul.mubr.f32.gmra.mrb[0].mxu0 %v3280
        %v3371 = vpop.f32.mrb[0].mxu0
        %v3372 = vadd.f32 0.0, %v3371
        %v3373 = vpop.f32.mrb[0].mxu0
        %3374 = vmatprep.mubr.f32.mxu0 0.0
        %3375 = vmatmul.mubr.f32.gmra.mrb[0].mxu0 %v3282
        %v3376 = vpop.f32.mrb[0].mxu0
        %v3377 = vadd.f32 0.0, %v3376
        %v3378 = vpop.f32.mrb[0].mxu0
        %3379 = vmatprep.mubr.f32.mxu0 0.0
        %3380 = vmatmul.mubr.f32.gmra.mrb[0].mxu0 %v3284
        %v3381 = vpop.f32.mrb[0].mxu0
        %v3382 = vadd.f32 0.0, %v3381
        %v3383 = vpop.f32.mrb[0].mxu0
        %3384 = vmatprep.mubr.f32.mxu0 0.0
        %3385 = vmatmul.mubr.f32.gmra.mrb[0].mxu0 %v3286
        %v3386 = vpop.f32.mrb[0].mxu0
        %v3387 = vadd.f32 0.0, %v3386
        %v3388 = vpop.f32.mrb[0].mxu0
        %3389 = vmatprep.mubr.f32.mxu0 0.0
        %3390 = vmatmul.mubr.f32.gmra.mrb[0].mxu0 %v3288
        %v3391 = vpop.f32.mrb[0].mxu0
        %v3392 = vadd.f32 0.0, %v3391
        %v3393 = vpop.f32.mrb[0].mxu0
        %3394 = vmatprep.mubr.f32.mxu0 0.0
        %3395 = vmatmul.mubr.f32.gmra.mrb[0].mxu0 %v3290
        %v3396 = vpop.f32.mrb[0].mxu0
        %v3397 = vadd.f32 0.0, %v3396
        %v3398 = vpop.f32.mrb[0].mxu0
        %3399 = vdwg.mxu0
        %3408 = vrot.lane.b32.xlu0 %v3232, 124
        %v3409 = vpop.permute.xlu0 %3408
        %3410 = vrot.lane.b32.xlu0 %v3233, 124
        %v3411 = vpop.permute.xlu0 %3410
        %3412 = vrot.lane.b32.xlu0 %v3234, 124
        %v3413 = vpop.permute.xlu0 %3412
        %3414 = vrot.lane.b32.xlu0 %v3235, 124
        %v3415 = vpop.permute.xlu0 %3414
        %3416 = vrot.lane.b32.xlu0 %v3236, 124
        %v3417 = vpop.permute.xlu0 %3416
        %3418 = vrot.lane.b32.xlu0 %v3237, 124
        %v3419 = vpop.permute.xlu0 %3418
        %3420 = vrot.lane.b32.xlu0 %v3238, 124
        %v3421 = vpop.permute.xlu0 %3420
        %3422 = vrot.lane.b32.xlu0 %v3239, 124
        %v3423 = vpop.permute.xlu0 %3422
        %v3424 = vsel %vm1687, %v3409, 0
        %v3426 = vsel %vm1687, %v3411, 0
        %v3428 = vsel %vm1687, %v3413, 0
        %v3430 = vsel %vm1687, %v3415, 0
        %v3432 = vsel %vm1687, %v3417, 0
        %v3434 = vsel %vm1687, %v3419, 0
        %v3436 = vsel %vm1687, %v3421, 0
        %v3438 = vsel %vm1687, %v3423, 0
        %v3441 = vsel %vm1712, %v3241, 0
        %3443 = vmatprep.subr.mxu0 0.0
        %3444 = vmatpush1.msra.mxu0 %v3240
        %3445 = vmatprep.subr.mxu0 0.0
        %3446 = vmatpush1.msra.mxu0 %v3441
        %3447 = vmatprep.subr.mxu0 0.0
        %3448 = vmatpush1.msra.mxu0 0.0
        %3449 = vmatprep.subr.mxu0 0.0
        %3450 = vmatpush1.msra.mxu0 0.0
        %3451 = vmatprep.subr.mxu0 0.0
        %3452 = vmatpush1.msra.mxu0 0.0
        %3453 = vmatprep.subr.mxu0 0.0
        %3454 = vmatpush1.msra.mxu0 0.0
        %3455 = vmatprep.subr.mxu0 0.0
        %3456 = vmatpush1.msra.mxu0 0.0
        %3457 = vmatprep.subr.mxu0 0.0
        %3458 = vmatpush1.msra.mxu0 0.0
        %3459 = vmatprep.subr.mxu0 0.0
        %3460 = vmatpush1.msra.mxu0 0.0
        %3461 = vmatprep.subr.mxu0 0.0
        %3462 = vmatpush1.msra.mxu0 0.0
        %3463 = vmatprep.subr.mxu0 0.0
        %3464 = vmatpush1.msra.mxu0 0.0
        %3465 = vmatprep.subr.mxu0 0.0
        %3466 = vmatpush1.msra.mxu0 0.0
        %3467 = vmatprep.subr.mxu0 0.0
        %3468 = vmatpush1.msra.mxu0 0.0
        %3469 = vmatprep.subr.mxu0 0.0
        %3470 = vmatpush1.msra.mxu0 0.0
        %3471 = vmatprep.subr.mxu0 0.0
        %3472 = vmatpush1.msra.mxu0 0.0
        %3473 = vmatprep.subr.mxu0 0.0
        %3474 = vmatpush1.msra.mxu0 0.0
        %3475 = vmatprep.subr.mxu0 0.0
        %3476 = vmatpush1.msra.mxu0 0.0
        %3477 = vmatprep.subr.mxu0 0.0
        %3478 = vmatpush1.msra.mxu0 0.0
        %3479 = vmatprep.subr.mxu0 0.0
        %3480 = vmatpush1.msra.mxu0 0.0
        %3481 = vmatprep.subr.mxu0 0.0
        %3482 = vmatpush1.msra.mxu0 0.0
        %3483 = vmatprep.subr.mxu0 0.0
        %3484 = vmatpush1.msra.mxu0 0.0
        %3485 = vmatprep.subr.mxu0 0.0
        %3486 = vmatpush1.msra.mxu0 0.0
        %3487 = vmatprep.subr.mxu0 0.0
        %3488 = vmatpush1.msra.mxu0 0.0
        %3489 = vmatprep.subr.mxu0 0.0
        %3490 = vmatpush1.msra.mxu0 0.0
        %3491 = vmatprep.subr.mxu0 0.0
        %3492 = vmatpush1.msra.mxu0 0.0
        %3493 = vmatprep.subr.mxu0 0.0
        %3494 = vmatpush1.msra.mxu0 0.0
        %3495 = vmatprep.subr.mxu0 0.0
        %3496 = vmatpush1.msra.mxu0 0.0
        %3497 = vmatprep.subr.mxu0 0.0
        %3498 = vmatpush1.msra.mxu0 0.0
        %3499 = vmatprep.subr.mxu0 0.0
        %3500 = vmatpush1.msra.mxu0 0.0
        %3501 = vmatprep.subr.mxu0 0.0
        %3502 = vmatpush1.msra.mxu0 0.0
        %3503 = vmatprep.subr.mxu0 0.0
        %3504 = vmatpush1.msra.mxu0 0.0
        %3505 = vmatprep.subr.mxu0 0.0
        %3506 = vmatpush1.msra.mxu0 0.0
        %3507 = vmatprep.mubr.f32.mxu0 0.0
        %3508 = vmatmul.mubr.f32.gmra.mrb[0].mxu0 %v3424
        %v3509 = vpop.f32.mrb[0].mxu0
        %v3510 = vadd.f32 %v3362, %v3509
        %v3511 = vpop.f32.mrb[0].mxu0
        %3512 = vmatprep.mubr.f32.mxu0 0.0
        %3513 = vmatmul.mubr.f32.gmra.mrb[0].mxu0 %v3426
        %v3514 = vpop.f32.mrb[0].mxu0
        %v3515 = vadd.f32 %v3367, %v3514
        %v3516 = vpop.f32.mrb[0].mxu0
        %3517 = vmatprep.mubr.f32.mxu0 0.0
        %3518 = vmatmul.mubr.f32.gmra.mrb[0].mxu0 %v3428
        %v3519 = vpop.f32.mrb[0].mxu0
        %v3520 = vadd.f32 %v3372, %v3519
        %v3521 = vpop.f32.mrb[0].mxu0
        %3522 = vmatprep.mubr.f32.mxu0 0.0
        %3523 = vmatmul.mubr.f32.gmra.mrb[0].mxu0 %v3430
        %v3524 = vpop.f32.mrb[0].mxu0
        %v3525 = vadd.f32 %v3377, %v3524
        %v3526 = vpop.f32.mrb[0].mxu0
        %3527 = vmatprep.mubr.f32.mxu0 0.0
        %3528 = vmatmul.mubr.f32.gmra.mrb[0].mxu0 %v3432
        %v3529 = vpop.f32.mrb[0].mxu0
        %v3530 = vadd.f32 %v3382, %v3529
        %v3531 = vpop.f32.mrb[0].mxu0
        %3532 = vmatprep.mubr.f32.mxu0 0.0
        %3533 = vmatmul.mubr.f32.gmra.mrb[0].mxu0 %v3434
        %v3534 = vpop.f32.mrb[0].mxu0
        %v3535 = vadd.f32 %v3387, %v3534
        %v3536 = vpop.f32.mrb[0].mxu0
        %3537 = vmatprep.mubr.f32.mxu0 0.0
        %3538 = vmatmul.mubr.f32.gmra.mrb[0].mxu0 %v3436
        %v3539 = vpop.f32.mrb[0].mxu0
        %v3540 = vadd.f32 %v3392, %v3539
        %v3541 = vpop.f32.mrb[0].mxu0
        %3542 = vmatprep.mubr.f32.mxu0 0.0
        %3543 = vmatmul.mubr.f32.gmra.mrb[0].mxu0 %v3438
        %v3544 = vpop.f32.mrb[0].mxu0
        %v3545 = vadd.f32 %v3397, %v3544
        %v3546 = vpop.f32.mrb[0].mxu0
        %3547 = vdwg.mxu0
        %v3548 = vld [vmem:[#allocation2 + $0x2] sm:$0xff]
        %v3549 = vld [vmem:[#allocation2 + $0x12] sm:$0xff]
        %v3550 = vld [vmem:[#allocation2 + $0x22] sm:$0xff]
        %v3551 = vld [vmem:[#allocation2 + $0x32] sm:$0xff]
        %v3552 = vld [vmem:[#allocation2 + $0x42] sm:$0xff]
        %v3553 = vld [vmem:[#allocation2 + $0x52] sm:$0xff]
        %v3554 = vld [vmem:[#allocation2 + $0x62] sm:$0xff]
        %v3555 = vld [vmem:[#allocation2 + $0x72] sm:$0xff]
        %v3556 = vld [vmem:[%s1961] sm:$0xff]
        %v3557 = vld [vmem:[%s1961 + $0x8] sm:$0xf]
        %3566 = vrot.lane.b32.xlu0 %v3548, 124
        %v3567 = vpop.permute.xlu0 %3566
        %3568 = vrot.lane.b32.xlu0 %v3549, 124
        %v3569 = vpop.permute.xlu0 %3568
        %3570 = vrot.lane.b32.xlu0 %v3550, 124
        %v3571 = vpop.permute.xlu0 %3570
        %3572 = vrot.lane.b32.xlu0 %v3551, 124
        %v3573 = vpop.permute.xlu0 %3572
        %3574 = vrot.lane.b32.xlu0 %v3552, 124
        %v3575 = vpop.permute.xlu0 %3574
        %3576 = vrot.lane.b32.xlu0 %v3553, 124
        %v3577 = vpop.permute.xlu0 %3576
        %3578 = vrot.lane.b32.xlu0 %v3554, 124
        %v3579 = vpop.permute.xlu0 %3578
        %3580 = vrot.lane.b32.xlu0 %v3555, 124
        %v3581 = vpop.permute.xlu0 %3580
        %v3582 = vsel %vm1687, %v3567, 0
        %v3584 = vsel %vm1687, %v3569, 0
        %v3586 = vsel %vm1687, %v3571, 0
        %v3588 = vsel %vm1687, %v3573, 0
        %v3590 = vsel %vm1687, %v3575, 0
        %v3592 = vsel %vm1687, %v3577, 0
        %v3594 = vsel %vm1687, %v3579, 0
        %v3596 = vsel %vm1687, %v3581, 0
        %v3599 = vsel %vm1712, %v3557, 0
        %3601 = vmatprep.subr.mxu0 0.0
        %3602 = vmatpush1.msra.mxu0 %v3556
        %3603 = vmatprep.subr.mxu0 0.0
        %3604 = vmatpush1.msra.mxu0 %v3599
        %3605 = vmatprep.subr.mxu0 0.0
        %3606 = vmatpush1.msra.mxu0 0.0
        %3607 = vmatprep.subr.mxu0 0.0
        %3608 = vmatpush1.msra.mxu0 0.0
        %3609 = vmatprep.subr.mxu0 0.0
        %3610 = vmatpush1.msra.mxu0 0.0
        %3611 = vmatprep.subr.mxu0 0.0
        %3612 = vmatpush1.msra.mxu0 0.0
        %3613 = vmatprep.subr.mxu0 0.0
        %3614 = vmatpush1.msra.mxu0 0.0
        %3615 = vmatprep.subr.mxu0 0.0
        %3616 = vmatpush1.msra.mxu0 0.0
        %3617 = vmatprep.subr.mxu0 0.0
        %3618 = vmatpush1.msra.mxu0 0.0
        %3619 = vmatprep.subr.mxu0 0.0
        %3620 = vmatpush1.msra.mxu0 0.0
        %3621 = vmatprep.subr.mxu0 0.0
        %3622 = vmatpush1.msra.mxu0 0.0
        %3623 = vmatprep.subr.mxu0 0.0
        %3624 = vmatpush1.msra.mxu0 0.0
        %3625 = vmatprep.subr.mxu0 0.0
        %3626 = vmatpush1.msra.mxu0 0.0
        %3627 = vmatprep.subr.mxu0 0.0
        %3628 = vmatpush1.msra.mxu0 0.0
        %3629 = vmatprep.subr.mxu0 0.0
        %3630 = vmatpush1.msra.mxu0 0.0
        %3631 = vmatprep.subr.mxu0 0.0
        %3632 = vmatpush1.msra.mxu0 0.0
        %3633 = vmatprep.subr.mxu0 0.0
        %3634 = vmatpush1.msra.mxu0 0.0
        %3635 = vmatprep.subr.mxu0 0.0
        %3636 = vmatpush1.msra.mxu0 0.0
        %3637 = vmatprep.subr.mxu0 0.0
        %3638 = vmatpush1.msra.mxu0 0.0
        %3639 = vmatprep.subr.mxu0 0.0
        %3640 = vmatpush1.msra.mxu0 0.0
        %3641 = vmatprep.subr.mxu0 0.0
        %3642 = vmatpush1.msra.mxu0 0.0
        %3643 = vmatprep.subr.mxu0 0.0
        %3644 = vmatpush1.msra.mxu0 0.0
        %3645 = vmatprep.subr.mxu0 0.0
        %3646 = vmatpush1.msra.mxu0 0.0
        %3647 = vmatprep.subr.mxu0 0.0
        %3648 = vmatpush1.msra.mxu0 0.0
        %3649 = vmatprep.subr.mxu0 0.0
        %3650 = vmatpush1.msra.mxu0 0.0
        %3651 = vmatprep.subr.mxu0 0.0
        %3652 = vmatpush1.msra.mxu0 0.0
        %3653 = vmatprep.subr.mxu0 0.0
        %3654 = vmatpush1.msra.mxu0 0.0
        %3655 = vmatprep.subr.mxu0 0.0
        %3656 = vmatpush1.msra.mxu0 0.0
        %3657 = vmatprep.subr.mxu0 0.0
        %3658 = vmatpush1.msra.mxu0 0.0
        %3659 = vmatprep.subr.mxu0 0.0
        %3660 = vmatpush1.msra.mxu0 0.0
        %3661 = vmatprep.subr.mxu0 0.0
        %3662 = vmatpush1.msra.mxu0 0.0
        %3663 = vmatprep.subr.mxu0 0.0
        %3664 = vmatpush1.msra.mxu0 0.0
        %3665 = vmatprep.mubr.f32.mxu0 0.0
        %3666 = vmatmul.mubr.f32.gmra.mrb[0].mxu0 %v3582
        %v3667 = vpop.f32.mrb[0].mxu0
        %v3668 = vadd.f32 0.0, %v3667
        %v3669 = vpop.f32.mrb[0].mxu0
        %3670 = vmatprep.mubr.f32.mxu0 0.0
        %3671 = vmatmul.mubr.f32.gmra.mrb[0].mxu0 %v3584
        %v3672 = vpop.f32.mrb[0].mxu0
        %v3673 = vadd.f32 0.0, %v3672
        %v3674 = vpop.f32.mrb[0].mxu0
        %3675 = vmatprep.mubr.f32.mxu0 0.0
        %3676 = vmatmul.mubr.f32.gmra.mrb[0].mxu0 %v3586
        %v3677 = vpop.f32.mrb[0].mxu0
        %v3678 = vadd.f32 0.0, %v3677
        %v3679 = vpop.f32.mrb[0].mxu0
        %3680 = vmatprep.mubr.f32.mxu0 0.0
        %3681 = vmatmul.mubr.f32.gmra.mrb[0].mxu0 %v3588
        %v3682 = vpop.f32.mrb[0].mxu0
        %v3683 = vadd.f32 0.0, %v3682
        %v3684 = vpop.f32.mrb[0].mxu0
        %3685 = vmatprep.mubr.f32.mxu0 0.0
        %3686 = vmatmul.mubr.f32.gmra.mrb[0].mxu0 %v3590
        %v3687 = vpop.f32.mrb[0].mxu0
        %v3688 = vadd.f32 0.0, %v3687
        %v3689 = vpop.f32.mrb[0].mxu0
        %3690 = vmatprep.mubr.f32.mxu0 0.0
        %3691 = vmatmul.mubr.f32.gmra.mrb[0].mxu0 %v3592
        %v3692 = vpop.f32.mrb[0].mxu0
        %v3693 = vadd.f32 0.0, %v3692
        %v3694 = vpop.f32.mrb[0].mxu0
        %3695 = vmatprep.mubr.f32.mxu0 0.0
        %3696 = vmatmul.mubr.f32.gmra.mrb[0].mxu0 %v3594
        %v3697 = vpop.f32.mrb[0].mxu0
        %v3698 = vadd.f32 0.0, %v3697
        %v3699 = vpop.f32.mrb[0].mxu0
        %3700 = vmatprep.mubr.f32.mxu0 0.0
        %3701 = vmatmul.mubr.f32.gmra.mrb[0].mxu0 %v3596
        %v3702 = vpop.f32.mrb[0].mxu0
        %v3703 = vadd.f32 0.0, %v3702
        %v3704 = vpop.f32.mrb[0].mxu0
        %3705 = vdwg.mxu0
        %v3706 = vadd.f32 %v3510, %v3668
        %v3707 = vadd.f32 %v3515, %v3673
        %v3708 = vadd.f32 %v3520, %v3678
        %v3709 = vadd.f32 %v3525, %v3683
        %v3710 = vadd.f32 %v3530, %v3688
        %v3711 = vadd.f32 %v3535, %v3693
        %v3712 = vadd.f32 %v3540, %v3698
        %v3713 = vadd.f32 %v3545, %v3703
        %v3714 = vld [vmem:[%s1096] sm:$0xff]
        %v3715 = vld [vmem:[%s1096 + $0x10] sm:$0xff]
        %v3716 = vld [vmem:[%s1096 + $0x20] sm:$0xff]
        %v3717 = vld [vmem:[%s1096 + $0x30] sm:$0xff]
        %v3718 = vld [vmem:[%s1096 + $0x40] sm:$0xff]
        %v3719 = vld [vmem:[%s1096 + $0x50] sm:$0xff]
        %v3720 = vld [vmem:[%s1096 + $0x60] sm:$0xff]
        %v3721 = vld [vmem:[%s1096 + $0x70] sm:$0xff]
        %v3722 = vld [vmem:[%s2112] sm:$0xff]
        %v3723 = vld [vmem:[%s2112 + $0x8] sm:$0xf]
        %3732 = vrot.lane.b32.xlu0 %v3714, 124
        %v3733 = vpop.permute.xlu0 %3732
        %3734 = vrot.lane.b32.xlu0 %v3715, 124
        %v3735 = vpop.permute.xlu0 %3734
        %3736 = vrot.lane.b32.xlu0 %v3716, 124
        %v3737 = vpop.permute.xlu0 %3736
        %3738 = vrot.lane.b32.xlu0 %v3717, 124
        %v3739 = vpop.permute.xlu0 %3738
        %3740 = vrot.lane.b32.xlu0 %v3718, 124
        %v3741 = vpop.permute.xlu0 %3740
        %3742 = vrot.lane.b32.xlu0 %v3719, 124
        %v3743 = vpop.permute.xlu0 %3742
        %3744 = vrot.lane.b32.xlu0 %v3720, 124
        %v3745 = vpop.permute.xlu0 %3744
        %3746 = vrot.lane.b32.xlu0 %v3721, 124
        %v3747 = vpop.permute.xlu0 %3746
        %v3748 = vsel %vm1687, %v3733, 0
        %v3750 = vsel %vm1687, %v3735, 0
        %v3752 = vsel %vm1687, %v3737, 0
        %v3754 = vsel %vm1687, %v3739, 0
        %v3756 = vsel %vm1687, %v3741, 0
        %v3758 = vsel %vm1687, %v3743, 0
        %v3760 = vsel %vm1687, %v3745, 0
        %v3762 = vsel %vm1687, %v3747, 0
        %v3765 = vsel %vm1712, %v3723, 0
        %3767 = vmatprep.subr.mxu0 0.0
        %3768 = vmatpush1.msra.mxu0 %v3722
        %3769 = vmatprep.subr.mxu0 0.0
        %3770 = vmatpush1.msra.mxu0 %v3765
        %3771 = vmatprep.subr.mxu0 0.0
        %3772 = vmatpush1.msra.mxu0 0.0
        %3773 = vmatprep.subr.mxu0 0.0
        %3774 = vmatpush1.msra.mxu0 0.0
        %3775 = vmatprep.subr.mxu0 0.0
        %3776 = vmatpush1.msra.mxu0 0.0
        %3777 = vmatprep.subr.mxu0 0.0
        %3778 = vmatpush1.msra.mxu0 0.0
        %3779 = vmatprep.subr.mxu0 0.0
        %3780 = vmatpush1.msra.mxu0 0.0
        %3781 = vmatprep.subr.mxu0 0.0
        %3782 = vmatpush1.msra.mxu0 0.0
        %3783 = vmatprep.subr.mxu0 0.0
        %3784 = vmatpush1.msra.mxu0 0.0
        %3785 = vmatprep.subr.mxu0 0.0
        %3786 = vmatpush1.msra.mxu0 0.0
        %3787 = vmatprep.subr.mxu0 0.0
        %3788 = vmatpush1.msra.mxu0 0.0
        %3789 = vmatprep.subr.mxu0 0.0
        %3790 = vmatpush1.msra.mxu0 0.0
        %3791 = vmatprep.subr.mxu0 0.0
        %3792 = vmatpush1.msra.mxu0 0.0
        %3793 = vmatprep.subr.mxu0 0.0
        %3794 = vmatpush1.msra.mxu0 0.0
        %3795 = vmatprep.subr.mxu0 0.0
        %3796 = vmatpush1.msra.mxu0 0.0
        %3797 = vmatprep.subr.mxu0 0.0
        %3798 = vmatpush1.msra.mxu0 0.0
        %3799 = vmatprep.subr.mxu0 0.0
        %3800 = vmatpush1.msra.mxu0 0.0
        %3801 = vmatprep.subr.mxu0 0.0
        %3802 = vmatpush1.msra.mxu0 0.0
        %3803 = vmatprep.subr.mxu0 0.0
        %3804 = vmatpush1.msra.mxu0 0.0
        %3805 = vmatprep.subr.mxu0 0.0
        %3806 = vmatpush1.msra.mxu0 0.0
        %3807 = vmatprep.subr.mxu0 0.0
        %3808 = vmatpush1.msra.mxu0 0.0
        %3809 = vmatprep.subr.mxu0 0.0
        %3810 = vmatpush1.msra.mxu0 0.0
        %3811 = vmatprep.subr.mxu0 0.0
        %3812 = vmatpush1.msra.mxu0 0.0
        %3813 = vmatprep.subr.mxu0 0.0
        %3814 = vmatpush1.msra.mxu0 0.0
        %3815 = vmatprep.subr.mxu0 0.0
        %3816 = vmatpush1.msra.mxu0 0.0
        %3817 = vmatprep.subr.mxu0 0.0
        %3818 = vmatpush1.msra.mxu0 0.0
        %3819 = vmatprep.subr.mxu0 0.0
        %3820 = vmatpush1.msra.mxu0 0.0
        %3821 = vmatprep.subr.mxu0 0.0
        %3822 = vmatpush1.msra.mxu0 0.0
        %3823 = vmatprep.subr.mxu0 0.0
        %3824 = vmatpush1.msra.mxu0 0.0
        %3825 = vmatprep.subr.mxu0 0.0
        %3826 = vmatpush1.msra.mxu0 0.0
        %3827 = vmatprep.subr.mxu0 0.0
        %3828 = vmatpush1.msra.mxu0 0.0
        %3829 = vmatprep.subr.mxu0 0.0
        %3830 = vmatpush1.msra.mxu0 0.0
        %3831 = vmatprep.mubr.f32.mxu0 0.0
        %3832 = vmatmul.mubr.f32.gmra.mrb[0].mxu0 %v3748
        %v3833 = vpop.f32.mrb[0].mxu0
        %v3834 = vadd.f32 0.0, %v3833
        %v3835 = vpop.f32.mrb[0].mxu0
        %3836 = vmatprep.mubr.f32.mxu0 0.0
        %3837 = vmatmul.mubr.f32.gmra.mrb[0].mxu0 %v3750
        %v3838 = vpop.f32.mrb[0].mxu0
        %v3839 = vadd.f32 0.0, %v3838
        %v3840 = vpop.f32.mrb[0].mxu0
        %3841 = vmatprep.mubr.f32.mxu0 0.0
        %3842 = vmatmul.mubr.f32.gmra.mrb[0].mxu0 %v3752
        %v3843 = vpop.f32.mrb[0].mxu0
        %v3844 = vadd.f32 0.0, %v3843
        %v3845 = vpop.f32.mrb[0].mxu0
        %3846 = vmatprep.mubr.f32.mxu0 0.0
        %3847 = vmatmul.mubr.f32.gmra.mrb[0].mxu0 %v3754
        %v3848 = vpop.f32.mrb[0].mxu0
        %v3849 = vadd.f32 0.0, %v3848
        %v3850 = vpop.f32.mrb[0].mxu0
        %3851 = vmatprep.mubr.f32.mxu0 0.0
        %3852 = vmatmul.mubr.f32.gmra.mrb[0].mxu0 %v3756
        %v3853 = vpop.f32.mrb[0].mxu0
        %v3854 = vadd.f32 0.0, %v3853
        %v3855 = vpop.f32.mrb[0].mxu0
        %3856 = vmatprep.mubr.f32.mxu0 0.0
        %3857 = vmatmul.mubr.f32.gmra.mrb[0].mxu0 %v3758
        %v3858 = vpop.f32.mrb[0].mxu0
        %v3859 = vadd.f32 0.0, %v3858
        %v3860 = vpop.f32.mrb[0].mxu0
        %3861 = vmatprep.mubr.f32.mxu0 0.0
        %3862 = vmatmul.mubr.f32.gmra.mrb[0].mxu0 %v3760
        %v3863 = vpop.f32.mrb[0].mxu0
        %v3864 = vadd.f32 0.0, %v3863
        %v3865 = vpop.f32.mrb[0].mxu0
        %3866 = vmatprep.mubr.f32.mxu0 0.0
        %3867 = vmatmul.mubr.f32.gmra.mrb[0].mxu0 %v3762
        %v3868 = vpop.f32.mrb[0].mxu0
        %v3869 = vadd.f32 0.0, %v3868
        %v3870 = vpop.f32.mrb[0].mxu0
        %3871 = vdwg.mxu0
        %v3872 = vadd.f32 %v3706, %v3834
        %v3873 = vadd.f32 %v3707, %v3839
        %v3874 = vadd.f32 %v3708, %v3844
        %v3875 = vadd.f32 %v3709, %v3849
        %v3876 = vadd.f32 %v3710, %v3854
        %v3877 = vadd.f32 %v3711, %v3859
        %v3878 = vadd.f32 %v3712, %v3864
        %v3879 = vadd.f32 %v3713, %v3869
        %v3880 = vld [vmem:[%s1096 + $0x1] sm:$0xff]
        %v3881 = vld [vmem:[%s1096 + $0x11] sm:$0xff]
        %v3882 = vld [vmem:[%s1096 + $0x21] sm:$0xff]
        %v3883 = vld [vmem:[%s1096 + $0x31] sm:$0xff]
        %v3884 = vld [vmem:[%s1096 + $0x41] sm:$0xff]
        %v3885 = vld [vmem:[%s1096 + $0x51] sm:$0xff]
        %v3886 = vld [vmem:[%s1096 + $0x61] sm:$0xff]
        %v3887 = vld [vmem:[%s1096 + $0x71] sm:$0xff]
        %v3888 = vld [vmem:[%s2263] sm:$0xff]
        %v3889 = vld [vmem:[%s2263 + $0x8] sm:$0xf]
        %3898 = vrot.lane.b32.xlu0 %v3880, 124
        %v3899 = vpop.permute.xlu0 %3898
        %3900 = vrot.lane.b32.xlu0 %v3881, 124
        %v3901 = vpop.permute.xlu0 %3900
        %3902 = vrot.lane.b32.xlu0 %v3882, 124
        %v3903 = vpop.permute.xlu0 %3902
        %3904 = vrot.lane.b32.xlu0 %v3883, 124
        %v3905 = vpop.permute.xlu0 %3904
        %3906 = vrot.lane.b32.xlu0 %v3884, 124
        %v3907 = vpop.permute.xlu0 %3906
        %3908 = vrot.lane.b32.xlu0 %v3885, 124
        %v3909 = vpop.permute.xlu0 %3908
        %3910 = vrot.lane.b32.xlu0 %v3886, 124
        %v3911 = vpop.permute.xlu0 %3910
        %3912 = vrot.lane.b32.xlu0 %v3887, 124
        %v3913 = vpop.permute.xlu0 %3912
        %v3914 = vsel %vm1687, %v3899, 0
        %v3916 = vsel %vm1687, %v3901, 0
        %v3918 = vsel %vm1687, %v3903, 0
        %v3920 = vsel %vm1687, %v3905, 0
        %v3922 = vsel %vm1687, %v3907, 0
        %v3924 = vsel %vm1687, %v3909, 0
        %v3926 = vsel %vm1687, %v3911, 0
        %v3928 = vsel %vm1687, %v3913, 0
        %v3931 = vsel %vm1712, %v3889, 0
        %3933 = vmatprep.subr.mxu0 0.0
        %3934 = vmatpush1.msra.mxu0 %v3888
        %3935 = vmatprep.subr.mxu0 0.0
        %3936 = vmatpush1.msra.mxu0 %v3931
        %3937 = vmatprep.subr.mxu0 0.0
        %3938 = vmatpush1.msra.mxu0 0.0
        %3939 = vmatprep.subr.mxu0 0.0
        %3940 = vmatpush1.msra.mxu0 0.0
        %3941 = vmatprep.subr.mxu0 0.0
        %3942 = vmatpush1.msra.mxu0 0.0
        %3943 = vmatprep.subr.mxu0 0.0
        %3944 = vmatpush1.msra.mxu0 0.0
        %3945 = vmatprep.subr.mxu0 0.0
        %3946 = vmatpush1.msra.mxu0 0.0
        %3947 = vmatprep.subr.mxu0 0.0
        %3948 = vmatpush1.msra.mxu0 0.0
        %3949 = vmatprep.subr.mxu0 0.0
        %3950 = vmatpush1.msra.mxu0 0.0
        %3951 = vmatprep.subr.mxu0 0.0
        %3952 = vmatpush1.msra.mxu0 0.0
        %3953 = vmatprep.subr.mxu0 0.0
        %3954 = vmatpush1.msra.mxu0 0.0
        %3955 = vmatprep.subr.mxu0 0.0
        %3956 = vmatpush1.msra.mxu0 0.0
        %3957 = vmatprep.subr.mxu0 0.0
        %3958 = vmatpush1.msra.mxu0 0.0
        %3959 = vmatprep.subr.mxu0 0.0
        %3960 = vmatpush1.msra.mxu0 0.0
        %3961 = vmatprep.subr.mxu0 0.0
        %3962 = vmatpush1.msra.mxu0 0.0
        %3963 = vmatprep.subr.mxu0 0.0
        %3964 = vmatpush1.msra.mxu0 0.0
        %3965 = vmatprep.subr.mxu0 0.0
        %3966 = vmatpush1.msra.mxu0 0.0
        %3967 = vmatprep.subr.mxu0 0.0
        %3968 = vmatpush1.msra.mxu0 0.0
        %3969 = vmatprep.subr.mxu0 0.0
        %3970 = vmatpush1.msra.mxu0 0.0
        %3971 = vmatprep.subr.mxu0 0.0
        %3972 = vmatpush1.msra.mxu0 0.0
        %3973 = vmatprep.subr.mxu0 0.0
        %3974 = vmatpush1.msra.mxu0 0.0
        %3975 = vmatprep.subr.mxu0 0.0
        %3976 = vmatpush1.msra.mxu0 0.0
        %3977 = vmatprep.subr.mxu0 0.0
        %3978 = vmatpush1.msra.mxu0 0.0
        %3979 = vmatprep.subr.mxu0 0.0
        %3980 = vmatpush1.msra.mxu0 0.0
        %3981 = vmatprep.subr.mxu0 0.0
        %3982 = vmatpush1.msra.mxu0 0.0
        %3983 = vmatprep.subr.mxu0 0.0
        %3984 = vmatpush1.msra.mxu0 0.0
        %3985 = vmatprep.subr.mxu0 0.0
        %3986 = vmatpush1.msra.mxu0 0.0
        %3987 = vmatprep.subr.mxu0 0.0
        %3988 = vmatpush1.msra.mxu0 0.0
        %3989 = vmatprep.subr.mxu0 0.0
        %3990 = vmatpush1.msra.mxu0 0.0
        %3991 = vmatprep.subr.mxu0 0.0
        %3992 = vmatpush1.msra.mxu0 0.0
        %3993 = vmatprep.subr.mxu0 0.0
        %3994 = vmatpush1.msra.mxu0 0.0
        %3995 = vmatprep.subr.mxu0 0.0
        %3996 = vmatpush1.msra.mxu0 0.0
        %3997 = vmatprep.mubr.f32.mxu0 0.0
        %3998 = vmatmul.mubr.f32.gmra.mrb[0].mxu0 %v3914
        %v3999 = vpop.f32.mrb[0].mxu0
        %v4000 = vadd.f32 0.0, %v3999
        %v4001 = vpop.f32.mrb[0].mxu0
        %4002 = vmatprep.mubr.f32.mxu0 0.0
        %4003 = vmatmul.mubr.f32.gmra.mrb[0].mxu0 %v3916
        %v4004 = vpop.f32.mrb[0].mxu0
        %v4005 = vadd.f32 0.0, %v4004
        %v4006 = vpop.f32.mrb[0].mxu0
        %4007 = vmatprep.mubr.f32.mxu0 0.0
        %4008 = vmatmul.mubr.f32.gmra.mrb[0].mxu0 %v3918
        %v4009 = vpop.f32.mrb[0].mxu0
        %v4010 = vadd.f32 0.0, %v4009
        %v4011 = vpop.f32.mrb[0].mxu0
        %4012 = vmatprep.mubr.f32.mxu0 0.0
        %4013 = vmatmul.mubr.f32.gmra.mrb[0].mxu0 %v3920
        %v4014 = vpop.f32.mrb[0].mxu0
        %v4015 = vadd.f32 0.0, %v4014
        %v4016 = vpop.f32.mrb[0].mxu0
        %4017 = vmatprep.mubr.f32.mxu0 0.0
        %4018 = vmatmul.mubr.f32.gmra.mrb[0].mxu0 %v3922
        %v4019 = vpop.f32.mrb[0].mxu0
        %v4020 = vadd.f32 0.0, %v4019
        %v4021 = vpop.f32.mrb[0].mxu0
        %4022 = vmatprep.mubr.f32.mxu0 0.0
        %4023 = vmatmul.mubr.f32.gmra.mrb[0].mxu0 %v3924
        %v4024 = vpop.f32.mrb[0].mxu0
        %v4025 = vadd.f32 0.0, %v4024
        %v4026 = vpop.f32.mrb[0].mxu0
        %4027 = vmatprep.mubr.f32.mxu0 0.0
        %4028 = vmatmul.mubr.f32.gmra.mrb[0].mxu0 %v3926
        %v4029 = vpop.f32.mrb[0].mxu0
        %v4030 = vadd.f32 0.0, %v4029
        %v4031 = vpop.f32.mrb[0].mxu0
        %4032 = vmatprep.mubr.f32.mxu0 0.0
        %4033 = vmatmul.mubr.f32.gmra.mrb[0].mxu0 %v3928
        %v4034 = vpop.f32.mrb[0].mxu0
        %v4035 = vadd.f32 0.0, %v4034
        %v4036 = vpop.f32.mrb[0].mxu0
        %4037 = vdwg.mxu0
        %v4038 = vadd.f32 %v3872, %v4000
        %v4039 = vadd.f32 %v3873, %v4005
        %v4040 = vadd.f32 %v3874, %v4010
        %v4041 = vadd.f32 %v3875, %v4015
        %v4042 = vadd.f32 %v3876, %v4020
        %v4043 = vadd.f32 %v3877, %v4025
        %v4044 = vadd.f32 %v3878, %v4030
        %v4045 = vadd.f32 %v3879, %v4035
        %v4046 = vld [vmem:[%s1096 + $0x2] sm:$0xff]
        %v4047 = vld [vmem:[%s1096 + $0x12] sm:$0xff]
        %v4048 = vld [vmem:[%s1096 + $0x22] sm:$0xff]
        %v4049 = vld [vmem:[%s1096 + $0x32] sm:$0xff]
        %v4050 = vld [vmem:[%s1096 + $0x42] sm:$0xff]
        %v4051 = vld [vmem:[%s1096 + $0x52] sm:$0xff]
        %v4052 = vld [vmem:[%s1096 + $0x62] sm:$0xff]
        %v4053 = vld [vmem:[%s1096 + $0x72] sm:$0xff]
        %v4054 = vld [vmem:[%s2414] sm:$0xff]
        %v4055 = vld [vmem:[%s2414 + $0x8] sm:$0xf]
        %4064 = vrot.lane.b32.xlu0 %v4046, 124
        %v4065 = vpop.permute.xlu0 %4064
        %4066 = vrot.lane.b32.xlu0 %v4047, 124
        %v4067 = vpop.permute.xlu0 %4066
        %4068 = vrot.lane.b32.xlu0 %v4048, 124
        %v4069 = vpop.permute.xlu0 %4068
        %4070 = vrot.lane.b32.xlu0 %v4049, 124
        %v4071 = vpop.permute.xlu0 %4070
        %4072 = vrot.lane.b32.xlu0 %v4050, 124
        %v4073 = vpop.permute.xlu0 %4072
        %4074 = vrot.lane.b32.xlu0 %v4051, 124
        %v4075 = vpop.permute.xlu0 %4074
        %4076 = vrot.lane.b32.xlu0 %v4052, 124
        %v4077 = vpop.permute.xlu0 %4076
        %4078 = vrot.lane.b32.xlu0 %v4053, 124
        %v4079 = vpop.permute.xlu0 %4078
        %v4080 = vsel %vm1687, %v4065, 0
        %v4082 = vsel %vm1687, %v4067, 0
        %v4084 = vsel %vm1687, %v4069, 0
        %v4086 = vsel %vm1687, %v4071, 0
        %v4088 = vsel %vm1687, %v4073, 0
        %v4090 = vsel %vm1687, %v4075, 0
        %v4092 = vsel %vm1687, %v4077, 0
        %v4094 = vsel %vm1687, %v4079, 0
        %v4097 = vsel %vm1712, %v4055, 0
        %4099 = vmatprep.subr.mxu0 0.0
        %4100 = vmatpush1.msra.mxu0 %v4054
        %4101 = vmatprep.subr.mxu0 0.0
        %4102 = vmatpush1.msra.mxu0 %v4097
        %4103 = vmatprep.subr.mxu0 0.0
        %4104 = vmatpush1.msra.mxu0 0.0
        %4105 = vmatprep.subr.mxu0 0.0
        %4106 = vmatpush1.msra.mxu0 0.0
        %4107 = vmatprep.subr.mxu0 0.0
        %4108 = vmatpush1.msra.mxu0 0.0
        %4109 = vmatprep.subr.mxu0 0.0
        %4110 = vmatpush1.msra.mxu0 0.0
        %4111 = vmatprep.subr.mxu0 0.0
        %4112 = vmatpush1.msra.mxu0 0.0
        %4113 = vmatprep.subr.mxu0 0.0
        %4114 = vmatpush1.msra.mxu0 0.0
        %4115 = vmatprep.subr.mxu0 0.0
        %4116 = vmatpush1.msra.mxu0 0.0
        %4117 = vmatprep.subr.mxu0 0.0
        %4118 = vmatpush1.msra.mxu0 0.0
        %4119 = vmatprep.subr.mxu0 0.0
        %4120 = vmatpush1.msra.mxu0 0.0
        %4121 = vmatprep.subr.mxu0 0.0
        %4122 = vmatpush1.msra.mxu0 0.0
        %4123 = vmatprep.subr.mxu0 0.0
        %4124 = vmatpush1.msra.mxu0 0.0
        %4125 = vmatprep.subr.mxu0 0.0
        %4126 = vmatpush1.msra.mxu0 0.0
        %4127 = vmatprep.subr.mxu0 0.0
        %4128 = vmatpush1.msra.mxu0 0.0
        %4129 = vmatprep.subr.mxu0 0.0
        %4130 = vmatpush1.msra.mxu0 0.0
        %4131 = vmatprep.subr.mxu0 0.0
        %4132 = vmatpush1.msra.mxu0 0.0
        %4133 = vmatprep.subr.mxu0 0.0
        %4134 = vmatpush1.msra.mxu0 0.0
        %4135 = vmatprep.subr.mxu0 0.0
        %4136 = vmatpush1.msra.mxu0 0.0
        %4137 = vmatprep.subr.mxu0 0.0
        %4138 = vmatpush1.msra.mxu0 0.0
        %4139 = vmatprep.subr.mxu0 0.0
        %4140 = vmatpush1.msra.mxu0 0.0
        %4141 = vmatprep.subr.mxu0 0.0
        %4142 = vmatpush1.msra.mxu0 0.0
        %4143 = vmatprep.subr.mxu0 0.0
        %4144 = vmatpush1.msra.mxu0 0.0
        %4145 = vmatprep.subr.mxu0 0.0
        %4146 = vmatpush1.msra.mxu0 0.0
        %4147 = vmatprep.subr.mxu0 0.0
        %4148 = vmatpush1.msra.mxu0 0.0
        %4149 = vmatprep.subr.mxu0 0.0
        %4150 = vmatpush1.msra.mxu0 0.0
        %4151 = vmatprep.subr.mxu0 0.0
        %4152 = vmatpush1.msra.mxu0 0.0
        %4153 = vmatprep.subr.mxu0 0.0
        %4154 = vmatpush1.msra.mxu0 0.0
        %4155 = vmatprep.subr.mxu0 0.0
        %4156 = vmatpush1.msra.mxu0 0.0
        %4157 = vmatprep.subr.mxu0 0.0
        %4158 = vmatpush1.msra.mxu0 0.0
        %4159 = vmatprep.subr.mxu0 0.0
        %4160 = vmatpush1.msra.mxu0 0.0
        %4161 = vmatprep.subr.mxu0 0.0
        %4162 = vmatpush1.msra.mxu0 0.0
        %4163 = vmatprep.mubr.f32.mxu0 0.0
        %4164 = vmatmul.mubr.f32.gmra.mrb[0].mxu0 %v4080
        %v4165 = vpop.f32.mrb[0].mxu0
        %v4166 = vadd.f32 0.0, %v4165
        %v4167 = vpop.f32.mrb[0].mxu0
        %4168 = vmatprep.mubr.f32.mxu0 0.0
        %4169 = vmatmul.mubr.f32.gmra.mrb[0].mxu0 %v4082
        %v4170 = vpop.f32.mrb[0].mxu0
        %v4171 = vadd.f32 0.0, %v4170
        %v4172 = vpop.f32.mrb[0].mxu0
        %4173 = vmatprep.mubr.f32.mxu0 0.0
        %4174 = vmatmul.mubr.f32.gmra.mrb[0].mxu0 %v4084
        %v4175 = vpop.f32.mrb[0].mxu0
        %v4176 = vadd.f32 0.0, %v4175
        %v4177 = vpop.f32.mrb[0].mxu0
        %4178 = vmatprep.mubr.f32.mxu0 0.0
        %4179 = vmatmul.mubr.f32.gmra.mrb[0].mxu0 %v4086
        %v4180 = vpop.f32.mrb[0].mxu0
        %v4181 = vadd.f32 0.0, %v4180
        %v4182 = vpop.f32.mrb[0].mxu0
        %4183 = vmatprep.mubr.f32.mxu0 0.0
        %4184 = vmatmul.mubr.f32.gmra.mrb[0].mxu0 %v4088
        %v4185 = vpop.f32.mrb[0].mxu0
        %v4186 = vadd.f32 0.0, %v4185
        %v4187 = vpop.f32.mrb[0].mxu0
        %4188 = vmatprep.mubr.f32.mxu0 0.0
        %4189 = vmatmul.mubr.f32.gmra.mrb[0].mxu0 %v4090
        %v4190 = vpop.f32.mrb[0].mxu0
        %v4191 = vadd.f32 0.0, %v4190
        %v4192 = vpop.f32.mrb[0].mxu0
        %4193 = vmatprep.mubr.f32.mxu0 0.0
        %4194 = vmatmul.mubr.f32.gmra.mrb[0].mxu0 %v4092
        %v4195 = vpop.f32.mrb[0].mxu0
        %v4196 = vadd.f32 0.0, %v4195
        %v4197 = vpop.f32.mrb[0].mxu0
        %4198 = vmatprep.mubr.f32.mxu0 0.0
        %4199 = vmatmul.mubr.f32.gmra.mrb[0].mxu0 %v4094
        %v4200 = vpop.f32.mrb[0].mxu0
        %v4201 = vadd.f32 0.0, %v4200
        %v4202 = vpop.f32.mrb[0].mxu0
        %4203 = vdwg.mxu0
        %v4204 = vadd.f32 %v4038, %v4166
        %v4205 = vadd.f32 %v4039, %v4171
        %v4206 = vadd.f32 %v4040, %v4176
        %v4207 = vadd.f32 %v4041, %v4181
        %v4208 = vadd.f32 %v4042, %v4186
        %v4209 = vadd.f32 %v4043, %v4191
        %v4210 = vadd.f32 %v4044, %v4196
        %v4211 = vadd.f32 %v4045, %v4201
        %v4212 = vld [vmem:[%s2557] sm:$0xff]
        %v4213 = vld [vmem:[%s2557 + $0x10] sm:$0xff]
        %v4214 = vld [vmem:[%s2557 + $0x20] sm:$0xff]
        %v4215 = vld [vmem:[%s2557 + $0x30] sm:$0xff]
        %v4216 = vld [vmem:[%s2557 + $0x40] sm:$0xff]
        %v4217 = vld [vmem:[%s2557 + $0x50] sm:$0xff]
        %v4218 = vld [vmem:[%s2557 + $0x60] sm:$0xff]
        %v4219 = vld [vmem:[%s2557 + $0x70] sm:$0xff]
        %v4220 = vld [vmem:[%s2566] sm:$0xff]
        %v4221 = vld [vmem:[%s2566 + $0x8] sm:$0xf]
        %4230 = vrot.lane.b32.xlu0 %v4212, 124
        %v4231 = vpop.permute.xlu0 %4230
        %4232 = vrot.lane.b32.xlu0 %v4213, 124
        %v4233 = vpop.permute.xlu0 %4232
        %4234 = vrot.lane.b32.xlu0 %v4214, 124
        %v4235 = vpop.permute.xlu0 %4234
        %4236 = vrot.lane.b32.xlu0 %v4215, 124
        %v4237 = vpop.permute.xlu0 %4236
        %4238 = vrot.lane.b32.xlu0 %v4216, 124
        %v4239 = vpop.permute.xlu0 %4238
        %4240 = vrot.lane.b32.xlu0 %v4217, 124
        %v4241 = vpop.permute.xlu0 %4240
        %4242 = vrot.lane.b32.xlu0 %v4218, 124
        %v4243 = vpop.permute.xlu0 %4242
        %4244 = vrot.lane.b32.xlu0 %v4219, 124
        %v4245 = vpop.permute.xlu0 %4244
        %v4246 = vsel %vm1687, %v4231, 0
        %v4248 = vsel %vm1687, %v4233, 0
        %v4250 = vsel %vm1687, %v4235, 0
        %v4252 = vsel %vm1687, %v4237, 0
        %v4254 = vsel %vm1687, %v4239, 0
        %v4256 = vsel %vm1687, %v4241, 0
        %v4258 = vsel %vm1687, %v4243, 0
        %v4260 = vsel %vm1687, %v4245, 0
        %v4263 = vsel %vm1712, %v4221, 0
        %4265 = vmatprep.subr.mxu0 0.0
        %4266 = vmatpush1.msra.mxu0 %v4220
        %4267 = vmatprep.subr.mxu0 0.0
        %4268 = vmatpush1.msra.mxu0 %v4263
        %4269 = vmatprep.subr.mxu0 0.0
        %4270 = vmatpush1.msra.mxu0 0.0
        %4271 = vmatprep.subr.mxu0 0.0
        %4272 = vmatpush1.msra.mxu0 0.0
        %4273 = vmatprep.subr.mxu0 0.0
        %4274 = vmatpush1.msra.mxu0 0.0
        %4275 = vmatprep.subr.mxu0 0.0
        %4276 = vmatpush1.msra.mxu0 0.0
        %4277 = vmatprep.subr.mxu0 0.0
        %4278 = vmatpush1.msra.mxu0 0.0
        %4279 = vmatprep.subr.mxu0 0.0
        %4280 = vmatpush1.msra.mxu0 0.0
        %4281 = vmatprep.subr.mxu0 0.0
        %4282 = vmatpush1.msra.mxu0 0.0
        %4283 = vmatprep.subr.mxu0 0.0
        %4284 = vmatpush1.msra.mxu0 0.0
        %4285 = vmatprep.subr.mxu0 0.0
        %4286 = vmatpush1.msra.mxu0 0.0
        %4287 = vmatprep.subr.mxu0 0.0
        %4288 = vmatpush1.msra.mxu0 0.0
        %4289 = vmatprep.subr.mxu0 0.0
        %4290 = vmatpush1.msra.mxu0 0.0
        %4291 = vmatprep.subr.mxu0 0.0
        %4292 = vmatpush1.msra.mxu0 0.0
        %4293 = vmatprep.subr.mxu0 0.0
        %4294 = vmatpush1.msra.mxu0 0.0
        %4295 = vmatprep.subr.mxu0 0.0
        %4296 = vmatpush1.msra.mxu0 0.0
        %4297 = vmatprep.subr.mxu0 0.0
        %4298 = vmatpush1.msra.mxu0 0.0
        %4299 = vmatprep.subr.mxu0 0.0
        %4300 = vmatpush1.msra.mxu0 0.0
        %4301 = vmatprep.subr.mxu0 0.0
        %4302 = vmatpush1.msra.mxu0 0.0
        %4303 = vmatprep.subr.mxu0 0.0
        %4304 = vmatpush1.msra.mxu0 0.0
        %4305 = vmatprep.subr.mxu0 0.0
        %4306 = vmatpush1.msra.mxu0 0.0
        %4307 = vmatprep.subr.mxu0 0.0
        %4308 = vmatpush1.msra.mxu0 0.0
        %4309 = vmatprep.subr.mxu0 0.0
        %4310 = vmatpush1.msra.mxu0 0.0
        %4311 = vmatprep.subr.mxu0 0.0
        %4312 = vmatpush1.msra.mxu0 0.0
        %4313 = vmatprep.subr.mxu0 0.0
        %4314 = vmatpush1.msra.mxu0 0.0
        %4315 = vmatprep.subr.mxu0 0.0
        %4316 = vmatpush1.msra.mxu0 0.0
        %4317 = vmatprep.subr.mxu0 0.0
        %4318 = vmatpush1.msra.mxu0 0.0
        %4319 = vmatprep.subr.mxu0 0.0
        %4320 = vmatpush1.msra.mxu0 0.0
        %4321 = vmatprep.subr.mxu0 0.0
        %4322 = vmatpush1.msra.mxu0 0.0
        %4323 = vmatprep.subr.mxu0 0.0
        %4324 = vmatpush1.msra.mxu0 0.0
        %4325 = vmatprep.subr.mxu0 0.0
        %4326 = vmatpush1.msra.mxu0 0.0
        %4327 = vmatprep.subr.mxu0 0.0
        %4328 = vmatpush1.msra.mxu0 0.0
        %4329 = vmatprep.mubr.f32.mxu0 0.0
        %4330 = vmatmul.mubr.f32.gmra.mrb[0].mxu0 %v4246
        %v4331 = vpop.f32.mrb[0].mxu0
        %v4332 = vadd.f32 0.0, %v4331
        %v4333 = vpop.f32.mrb[0].mxu0
        %4334 = vmatprep.mubr.f32.mxu0 0.0
        %4335 = vmatmul.mubr.f32.gmra.mrb[0].mxu0 %v4248
        %v4336 = vpop.f32.mrb[0].mxu0
        %v4337 = vadd.f32 0.0, %v4336
        %v4338 = vpop.f32.mrb[0].mxu0
        %4339 = vmatprep.mubr.f32.mxu0 0.0
        %4340 = vmatmul.mubr.f32.gmra.mrb[0].mxu0 %v4250
        %v4341 = vpop.f32.mrb[0].mxu0
        %v4342 = vadd.f32 0.0, %v4341
        %v4343 = vpop.f32.mrb[0].mxu0
        %4344 = vmatprep.mubr.f32.mxu0 0.0
        %4345 = vmatmul.mubr.f32.gmra.mrb[0].mxu0 %v4252
        %v4346 = vpop.f32.mrb[0].mxu0
        %v4347 = vadd.f32 0.0, %v4346
        %v4348 = vpop.f32.mrb[0].mxu0
        %4349 = vmatprep.mubr.f32.mxu0 0.0
        %4350 = vmatmul.mubr.f32.gmra.mrb[0].mxu0 %v4254
        %v4351 = vpop.f32.mrb[0].mxu0
        %v4352 = vadd.f32 0.0, %v4351
        %v4353 = vpop.f32.mrb[0].mxu0
        %4354 = vmatprep.mubr.f32.mxu0 0.0
        %4355 = vmatmul.mubr.f32.gmra.mrb[0].mxu0 %v4256
        %v4356 = vpop.f32.mrb[0].mxu0
        %v4357 = vadd.f32 0.0, %v4356
        %v4358 = vpop.f32.mrb[0].mxu0
        %4359 = vmatprep.mubr.f32.mxu0 0.0
        %4360 = vmatmul.mubr.f32.gmra.mrb[0].mxu0 %v4258
        %v4361 = vpop.f32.mrb[0].mxu0
        %v4362 = vadd.f32 0.0, %v4361
        %v4363 = vpop.f32.mrb[0].mxu0
        %4364 = vmatprep.mubr.f32.mxu0 0.0
        %4365 = vmatmul.mubr.f32.gmra.mrb[0].mxu0 %v4260
        %v4366 = vpop.f32.mrb[0].mxu0
        %v4367 = vadd.f32 0.0, %v4366
        %v4368 = vpop.f32.mrb[0].mxu0
        %4369 = vdwg.mxu0
        %v4370 = vadd.f32 %v4204, %v4332
        %v4371 = vadd.f32 %v4205, %v4337
        %v4372 = vadd.f32 %v4206, %v4342
        %v4373 = vadd.f32 %v4207, %v4347
        %v4374 = vadd.f32 %v4208, %v4352
        %v4375 = vadd.f32 %v4209, %v4357
        %v4376 = vadd.f32 %v4210, %v4362
        %v4377 = vadd.f32 %v4211, %v4367
        %v4378 = vld [vmem:[%s2557 + $0x1] sm:$0xff]
        %v4379 = vld [vmem:[%s2557 + $0x11] sm:$0xff]
        %v4380 = vld [vmem:[%s2557 + $0x21] sm:$0xff]
        %v4381 = vld [vmem:[%s2557 + $0x31] sm:$0xff]
        %v4382 = vld [vmem:[%s2557 + $0x41] sm:$0xff]
        %v4383 = vld [vmem:[%s2557 + $0x51] sm:$0xff]
        %v4384 = vld [vmem:[%s2557 + $0x61] sm:$0xff]
        %v4385 = vld [vmem:[%s2557 + $0x71] sm:$0xff]
        %v4386 = vld [vmem:[%s2717] sm:$0xff]
        %v4387 = vld [vmem:[%s2717 + $0x8] sm:$0xf]
        %4396 = vrot.lane.b32.xlu0 %v4378, 124
        %v4397 = vpop.permute.xlu0 %4396
        %4398 = vrot.lane.b32.xlu0 %v4379, 124
        %v4399 = vpop.permute.xlu0 %4398
        %4400 = vrot.lane.b32.xlu0 %v4380, 124
        %v4401 = vpop.permute.xlu0 %4400
        %4402 = vrot.lane.b32.xlu0 %v4381, 124
        %v4403 = vpop.permute.xlu0 %4402
        %4404 = vrot.lane.b32.xlu0 %v4382, 124
        %v4405 = vpop.permute.xlu0 %4404
        %4406 = vrot.lane.b32.xlu0 %v4383, 124
        %v4407 = vpop.permute.xlu0 %4406
        %4408 = vrot.lane.b32.xlu0 %v4384, 124
        %v4409 = vpop.permute.xlu0 %4408
        %4410 = vrot.lane.b32.xlu0 %v4385, 124
        %v4411 = vpop.permute.xlu0 %4410
        %v4412 = vsel %vm1687, %v4397, 0
        %v4414 = vsel %vm1687, %v4399, 0
        %v4416 = vsel %vm1687, %v4401, 0
        %v4418 = vsel %vm1687, %v4403, 0
        %v4420 = vsel %vm1687, %v4405, 0
        %v4422 = vsel %vm1687, %v4407, 0
        %v4424 = vsel %vm1687, %v4409, 0
        %v4426 = vsel %vm1687, %v4411, 0
        %v4429 = vsel %vm1712, %v4387, 0
        %4431 = vmatprep.subr.mxu0 0.0
        %4432 = vmatpush1.msra.mxu0 %v4386
        %4433 = vmatprep.subr.mxu0 0.0
        %4434 = vmatpush1.msra.mxu0 %v4429
        %4435 = vmatprep.subr.mxu0 0.0
        %4436 = vmatpush1.msra.mxu0 0.0
        %4437 = vmatprep.subr.mxu0 0.0
        %4438 = vmatpush1.msra.mxu0 0.0
        %4439 = vmatprep.subr.mxu0 0.0
        %4440 = vmatpush1.msra.mxu0 0.0
        %4441 = vmatprep.subr.mxu0 0.0
        %4442 = vmatpush1.msra.mxu0 0.0
        %4443 = vmatprep.subr.mxu0 0.0
        %4444 = vmatpush1.msra.mxu0 0.0
        %4445 = vmatprep.subr.mxu0 0.0
        %4446 = vmatpush1.msra.mxu0 0.0
        %4447 = vmatprep.subr.mxu0 0.0
        %4448 = vmatpush1.msra.mxu0 0.0
        %4449 = vmatprep.subr.mxu0 0.0
        %4450 = vmatpush1.msra.mxu0 0.0
        %4451 = vmatprep.subr.mxu0 0.0
        %4452 = vmatpush1.msra.mxu0 0.0
        %4453 = vmatprep.subr.mxu0 0.0
        %4454 = vmatpush1.msra.mxu0 0.0
        %4455 = vmatprep.subr.mxu0 0.0
        %4456 = vmatpush1.msra.mxu0 0.0
        %4457 = vmatprep.subr.mxu0 0.0
        %4458 = vmatpush1.msra.mxu0 0.0
        %4459 = vmatprep.subr.mxu0 0.0
        %4460 = vmatpush1.msra.mxu0 0.0
        %4461 = vmatprep.subr.mxu0 0.0
        %4462 = vmatpush1.msra.mxu0 0.0
        %4463 = vmatprep.subr.mxu0 0.0
        %4464 = vmatpush1.msra.mxu0 0.0
        %4465 = vmatprep.subr.mxu0 0.0
        %4466 = vmatpush1.msra.mxu0 0.0
        %4467 = vmatprep.subr.mxu0 0.0
        %4468 = vmatpush1.msra.mxu0 0.0
        %4469 = vmatprep.subr.mxu0 0.0
        %4470 = vmatpush1.msra.mxu0 0.0
        %4471 = vmatprep.subr.mxu0 0.0
        %4472 = vmatpush1.msra.mxu0 0.0
        %4473 = vmatprep.subr.mxu0 0.0
        %4474 = vmatpush1.msra.mxu0 0.0
        %4475 = vmatprep.subr.mxu0 0.0
        %4476 = vmatpush1.msra.mxu0 0.0
        %4477 = vmatprep.subr.mxu0 0.0
        %4478 = vmatpush1.msra.mxu0 0.0
        %4479 = vmatprep.subr.mxu0 0.0
        %4480 = vmatpush1.msra.mxu0 0.0
        %4481 = vmatprep.subr.mxu0 0.0
        %4482 = vmatpush1.msra.mxu0 0.0
        %4483 = vmatprep.subr.mxu0 0.0
        %4484 = vmatpush1.msra.mxu0 0.0
        %4485 = vmatprep.subr.mxu0 0.0
        %4486 = vmatpush1.msra.mxu0 0.0
        %4487 = vmatprep.subr.mxu0 0.0
        %4488 = vmatpush1.msra.mxu0 0.0
        %4489 = vmatprep.subr.mxu0 0.0
        %4490 = vmatpush1.msra.mxu0 0.0
        %4491 = vmatprep.subr.mxu0 0.0
        %4492 = vmatpush1.msra.mxu0 0.0
        %4493 = vmatprep.subr.mxu0 0.0
        %4494 = vmatpush1.msra.mxu0 0.0
        %4495 = vmatprep.mubr.f32.mxu0 0.0
        %4496 = vmatmul.mubr.f32.gmra.mrb[0].mxu0 %v4412
        %v4497 = vpop.f32.mrb[0].mxu0
        %v4498 = vadd.f32 0.0, %v4497
        %v4499 = vpop.f32.mrb[0].mxu0
        %4500 = vmatprep.mubr.f32.mxu0 0.0
        %4501 = vmatmul.mubr.f32.gmra.mrb[0].mxu0 %v4414
        %v4502 = vpop.f32.mrb[0].mxu0
        %v4503 = vadd.f32 0.0, %v4502
        %v4504 = vpop.f32.mrb[0].mxu0
        %4505 = vmatprep.mubr.f32.mxu0 0.0
        %4506 = vmatmul.mubr.f32.gmra.mrb[0].mxu0 %v4416
        %v4507 = vpop.f32.mrb[0].mxu0
        %v4508 = vadd.f32 0.0, %v4507
        %v4509 = vpop.f32.mrb[0].mxu0
        %4510 = vmatprep.mubr.f32.mxu0 0.0
        %4511 = vmatmul.mubr.f32.gmra.mrb[0].mxu0 %v4418
        %v4512 = vpop.f32.mrb[0].mxu0
        %v4513 = vadd.f32 0.0, %v4512
        %v4514 = vpop.f32.mrb[0].mxu0
        %4515 = vmatprep.mubr.f32.mxu0 0.0
        %4516 = vmatmul.mubr.f32.gmra.mrb[0].mxu0 %v4420
        %v4517 = vpop.f32.mrb[0].mxu0
        %v4518 = vadd.f32 0.0, %v4517
        %v4519 = vpop.f32.mrb[0].mxu0
        %4520 = vmatprep.mubr.f32.mxu0 0.0
        %4521 = vmatmul.mubr.f32.gmra.mrb[0].mxu0 %v4422
        %v4522 = vpop.f32.mrb[0].mxu0
        %v4523 = vadd.f32 0.0, %v4522
        %v4524 = vpop.f32.mrb[0].mxu0
        %4525 = vmatprep.mubr.f32.mxu0 0.0
        %4526 = vmatmul.mubr.f32.gmra.mrb[0].mxu0 %v4424
        %v4527 = vpop.f32.mrb[0].mxu0
        %v4528 = vadd.f32 0.0, %v4527
        %v4529 = vpop.f32.mrb[0].mxu0
        %4530 = vmatprep.mubr.f32.mxu0 0.0
        %4531 = vmatmul.mubr.f32.gmra.mrb[0].mxu0 %v4426
        %v4532 = vpop.f32.mrb[0].mxu0
        %v4533 = vadd.f32 0.0, %v4532
        %v4534 = vpop.f32.mrb[0].mxu0
        %4535 = vdwg.mxu0
        %v4536 = vadd.f32 %v4370, %v4498
        %v4537 = vadd.f32 %v4371, %v4503
        %v4538 = vadd.f32 %v4372, %v4508
        %v4539 = vadd.f32 %v4373, %v4513
        %v4540 = vadd.f32 %v4374, %v4518
        %v4541 = vadd.f32 %v4375, %v4523
        %v4542 = vadd.f32 %v4376, %v4528
        %v4543 = vadd.f32 %v4377, %v4533
        %v4544 = vld [vmem:[%s2557 + $0x2] sm:$0xff]
        %v4545 = vld [vmem:[%s2557 + $0x12] sm:$0xff]
        %v4546 = vld [vmem:[%s2557 + $0x22] sm:$0xff]
        %v4547 = vld [vmem:[%s2557 + $0x32] sm:$0xff]
        %v4548 = vld [vmem:[%s2557 + $0x42] sm:$0xff]
        %v4549 = vld [vmem:[%s2557 + $0x52] sm:$0xff]
        %v4550 = vld [vmem:[%s2557 + $0x62] sm:$0xff]
        %v4551 = vld [vmem:[%s2557 + $0x72] sm:$0xff]
        %v4552 = vld [vmem:[%s2868] sm:$0xff]
        %v4553 = vld [vmem:[%s2868 + $0x8] sm:$0xf]
        %4562 = vrot.lane.b32.xlu0 %v4544, 124
        %v4563 = vpop.permute.xlu0 %4562
        %4564 = vrot.lane.b32.xlu0 %v4545, 124
        %v4565 = vpop.permute.xlu0 %4564
        %4566 = vrot.lane.b32.xlu0 %v4546, 124
        %v4567 = vpop.permute.xlu0 %4566
        %4568 = vrot.lane.b32.xlu0 %v4547, 124
        %v4569 = vpop.permute.xlu0 %4568
        %4570 = vrot.lane.b32.xlu0 %v4548, 124
        %v4571 = vpop.permute.xlu0 %4570
        %4572 = vrot.lane.b32.xlu0 %v4549, 124
        %v4573 = vpop.permute.xlu0 %4572
        %4574 = vrot.lane.b32.xlu0 %v4550, 124
        %v4575 = vpop.permute.xlu0 %4574
        %4576 = vrot.lane.b32.xlu0 %v4551, 124
        %v4577 = vpop.permute.xlu0 %4576
        %v4578 = vsel %vm1687, %v4563, 0
        %v4580 = vsel %vm1687, %v4565, 0
        %v4582 = vsel %vm1687, %v4567, 0
        %v4584 = vsel %vm1687, %v4569, 0
        %v4586 = vsel %vm1687, %v4571, 0
        %v4588 = vsel %vm1687, %v4573, 0
        %v4590 = vsel %vm1687, %v4575, 0
        %v4592 = vsel %vm1687, %v4577, 0
        %v4595 = vsel %vm1712, %v4553, 0
        %4597 = vmatprep.subr.mxu0 0.0
        %4598 = vmatpush1.msra.mxu0 %v4552
        %4599 = vmatprep.subr.mxu0 0.0
        %4600 = vmatpush1.msra.mxu0 %v4595
        %4601 = vmatprep.subr.mxu0 0.0
        %4602 = vmatpush1.msra.mxu0 0.0
        %4603 = vmatprep.subr.mxu0 0.0
        %4604 = vmatpush1.msra.mxu0 0.0
        %4605 = vmatprep.subr.mxu0 0.0
        %4606 = vmatpush1.msra.mxu0 0.0
        %4607 = vmatprep.subr.mxu0 0.0
        %4608 = vmatpush1.msra.mxu0 0.0
        %4609 = vmatprep.subr.mxu0 0.0
        %4610 = vmatpush1.msra.mxu0 0.0
        %4611 = vmatprep.subr.mxu0 0.0
        %4612 = vmatpush1.msra.mxu0 0.0
        %4613 = vmatprep.subr.mxu0 0.0
        %4614 = vmatpush1.msra.mxu0 0.0
        %4615 = vmatprep.subr.mxu0 0.0
        %4616 = vmatpush1.msra.mxu0 0.0
        %4617 = vmatprep.subr.mxu0 0.0
        %4618 = vmatpush1.msra.mxu0 0.0
        %4619 = vmatprep.subr.mxu0 0.0
        %4620 = vmatpush1.msra.mxu0 0.0
        %4621 = vmatprep.subr.mxu0 0.0
        %4622 = vmatpush1.msra.mxu0 0.0
        %4623 = vmatprep.subr.mxu0 0.0
        %4624 = vmatpush1.msra.mxu0 0.0
        %4625 = vmatprep.subr.mxu0 0.0
        %4626 = vmatpush1.msra.mxu0 0.0
        %4627 = vmatprep.subr.mxu0 0.0
        %4628 = vmatpush1.msra.mxu0 0.0
        %4629 = vmatprep.subr.mxu0 0.0
        %4630 = vmatpush1.msra.mxu0 0.0
        %4631 = vmatprep.subr.mxu0 0.0
        %4632 = vmatpush1.msra.mxu0 0.0
        %4633 = vmatprep.subr.mxu0 0.0
        %4634 = vmatpush1.msra.mxu0 0.0
        %4635 = vmatprep.subr.mxu0 0.0
        %4636 = vmatpush1.msra.mxu0 0.0
        %4637 = vmatprep.subr.mxu0 0.0
        %4638 = vmatpush1.msra.mxu0 0.0
        %4639 = vmatprep.subr.mxu0 0.0
        %4640 = vmatpush1.msra.mxu0 0.0
        %4641 = vmatprep.subr.mxu0 0.0
        %4642 = vmatpush1.msra.mxu0 0.0
        %4643 = vmatprep.subr.mxu0 0.0
        %4644 = vmatpush1.msra.mxu0 0.0
        %4645 = vmatprep.subr.mxu0 0.0
        %4646 = vmatpush1.msra.mxu0 0.0
        %4647 = vmatprep.subr.mxu0 0.0
        %4648 = vmatpush1.msra.mxu0 0.0
        %4649 = vmatprep.subr.mxu0 0.0
        %4650 = vmatpush1.msra.mxu0 0.0
        %4651 = vmatprep.subr.mxu0 0.0
        %4652 = vmatpush1.msra.mxu0 0.0
        %4653 = vmatprep.subr.mxu0 0.0
        %4654 = vmatpush1.msra.mxu0 0.0
        %4655 = vmatprep.subr.mxu0 0.0
        %4656 = vmatpush1.msra.mxu0 0.0
        %4657 = vmatprep.subr.mxu0 0.0
        %4658 = vmatpush1.msra.mxu0 0.0
        %4659 = vmatprep.subr.mxu0 0.0
        %4660 = vmatpush1.msra.mxu0 0.0
        %4661 = vmatprep.mubr.f32.mxu0 0.0
        %4662 = vmatmul.mubr.f32.gmra.mrb[0].mxu0 %v4578
        %v4663 = vpop.f32.mrb[0].mxu0
        %v4664 = vadd.f32 0.0, %v4663
        %v4665 = vpop.f32.mrb[0].mxu0
        %4666 = vmatprep.mubr.f32.mxu0 0.0
        %4667 = vmatmul.mubr.f32.gmra.mrb[0].mxu0 %v4580
        %v4668 = vpop.f32.mrb[0].mxu0
        %v4669 = vadd.f32 0.0, %v4668
        %v4670 = vpop.f32.mrb[0].mxu0
        %4671 = vmatprep.mubr.f32.mxu0 0.0
        %4672 = vmatmul.mubr.f32.gmra.mrb[0].mxu0 %v4582
        %v4673 = vpop.f32.mrb[0].mxu0
        %v4674 = vadd.f32 0.0, %v4673
        %v4675 = vpop.f32.mrb[0].mxu0
        %4676 = vmatprep.mubr.f32.mxu0 0.0
        %4677 = vmatmul.mubr.f32.gmra.mrb[0].mxu0 %v4584
        %v4678 = vpop.f32.mrb[0].mxu0
        %v4679 = vadd.f32 0.0, %v4678
        %v4680 = vpop.f32.mrb[0].mxu0
        %4681 = vmatprep.mubr.f32.mxu0 0.0
        %4682 = vmatmul.mubr.f32.gmra.mrb[0].mxu0 %v4586
        %v4683 = vpop.f32.mrb[0].mxu0
        %v4684 = vadd.f32 0.0, %v4683
        %v4685 = vpop.f32.mrb[0].mxu0
        %4686 = vmatprep.mubr.f32.mxu0 0.0
        %4687 = vmatmul.mubr.f32.gmra.mrb[0].mxu0 %v4588
        %v4688 = vpop.f32.mrb[0].mxu0
        %v4689 = vadd.f32 0.0, %v4688
        %v4690 = vpop.f32.mrb[0].mxu0
        %4691 = vmatprep.mubr.f32.mxu0 0.0
        %4692 = vmatmul.mubr.f32.gmra.mrb[0].mxu0 %v4590
        %v4693 = vpop.f32.mrb[0].mxu0
        %v4694 = vadd.f32 0.0, %v4693
        %v4695 = vpop.f32.mrb[0].mxu0
        %4696 = vmatprep.mubr.f32.mxu0 0.0
        %4697 = vmatmul.mubr.f32.gmra.mrb[0].mxu0 %v4592
        %v4698 = vpop.f32.mrb[0].mxu0
        %v4699 = vadd.f32 0.0, %v4698
        %v4700 = vpop.f32.mrb[0].mxu0
        %4701 = vdwg.mxu0
        %v4702 = vadd.f32 %v4536, %v4664
        %v4703 = vadd.f32 %v4537, %v4669
        %v4704 = vadd.f32 %v4538, %v4674
        %v4705 = vadd.f32 %v4539, %v4679
        %v4706 = vadd.f32 %v4540, %v4684
        %v4707 = vadd.f32 %v4541, %v4689
        %v4708 = vadd.f32 %v4542, %v4694
        %v4709 = vadd.f32 %v4543, %v4699
        %v4710 = vmul.f32 %v4702, %v3015
        %v4711 = vmul.f32 %v4703, %v3015
        %v4712 = vmul.f32 %v4704, %v3015
        %v4713 = vmul.f32 %v4705, %v3015
        %v4714 = vmul.f32 %v4706, %v3015
        %v4715 = vmul.f32 %v4707, %v3015
        %v4716 = vmul.f32 %v4708, %v3015
        %v4717 = vmul.f32 %v4709, %v3015
        %v4718 = vadd.f32 %v4710, %v3029
        %v4719 = vadd.f32 %v4711, %v3029
        %v4720 = vadd.f32 %v4712, %v3029
        %v4721 = vadd.f32 %v4713, %v3029
        %v4722 = vadd.f32 %v4714, %v3029
        %v4723 = vadd.f32 %v4715, %v3029
        %v4724 = vadd.f32 %v4716, %v3029
        %v4725 = vadd.f32 %v4717, %v3029
        %v4726 = vmax.f32 %v4718, 0.0
        %v4727 = vmax.f32 %v4719, 0.0
        %v4728 = vmax.f32 %v4720, 0.0
        %v4729 = vmax.f32 %v4721, 0.0
        %v4730 = vmax.f32 %v4722, 0.0
        %v4731 = vmax.f32 %v4723, 0.0
        %v4732 = vmax.f32 %v4724, 0.0
        %v4733 = vmax.f32 %v4725, 0.0
        %v4735 = vsel %vm3047, %v4726, 0
        %v4738 = vsel %vm3047, %v4727, 0
        %v4741 = vsel %vm3047, %v4728, 0
        %v4744 = vsel %vm3047, %v4729, 0
        %v4747 = vsel %vm3047, %v4730, 0
        %v4750 = vsel %vm3047, %v4731, 0
        %v4753 = vsel %vm3047, %v4732, 0
        %v4756 = vsel %vm3047, %v4733, 0
        %4758 = vmatprep.subr.mxu0 0.0
        %4759 = vmatpush1.msra.mxu0 %v3073
        %4760 = vmatprep.subr.mxu0 0.0
        %4761 = vmatpush1.msra.mxu0 0.0
        %4762 = vmatprep.subr.mxu0 0.0
        %4763 = vmatpush1.msra.mxu0 0.0
        %4764 = vmatprep.subr.mxu0 0.0
        %4765 = vmatpush1.msra.mxu0 0.0
        %4766 = vmatprep.subr.mxu0 0.0
        %4767 = vmatpush1.msra.mxu0 0.0
        %4768 = vmatprep.subr.mxu0 0.0
        %4769 = vmatpush1.msra.mxu0 0.0
        %4770 = vmatprep.subr.mxu0 0.0
        %4771 = vmatpush1.msra.mxu0 0.0
        %4772 = vmatprep.subr.mxu0 0.0
        %4773 = vmatpush1.msra.mxu0 0.0
        %4774 = vmatprep.subr.mxu0 0.0
        %4775 = vmatpush1.msra.mxu0 0.0
        %4776 = vmatprep.subr.mxu0 0.0
        %4777 = vmatpush1.msra.mxu0 0.0
        %4778 = vmatprep.subr.mxu0 0.0
        %4779 = vmatpush1.msra.mxu0 0.0
        %4780 = vmatprep.subr.mxu0 0.0
        %4781 = vmatpush1.msra.mxu0 0.0
        %4782 = vmatprep.subr.mxu0 0.0
        %4783 = vmatpush1.msra.mxu0 0.0
        %4784 = vmatprep.subr.mxu0 0.0
        %4785 = vmatpush1.msra.mxu0 0.0
        %4786 = vmatprep.subr.mxu0 0.0
        %4787 = vmatpush1.msra.mxu0 0.0
        %4788 = vmatprep.subr.mxu0 0.0
        %4789 = vmatpush1.msra.mxu0 0.0
        %4790 = vmatprep.subr.mxu0 0.0
        %4791 = vmatpush1.msra.mxu0 0.0
        %4792 = vmatprep.subr.mxu0 0.0
        %4793 = vmatpush1.msra.mxu0 0.0
        %4794 = vmatprep.subr.mxu0 0.0
        %4795 = vmatpush1.msra.mxu0 0.0
        %4796 = vmatprep.subr.mxu0 0.0
        %4797 = vmatpush1.msra.mxu0 0.0
        %4798 = vmatprep.subr.mxu0 0.0
        %4799 = vmatpush1.msra.mxu0 0.0
        %4800 = vmatprep.subr.mxu0 0.0
        %4801 = vmatpush1.msra.mxu0 0.0
        %4802 = vmatprep.subr.mxu0 0.0
        %4803 = vmatpush1.msra.mxu0 0.0
        %4804 = vmatprep.subr.mxu0 0.0
        %4805 = vmatpush1.msra.mxu0 0.0
        %4806 = vmatprep.subr.mxu0 0.0
        %4807 = vmatpush1.msra.mxu0 0.0
        %4808 = vmatprep.subr.mxu0 0.0
        %4809 = vmatpush1.msra.mxu0 0.0
        %4810 = vmatprep.subr.mxu0 0.0
        %4811 = vmatpush1.msra.mxu0 0.0
        %4812 = vmatprep.subr.mxu0 0.0
        %4813 = vmatpush1.msra.mxu0 0.0
        %4814 = vmatprep.subr.mxu0 0.0
        %4815 = vmatpush1.msra.mxu0 0.0
        %4816 = vmatprep.subr.mxu0 0.0
        %4817 = vmatpush1.msra.mxu0 0.0
        %4818 = vmatprep.subr.mxu0 0.0
        %4819 = vmatpush1.msra.mxu0 0.0
        %4820 = vmatprep.subr.mxu0 0.0
        %4821 = vmatpush1.msra.mxu0 0.0
        %4822 = vmatprep.mubr.f32.mxu0 0.0
        %4823 = vmatmul.mubr.f32.gmra.mrb[0].mxu0 %v4735
        %v4824 = vpop.f32.mrb[0].mxu0
        %v4825 = vadd.f32 0.0, %v4824
        %v4826 = vpop.f32.mrb[0].mxu0
        %4827 = vmatprep.mubr.f32.mxu0 0.0
        %4828 = vmatmul.mubr.f32.gmra.mrb[0].mxu0 %v4738
        %v4829 = vpop.f32.mrb[0].mxu0
        %v4830 = vadd.f32 0.0, %v4829
        %v4831 = vpop.f32.mrb[0].mxu0
        %4832 = vmatprep.mubr.f32.mxu0 0.0
        %4833 = vmatmul.mubr.f32.gmra.mrb[0].mxu0 %v4741
        %v4834 = vpop.f32.mrb[0].mxu0
        %v4835 = vadd.f32 0.0, %v4834
        %v4836 = vpop.f32.mrb[0].mxu0
        %4837 = vmatprep.mubr.f32.mxu0 0.0
        %4838 = vmatmul.mubr.f32.gmra.mrb[0].mxu0 %v4744
        %v4839 = vpop.f32.mrb[0].mxu0
        %v4840 = vadd.f32 0.0, %v4839
        %v4841 = vpop.f32.mrb[0].mxu0
        %4842 = vmatprep.mubr.f32.mxu0 0.0
        %4843 = vmatmul.mubr.f32.gmra.mrb[0].mxu0 %v4747
        %v4844 = vpop.f32.mrb[0].mxu0
        %v4845 = vadd.f32 0.0, %v4844
        %v4846 = vpop.f32.mrb[0].mxu0
        %4847 = vmatprep.mubr.f32.mxu0 0.0
        %4848 = vmatmul.mubr.f32.gmra.mrb[0].mxu0 %v4750
        %v4849 = vpop.f32.mrb[0].mxu0
        %v4850 = vadd.f32 0.0, %v4849
        %v4851 = vpop.f32.mrb[0].mxu0
        %4852 = vmatprep.mubr.f32.mxu0 0.0
        %4853 = vmatmul.mubr.f32.gmra.mrb[0].mxu0 %v4753
        %v4854 = vpop.f32.mrb[0].mxu0
        %v4855 = vadd.f32 0.0, %v4854
        %v4856 = vpop.f32.mrb[0].mxu0
        %4857 = vmatprep.mubr.f32.mxu0 0.0
        %4858 = vmatmul.mubr.f32.gmra.mrb[0].mxu0 %v4756
        %v4859 = vpop.f32.mrb[0].mxu0
        %v4860 = vadd.f32 0.0, %v4859
        %v4861 = vpop.f32.mrb[0].mxu0
        %4862 = vdwg.mxu0
        %v4863 = vmul.f32 %v4825, %v3184
        %v4864 = vmul.f32 %v4830, %v3184
        %v4865 = vmul.f32 %v4835, %v3184
        %v4866 = vmul.f32 %v4840, %v3184
        %v4867 = vmul.f32 %v4845, %v3184
        %v4868 = vmul.f32 %v4850, %v3184
        %v4869 = vmul.f32 %v4855, %v3184
        %v4870 = vmul.f32 %v4860, %v3184
        %v4871 = vadd.f32 %v4863, %v3198
        %v4872 = vadd.f32 %v4864, %v3198
        %v4873 = vadd.f32 %v4865, %v3198
        %v4874 = vadd.f32 %v4866, %v3198
        %v4875 = vadd.f32 %v4867, %v3198
        %v4876 = vadd.f32 %v4868, %v3198
        %v4877 = vadd.f32 %v4869, %v3198
        %v4878 = vadd.f32 %v4870, %v3198
        %v4879 = vadd.f32 %v4871, %v610
        %v4880 = vadd.f32 %v4872, %v611
        %v4881 = vadd.f32 %v4873, %v612
        %v4882 = vadd.f32 %v4874, %v613
        %v4883 = vadd.f32 %v4875, %v614
        %v4884 = vadd.f32 %v4876, %v615
        %v4885 = vadd.f32 %v4877, %v616
        %v4886 = vadd.f32 %v4878, %v617
        %v4887 = vmax.f32 %v4879, 0.0
        %v4888 = vmax.f32 %v4880, 0.0
        %v4889 = vmax.f32 %v4881, 0.0
        %v4890 = vmax.f32 %v4882, 0.0
        %v4891 = vmax.f32 %v4883, 0.0
        %v4892 = vmax.f32 %v4884, 0.0
        %v4893 = vmax.f32 %v4885, 0.0
        %v4894 = vmax.f32 %v4886, 0.0
        %s4895 = scalar_lea.vmem %s559, 64 [#allocation9]
        %4896 = vst.msk [vmem:[%s4895] sm:$0xff] %vm634, %v4887
        %4897 = vst.msk [vmem:[%s4895 + $0x8] sm:$0xff] %vm634, %v4888
        %4898 = vst.msk [vmem:[%s4895 + $0x10] sm:$0xff] %vm634, %v4889
        %4899 = vst.msk [vmem:[%s4895 + $0x18] sm:$0xff] %vm634, %v4890
        %4900 = vst.msk [vmem:[%s4895 + $0x20] sm:$0xff] %vm634, %v4891
        %4901 = vst.msk [vmem:[%s4895 + $0x28] sm:$0xff] %vm634, %v4892
        %4902 = vst.msk [vmem:[%s4895 + $0x30] sm:$0xff] %vm634, %v4893
        %4903 = vst.msk [vmem:[%s4895 + $0x38] sm:$0xff] %vm634, %v4894
        %v4904 = vld [vmem:[#allocation2] sm:$0xff]
        %v4905 = vld [vmem:[#allocation2 + $0x10] sm:$0xff]
        %v4906 = vld [vmem:[#allocation2 + $0x20] sm:$0xff]
        %v4907 = vld [vmem:[#allocation2 + $0x30] sm:$0xff]
        %v4908 = vld [vmem:[#allocation2 + $0x40] sm:$0xff]
        %v4909 = vld [vmem:[#allocation2 + $0x50] sm:$0xff]
        %v4910 = vld [vmem:[#allocation2 + $0x60] sm:$0xff]
        %v4911 = vld [vmem:[#allocation2 + $0x70] sm:$0xff]
        %v4912 = vld [vmem:[%s6] sm:$0xff]
        %v4913 = vld [vmem:[%s6 + $0x8] sm:$0xf]
        %v4914 = vld [vmem:[#allocation2 + $0x1] sm:$0xff]
        %v4915 = vld [vmem:[#allocation2 + $0x11] sm:$0xff]
        %v4916 = vld [vmem:[#allocation2 + $0x21] sm:$0xff]
        %v4917 = vld [vmem:[#allocation2 + $0x31] sm:$0xff]
        %v4918 = vld [vmem:[#allocation2 + $0x41] sm:$0xff]
        %v4919 = vld [vmem:[#allocation2 + $0x51] sm:$0xff]
        %v4920 = vld [vmem:[#allocation2 + $0x61] sm:$0xff]
        %v4921 = vld [vmem:[#allocation2 + $0x71] sm:$0xff]
        %v4922 = vld [vmem:[%s1684] sm:$0xff]
        %v4923 = vld [vmem:[%s1684 + $0x8] sm:$0xf]
        %4932 = vrot.lane.b32.xlu0 %v4914, 120
        %v4933 = vpop.permute.xlu0 %4932
        %4934 = vrot.lane.b32.xlu0 %v4915, 120
        %v4935 = vpop.permute.xlu0 %4934
        %4936 = vrot.lane.b32.xlu0 %v4916, 120
        %v4937 = vpop.permute.xlu0 %4936
        %4938 = vrot.lane.b32.xlu0 %v4917, 120
        %v4939 = vpop.permute.xlu0 %4938
        %4940 = vrot.lane.b32.xlu0 %v4918, 120
        %v4941 = vpop.permute.xlu0 %4940
        %4942 = vrot.lane.b32.xlu0 %v4919, 120
        %v4943 = vpop.permute.xlu0 %4942
        %4944 = vrot.lane.b32.xlu0 %v4920, 120
        %v4945 = vpop.permute.xlu0 %4944
        %4946 = vrot.lane.b32.xlu0 %v4921, 120
        %v4947 = vpop.permute.xlu0 %4946
        %v4948 = vsel %vm1687, %v4933, 0
        %v4950 = vsel %vm1687, %v4935, 0
        %v4952 = vsel %vm1687, %v4937, 0
        %v4954 = vsel %vm1687, %v4939, 0
        %v4956 = vsel %vm1687, %v4941, 0
        %v4958 = vsel %vm1687, %v4943, 0
        %v4960 = vsel %vm1687, %v4945, 0
        %v4962 = vsel %vm1687, %v4947, 0
        %v4965 = vsel %vm1712, %v4923, 0
        %4967 = vmatprep.subr.mxu0 0.0
        %4968 = vmatpush1.msra.mxu0 %v4922
        %4969 = vmatprep.subr.mxu0 0.0
        %4970 = vmatpush1.msra.mxu0 %v4965
        %4971 = vmatprep.subr.mxu0 0.0
        %4972 = vmatpush1.msra.mxu0 0.0
        %4973 = vmatprep.subr.mxu0 0.0
        %4974 = vmatpush1.msra.mxu0 0.0
        %4975 = vmatprep.subr.mxu0 0.0
        %4976 = vmatpush1.msra.mxu0 0.0
        %4977 = vmatprep.subr.mxu0 0.0
        %4978 = vmatpush1.msra.mxu0 0.0
        %4979 = vmatprep.subr.mxu0 0.0
        %4980 = vmatpush1.msra.mxu0 0.0
        %4981 = vmatprep.subr.mxu0 0.0
        %4982 = vmatpush1.msra.mxu0 0.0
        %4983 = vmatprep.subr.mxu0 0.0
        %4984 = vmatpush1.msra.mxu0 0.0
        %4985 = vmatprep.subr.mxu0 0.0
        %4986 = vmatpush1.msra.mxu0 0.0
        %4987 = vmatprep.subr.mxu0 0.0
        %4988 = vmatpush1.msra.mxu0 0.0
        %4989 = vmatprep.subr.mxu0 0.0
        %4990 = vmatpush1.msra.mxu0 0.0
        %4991 = vmatprep.subr.mxu0 0.0
        %4992 = vmatpush1.msra.mxu0 0.0
        %4993 = vmatprep.subr.mxu0 0.0
        %4994 = vmatpush1.msra.mxu0 0.0
        %4995 = vmatprep.subr.mxu0 0.0
        %4996 = vmatpush1.msra.mxu0 0.0
        %4997 = vmatprep.subr.mxu0 0.0
        %4998 = vmatpush1.msra.mxu0 0.0
        %4999 = vmatprep.subr.mxu0 0.0
        %5000 = vmatpush1.msra.mxu0 0.0
        %5001 = vmatprep.subr.mxu0 0.0
        %5002 = vmatpush1.msra.mxu0 0.0
        %5003 = vmatprep.subr.mxu0 0.0
        %5004 = vmatpush1.msra.mxu0 0.0
        %5005 = vmatprep.subr.mxu0 0.0
        %5006 = vmatpush1.msra.mxu0 0.0
        %5007 = vmatprep.subr.mxu0 0.0
        %5008 = vmatpush1.msra.mxu0 0.0
        %5009 = vmatprep.subr.mxu0 0.0
        %5010 = vmatpush1.msra.mxu0 0.0
        %5011 = vmatprep.subr.mxu0 0.0
        %5012 = vmatpush1.msra.mxu0 0.0
        %5013 = vmatprep.subr.mxu0 0.0
        %5014 = vmatpush1.msra.mxu0 0.0
        %5015 = vmatprep.subr.mxu0 0.0
        %5016 = vmatpush1.msra.mxu0 0.0
        %5017 = vmatprep.subr.mxu0 0.0
        %5018 = vmatpush1.msra.mxu0 0.0
        %5019 = vmatprep.subr.mxu0 0.0
        %5020 = vmatpush1.msra.mxu0 0.0
        %5021 = vmatprep.subr.mxu0 0.0
        %5022 = vmatpush1.msra.mxu0 0.0
        %5023 = vmatprep.subr.mxu0 0.0
        %5024 = vmatpush1.msra.mxu0 0.0
        %5025 = vmatprep.subr.mxu0 0.0
        %5026 = vmatpush1.msra.mxu0 0.0
        %5027 = vmatprep.subr.mxu0 0.0
        %5028 = vmatpush1.msra.mxu0 0.0
        %5029 = vmatprep.subr.mxu0 0.0
        %5030 = vmatpush1.msra.mxu0 0.0
        %5031 = vmatprep.mubr.f32.mxu0 0.0
        %5032 = vmatmul.mubr.f32.gmra.mrb[0].mxu0 %v4948
        %v5033 = vpop.f32.mrb[0].mxu0
        %v5034 = vadd.f32 0.0, %v5033
        %v5035 = vpop.f32.mrb[0].mxu0
        %5036 = vmatprep.mubr.f32.mxu0 0.0
        %5037 = vmatmul.mubr.f32.gmra.mrb[0].mxu0 %v4950
        %v5038 = vpop.f32.mrb[0].mxu0
        %v5039 = vadd.f32 0.0, %v5038
        %v5040 = vpop.f32.mrb[0].mxu0
        %5041 = vmatprep.mubr.f32.mxu0 0.0
        %5042 = vmatmul.mubr.f32.gmra.mrb[0].mxu0 %v4952
        %v5043 = vpop.f32.mrb[0].mxu0
        %v5044 = vadd.f32 0.0, %v5043
        %v5045 = vpop.f32.mrb[0].mxu0
        %5046 = vmatprep.mubr.f32.mxu0 0.0
        %5047 = vmatmul.mubr.f32.gmra.mrb[0].mxu0 %v4954
        %v5048 = vpop.f32.mrb[0].mxu0
        %v5049 = vadd.f32 0.0, %v5048
        %v5050 = vpop.f32.mrb[0].mxu0
        %5051 = vmatprep.mubr.f32.mxu0 0.0
        %5052 = vmatmul.mubr.f32.gmra.mrb[0].mxu0 %v4956
        %v5053 = vpop.f32.mrb[0].mxu0
        %v5054 = vadd.f32 0.0, %v5053
        %v5055 = vpop.f32.mrb[0].mxu0
        %5056 = vmatprep.mubr.f32.mxu0 0.0
        %5057 = vmatmul.mubr.f32.gmra.mrb[0].mxu0 %v4958
        %v5058 = vpop.f32.mrb[0].mxu0
        %v5059 = vadd.f32 0.0, %v5058
        %v5060 = vpop.f32.mrb[0].mxu0
        %5061 = vmatprep.mubr.f32.mxu0 0.0
        %5062 = vmatmul.mubr.f32.gmra.mrb[0].mxu0 %v4960
        %v5063 = vpop.f32.mrb[0].mxu0
        %v5064 = vadd.f32 0.0, %v5063
        %v5065 = vpop.f32.mrb[0].mxu0
        %5066 = vmatprep.mubr.f32.mxu0 0.0
        %5067 = vmatmul.mubr.f32.gmra.mrb[0].mxu0 %v4962
        %v5068 = vpop.f32.mrb[0].mxu0
        %v5069 = vadd.f32 0.0, %v5068
        %v5070 = vpop.f32.mrb[0].mxu0
        %5071 = vdwg.mxu0
        %5080 = vrot.lane.b32.xlu0 %v4904, 120
        %v5081 = vpop.permute.xlu0 %5080
        %5082 = vrot.lane.b32.xlu0 %v4905, 120
        %v5083 = vpop.permute.xlu0 %5082
        %5084 = vrot.lane.b32.xlu0 %v4906, 120
        %v5085 = vpop.permute.xlu0 %5084
        %5086 = vrot.lane.b32.xlu0 %v4907, 120
        %v5087 = vpop.permute.xlu0 %5086
        %5088 = vrot.lane.b32.xlu0 %v4908, 120
        %v5089 = vpop.permute.xlu0 %5088
        %5090 = vrot.lane.b32.xlu0 %v4909, 120
        %v5091 = vpop.permute.xlu0 %5090
        %5092 = vrot.lane.b32.xlu0 %v4910, 120
        %v5093 = vpop.permute.xlu0 %5092
        %5094 = vrot.lane.b32.xlu0 %v4911, 120
        %v5095 = vpop.permute.xlu0 %5094
        %v5096 = vsel %vm1687, %v5081, 0
        %v5098 = vsel %vm1687, %v5083, 0
        %v5100 = vsel %vm1687, %v5085, 0
        %v5102 = vsel %vm1687, %v5087, 0
        %v5104 = vsel %vm1687, %v5089, 0
        %v5106 = vsel %vm1687, %v5091, 0
        %v5108 = vsel %vm1687, %v5093, 0
        %v5110 = vsel %vm1687, %v5095, 0
        %v5113 = vsel %vm1712, %v4913, 0
        %5115 = vmatprep.subr.mxu0 0.0
        %5116 = vmatpush1.msra.mxu0 %v4912
        %5117 = vmatprep.subr.mxu0 0.0
        %5118 = vmatpush1.msra.mxu0 %v5113
        %5119 = vmatprep.subr.mxu0 0.0
        %5120 = vmatpush1.msra.mxu0 0.0
        %5121 = vmatprep.subr.mxu0 0.0
        %5122 = vmatpush1.msra.mxu0 0.0
        %5123 = vmatprep.subr.mxu0 0.0
        %5124 = vmatpush1.msra.mxu0 0.0
        %5125 = vmatprep.subr.mxu0 0.0
        %5126 = vmatpush1.msra.mxu0 0.0
        %5127 = vmatprep.subr.mxu0 0.0
        %5128 = vmatpush1.msra.mxu0 0.0
        %5129 = vmatprep.subr.mxu0 0.0
        %5130 = vmatpush1.msra.mxu0 0.0
        %5131 = vmatprep.subr.mxu0 0.0
        %5132 = vmatpush1.msra.mxu0 0.0
        %5133 = vmatprep.subr.mxu0 0.0
        %5134 = vmatpush1.msra.mxu0 0.0
        %5135 = vmatprep.subr.mxu0 0.0
        %5136 = vmatpush1.msra.mxu0 0.0
        %5137 = vmatprep.subr.mxu0 0.0
        %5138 = vmatpush1.msra.mxu0 0.0
        %5139 = vmatprep.subr.mxu0 0.0
        %5140 = vmatpush1.msra.mxu0 0.0
        %5141 = vmatprep.subr.mxu0 0.0
        %5142 = vmatpush1.msra.mxu0 0.0
        %5143 = vmatprep.subr.mxu0 0.0
        %5144 = vmatpush1.msra.mxu0 0.0
        %5145 = vmatprep.subr.mxu0 0.0
        %5146 = vmatpush1.msra.mxu0 0.0
        %5147 = vmatprep.subr.mxu0 0.0
        %5148 = vmatpush1.msra.mxu0 0.0
        %5149 = vmatprep.subr.mxu0 0.0
        %5150 = vmatpush1.msra.mxu0 0.0
        %5151 = vmatprep.subr.mxu0 0.0
        %5152 = vmatpush1.msra.mxu0 0.0
        %5153 = vmatprep.subr.mxu0 0.0
        %5154 = vmatpush1.msra.mxu0 0.0
        %5155 = vmatprep.subr.mxu0 0.0
        %5156 = vmatpush1.msra.mxu0 0.0
        %5157 = vmatprep.subr.mxu0 0.0
        %5158 = vmatpush1.msra.mxu0 0.0
        %5159 = vmatprep.subr.mxu0 0.0
        %5160 = vmatpush1.msra.mxu0 0.0
        %5161 = vmatprep.subr.mxu0 0.0
        %5162 = vmatpush1.msra.mxu0 0.0
        %5163 = vmatprep.subr.mxu0 0.0
        %5164 = vmatpush1.msra.mxu0 0.0
        %5165 = vmatprep.subr.mxu0 0.0
        %5166 = vmatpush1.msra.mxu0 0.0
        %5167 = vmatprep.subr.mxu0 0.0
        %5168 = vmatpush1.msra.mxu0 0.0
        %5169 = vmatprep.subr.mxu0 0.0
        %5170 = vmatpush1.msra.mxu0 0.0
        %5171 = vmatprep.subr.mxu0 0.0
        %5172 = vmatpush1.msra.mxu0 0.0
        %5173 = vmatprep.subr.mxu0 0.0
        %5174 = vmatpush1.msra.mxu0 0.0
        %5175 = vmatprep.subr.mxu0 0.0
        %5176 = vmatpush1.msra.mxu0 0.0
        %5177 = vmatprep.subr.mxu0 0.0
        %5178 = vmatpush1.msra.mxu0 0.0
        %5179 = vmatprep.mubr.f32.mxu0 0.0
        %5180 = vmatmul.mubr.f32.gmra.mrb[0].mxu0 %v5096
        %v5181 = vpop.f32.mrb[0].mxu0
        %v5182 = vadd.f32 %v5034, %v5181
        %v5183 = vpop.f32.mrb[0].mxu0
        %5184 = vmatprep.mubr.f32.mxu0 0.0
        %5185 = vmatmul.mubr.f32.gmra.mrb[0].mxu0 %v5098
        %v5186 = vpop.f32.mrb[0].mxu0
        %v5187 = vadd.f32 %v5039, %v5186
        %v5188 = vpop.f32.mrb[0].mxu0
        %5189 = vmatprep.mubr.f32.mxu0 0.0
        %5190 = vmatmul.mubr.f32.gmra.mrb[0].mxu0 %v5100
        %v5191 = vpop.f32.mrb[0].mxu0
        %v5192 = vadd.f32 %v5044, %v5191
        %v5193 = vpop.f32.mrb[0].mxu0
        %5194 = vmatprep.mubr.f32.mxu0 0.0
        %5195 = vmatmul.mubr.f32.gmra.mrb[0].mxu0 %v5102
        %v5196 = vpop.f32.mrb[0].mxu0
        %v5197 = vadd.f32 %v5049, %v5196
        %v5198 = vpop.f32.mrb[0].mxu0
        %5199 = vmatprep.mubr.f32.mxu0 0.0
        %5200 = vmatmul.mubr.f32.gmra.mrb[0].mxu0 %v5104
        %v5201 = vpop.f32.mrb[0].mxu0
        %v5202 = vadd.f32 %v5054, %v5201
        %v5203 = vpop.f32.mrb[0].mxu0
        %5204 = vmatprep.mubr.f32.mxu0 0.0
        %5205 = vmatmul.mubr.f32.gmra.mrb[0].mxu0 %v5106
        %v5206 = vpop.f32.mrb[0].mxu0
        %v5207 = vadd.f32 %v5059, %v5206
        %v5208 = vpop.f32.mrb[0].mxu0
        %5209 = vmatprep.mubr.f32.mxu0 0.0
        %5210 = vmatmul.mubr.f32.gmra.mrb[0].mxu0 %v5108
        %v5211 = vpop.f32.mrb[0].mxu0
        %v5212 = vadd.f32 %v5064, %v5211
        %v5213 = vpop.f32.mrb[0].mxu0
        %5214 = vmatprep.mubr.f32.mxu0 0.0
        %5215 = vmatmul.mubr.f32.gmra.mrb[0].mxu0 %v5110
        %v5216 = vpop.f32.mrb[0].mxu0
        %v5217 = vadd.f32 %v5069, %v5216
        %v5218 = vpop.f32.mrb[0].mxu0
        %5219 = vdwg.mxu0
        %v5220 = vld [vmem:[#allocation2 + $0x2] sm:$0xff]
        %v5221 = vld [vmem:[#allocation2 + $0x12] sm:$0xff]
        %v5222 = vld [vmem:[#allocation2 + $0x22] sm:$0xff]
        %v5223 = vld [vmem:[#allocation2 + $0x32] sm:$0xff]
        %v5224 = vld [vmem:[#allocation2 + $0x42] sm:$0xff]
        %v5225 = vld [vmem:[#allocation2 + $0x52] sm:$0xff]
        %v5226 = vld [vmem:[#allocation2 + $0x62] sm:$0xff]
        %v5227 = vld [vmem:[#allocation2 + $0x72] sm:$0xff]
        %v5228 = vld [vmem:[%s1961] sm:$0xff]
        %v5229 = vld [vmem:[%s1961 + $0x8] sm:$0xf]
        %5238 = vrot.lane.b32.xlu0 %v5220, 120
        %v5239 = vpop.permute.xlu0 %5238
        %5240 = vrot.lane.b32.xlu0 %v5221, 120
        %v5241 = vpop.permute.xlu0 %5240
        %5242 = vrot.lane.b32.xlu0 %v5222, 120
        %v5243 = vpop.permute.xlu0 %5242
        %5244 = vrot.lane.b32.xlu0 %v5223, 120
        %v5245 = vpop.permute.xlu0 %5244
        %5246 = vrot.lane.b32.xlu0 %v5224, 120
        %v5247 = vpop.permute.xlu0 %5246
        %5248 = vrot.lane.b32.xlu0 %v5225, 120
        %v5249 = vpop.permute.xlu0 %5248
        %5250 = vrot.lane.b32.xlu0 %v5226, 120
        %v5251 = vpop.permute.xlu0 %5250
        %5252 = vrot.lane.b32.xlu0 %v5227, 120
        %v5253 = vpop.permute.xlu0 %5252
        %v5254 = vsel %vm1687, %v5239, 0
        %v5256 = vsel %vm1687, %v5241, 0
        %v5258 = vsel %vm1687, %v5243, 0
        %v5260 = vsel %vm1687, %v5245, 0
        %v5262 = vsel %vm1687, %v5247, 0
        %v5264 = vsel %vm1687, %v5249, 0
        %v5266 = vsel %vm1687, %v5251, 0
        %v5268 = vsel %vm1687, %v5253, 0
        %v5271 = vsel %vm1712, %v5229, 0
        %5273 = vmatprep.subr.mxu0 0.0
        %5274 = vmatpush1.msra.mxu0 %v5228
        %5275 = vmatprep.subr.mxu0 0.0
        %5276 = vmatpush1.msra.mxu0 %v5271
        %5277 = vmatprep.subr.mxu0 0.0
        %5278 = vmatpush1.msra.mxu0 0.0
        %5279 = vmatprep.subr.mxu0 0.0
        %5280 = vmatpush1.msra.mxu0 0.0
        %5281 = vmatprep.subr.mxu0 0.0
        %5282 = vmatpush1.msra.mxu0 0.0
        %5283 = vmatprep.subr.mxu0 0.0
        %5284 = vmatpush1.msra.mxu0 0.0
        %5285 = vmatprep.subr.mxu0 0.0
        %5286 = vmatpush1.msra.mxu0 0.0
        %5287 = vmatprep.subr.mxu0 0.0
        %5288 = vmatpush1.msra.mxu0 0.0
        %5289 = vmatprep.subr.mxu0 0.0
        %5290 = vmatpush1.msra.mxu0 0.0
        %5291 = vmatprep.subr.mxu0 0.0
        %5292 = vmatpush1.msra.mxu0 0.0
        %5293 = vmatprep.subr.mxu0 0.0
        %5294 = vmatpush1.msra.mxu0 0.0
        %5295 = vmatprep.subr.mxu0 0.0
        %5296 = vmatpush1.msra.mxu0 0.0
        %5297 = vmatprep.subr.mxu0 0.0
        %5298 = vmatpush1.msra.mxu0 0.0
        %5299 = vmatprep.subr.mxu0 0.0
        %5300 = vmatpush1.msra.mxu0 0.0
        %5301 = vmatprep.subr.mxu0 0.0
        %5302 = vmatpush1.msra.mxu0 0.0
        %5303 = vmatprep.subr.mxu0 0.0
        %5304 = vmatpush1.msra.mxu0 0.0
        %5305 = vmatprep.subr.mxu0 0.0
        %5306 = vmatpush1.msra.mxu0 0.0
        %5307 = vmatprep.subr.mxu0 0.0
        %5308 = vmatpush1.msra.mxu0 0.0
        %5309 = vmatprep.subr.mxu0 0.0
        %5310 = vmatpush1.msra.mxu0 0.0
        %5311 = vmatprep.subr.mxu0 0.0
        %5312 = vmatpush1.msra.mxu0 0.0
        %5313 = vmatprep.subr.mxu0 0.0
        %5314 = vmatpush1.msra.mxu0 0.0
        %5315 = vmatprep.subr.mxu0 0.0
        %5316 = vmatpush1.msra.mxu0 0.0
        %5317 = vmatprep.subr.mxu0 0.0
        %5318 = vmatpush1.msra.mxu0 0.0
        %5319 = vmatprep.subr.mxu0 0.0
        %5320 = vmatpush1.msra.mxu0 0.0
        %5321 = vmatprep.subr.mxu0 0.0
        %5322 = vmatpush1.msra.mxu0 0.0
        %5323 = vmatprep.subr.mxu0 0.0
        %5324 = vmatpush1.msra.mxu0 0.0
        %5325 = vmatprep.subr.mxu0 0.0
        %5326 = vmatpush1.msra.mxu0 0.0
        %5327 = vmatprep.subr.mxu0 0.0
        %5328 = vmatpush1.msra.mxu0 0.0
        %5329 = vmatprep.subr.mxu0 0.0
        %5330 = vmatpush1.msra.mxu0 0.0
        %5331 = vmatprep.subr.mxu0 0.0
        %5332 = vmatpush1.msra.mxu0 0.0
        %5333 = vmatprep.subr.mxu0 0.0
        %5334 = vmatpush1.msra.mxu0 0.0
        %5335 = vmatprep.subr.mxu0 0.0
        %5336 = vmatpush1.msra.mxu0 0.0
        %5337 = vmatprep.mubr.f32.mxu0 0.0
        %5338 = vmatmul.mubr.f32.gmra.mrb[0].mxu0 %v5254
        %v5339 = vpop.f32.mrb[0].mxu0
        %v5340 = vadd.f32 0.0, %v5339
        %v5341 = vpop.f32.mrb[0].mxu0
        %5342 = vmatprep.mubr.f32.mxu0 0.0
        %5343 = vmatmul.mubr.f32.gmra.mrb[0].mxu0 %v5256
        %v5344 = vpop.f32.mrb[0].mxu0
        %v5345 = vadd.f32 0.0, %v5344
        %v5346 = vpop.f32.mrb[0].mxu0
        %5347 = vmatprep.mubr.f32.mxu0 0.0
        %5348 = vmatmul.mubr.f32.gmra.mrb[0].mxu0 %v5258
        %v5349 = vpop.f32.mrb[0].mxu0
        %v5350 = vadd.f32 0.0, %v5349
        %v5351 = vpop.f32.mrb[0].mxu0
        %5352 = vmatprep.mubr.f32.mxu0 0.0
        %5353 = vmatmul.mubr.f32.gmra.mrb[0].mxu0 %v5260
        %v5354 = vpop.f32.mrb[0].mxu0
        %v5355 = vadd.f32 0.0, %v5354
        %v5356 = vpop.f32.mrb[0].mxu0
        %5357 = vmatprep.mubr.f32.mxu0 0.0
        %5358 = vmatmul.mubr.f32.gmra.mrb[0].mxu0 %v5262
        %v5359 = vpop.f32.mrb[0].mxu0
        %v5360 = vadd.f32 0.0, %v5359
        %v5361 = vpop.f32.mrb[0].mxu0
        %5362 = vmatprep.mubr.f32.mxu0 0.0
        %5363 = vmatmul.mubr.f32.gmra.mrb[0].mxu0 %v5264
        %v5364 = vpop.f32.mrb[0].mxu0
        %v5365 = vadd.f32 0.0, %v5364
        %v5366 = vpop.f32.mrb[0].mxu0
        %5367 = vmatprep.mubr.f32.mxu0 0.0
        %5368 = vmatmul.mubr.f32.gmra.mrb[0].mxu0 %v5266
        %v5369 = vpop.f32.mrb[0].mxu0
        %v5370 = vadd.f32 0.0, %v5369
        %v5371 = vpop.f32.mrb[0].mxu0
        %5372 = vmatprep.mubr.f32.mxu0 0.0
        %5373 = vmatmul.mubr.f32.gmra.mrb[0].mxu0 %v5268
        %v5374 = vpop.f32.mrb[0].mxu0
        %v5375 = vadd.f32 0.0, %v5374
        %v5376 = vpop.f32.mrb[0].mxu0
        %5377 = vdwg.mxu0
        %v5378 = vadd.f32 %v5182, %v5340
        %v5379 = vadd.f32 %v5187, %v5345
        %v5380 = vadd.f32 %v5192, %v5350
        %v5381 = vadd.f32 %v5197, %v5355
        %v5382 = vadd.f32 %v5202, %v5360
        %v5383 = vadd.f32 %v5207, %v5365
        %v5384 = vadd.f32 %v5212, %v5370
        %v5385 = vadd.f32 %v5217, %v5375
        %v5386 = vld [vmem:[%s1096] sm:$0xff]
        %v5387 = vld [vmem:[%s1096 + $0x10] sm:$0xff]
        %v5388 = vld [vmem:[%s1096 + $0x20] sm:$0xff]
        %v5389 = vld [vmem:[%s1096 + $0x30] sm:$0xff]
        %v5390 = vld [vmem:[%s1096 + $0x40] sm:$0xff]
        %v5391 = vld [vmem:[%s1096 + $0x50] sm:$0xff]
        %v5392 = vld [vmem:[%s1096 + $0x60] sm:$0xff]
        %v5393 = vld [vmem:[%s1096 + $0x70] sm:$0xff]
        %v5394 = vld [vmem:[%s2112] sm:$0xff]
        %v5395 = vld [vmem:[%s2112 + $0x8] sm:$0xf]
        %5404 = vrot.lane.b32.xlu0 %v5386, 120
        %v5405 = vpop.permute.xlu0 %5404
        %5406 = vrot.lane.b32.xlu0 %v5387, 120
        %v5407 = vpop.permute.xlu0 %5406
        %5408 = vrot.lane.b32.xlu0 %v5388, 120
        %v5409 = vpop.permute.xlu0 %5408
        %5410 = vrot.lane.b32.xlu0 %v5389, 120
        %v5411 = vpop.permute.xlu0 %5410
        %5412 = vrot.lane.b32.xlu0 %v5390, 120
        %v5413 = vpop.permute.xlu0 %5412
        %5414 = vrot.lane.b32.xlu0 %v5391, 120
        %v5415 = vpop.permute.xlu0 %5414
        %5416 = vrot.lane.b32.xlu0 %v5392, 120
        %v5417 = vpop.permute.xlu0 %5416
        %5418 = vrot.lane.b32.xlu0 %v5393, 120
        %v5419 = vpop.permute.xlu0 %5418
        %v5420 = vsel %vm1687, %v5405, 0
        %v5422 = vsel %vm1687, %v5407, 0
        %v5424 = vsel %vm1687, %v5409, 0
        %v5426 = vsel %vm1687, %v5411, 0
        %v5428 = vsel %vm1687, %v5413, 0
        %v5430 = vsel %vm1687, %v5415, 0
        %v5432 = vsel %vm1687, %v5417, 0
        %v5434 = vsel %vm1687, %v5419, 0
        %v5437 = vsel %vm1712, %v5395, 0
        %5439 = vmatprep.subr.mxu0 0.0
        %5440 = vmatpush1.msra.mxu0 %v5394
        %5441 = vmatprep.subr.mxu0 0.0
        %5442 = vmatpush1.msra.mxu0 %v5437
        %5443 = vmatprep.subr.mxu0 0.0
        %5444 = vmatpush1.msra.mxu0 0.0
        %5445 = vmatprep.subr.mxu0 0.0
        %5446 = vmatpush1.msra.mxu0 0.0
        %5447 = vmatprep.subr.mxu0 0.0
        %5448 = vmatpush1.msra.mxu0 0.0
        %5449 = vmatprep.subr.mxu0 0.0
        %5450 = vmatpush1.msra.mxu0 0.0
        %5451 = vmatprep.subr.mxu0 0.0
        %5452 = vmatpush1.msra.mxu0 0.0
        %5453 = vmatprep.subr.mxu0 0.0
        %5454 = vmatpush1.msra.mxu0 0.0
        %5455 = vmatprep.subr.mxu0 0.0
        %5456 = vmatpush1.msra.mxu0 0.0
        %5457 = vmatprep.subr.mxu0 0.0
        %5458 = vmatpush1.msra.mxu0 0.0
        %5459 = vmatprep.subr.mxu0 0.0
        %5460 = vmatpush1.msra.mxu0 0.0
        %5461 = vmatprep.subr.mxu0 0.0
        %5462 = vmatpush1.msra.mxu0 0.0
        %5463 = vmatprep.subr.mxu0 0.0
        %5464 = vmatpush1.msra.mxu0 0.0
        %5465 = vmatprep.subr.mxu0 0.0
        %5466 = vmatpush1.msra.mxu0 0.0
        %5467 = vmatprep.subr.mxu0 0.0
        %5468 = vmatpush1.msra.mxu0 0.0
        %5469 = vmatprep.subr.mxu0 0.0
        %5470 = vmatpush1.msra.mxu0 0.0
        %5471 = vmatprep.subr.mxu0 0.0
        %5472 = vmatpush1.msra.mxu0 0.0
        %5473 = vmatprep.subr.mxu0 0.0
        %5474 = vmatpush1.msra.mxu0 0.0
        %5475 = vmatprep.subr.mxu0 0.0
        %5476 = vmatpush1.msra.mxu0 0.0
        %5477 = vmatprep.subr.mxu0 0.0
        %5478 = vmatpush1.msra.mxu0 0.0
        %5479 = vmatprep.subr.mxu0 0.0
        %5480 = vmatpush1.msra.mxu0 0.0
        %5481 = vmatprep.subr.mxu0 0.0
        %5482 = vmatpush1.msra.mxu0 0.0
        %5483 = vmatprep.subr.mxu0 0.0
        %5484 = vmatpush1.msra.mxu0 0.0
        %5485 = vmatprep.subr.mxu0 0.0
        %5486 = vmatpush1.msra.mxu0 0.0
        %5487 = vmatprep.subr.mxu0 0.0
        %5488 = vmatpush1.msra.mxu0 0.0
        %5489 = vmatprep.subr.mxu0 0.0
        %5490 = vmatpush1.msra.mxu0 0.0
        %5491 = vmatprep.subr.mxu0 0.0
        %5492 = vmatpush1.msra.mxu0 0.0
        %5493 = vmatprep.subr.mxu0 0.0
        %5494 = vmatpush1.msra.mxu0 0.0
        %5495 = vmatprep.subr.mxu0 0.0
        %5496 = vmatpush1.msra.mxu0 0.0
        %5497 = vmatprep.subr.mxu0 0.0
        %5498 = vmatpush1.msra.mxu0 0.0
        %5499 = vmatprep.subr.mxu0 0.0
        %5500 = vmatpush1.msra.mxu0 0.0
        %5501 = vmatprep.subr.mxu0 0.0
        %5502 = vmatpush1.msra.mxu0 0.0
        %5503 = vmatprep.mubr.f32.mxu0 0.0
        %5504 = vmatmul.mubr.f32.gmra.mrb[0].mxu0 %v5420
        %v5505 = vpop.f32.mrb[0].mxu0
        %v5506 = vadd.f32 0.0, %v5505
        %v5507 = vpop.f32.mrb[0].mxu0
        %5508 = vmatprep.mubr.f32.mxu0 0.0
        %5509 = vmatmul.mubr.f32.gmra.mrb[0].mxu0 %v5422
        %v5510 = vpop.f32.mrb[0].mxu0
        %v5511 = vadd.f32 0.0, %v5510
        %v5512 = vpop.f32.mrb[0].mxu0
        %5513 = vmatprep.mubr.f32.mxu0 0.0
        %5514 = vmatmul.mubr.f32.gmra.mrb[0].mxu0 %v5424
        %v5515 = vpop.f32.mrb[0].mxu0
        %v5516 = vadd.f32 0.0, %v5515
        %v5517 = vpop.f32.mrb[0].mxu0
        %5518 = vmatprep.mubr.f32.mxu0 0.0
        %5519 = vmatmul.mubr.f32.gmra.mrb[0].mxu0 %v5426
        %v5520 = vpop.f32.mrb[0].mxu0
        %v5521 = vadd.f32 0.0, %v5520
        %v5522 = vpop.f32.mrb[0].mxu0
        %5523 = vmatprep.mubr.f32.mxu0 0.0
        %5524 = vmatmul.mubr.f32.gmra.mrb[0].mxu0 %v5428
        %v5525 = vpop.f32.mrb[0].mxu0
        %v5526 = vadd.f32 0.0, %v5525
        %v5527 = vpop.f32.mrb[0].mxu0
        %5528 = vmatprep.mubr.f32.mxu0 0.0
        %5529 = vmatmul.mubr.f32.gmra.mrb[0].mxu0 %v5430
        %v5530 = vpop.f32.mrb[0].mxu0
        %v5531 = vadd.f32 0.0, %v5530
        %v5532 = vpop.f32.mrb[0].mxu0
        %5533 = vmatprep.mubr.f32.mxu0 0.0
        %5534 = vmatmul.mubr.f32.gmra.mrb[0].mxu0 %v5432
        %v5535 = vpop.f32.mrb[0].mxu0
        %v5536 = vadd.f32 0.0, %v5535
        %v5537 = vpop.f32.mrb[0].mxu0
        %5538 = vmatprep.mubr.f32.mxu0 0.0
        %5539 = vmatmul.mubr.f32.gmra.mrb[0].mxu0 %v5434
        %v5540 = vpop.f32.mrb[0].mxu0
        %v5541 = vadd.f32 0.0, %v5540
        %v5542 = vpop.f32.mrb[0].mxu0
        %5543 = vdwg.mxu0
        %v5544 = vadd.f32 %v5378, %v5506
        %v5545 = vadd.f32 %v5379, %v5511
        %v5546 = vadd.f32 %v5380, %v5516
        %v5547 = vadd.f32 %v5381, %v5521
        %v5548 = vadd.f32 %v5382, %v5526
        %v5549 = vadd.f32 %v5383, %v5531
        %v5550 = vadd.f32 %v5384, %v5536
        %v5551 = vadd.f32 %v5385, %v5541
        %v5552 = vld [vmem:[%s1096 + $0x1] sm:$0xff]
        %v5553 = vld [vmem:[%s1096 + $0x11] sm:$0xff]
        %v5554 = vld [vmem:[%s1096 + $0x21] sm:$0xff]
        %v5555 = vld [vmem:[%s1096 + $0x31] sm:$0xff]
        %v5556 = vld [vmem:[%s1096 + $0x41] sm:$0xff]
        %v5557 = vld [vmem:[%s1096 + $0x51] sm:$0xff]
        %v5558 = vld [vmem:[%s1096 + $0x61] sm:$0xff]
        %v5559 = vld [vmem:[%s1096 + $0x71] sm:$0xff]
        %v5560 = vld [vmem:[%s2263] sm:$0xff]
        %v5561 = vld [vmem:[%s2263 + $0x8] sm:$0xf]
        %5570 = vrot.lane.b32.xlu0 %v5552, 120
        %v5571 = vpop.permute.xlu0 %5570
        %5572 = vrot.lane.b32.xlu0 %v5553, 120
        %v5573 = vpop.permute.xlu0 %5572
        %5574 = vrot.lane.b32.xlu0 %v5554, 120
        %v5575 = vpop.permute.xlu0 %5574
        %5576 = vrot.lane.b32.xlu0 %v5555, 120
        %v5577 = vpop.permute.xlu0 %5576
        %5578 = vrot.lane.b32.xlu0 %v5556, 120
        %v5579 = vpop.permute.xlu0 %5578
        %5580 = vrot.lane.b32.xlu0 %v5557, 120
        %v5581 = vpop.permute.xlu0 %5580
        %5582 = vrot.lane.b32.xlu0 %v5558, 120
        %v5583 = vpop.permute.xlu0 %5582
        %5584 = vrot.lane.b32.xlu0 %v5559, 120
        %v5585 = vpop.permute.xlu0 %5584
        %v5586 = vsel %vm1687, %v5571, 0
        %v5588 = vsel %vm1687, %v5573, 0
        %v5590 = vsel %vm1687, %v5575, 0
        %v5592 = vsel %vm1687, %v5577, 0
        %v5594 = vsel %vm1687, %v5579, 0
        %v5596 = vsel %vm1687, %v5581, 0
        %v5598 = vsel %vm1687, %v5583, 0
        %v5600 = vsel %vm1687, %v5585, 0
        %v5603 = vsel %vm1712, %v5561, 0
        %5605 = vmatprep.subr.mxu0 0.0
        %5606 = vmatpush1.msra.mxu0 %v5560
        %5607 = vmatprep.subr.mxu0 0.0
        %5608 = vmatpush1.msra.mxu0 %v5603
        %5609 = vmatprep.subr.mxu0 0.0
        %5610 = vmatpush1.msra.mxu0 0.0
        %5611 = vmatprep.subr.mxu0 0.0
        %5612 = vmatpush1.msra.mxu0 0.0
        %5613 = vmatprep.subr.mxu0 0.0
        %5614 = vmatpush1.msra.mxu0 0.0
        %5615 = vmatprep.subr.mxu0 0.0
        %5616 = vmatpush1.msra.mxu0 0.0
        %5617 = vmatprep.subr.mxu0 0.0
        %5618 = vmatpush1.msra.mxu0 0.0
        %5619 = vmatprep.subr.mxu0 0.0
        %5620 = vmatpush1.msra.mxu0 0.0
        %5621 = vmatprep.subr.mxu0 0.0
        %5622 = vmatpush1.msra.mxu0 0.0
        %5623 = vmatprep.subr.mxu0 0.0
        %5624 = vmatpush1.msra.mxu0 0.0
        %5625 = vmatprep.subr.mxu0 0.0
        %5626 = vmatpush1.msra.mxu0 0.0
        %5627 = vmatprep.subr.mxu0 0.0
        %5628 = vmatpush1.msra.mxu0 0.0
        %5629 = vmatprep.subr.mxu0 0.0
        %5630 = vmatpush1.msra.mxu0 0.0
        %5631 = vmatprep.subr.mxu0 0.0
        %5632 = vmatpush1.msra.mxu0 0.0
        %5633 = vmatprep.subr.mxu0 0.0
        %5634 = vmatpush1.msra.mxu0 0.0
        %5635 = vmatprep.subr.mxu0 0.0
        %5636 = vmatpush1.msra.mxu0 0.0
        %5637 = vmatprep.subr.mxu0 0.0
        %5638 = vmatpush1.msra.mxu0 0.0
        %5639 = vmatprep.subr.mxu0 0.0
        %5640 = vmatpush1.msra.mxu0 0.0
        %5641 = vmatprep.subr.mxu0 0.0
        %5642 = vmatpush1.msra.mxu0 0.0
        %5643 = vmatprep.subr.mxu0 0.0
        %5644 = vmatpush1.msra.mxu0 0.0
        %5645 = vmatprep.subr.mxu0 0.0
        %5646 = vmatpush1.msra.mxu0 0.0
        %5647 = vmatprep.subr.mxu0 0.0
        %5648 = vmatpush1.msra.mxu0 0.0
        %5649 = vmatprep.subr.mxu0 0.0
        %5650 = vmatpush1.msra.mxu0 0.0
        %5651 = vmatprep.subr.mxu0 0.0
        %5652 = vmatpush1.msra.mxu0 0.0
        %5653 = vmatprep.subr.mxu0 0.0
        %5654 = vmatpush1.msra.mxu0 0.0
        %5655 = vmatprep.subr.mxu0 0.0
        %5656 = vmatpush1.msra.mxu0 0.0
        %5657 = vmatprep.subr.mxu0 0.0
        %5658 = vmatpush1.msra.mxu0 0.0
        %5659 = vmatprep.subr.mxu0 0.0
        %5660 = vmatpush1.msra.mxu0 0.0
        %5661 = vmatprep.subr.mxu0 0.0
        %5662 = vmatpush1.msra.mxu0 0.0
        %5663 = vmatprep.subr.mxu0 0.0
        %5664 = vmatpush1.msra.mxu0 0.0
        %5665 = vmatprep.subr.mxu0 0.0
        %5666 = vmatpush1.msra.mxu0 0.0
        %5667 = vmatprep.subr.mxu0 0.0
        %5668 = vmatpush1.msra.mxu0 0.0
        %5669 = vmatprep.mubr.f32.mxu0 0.0
        %5670 = vmatmul.mubr.f32.gmra.mrb[0].mxu0 %v5586
        %v5671 = vpop.f32.mrb[0].mxu0
        %v5672 = vadd.f32 0.0, %v5671
        %v5673 = vpop.f32.mrb[0].mxu0
        %5674 = vmatprep.mubr.f32.mxu0 0.0
        %5675 = vmatmul.mubr.f32.gmra.mrb[0].mxu0 %v5588
        %v5676 = vpop.f32.mrb[0].mxu0
        %v5677 = vadd.f32 0.0, %v5676
        %v5678 = vpop.f32.mrb[0].mxu0
        %5679 = vmatprep.mubr.f32.mxu0 0.0
        %5680 = vmatmul.mubr.f32.gmra.mrb[0].mxu0 %v5590
        %v5681 = vpop.f32.mrb[0].mxu0
        %v5682 = vadd.f32 0.0, %v5681
        %v5683 = vpop.f32.mrb[0].mxu0
        %5684 = vmatprep.mubr.f32.mxu0 0.0
        %5685 = vmatmul.mubr.f32.gmra.mrb[0].mxu0 %v5592
        %v5686 = vpop.f32.mrb[0].mxu0
        %v5687 = vadd.f32 0.0, %v5686
        %v5688 = vpop.f32.mrb[0].mxu0
        %5689 = vmatprep.mubr.f32.mxu0 0.0
        %5690 = vmatmul.mubr.f32.gmra.mrb[0].mxu0 %v5594
        %v5691 = vpop.f32.mrb[0].mxu0
        %v5692 = vadd.f32 0.0, %v5691
        %v5693 = vpop.f32.mrb[0].mxu0
        %5694 = vmatprep.mubr.f32.mxu0 0.0
        %5695 = vmatmul.mubr.f32.gmra.mrb[0].mxu0 %v5596
        %v5696 = vpop.f32.mrb[0].mxu0
        %v5697 = vadd.f32 0.0, %v5696
        %v5698 = vpop.f32.mrb[0].mxu0
        %5699 = vmatprep.mubr.f32.mxu0 0.0
        %5700 = vmatmul.mubr.f32.gmra.mrb[0].mxu0 %v5598
        %v5701 = vpop.f32.mrb[0].mxu0
        %v5702 = vadd.f32 0.0, %v5701
        %v5703 = vpop.f32.mrb[0].mxu0
        %5704 = vmatprep.mubr.f32.mxu0 0.0
        %5705 = vmatmul.mubr.f32.gmra.mrb[0].mxu0 %v5600
        %v5706 = vpop.f32.mrb[0].mxu0
        %v5707 = vadd.f32 0.0, %v5706
        %v5708 = vpop.f32.mrb[0].mxu0
        %5709 = vdwg.mxu0
        %v5710 = vadd.f32 %v5544, %v5672
        %v5711 = vadd.f32 %v5545, %v5677
        %v5712 = vadd.f32 %v5546, %v5682
        %v5713 = vadd.f32 %v5547, %v5687
        %v5714 = vadd.f32 %v5548, %v5692
        %v5715 = vadd.f32 %v5549, %v5697
        %v5716 = vadd.f32 %v5550, %v5702
        %v5717 = vadd.f32 %v5551, %v5707
        %v5718 = vld [vmem:[%s1096 + $0x2] sm:$0xff]
        %v5719 = vld [vmem:[%s1096 + $0x12] sm:$0xff]
        %v5720 = vld [vmem:[%s1096 + $0x22] sm:$0xff]
        %v5721 = vld [vmem:[%s1096 + $0x32] sm:$0xff]
        %v5722 = vld [vmem:[%s1096 + $0x42] sm:$0xff]
        %v5723 = vld [vmem:[%s1096 + $0x52] sm:$0xff]
        %v5724 = vld [vmem:[%s1096 + $0x62] sm:$0xff]
        %v5725 = vld [vmem:[%s1096 + $0x72] sm:$0xff]
        %v5726 = vld [vmem:[%s2414] sm:$0xff]
        %v5727 = vld [vmem:[%s2414 + $0x8] sm:$0xf]
        %5736 = vrot.lane.b32.xlu0 %v5718, 120
        %v5737 = vpop.permute.xlu0 %5736
        %5738 = vrot.lane.b32.xlu0 %v5719, 120
        %v5739 = vpop.permute.xlu0 %5738
        %5740 = vrot.lane.b32.xlu0 %v5720, 120
        %v5741 = vpop.permute.xlu0 %5740
        %5742 = vrot.lane.b32.xlu0 %v5721, 120
        %v5743 = vpop.permute.xlu0 %5742
        %5744 = vrot.lane.b32.xlu0 %v5722, 120
        %v5745 = vpop.permute.xlu0 %5744
        %5746 = vrot.lane.b32.xlu0 %v5723, 120
        %v5747 = vpop.permute.xlu0 %5746
        %5748 = vrot.lane.b32.xlu0 %v5724, 120
        %v5749 = vpop.permute.xlu0 %5748
        %5750 = vrot.lane.b32.xlu0 %v5725, 120
        %v5751 = vpop.permute.xlu0 %5750
        %v5752 = vsel %vm1687, %v5737, 0
        %v5754 = vsel %vm1687, %v5739, 0
        %v5756 = vsel %vm1687, %v5741, 0
        %v5758 = vsel %vm1687, %v5743, 0
        %v5760 = vsel %vm1687, %v5745, 0
        %v5762 = vsel %vm1687, %v5747, 0
        %v5764 = vsel %vm1687, %v5749, 0
        %v5766 = vsel %vm1687, %v5751, 0
        %v5769 = vsel %vm1712, %v5727, 0
        %5771 = vmatprep.subr.mxu0 0.0
        %5772 = vmatpush1.msra.mxu0 %v5726
        %5773 = vmatprep.subr.mxu0 0.0
        %5774 = vmatpush1.msra.mxu0 %v5769
        %5775 = vmatprep.subr.mxu0 0.0
        %5776 = vmatpush1.msra.mxu0 0.0
        %5777 = vmatprep.subr.mxu0 0.0
        %5778 = vmatpush1.msra.mxu0 0.0
        %5779 = vmatprep.subr.mxu0 0.0
        %5780 = vmatpush1.msra.mxu0 0.0
        %5781 = vmatprep.subr.mxu0 0.0
        %5782 = vmatpush1.msra.mxu0 0.0
        %5783 = vmatprep.subr.mxu0 0.0
        %5784 = vmatpush1.msra.mxu0 0.0
        %5785 = vmatprep.subr.mxu0 0.0
        %5786 = vmatpush1.msra.mxu0 0.0
        %5787 = vmatprep.subr.mxu0 0.0
        %5788 = vmatpush1.msra.mxu0 0.0
        %5789 = vmatprep.subr.mxu0 0.0
        %5790 = vmatpush1.msra.mxu0 0.0
        %5791 = vmatprep.subr.mxu0 0.0
        %5792 = vmatpush1.msra.mxu0 0.0
        %5793 = vmatprep.subr.mxu0 0.0
        %5794 = vmatpush1.msra.mxu0 0.0
        %5795 = vmatprep.subr.mxu0 0.0
        %5796 = vmatpush1.msra.mxu0 0.0
        %5797 = vmatprep.subr.mxu0 0.0
        %5798 = vmatpush1.msra.mxu0 0.0
        %5799 = vmatprep.subr.mxu0 0.0
        %5800 = vmatpush1.msra.mxu0 0.0
        %5801 = vmatprep.subr.mxu0 0.0
        %5802 = vmatpush1.msra.mxu0 0.0
        %5803 = vmatprep.subr.mxu0 0.0
        %5804 = vmatpush1.msra.mxu0 0.0
        %5805 = vmatprep.subr.mxu0 0.0
        %5806 = vmatpush1.msra.mxu0 0.0
        %5807 = vmatprep.subr.mxu0 0.0
        %5808 = vmatpush1.msra.mxu0 0.0
        %5809 = vmatprep.subr.mxu0 0.0
        %5810 = vmatpush1.msra.mxu0 0.0
        %5811 = vmatprep.subr.mxu0 0.0
        %5812 = vmatpush1.msra.mxu0 0.0
        %5813 = vmatprep.subr.mxu0 0.0
        %5814 = vmatpush1.msra.mxu0 0.0
        %5815 = vmatprep.subr.mxu0 0.0
        %5816 = vmatpush1.msra.mxu0 0.0
        %5817 = vmatprep.subr.mxu0 0.0
        %5818 = vmatpush1.msra.mxu0 0.0
        %5819 = vmatprep.subr.mxu0 0.0
        %5820 = vmatpush1.msra.mxu0 0.0
        %5821 = vmatprep.subr.mxu0 0.0
        %5822 = vmatpush1.msra.mxu0 0.0
        %5823 = vmatprep.subr.mxu0 0.0
        %5824 = vmatpush1.msra.mxu0 0.0
        %5825 = vmatprep.subr.mxu0 0.0
        %5826 = vmatpush1.msra.mxu0 0.0
        %5827 = vmatprep.subr.mxu0 0.0
        %5828 = vmatpush1.msra.mxu0 0.0
        %5829 = vmatprep.subr.mxu0 0.0
        %5830 = vmatpush1.msra.mxu0 0.0
        %5831 = vmatprep.subr.mxu0 0.0
        %5832 = vmatpush1.msra.mxu0 0.0
        %5833 = vmatprep.subr.mxu0 0.0
        %5834 = vmatpush1.msra.mxu0 0.0
        %5835 = vmatprep.mubr.f32.mxu0 0.0
        %5836 = vmatmul.mubr.f32.gmra.mrb[0].mxu0 %v5752
        %v5837 = vpop.f32.mrb[0].mxu0
        %v5838 = vadd.f32 0.0, %v5837
        %v5839 = vpop.f32.mrb[0].mxu0
        %5840 = vmatprep.mubr.f32.mxu0 0.0
        %5841 = vmatmul.mubr.f32.gmra.mrb[0].mxu0 %v5754
        %v5842 = vpop.f32.mrb[0].mxu0
        %v5843 = vadd.f32 0.0, %v5842
        %v5844 = vpop.f32.mrb[0].mxu0
        %5845 = vmatprep.mubr.f32.mxu0 0.0
        %5846 = vmatmul.mubr.f32.gmra.mrb[0].mxu0 %v5756
        %v5847 = vpop.f32.mrb[0].mxu0
        %v5848 = vadd.f32 0.0, %v5847
        %v5849 = vpop.f32.mrb[0].mxu0
        %5850 = vmatprep.mubr.f32.mxu0 0.0
        %5851 = vmatmul.mubr.f32.gmra.mrb[0].mxu0 %v5758
        %v5852 = vpop.f32.mrb[0].mxu0
        %v5853 = vadd.f32 0.0, %v5852
        %v5854 = vpop.f32.mrb[0].mxu0
        %5855 = vmatprep.mubr.f32.mxu0 0.0
        %5856 = vmatmul.mubr.f32.gmra.mrb[0].mxu0 %v5760
        %v5857 = vpop.f32.mrb[0].mxu0
        %v5858 = vadd.f32 0.0, %v5857
        %v5859 = vpop.f32.mrb[0].mxu0
        %5860 = vmatprep.mubr.f32.mxu0 0.0
        %5861 = vmatmul.mubr.f32.gmra.mrb[0].mxu0 %v5762
        %v5862 = vpop.f32.mrb[0].mxu0
        %v5863 = vadd.f32 0.0, %v5862
        %v5864 = vpop.f32.mrb[0].mxu0
        %5865 = vmatprep.mubr.f32.mxu0 0.0
        %5866 = vmatmul.mubr.f32.gmra.mrb[0].mxu0 %v5764
        %v5867 = vpop.f32.mrb[0].mxu0
        %v5868 = vadd.f32 0.0, %v5867
        %v5869 = vpop.f32.mrb[0].mxu0
        %5870 = vmatprep.mubr.f32.mxu0 0.0
        %5871 = vmatmul.mubr.f32.gmra.mrb[0].mxu0 %v5766
        %v5872 = vpop.f32.mrb[0].mxu0
        %v5873 = vadd.f32 0.0, %v5872
        %v5874 = vpop.f32.mrb[0].mxu0
        %5875 = vdwg.mxu0
        %v5876 = vadd.f32 %v5710, %v5838
        %v5877 = vadd.f32 %v5711, %v5843
        %v5878 = vadd.f32 %v5712, %v5848
        %v5879 = vadd.f32 %v5713, %v5853
        %v5880 = vadd.f32 %v5714, %v5858
        %v5881 = vadd.f32 %v5715, %v5863
        %v5882 = vadd.f32 %v5716, %v5868
        %v5883 = vadd.f32 %v5717, %v5873
        %v5884 = vld [vmem:[%s2557] sm:$0xff]
        %v5885 = vld [vmem:[%s2557 + $0x10] sm:$0xff]
        %v5886 = vld [vmem:[%s2557 + $0x20] sm:$0xff]
        %v5887 = vld [vmem:[%s2557 + $0x30] sm:$0xff]
        %v5888 = vld [vmem:[%s2557 + $0x40] sm:$0xff]
        %v5889 = vld [vmem:[%s2557 + $0x50] sm:$0xff]
        %v5890 = vld [vmem:[%s2557 + $0x60] sm:$0xff]
        %v5891 = vld [vmem:[%s2557 + $0x70] sm:$0xff]
        %v5892 = vld [vmem:[%s2566] sm:$0xff]
        %v5893 = vld [vmem:[%s2566 + $0x8] sm:$0xf]
        %5902 = vrot.lane.b32.xlu0 %v5884, 120
        %v5903 = vpop.permute.xlu0 %5902
        %5904 = vrot.lane.b32.xlu0 %v5885, 120
        %v5905 = vpop.permute.xlu0 %5904
        %5906 = vrot.lane.b32.xlu0 %v5886, 120
        %v5907 = vpop.permute.xlu0 %5906
        %5908 = vrot.lane.b32.xlu0 %v5887, 120
        %v5909 = vpop.permute.xlu0 %5908
        %5910 = vrot.lane.b32.xlu0 %v5888, 120
        %v5911 = vpop.permute.xlu0 %5910
        %5912 = vrot.lane.b32.xlu0 %v5889, 120
        %v5913 = vpop.permute.xlu0 %5912
        %5914 = vrot.lane.b32.xlu0 %v5890, 120
        %v5915 = vpop.permute.xlu0 %5914
        %5916 = vrot.lane.b32.xlu0 %v5891, 120
        %v5917 = vpop.permute.xlu0 %5916
        %v5918 = vsel %vm1687, %v5903, 0
        %v5920 = vsel %vm1687, %v5905, 0
        %v5922 = vsel %vm1687, %v5907, 0
        %v5924 = vsel %vm1687, %v5909, 0
        %v5926 = vsel %vm1687, %v5911, 0
        %v5928 = vsel %vm1687, %v5913, 0
        %v5930 = vsel %vm1687, %v5915, 0
        %v5932 = vsel %vm1687, %v5917, 0
        %v5935 = vsel %vm1712, %v5893, 0
        %5937 = vmatprep.subr.mxu0 0.0
        %5938 = vmatpush1.msra.mxu0 %v5892
        %5939 = vmatprep.subr.mxu0 0.0
        %5940 = vmatpush1.msra.mxu0 %v5935
        %5941 = vmatprep.subr.mxu0 0.0
        %5942 = vmatpush1.msra.mxu0 0.0
        %5943 = vmatprep.subr.mxu0 0.0
        %5944 = vmatpush1.msra.mxu0 0.0
        %5945 = vmatprep.subr.mxu0 0.0
        %5946 = vmatpush1.msra.mxu0 0.0
        %5947 = vmatprep.subr.mxu0 0.0
        %5948 = vmatpush1.msra.mxu0 0.0
        %5949 = vmatprep.subr.mxu0 0.0
        %5950 = vmatpush1.msra.mxu0 0.0
        %5951 = vmatprep.subr.mxu0 0.0
        %5952 = vmatpush1.msra.mxu0 0.0
        %5953 = vmatprep.subr.mxu0 0.0
        %5954 = vmatpush1.msra.mxu0 0.0
        %5955 = vmatprep.subr.mxu0 0.0
        %5956 = vmatpush1.msra.mxu0 0.0
        %5957 = vmatprep.subr.mxu0 0.0
        %5958 = vmatpush1.msra.mxu0 0.0
        %5959 = vmatprep.subr.mxu0 0.0
        %5960 = vmatpush1.msra.mxu0 0.0
        %5961 = vmatprep.subr.mxu0 0.0
        %5962 = vmatpush1.msra.mxu0 0.0
        %5963 = vmatprep.subr.mxu0 0.0
        %5964 = vmatpush1.msra.mxu0 0.0
        %5965 = vmatprep.subr.mxu0 0.0
        %5966 = vmatpush1.msra.mxu0 0.0
        %5967 = vmatprep.subr.mxu0 0.0
        %5968 = vmatpush1.msra.mxu0 0.0
        %5969 = vmatprep.subr.mxu0 0.0
        %5970 = vmatpush1.msra.mxu0 0.0
        %5971 = vmatprep.subr.mxu0 0.0
        %5972 = vmatpush1.msra.mxu0 0.0
        %5973 = vmatprep.subr.mxu0 0.0
        %5974 = vmatpush1.msra.mxu0 0.0
        %5975 = vmatprep.subr.mxu0 0.0
        %5976 = vmatpush1.msra.mxu0 0.0
        %5977 = vmatprep.subr.mxu0 0.0
        %5978 = vmatpush1.msra.mxu0 0.0
        %5979 = vmatprep.subr.mxu0 0.0
        %5980 = vmatpush1.msra.mxu0 0.0
        %5981 = vmatprep.subr.mxu0 0.0
        %5982 = vmatpush1.msra.mxu0 0.0
        %5983 = vmatprep.subr.mxu0 0.0
        %5984 = vmatpush1.msra.mxu0 0.0
        %5985 = vmatprep.subr.mxu0 0.0
        %5986 = vmatpush1.msra.mxu0 0.0
        %5987 = vmatprep.subr.mxu0 0.0
        %5988 = vmatpush1.msra.mxu0 0.0
        %5989 = vmatprep.subr.mxu0 0.0
        %5990 = vmatpush1.msra.mxu0 0.0
        %5991 = vmatprep.subr.mxu0 0.0
        %5992 = vmatpush1.msra.mxu0 0.0
        %5993 = vmatprep.subr.mxu0 0.0
        %5994 = vmatpush1.msra.mxu0 0.0
        %5995 = vmatprep.subr.mxu0 0.0
        %5996 = vmatpush1.msra.mxu0 0.0
        %5997 = vmatprep.subr.mxu0 0.0
        %5998 = vmatpush1.msra.mxu0 0.0
        %5999 = vmatprep.subr.mxu0 0.0
        %6000 = vmatpush1.msra.mxu0 0.0
        %6001 = vmatprep.mubr.f32.mxu0 0.0
        %6002 = vmatmul.mubr.f32.gmra.mrb[0].mxu0 %v5918
        %v6003 = vpop.f32.mrb[0].mxu0
        %v6004 = vadd.f32 0.0, %v6003
        %v6005 = vpop.f32.mrb[0].mxu0
        %6006 = vmatprep.mubr.f32.mxu0 0.0
        %6007 = vmatmul.mubr.f32.gmra.mrb[0].mxu0 %v5920
        %v6008 = vpop.f32.mrb[0].mxu0
        %v6009 = vadd.f32 0.0, %v6008
        %v6010 = vpop.f32.mrb[0].mxu0
        %6011 = vmatprep.mubr.f32.mxu0 0.0
        %6012 = vmatmul.mubr.f32.gmra.mrb[0].mxu0 %v5922
        %v6013 = vpop.f32.mrb[0].mxu0
        %v6014 = vadd.f32 0.0, %v6013
        %v6015 = vpop.f32.mrb[0].mxu0
        %6016 = vmatprep.mubr.f32.mxu0 0.0
        %6017 = vmatmul.mubr.f32.gmra.mrb[0].mxu0 %v5924
        %v6018 = vpop.f32.mrb[0].mxu0
        %v6019 = vadd.f32 0.0, %v6018
        %v6020 = vpop.f32.mrb[0].mxu0
        %6021 = vmatprep.mubr.f32.mxu0 0.0
        %6022 = vmatmul.mubr.f32.gmra.mrb[0].mxu0 %v5926
        %v6023 = vpop.f32.mrb[0].mxu0
        %v6024 = vadd.f32 0.0, %v6023
        %v6025 = vpop.f32.mrb[0].mxu0
        %6026 = vmatprep.mubr.f32.mxu0 0.0
        %6027 = vmatmul.mubr.f32.gmra.mrb[0].mxu0 %v5928
        %v6028 = vpop.f32.mrb[0].mxu0
        %v6029 = vadd.f32 0.0, %v6028
        %v6030 = vpop.f32.mrb[0].mxu0
        %6031 = vmatprep.mubr.f32.mxu0 0.0
        %6032 = vmatmul.mubr.f32.gmra.mrb[0].mxu0 %v5930
        %v6033 = vpop.f32.mrb[0].mxu0
        %v6034 = vadd.f32 0.0, %v6033
        %v6035 = vpop.f32.mrb[0].mxu0
        %6036 = vmatprep.mubr.f32.mxu0 0.0
        %6037 = vmatmul.mubr.f32.gmra.mrb[0].mxu0 %v5932
        %v6038 = vpop.f32.mrb[0].mxu0
        %v6039 = vadd.f32 0.0, %v6038
        %v6040 = vpop.f32.mrb[0].mxu0
        %6041 = vdwg.mxu0
        %v6042 = vadd.f32 %v5876, %v6004
        %v6043 = vadd.f32 %v5877, %v6009
        %v6044 = vadd.f32 %v5878, %v6014
        %v6045 = vadd.f32 %v5879, %v6019
        %v6046 = vadd.f32 %v5880, %v6024
        %v6047 = vadd.f32 %v5881, %v6029
        %v6048 = vadd.f32 %v5882, %v6034
        %v6049 = vadd.f32 %v5883, %v6039
        %v6050 = vld [vmem:[%s2557 + $0x1] sm:$0xff]
        %v6051 = vld [vmem:[%s2557 + $0x11] sm:$0xff]
        %v6052 = vld [vmem:[%s2557 + $0x21] sm:$0xff]
        %v6053 = vld [vmem:[%s2557 + $0x31] sm:$0xff]
        %v6054 = vld [vmem:[%s2557 + $0x41] sm:$0xff]
        %v6055 = vld [vmem:[%s2557 + $0x51] sm:$0xff]
        %v6056 = vld [vmem:[%s2557 + $0x61] sm:$0xff]
        %v6057 = vld [vmem:[%s2557 + $0x71] sm:$0xff]
        %v6058 = vld [vmem:[%s2717] sm:$0xff]
        %v6059 = vld [vmem:[%s2717 + $0x8] sm:$0xf]
        %6068 = vrot.lane.b32.xlu0 %v6050, 120
        %v6069 = vpop.permute.xlu0 %6068
        %6070 = vrot.lane.b32.xlu0 %v6051, 120
        %v6071 = vpop.permute.xlu0 %6070
        %6072 = vrot.lane.b32.xlu0 %v6052, 120
        %v6073 = vpop.permute.xlu0 %6072
        %6074 = vrot.lane.b32.xlu0 %v6053, 120
        %v6075 = vpop.permute.xlu0 %6074
        %6076 = vrot.lane.b32.xlu0 %v6054, 120
        %v6077 = vpop.permute.xlu0 %6076
        %6078 = vrot.lane.b32.xlu0 %v6055, 120
        %v6079 = vpop.permute.xlu0 %6078
        %6080 = vrot.lane.b32.xlu0 %v6056, 120
        %v6081 = vpop.permute.xlu0 %6080
        %6082 = vrot.lane.b32.xlu0 %v6057, 120
        %v6083 = vpop.permute.xlu0 %6082
        %v6084 = vsel %vm1687, %v6069, 0
        %v6086 = vsel %vm1687, %v6071, 0
        %v6088 = vsel %vm1687, %v6073, 0
        %v6090 = vsel %vm1687, %v6075, 0
        %v6092 = vsel %vm1687, %v6077, 0
        %v6094 = vsel %vm1687, %v6079, 0
        %v6096 = vsel %vm1687, %v6081, 0
        %v6098 = vsel %vm1687, %v6083, 0
        %v6101 = vsel %vm1712, %v6059, 0
        %6103 = vmatprep.subr.mxu0 0.0
        %6104 = vmatpush1.msra.mxu0 %v6058
        %6105 = vmatprep.subr.mxu0 0.0
        %6106 = vmatpush1.msra.mxu0 %v6101
        %6107 = vmatprep.subr.mxu0 0.0
        %6108 = vmatpush1.msra.mxu0 0.0
        %6109 = vmatprep.subr.mxu0 0.0
        %6110 = vmatpush1.msra.mxu0 0.0
        %6111 = vmatprep.subr.mxu0 0.0
        %6112 = vmatpush1.msra.mxu0 0.0
        %6113 = vmatprep.subr.mxu0 0.0
        %6114 = vmatpush1.msra.mxu0 0.0
        %6115 = vmatprep.subr.mxu0 0.0
        %6116 = vmatpush1.msra.mxu0 0.0
        %6117 = vmatprep.subr.mxu0 0.0
        %6118 = vmatpush1.msra.mxu0 0.0
        %6119 = vmatprep.subr.mxu0 0.0
        %6120 = vmatpush1.msra.mxu0 0.0
        %6121 = vmatprep.subr.mxu0 0.0
        %6122 = vmatpush1.msra.mxu0 0.0
        %6123 = vmatprep.subr.mxu0 0.0
        %6124 = vmatpush1.msra.mxu0 0.0
        %6125 = vmatprep.subr.mxu0 0.0
        %6126 = vmatpush1.msra.mxu0 0.0
        %6127 = vmatprep.subr.mxu0 0.0
        %6128 = vmatpush1.msra.mxu0 0.0
        %6129 = vmatprep.subr.mxu0 0.0
        %6130 = vmatpush1.msra.mxu0 0.0
        %6131 = vmatprep.subr.mxu0 0.0
        %6132 = vmatpush1.msra.mxu0 0.0
        %6133 = vmatprep.subr.mxu0 0.0
        %6134 = vmatpush1.msra.mxu0 0.0
        %6135 = vmatprep.subr.mxu0 0.0
        %6136 = vmatpush1.msra.mxu0 0.0
        %6137 = vmatprep.subr.mxu0 0.0
        %6138 = vmatpush1.msra.mxu0 0.0
        %6139 = vmatprep.subr.mxu0 0.0
        %6140 = vmatpush1.msra.mxu0 0.0
        %6141 = vmatprep.subr.mxu0 0.0
        %6142 = vmatpush1.msra.mxu0 0.0
        %6143 = vmatprep.subr.mxu0 0.0
        %6144 = vmatpush1.msra.mxu0 0.0
        %6145 = vmatprep.subr.mxu0 0.0
        %6146 = vmatpush1.msra.mxu0 0.0
        %6147 = vmatprep.subr.mxu0 0.0
        %6148 = vmatpush1.msra.mxu0 0.0
        %6149 = vmatprep.subr.mxu0 0.0
        %6150 = vmatpush1.msra.mxu0 0.0
        %6151 = vmatprep.subr.mxu0 0.0
        %6152 = vmatpush1.msra.mxu0 0.0
        %6153 = vmatprep.subr.mxu0 0.0
        %6154 = vmatpush1.msra.mxu0 0.0
        %6155 = vmatprep.subr.mxu0 0.0
        %6156 = vmatpush1.msra.mxu0 0.0
        %6157 = vmatprep.subr.mxu0 0.0
        %6158 = vmatpush1.msra.mxu0 0.0
        %6159 = vmatprep.subr.mxu0 0.0
        %6160 = vmatpush1.msra.mxu0 0.0
        %6161 = vmatprep.subr.mxu0 0.0
        %6162 = vmatpush1.msra.mxu0 0.0
        %6163 = vmatprep.subr.mxu0 0.0
        %6164 = vmatpush1.msra.mxu0 0.0
        %6165 = vmatprep.subr.mxu0 0.0
        %6166 = vmatpush1.msra.mxu0 0.0
        %6167 = vmatprep.mubr.f32.mxu0 0.0
        %6168 = vmatmul.mubr.f32.gmra.mrb[0].mxu0 %v6084
        %v6169 = vpop.f32.mrb[0].mxu0
        %v6170 = vadd.f32 0.0, %v6169
        %v6171 = vpop.f32.mrb[0].mxu0
        %6172 = vmatprep.mubr.f32.mxu0 0.0
        %6173 = vmatmul.mubr.f32.gmra.mrb[0].mxu0 %v6086
        %v6174 = vpop.f32.mrb[0].mxu0
        %v6175 = vadd.f32 0.0, %v6174
        %v6176 = vpop.f32.mrb[0].mxu0
        %6177 = vmatprep.mubr.f32.mxu0 0.0
        %6178 = vmatmul.mubr.f32.gmra.mrb[0].mxu0 %v6088
        %v6179 = vpop.f32.mrb[0].mxu0
        %v6180 = vadd.f32 0.0, %v6179
        %v6181 = vpop.f32.mrb[0].mxu0
        %6182 = vmatprep.mubr.f32.mxu0 0.0
        %6183 = vmatmul.mubr.f32.gmra.mrb[0].mxu0 %v6090
        %v6184 = vpop.f32.mrb[0].mxu0
        %v6185 = vadd.f32 0.0, %v6184
        %v6186 = vpop.f32.mrb[0].mxu0
        %6187 = vmatprep.mubr.f32.mxu0 0.0
        %6188 = vmatmul.mubr.f32.gmra.mrb[0].mxu0 %v6092
        %v6189 = vpop.f32.mrb[0].mxu0
        %v6190 = vadd.f32 0.0, %v6189
        %v6191 = vpop.f32.mrb[0].mxu0
        %6192 = vmatprep.mubr.f32.mxu0 0.0
        %6193 = vmatmul.mubr.f32.gmra.mrb[0].mxu0 %v6094
        %v6194 = vpop.f32.mrb[0].mxu0
        %v6195 = vadd.f32 0.0, %v6194
        %v6196 = vpop.f32.mrb[0].mxu0
        %6197 = vmatprep.mubr.f32.mxu0 0.0
        %6198 = vmatmul.mubr.f32.gmra.mrb[0].mxu0 %v6096
        %v6199 = vpop.f32.mrb[0].mxu0
        %v6200 = vadd.f32 0.0, %v6199
        %v6201 = vpop.f32.mrb[0].mxu0
        %6202 = vmatprep.mubr.f32.mxu0 0.0
        %6203 = vmatmul.mubr.f32.gmra.mrb[0].mxu0 %v6098
        %v6204 = vpop.f32.mrb[0].mxu0
        %v6205 = vadd.f32 0.0, %v6204
        %v6206 = vpop.f32.mrb[0].mxu0
        %6207 = vdwg.mxu0
        %v6208 = vadd.f32 %v6042, %v6170
        %v6209 = vadd.f32 %v6043, %v6175
        %v6210 = vadd.f32 %v6044, %v6180
        %v6211 = vadd.f32 %v6045, %v6185
        %v6212 = vadd.f32 %v6046, %v6190
        %v6213 = vadd.f32 %v6047, %v6195
        %v6214 = vadd.f32 %v6048, %v6200
        %v6215 = vadd.f32 %v6049, %v6205
        %v6216 = vld [vmem:[%s2557 + $0x2] sm:$0xff]
        %v6217 = vld [vmem:[%s2557 + $0x12] sm:$0xff]
        %v6218 = vld [vmem:[%s2557 + $0x22] sm:$0xff]
        %v6219 = vld [vmem:[%s2557 + $0x32] sm:$0xff]
        %v6220 = vld [vmem:[%s2557 + $0x42] sm:$0xff]
        %v6221 = vld [vmem:[%s2557 + $0x52] sm:$0xff]
        %v6222 = vld [vmem:[%s2557 + $0x62] sm:$0xff]
        %v6223 = vld [vmem:[%s2557 + $0x72] sm:$0xff]
        %v6224 = vld [vmem:[%s2868] sm:$0xff]
        %v6225 = vld [vmem:[%s2868 + $0x8] sm:$0xf]
        %6234 = vrot.lane.b32.xlu0 %v6216, 120
        %v6235 = vpop.permute.xlu0 %6234
        %6236 = vrot.lane.b32.xlu0 %v6217, 120
        %v6237 = vpop.permute.xlu0 %6236
        %6238 = vrot.lane.b32.xlu0 %v6218, 120
        %v6239 = vpop.permute.xlu0 %6238
        %6240 = vrot.lane.b32.xlu0 %v6219, 120
        %v6241 = vpop.permute.xlu0 %6240
        %6242 = vrot.lane.b32.xlu0 %v6220, 120
        %v6243 = vpop.permute.xlu0 %6242
        %6244 = vrot.lane.b32.xlu0 %v6221, 120
        %v6245 = vpop.permute.xlu0 %6244
        %6246 = vrot.lane.b32.xlu0 %v6222, 120
        %v6247 = vpop.permute.xlu0 %6246
        %6248 = vrot.lane.b32.xlu0 %v6223, 120
        %v6249 = vpop.permute.xlu0 %6248
        %v6250 = vsel %vm1687, %v6235, 0
        %v6252 = vsel %vm1687, %v6237, 0
        %v6254 = vsel %vm1687, %v6239, 0
        %v6256 = vsel %vm1687, %v6241, 0
        %v6258 = vsel %vm1687, %v6243, 0
        %v6260 = vsel %vm1687, %v6245, 0
        %v6262 = vsel %vm1687, %v6247, 0
        %v6264 = vsel %vm1687, %v6249, 0
        %v6267 = vsel %vm1712, %v6225, 0
        %6269 = vmatprep.subr.mxu0 0.0
        %6270 = vmatpush1.msra.mxu0 %v6224
        %6271 = vmatprep.subr.mxu0 0.0
        %6272 = vmatpush1.msra.mxu0 %v6267
        %6273 = vmatprep.subr.mxu0 0.0
        %6274 = vmatpush1.msra.mxu0 0.0
        %6275 = vmatprep.subr.mxu0 0.0
        %6276 = vmatpush1.msra.mxu0 0.0
        %6277 = vmatprep.subr.mxu0 0.0
        %6278 = vmatpush1.msra.mxu0 0.0
        %6279 = vmatprep.subr.mxu0 0.0
        %6280 = vmatpush1.msra.mxu0 0.0
        %6281 = vmatprep.subr.mxu0 0.0
        %6282 = vmatpush1.msra.mxu0 0.0
        %6283 = vmatprep.subr.mxu0 0.0
        %6284 = vmatpush1.msra.mxu0 0.0
        %6285 = vmatprep.subr.mxu0 0.0
        %6286 = vmatpush1.msra.mxu0 0.0
        %6287 = vmatprep.subr.mxu0 0.0
        %6288 = vmatpush1.msra.mxu0 0.0
        %6289 = vmatprep.subr.mxu0 0.0
        %6290 = vmatpush1.msra.mxu0 0.0
        %6291 = vmatprep.subr.mxu0 0.0
        %6292 = vmatpush1.msra.mxu0 0.0
        %6293 = vmatprep.subr.mxu0 0.0
        %6294 = vmatpush1.msra.mxu0 0.0
        %6295 = vmatprep.subr.mxu0 0.0
        %6296 = vmatpush1.msra.mxu0 0.0
        %6297 = vmatprep.subr.mxu0 0.0
        %6298 = vmatpush1.msra.mxu0 0.0
        %6299 = vmatprep.subr.mxu0 0.0
        %6300 = vmatpush1.msra.mxu0 0.0
        %6301 = vmatprep.subr.mxu0 0.0
        %6302 = vmatpush1.msra.mxu0 0.0
        %6303 = vmatprep.subr.mxu0 0.0
        %6304 = vmatpush1.msra.mxu0 0.0
        %6305 = vmatprep.subr.mxu0 0.0
        %6306 = vmatpush1.msra.mxu0 0.0
        %6307 = vmatprep.subr.mxu0 0.0
        %6308 = vmatpush1.msra.mxu0 0.0
        %6309 = vmatprep.subr.mxu0 0.0
        %6310 = vmatpush1.msra.mxu0 0.0
        %6311 = vmatprep.subr.mxu0 0.0
        %6312 = vmatpush1.msra.mxu0 0.0
        %6313 = vmatprep.subr.mxu0 0.0
        %6314 = vmatpush1.msra.mxu0 0.0
        %6315 = vmatprep.subr.mxu0 0.0
        %6316 = vmatpush1.msra.mxu0 0.0
        %6317 = vmatprep.subr.mxu0 0.0
        %6318 = vmatpush1.msra.mxu0 0.0
        %6319 = vmatprep.subr.mxu0 0.0
        %6320 = vmatpush1.msra.mxu0 0.0
        %6321 = vmatprep.subr.mxu0 0.0
        %6322 = vmatpush1.msra.mxu0 0.0
        %6323 = vmatprep.subr.mxu0 0.0
        %6324 = vmatpush1.msra.mxu0 0.0
        %6325 = vmatprep.subr.mxu0 0.0
        %6326 = vmatpush1.msra.mxu0 0.0
        %6327 = vmatprep.subr.mxu0 0.0
        %6328 = vmatpush1.msra.mxu0 0.0
        %6329 = vmatprep.subr.mxu0 0.0
        %6330 = vmatpush1.msra.mxu0 0.0
        %6331 = vmatprep.subr.mxu0 0.0
        %6332 = vmatpush1.msra.mxu0 0.0
        %6333 = vmatprep.mubr.f32.mxu0 0.0
        %6334 = vmatmul.mubr.f32.gmra.mrb[0].mxu0 %v6250
        %v6335 = vpop.f32.mrb[0].mxu0
        %v6336 = vadd.f32 0.0, %v6335
        %v6337 = vpop.f32.mrb[0].mxu0
        %6338 = vmatprep.mubr.f32.mxu0 0.0
        %6339 = vmatmul.mubr.f32.gmra.mrb[0].mxu0 %v6252
        %v6340 = vpop.f32.mrb[0].mxu0
        %v6341 = vadd.f32 0.0, %v6340
        %v6342 = vpop.f32.mrb[0].mxu0
        %6343 = vmatprep.mubr.f32.mxu0 0.0
        %6344 = vmatmul.mubr.f32.gmra.mrb[0].mxu0 %v6254
        %v6345 = vpop.f32.mrb[0].mxu0
        %v6346 = vadd.f32 0.0, %v6345
        %v6347 = vpop.f32.mrb[0].mxu0
        %6348 = vmatprep.mubr.f32.mxu0 0.0
        %6349 = vmatmul.mubr.f32.gmra.mrb[0].mxu0 %v6256
        %v6350 = vpop.f32.mrb[0].mxu0
        %v6351 = vadd.f32 0.0, %v6350
        %v6352 = vpop.f32.mrb[0].mxu0
        %6353 = vmatprep.mubr.f32.mxu0 0.0
        %6354 = vmatmul.mubr.f32.gmra.mrb[0].mxu0 %v6258
        %v6355 = vpop.f32.mrb[0].mxu0
        %v6356 = vadd.f32 0.0, %v6355
        %v6357 = vpop.f32.mrb[0].mxu0
        %6358 = vmatprep.mubr.f32.mxu0 0.0
        %6359 = vmatmul.mubr.f32.gmra.mrb[0].mxu0 %v6260
        %v6360 = vpop.f32.mrb[0].mxu0
        %v6361 = vadd.f32 0.0, %v6360
        %v6362 = vpop.f32.mrb[0].mxu0
        %6363 = vmatprep.mubr.f32.mxu0 0.0
        %6364 = vmatmul.mubr.f32.gmra.mrb[0].mxu0 %v6262
        %v6365 = vpop.f32.mrb[0].mxu0
        %v6366 = vadd.f32 0.0, %v6365
        %v6367 = vpop.f32.mrb[0].mxu0
        %6368 = vmatprep.mubr.f32.mxu0 0.0
        %6369 = vmatmul.mubr.f32.gmra.mrb[0].mxu0 %v6264
        %v6370 = vpop.f32.mrb[0].mxu0
        %v6371 = vadd.f32 0.0, %v6370
        %v6372 = vpop.f32.mrb[0].mxu0
        %6373 = vdwg.mxu0
        %v6374 = vadd.f32 %v6208, %v6336
        %v6375 = vadd.f32 %v6209, %v6341
        %v6376 = vadd.f32 %v6210, %v6346
        %v6377 = vadd.f32 %v6211, %v6351
        %v6378 = vadd.f32 %v6212, %v6356
        %v6379 = vadd.f32 %v6213, %v6361
        %v6380 = vadd.f32 %v6214, %v6366
        %v6381 = vadd.f32 %v6215, %v6371
        %v6382 = vmul.f32 %v6374, %v3015
        %v6383 = vmul.f32 %v6375, %v3015
        %v6384 = vmul.f32 %v6376, %v3015
        %v6385 = vmul.f32 %v6377, %v3015
        %v6386 = vmul.f32 %v6378, %v3015
        %v6387 = vmul.f32 %v6379, %v3015
        %v6388 = vmul.f32 %v6380, %v3015
        %v6389 = vmul.f32 %v6381, %v3015
        %v6390 = vadd.f32 %v6382, %v3029
        %v6391 = vadd.f32 %v6383, %v3029
        %v6392 = vadd.f32 %v6384, %v3029
        %v6393 = vadd.f32 %v6385, %v3029
        %v6394 = vadd.f32 %v6386, %v3029
        %v6395 = vadd.f32 %v6387, %v3029
        %v6396 = vadd.f32 %v6388, %v3029
        %v6397 = vadd.f32 %v6389, %v3029
        %v6398 = vmax.f32 %v6390, 0.0
        %v6399 = vmax.f32 %v6391, 0.0
        %v6400 = vmax.f32 %v6392, 0.0
        %v6401 = vmax.f32 %v6393, 0.0
        %v6402 = vmax.f32 %v6394, 0.0
        %v6403 = vmax.f32 %v6395, 0.0
        %v6404 = vmax.f32 %v6396, 0.0
        %v6405 = vmax.f32 %v6397, 0.0
        %v6407 = vsel %vm3047, %v6398, 0
        %v6410 = vsel %vm3047, %v6399, 0
        %v6413 = vsel %vm3047, %v6400, 0
        %v6416 = vsel %vm3047, %v6401, 0
        %v6419 = vsel %vm3047, %v6402, 0
        %v6422 = vsel %vm3047, %v6403, 0
        %v6425 = vsel %vm3047, %v6404, 0
        %v6428 = vsel %vm3047, %v6405, 0
        %6430 = vmatprep.subr.mxu0 0.0
        %6431 = vmatpush1.msra.mxu0 %v3073
        %6432 = vmatprep.subr.mxu0 0.0
        %6433 = vmatpush1.msra.mxu0 0.0
        %6434 = vmatprep.subr.mxu0 0.0
        %6435 = vmatpush1.msra.mxu0 0.0
        %6436 = vmatprep.subr.mxu0 0.0
        %6437 = vmatpush1.msra.mxu0 0.0
        %6438 = vmatprep.subr.mxu0 0.0
        %6439 = vmatpush1.msra.mxu0 0.0
        %6440 = vmatprep.subr.mxu0 0.0
        %6441 = vmatpush1.msra.mxu0 0.0
        %6442 = vmatprep.subr.mxu0 0.0
        %6443 = vmatpush1.msra.mxu0 0.0
        %6444 = vmatprep.subr.mxu0 0.0
        %6445 = vmatpush1.msra.mxu0 0.0
        %6446 = vmatprep.subr.mxu0 0.0
        %6447 = vmatpush1.msra.mxu0 0.0
        %6448 = vmatprep.subr.mxu0 0.0
        %6449 = vmatpush1.msra.mxu0 0.0
        %6450 = vmatprep.subr.mxu0 0.0
        %6451 = vmatpush1.msra.mxu0 0.0
        %6452 = vmatprep.subr.mxu0 0.0
        %6453 = vmatpush1.msra.mxu0 0.0
        %6454 = vmatprep.subr.mxu0 0.0
        %6455 = vmatpush1.msra.mxu0 0.0
        %6456 = vmatprep.subr.mxu0 0.0
        %6457 = vmatpush1.msra.mxu0 0.0
        %6458 = vmatprep.subr.mxu0 0.0
        %6459 = vmatpush1.msra.mxu0 0.0
        %6460 = vmatprep.subr.mxu0 0.0
        %6461 = vmatpush1.msra.mxu0 0.0
        %6462 = vmatprep.subr.mxu0 0.0
        %6463 = vmatpush1.msra.mxu0 0.0
        %6464 = vmatprep.subr.mxu0 0.0
        %6465 = vmatpush1.msra.mxu0 0.0
        %6466 = vmatprep.subr.mxu0 0.0
        %6467 = vmatpush1.msra.mxu0 0.0
        %6468 = vmatprep.subr.mxu0 0.0
        %6469 = vmatpush1.msra.mxu0 0.0
        %6470 = vmatprep.subr.mxu0 0.0
        %6471 = vmatpush1.msra.mxu0 0.0
        %6472 = vmatprep.subr.mxu0 0.0
        %6473 = vmatpush1.msra.mxu0 0.0
        %6474 = vmatprep.subr.mxu0 0.0
        %6475 = vmatpush1.msra.mxu0 0.0
        %6476 = vmatprep.subr.mxu0 0.0
        %6477 = vmatpush1.msra.mxu0 0.0
        %6478 = vmatprep.subr.mxu0 0.0
        %6479 = vmatpush1.msra.mxu0 0.0
        %6480 = vmatprep.subr.mxu0 0.0
        %6481 = vmatpush1.msra.mxu0 0.0
        %6482 = vmatprep.subr.mxu0 0.0
        %6483 = vmatpush1.msra.mxu0 0.0
        %6484 = vmatprep.subr.mxu0 0.0
        %6485 = vmatpush1.msra.mxu0 0.0
        %6486 = vmatprep.subr.mxu0 0.0
        %6487 = vmatpush1.msra.mxu0 0.0
        %6488 = vmatprep.subr.mxu0 0.0
        %6489 = vmatpush1.msra.mxu0 0.0
        %6490 = vmatprep.subr.mxu0 0.0
        %6491 = vmatpush1.msra.mxu0 0.0
        %6492 = vmatprep.subr.mxu0 0.0
        %6493 = vmatpush1.msra.mxu0 0.0
        %6494 = vmatprep.mubr.f32.mxu0 0.0
        %6495 = vmatmul.mubr.f32.gmra.mrb[0].mxu0 %v6407
        %v6496 = vpop.f32.mrb[0].mxu0
        %v6497 = vadd.f32 0.0, %v6496
        %v6498 = vpop.f32.mrb[0].mxu0
        %6499 = vmatprep.mubr.f32.mxu0 0.0
        %6500 = vmatmul.mubr.f32.gmra.mrb[0].mxu0 %v6410
        %v6501 = vpop.f32.mrb[0].mxu0
        %v6502 = vadd.f32 0.0, %v6501
        %v6503 = vpop.f32.mrb[0].mxu0
        %6504 = vmatprep.mubr.f32.mxu0 0.0
        %6505 = vmatmul.mubr.f32.gmra.mrb[0].mxu0 %v6413
        %v6506 = vpop.f32.mrb[0].mxu0
        %v6507 = vadd.f32 0.0, %v6506
        %v6508 = vpop.f32.mrb[0].mxu0
        %6509 = vmatprep.mubr.f32.mxu0 0.0
        %6510 = vmatmul.mubr.f32.gmra.mrb[0].mxu0 %v6416
        %v6511 = vpop.f32.mrb[0].mxu0
        %v6512 = vadd.f32 0.0, %v6511
        %v6513 = vpop.f32.mrb[0].mxu0
        %6514 = vmatprep.mubr.f32.mxu0 0.0
        %6515 = vmatmul.mubr.f32.gmra.mrb[0].mxu0 %v6419
        %v6516 = vpop.f32.mrb[0].mxu0
        %v6517 = vadd.f32 0.0, %v6516
        %v6518 = vpop.f32.mrb[0].mxu0
        %6519 = vmatprep.mubr.f32.mxu0 0.0
        %6520 = vmatmul.mubr.f32.gmra.mrb[0].mxu0 %v6422
        %v6521 = vpop.f32.mrb[0].mxu0
        %v6522 = vadd.f32 0.0, %v6521
        %v6523 = vpop.f32.mrb[0].mxu0
        %6524 = vmatprep.mubr.f32.mxu0 0.0
        %6525 = vmatmul.mubr.f32.gmra.mrb[0].mxu0 %v6425
        %v6526 = vpop.f32.mrb[0].mxu0
        %v6527 = vadd.f32 0.0, %v6526
        %v6528 = vpop.f32.mrb[0].mxu0
        %6529 = vmatprep.mubr.f32.mxu0 0.0
        %6530 = vmatmul.mubr.f32.gmra.mrb[0].mxu0 %v6428
        %v6531 = vpop.f32.mrb[0].mxu0
        %v6532 = vadd.f32 0.0, %v6531
        %v6533 = vpop.f32.mrb[0].mxu0
        %6534 = vdwg.mxu0
        %v6535 = vmul.f32 %v6497, %v3184
        %v6536 = vmul.f32 %v6502, %v3184
        %v6537 = vmul.f32 %v6507, %v3184
        %v6538 = vmul.f32 %v6512, %v3184
        %v6539 = vmul.f32 %v6517, %v3184
        %v6540 = vmul.f32 %v6522, %v3184
        %v6541 = vmul.f32 %v6527, %v3184
        %v6542 = vmul.f32 %v6532, %v3184
        %v6543 = vadd.f32 %v6535, %v3198
        %v6544 = vadd.f32 %v6536, %v3198
        %v6545 = vadd.f32 %v6537, %v3198
        %v6546 = vadd.f32 %v6538, %v3198
        %v6547 = vadd.f32 %v6539, %v3198
        %v6548 = vadd.f32 %v6540, %v3198
        %v6549 = vadd.f32 %v6541, %v3198
        %v6550 = vadd.f32 %v6542, %v3198
        %v6551 = vadd.f32 %v6543, %v618
        %v6552 = vadd.f32 %v6544, %v619
        %v6553 = vadd.f32 %v6545, %v620
        %v6554 = vadd.f32 %v6546, %v621
        %v6555 = vadd.f32 %v6547, %v622
        %v6556 = vadd.f32 %v6548, %v623
        %v6557 = vadd.f32 %v6549, %v624
        %v6558 = vadd.f32 %v6550, %v625
        %v6559 = vmax.f32 %v6551, 0.0
        %v6560 = vmax.f32 %v6552, 0.0
        %v6561 = vmax.f32 %v6553, 0.0
        %v6562 = vmax.f32 %v6554, 0.0
        %v6563 = vmax.f32 %v6555, 0.0
        %v6564 = vmax.f32 %v6556, 0.0
        %v6565 = vmax.f32 %v6557, 0.0
        %v6566 = vmax.f32 %v6558, 0.0
        %s6567 = scalar_lea.vmem %s559, 128 [#allocation9]
        %6568 = vst.msk [vmem:[%s6567] sm:$0xff] %vm634, %v6559
        %6569 = vst.msk [vmem:[%s6567 + $0x8] sm:$0xff] %vm634, %v6560
        %6570 = vst.msk [vmem:[%s6567 + $0x10] sm:$0xff] %vm634, %v6561
        %6571 = vst.msk [vmem:[%s6567 + $0x18] sm:$0xff] %vm634, %v6562
        %6572 = vst.msk [vmem:[%s6567 + $0x20] sm:$0xff] %vm634, %v6563
        %6573 = vst.msk [vmem:[%s6567 + $0x28] sm:$0xff] %vm634, %v6564
        %6574 = vst.msk [vmem:[%s6567 + $0x30] sm:$0xff] %vm634, %v6565
        %6575 = vst.msk [vmem:[%s6567 + $0x38] sm:$0xff] %vm634, %v6566
        %v6576 = vld [vmem:[#allocation2] sm:$0xff]
        %v6577 = vld [vmem:[#allocation2 + $0x10] sm:$0xff]
        %v6578 = vld [vmem:[#allocation2 + $0x20] sm:$0xff]
        %v6579 = vld [vmem:[#allocation2 + $0x30] sm:$0xff]
        %v6580 = vld [vmem:[#allocation2 + $0x40] sm:$0xff]
        %v6581 = vld [vmem:[#allocation2 + $0x50] sm:$0xff]
        %v6582 = vld [vmem:[#allocation2 + $0x60] sm:$0xff]
        %v6583 = vld [vmem:[#allocation2 + $0x70] sm:$0xff]
        %v6584 = vld [vmem:[%s6] sm:$0xff]
        %v6585 = vld [vmem:[%s6 + $0x8] sm:$0xf]
        %v6586 = vld [vmem:[#allocation2 + $0x1] sm:$0xff]
        %v6587 = vld [vmem:[#allocation2 + $0x11] sm:$0xff]
        %v6588 = vld [vmem:[#allocation2 + $0x21] sm:$0xff]
        %v6589 = vld [vmem:[#allocation2 + $0x31] sm:$0xff]
        %v6590 = vld [vmem:[#allocation2 + $0x41] sm:$0xff]
        %v6591 = vld [vmem:[#allocation2 + $0x51] sm:$0xff]
        %v6592 = vld [vmem:[#allocation2 + $0x61] sm:$0xff]
        %v6593 = vld [vmem:[#allocation2 + $0x71] sm:$0xff]
        %v6594 = vld [vmem:[%s1684] sm:$0xff]
        %v6595 = vld [vmem:[%s1684 + $0x8] sm:$0xf]
        %6604 = vrot.lane.b32.xlu0 %v6586, 116
        %v6605 = vpop.permute.xlu0 %6604
        %6606 = vrot.lane.b32.xlu0 %v6587, 116
        %v6607 = vpop.permute.xlu0 %6606
        %6608 = vrot.lane.b32.xlu0 %v6588, 116
        %v6609 = vpop.permute.xlu0 %6608
        %6610 = vrot.lane.b32.xlu0 %v6589, 116
        %v6611 = vpop.permute.xlu0 %6610
        %6612 = vrot.lane.b32.xlu0 %v6590, 116
        %v6613 = vpop.permute.xlu0 %6612
        %6614 = vrot.lane.b32.xlu0 %v6591, 116
        %v6615 = vpop.permute.xlu0 %6614
        %6616 = vrot.lane.b32.xlu0 %v6592, 116
        %v6617 = vpop.permute.xlu0 %6616
        %6618 = vrot.lane.b32.xlu0 %v6593, 116
        %v6619 = vpop.permute.xlu0 %6618
        %v6620 = vsel %vm1687, %v6605, 0
        %v6622 = vsel %vm1687, %v6607, 0
        %v6624 = vsel %vm1687, %v6609, 0
        %v6626 = vsel %vm1687, %v6611, 0
        %v6628 = vsel %vm1687, %v6613, 0
        %v6630 = vsel %vm1687, %v6615, 0
        %v6632 = vsel %vm1687, %v6617, 0
        %v6634 = vsel %vm1687, %v6619, 0
        %v6637 = vsel %vm1712, %v6595, 0
        %6639 = vmatprep.subr.mxu0 0.0
        %6640 = vmatpush1.msra.mxu0 %v6594
        %6641 = vmatprep.subr.mxu0 0.0
        %6642 = vmatpush1.msra.mxu0 %v6637
        %6643 = vmatprep.subr.mxu0 0.0
        %6644 = vmatpush1.msra.mxu0 0.0
        %6645 = vmatprep.subr.mxu0 0.0
        %6646 = vmatpush1.msra.mxu0 0.0
        %6647 = vmatprep.subr.mxu0 0.0
        %6648 = vmatpush1.msra.mxu0 0.0
        %6649 = vmatprep.subr.mxu0 0.0
        %6650 = vmatpush1.msra.mxu0 0.0
        %6651 = vmatprep.subr.mxu0 0.0
        %6652 = vmatpush1.msra.mxu0 0.0
        %6653 = vmatprep.subr.mxu0 0.0
        %6654 = vmatpush1.msra.mxu0 0.0
        %6655 = vmatprep.subr.mxu0 0.0
        %6656 = vmatpush1.msra.mxu0 0.0
        %6657 = vmatprep.subr.mxu0 0.0
        %6658 = vmatpush1.msra.mxu0 0.0
        %6659 = vmatprep.subr.mxu0 0.0
        %6660 = vmatpush1.msra.mxu0 0.0
        %6661 = vmatprep.subr.mxu0 0.0
        %6662 = vmatpush1.msra.mxu0 0.0
        %6663 = vmatprep.subr.mxu0 0.0
        %6664 = vmatpush1.msra.mxu0 0.0
        %6665 = vmatprep.subr.mxu0 0.0
        %6666 = vmatpush1.msra.mxu0 0.0
        %6667 = vmatprep.subr.mxu0 0.0
        %6668 = vmatpush1.msra.mxu0 0.0
        %6669 = vmatprep.subr.mxu0 0.0
        %6670 = vmatpush1.msra.mxu0 0.0
        %6671 = vmatprep.subr.mxu0 0.0
        %6672 = vmatpush1.msra.mxu0 0.0
        %6673 = vmatprep.subr.mxu0 0.0
        %6674 = vmatpush1.msra.mxu0 0.0
        %6675 = vmatprep.subr.mxu0 0.0
        %6676 = vmatpush1.msra.mxu0 0.0
        %6677 = vmatprep.subr.mxu0 0.0
        %6678 = vmatpush1.msra.mxu0 0.0
        %6679 = vmatprep.subr.mxu0 0.0
        %6680 = vmatpush1.msra.mxu0 0.0
        %6681 = vmatprep.subr.mxu0 0.0
        %6682 = vmatpush1.msra.mxu0 0.0
        %6683 = vmatprep.subr.mxu0 0.0
        %6684 = vmatpush1.msra.mxu0 0.0
        %6685 = vmatprep.subr.mxu0 0.0
        %6686 = vmatpush1.msra.mxu0 0.0
        %6687 = vmatprep.subr.mxu0 0.0
        %6688 = vmatpush1.msra.mxu0 0.0
        %6689 = vmatprep.subr.mxu0 0.0
        %6690 = vmatpush1.msra.mxu0 0.0
        %6691 = vmatprep.subr.mxu0 0.0
        %6692 = vmatpush1.msra.mxu0 0.0
        %6693 = vmatprep.subr.mxu0 0.0
        %6694 = vmatpush1.msra.mxu0 0.0
        %6695 = vmatprep.subr.mxu0 0.0
        %6696 = vmatpush1.msra.mxu0 0.0
        %6697 = vmatprep.subr.mxu0 0.0
        %6698 = vmatpush1.msra.mxu0 0.0
        %6699 = vmatprep.subr.mxu0 0.0
        %6700 = vmatpush1.msra.mxu0 0.0
        %6701 = vmatprep.subr.mxu0 0.0
        %6702 = vmatpush1.msra.mxu0 0.0
        %6703 = vmatprep.mubr.f32.mxu0 0.0
        %6704 = vmatmul.mubr.f32.gmra.mrb[0].mxu0 %v6620
        %v6705 = vpop.f32.mrb[0].mxu0
        %v6706 = vadd.f32 0.0, %v6705
        %v6707 = vpop.f32.mrb[0].mxu0
        %6708 = vmatprep.mubr.f32.mxu0 0.0
        %6709 = vmatmul.mubr.f32.gmra.mrb[0].mxu0 %v6622
        %v6710 = vpop.f32.mrb[0].mxu0
        %v6711 = vadd.f32 0.0, %v6710
        %v6712 = vpop.f32.mrb[0].mxu0
        %6713 = vmatprep.mubr.f32.mxu0 0.0
        %6714 = vmatmul.mubr.f32.gmra.mrb[0].mxu0 %v6624
        %v6715 = vpop.f32.mrb[0].mxu0
        %v6716 = vadd.f32 0.0, %v6715
        %v6717 = vpop.f32.mrb[0].mxu0
        %6718 = vmatprep.mubr.f32.mxu0 0.0
        %6719 = vmatmul.mubr.f32.gmra.mrb[0].mxu0 %v6626
        %v6720 = vpop.f32.mrb[0].mxu0
        %v6721 = vadd.f32 0.0, %v6720
        %v6722 = vpop.f32.mrb[0].mxu0
        %6723 = vmatprep.mubr.f32.mxu0 0.0
        %6724 = vmatmul.mubr.f32.gmra.mrb[0].mxu0 %v6628
        %v6725 = vpop.f32.mrb[0].mxu0
        %v6726 = vadd.f32 0.0, %v6725
        %v6727 = vpop.f32.mrb[0].mxu0
        %6728 = vmatprep.mubr.f32.mxu0 0.0
        %6729 = vmatmul.mubr.f32.gmra.mrb[0].mxu0 %v6630
        %v6730 = vpop.f32.mrb[0].mxu0
        %v6731 = vadd.f32 0.0, %v6730
        %v6732 = vpop.f32.mrb[0].mxu0
        %6733 = vmatprep.mubr.f32.mxu0 0.0
        %6734 = vmatmul.mubr.f32.gmra.mrb[0].mxu0 %v6632
        %v6735 = vpop.f32.mrb[0].mxu0
        %v6736 = vadd.f32 0.0, %v6735
        %v6737 = vpop.f32.mrb[0].mxu0
        %6738 = vmatprep.mubr.f32.mxu0 0.0
        %6739 = vmatmul.mubr.f32.gmra.mrb[0].mxu0 %v6634
        %v6740 = vpop.f32.mrb[0].mxu0
        %v6741 = vadd.f32 0.0, %v6740
        %v6742 = vpop.f32.mrb[0].mxu0
        %6743 = vdwg.mxu0
        %6752 = vrot.lane.b32.xlu0 %v6576, 116
        %v6753 = vpop.permute.xlu0 %6752
        %6754 = vrot.lane.b32.xlu0 %v6577, 116
        %v6755 = vpop.permute.xlu0 %6754
        %6756 = vrot.lane.b32.xlu0 %v6578, 116
        %v6757 = vpop.permute.xlu0 %6756
        %6758 = vrot.lane.b32.xlu0 %v6579, 116
        %v6759 = vpop.permute.xlu0 %6758
        %6760 = vrot.lane.b32.xlu0 %v6580, 116
        %v6761 = vpop.permute.xlu0 %6760
        %6762 = vrot.lane.b32.xlu0 %v6581, 116
        %v6763 = vpop.permute.xlu0 %6762
        %6764 = vrot.lane.b32.xlu0 %v6582, 116
        %v6765 = vpop.permute.xlu0 %6764
        %6766 = vrot.lane.b32.xlu0 %v6583, 116
        %v6767 = vpop.permute.xlu0 %6766
        %v6768 = vsel %vm1687, %v6753, 0
        %v6770 = vsel %vm1687, %v6755, 0
        %v6772 = vsel %vm1687, %v6757, 0
        %v6774 = vsel %vm1687, %v6759, 0
        %v6776 = vsel %vm1687, %v6761, 0
        %v6778 = vsel %vm1687, %v6763, 0
        %v6780 = vsel %vm1687, %v6765, 0
        %v6782 = vsel %vm1687, %v6767, 0
        %v6785 = vsel %vm1712, %v6585, 0
        %6787 = vmatprep.subr.mxu0 0.0
        %6788 = vmatpush1.msra.mxu0 %v6584
        %6789 = vmatprep.subr.mxu0 0.0
        %6790 = vmatpush1.msra.mxu0 %v6785
        %6791 = vmatprep.subr.mxu0 0.0
        %6792 = vmatpush1.msra.mxu0 0.0
        %6793 = vmatprep.subr.mxu0 0.0
        %6794 = vmatpush1.msra.mxu0 0.0
        %6795 = vmatprep.subr.mxu0 0.0
        %6796 = vmatpush1.msra.mxu0 0.0
        %6797 = vmatprep.subr.mxu0 0.0
        %6798 = vmatpush1.msra.mxu0 0.0
        %6799 = vmatprep.subr.mxu0 0.0
        %6800 = vmatpush1.msra.mxu0 0.0
        %6801 = vmatprep.subr.mxu0 0.0
        %6802 = vmatpush1.msra.mxu0 0.0
        %6803 = vmatprep.subr.mxu0 0.0
        %6804 = vmatpush1.msra.mxu0 0.0
        %6805 = vmatprep.subr.mxu0 0.0
        %6806 = vmatpush1.msra.mxu0 0.0
        %6807 = vmatprep.subr.mxu0 0.0
        %6808 = vmatpush1.msra.mxu0 0.0
        %6809 = vmatprep.subr.mxu0 0.0
        %6810 = vmatpush1.msra.mxu0 0.0
        %6811 = vmatprep.subr.mxu0 0.0
        %6812 = vmatpush1.msra.mxu0 0.0
        %6813 = vmatprep.subr.mxu0 0.0
        %6814 = vmatpush1.msra.mxu0 0.0
        %6815 = vmatprep.subr.mxu0 0.0
        %6816 = vmatpush1.msra.mxu0 0.0
        %6817 = vmatprep.subr.mxu0 0.0
        %6818 = vmatpush1.msra.mxu0 0.0
        %6819 = vmatprep.subr.mxu0 0.0
        %6820 = vmatpush1.msra.mxu0 0.0
        %6821 = vmatprep.subr.mxu0 0.0
        %6822 = vmatpush1.msra.mxu0 0.0
        %6823 = vmatprep.subr.mxu0 0.0
        %6824 = vmatpush1.msra.mxu0 0.0
        %6825 = vmatprep.subr.mxu0 0.0
        %6826 = vmatpush1.msra.mxu0 0.0
        %6827 = vmatprep.subr.mxu0 0.0
        %6828 = vmatpush1.msra.mxu0 0.0
        %6829 = vmatprep.subr.mxu0 0.0
        %6830 = vmatpush1.msra.mxu0 0.0
        %6831 = vmatprep.subr.mxu0 0.0
        %6832 = vmatpush1.msra.mxu0 0.0
        %6833 = vmatprep.subr.mxu0 0.0
        %6834 = vmatpush1.msra.mxu0 0.0
        %6835 = vmatprep.subr.mxu0 0.0
        %6836 = vmatpush1.msra.mxu0 0.0
        %6837 = vmatprep.subr.mxu0 0.0
        %6838 = vmatpush1.msra.mxu0 0.0
        %6839 = vmatprep.subr.mxu0 0.0
        %6840 = vmatpush1.msra.mxu0 0.0
        %6841 = vmatprep.subr.mxu0 0.0
        %6842 = vmatpush1.msra.mxu0 0.0
        %6843 = vmatprep.subr.mxu0 0.0
        %6844 = vmatpush1.msra.mxu0 0.0
        %6845 = vmatprep.subr.mxu0 0.0
        %6846 = vmatpush1.msra.mxu0 0.0
        %6847 = vmatprep.subr.mxu0 0.0
        %6848 = vmatpush1.msra.mxu0 0.0
        %6849 = vmatprep.subr.mxu0 0.0
        %6850 = vmatpush1.msra.mxu0 0.0
        %6851 = vmatprep.mubr.f32.mxu0 0.0
        %6852 = vmatmul.mubr.f32.gmra.mrb[0].mxu0 %v6768
        %v6853 = vpop.f32.mrb[0].mxu0
        %v6854 = vadd.f32 %v6706, %v6853
        %v6855 = vpop.f32.mrb[0].mxu0
        %6856 = vmatprep.mubr.f32.mxu0 0.0
        %6857 = vmatmul.mubr.f32.gmra.mrb[0].mxu0 %v6770
        %v6858 = vpop.f32.mrb[0].mxu0
        %v6859 = vadd.f32 %v6711, %v6858
        %v6860 = vpop.f32.mrb[0].mxu0
        %6861 = vmatprep.mubr.f32.mxu0 0.0
        %6862 = vmatmul.mubr.f32.gmra.mrb[0].mxu0 %v6772
        %v6863 = vpop.f32.mrb[0].mxu0
        %v6864 = vadd.f32 %v6716, %v6863
        %v6865 = vpop.f32.mrb[0].mxu0
        %6866 = vmatprep.mubr.f32.mxu0 0.0
        %6867 = vmatmul.mubr.f32.gmra.mrb[0].mxu0 %v6774
        %v6868 = vpop.f32.mrb[0].mxu0
        %v6869 = vadd.f32 %v6721, %v6868
        %v6870 = vpop.f32.mrb[0].mxu0
        %6871 = vmatprep.mubr.f32.mxu0 0.0
        %6872 = vmatmul.mubr.f32.gmra.mrb[0].mxu0 %v6776
        %v6873 = vpop.f32.mrb[0].mxu0
        %v6874 = vadd.f32 %v6726, %v6873
        %v6875 = vpop.f32.mrb[0].mxu0
        %6876 = vmatprep.mubr.f32.mxu0 0.0
        %6877 = vmatmul.mubr.f32.gmra.mrb[0].mxu0 %v6778
        %v6878 = vpop.f32.mrb[0].mxu0
        %v6879 = vadd.f32 %v6731, %v6878
        %v6880 = vpop.f32.mrb[0].mxu0
        %6881 = vmatprep.mubr.f32.mxu0 0.0
        %6882 = vmatmul.mubr.f32.gmra.mrb[0].mxu0 %v6780
        %v6883 = vpop.f32.mrb[0].mxu0
        %v6884 = vadd.f32 %v6736, %v6883
        %v6885 = vpop.f32.mrb[0].mxu0
        %6886 = vmatprep.mubr.f32.mxu0 0.0
        %6887 = vmatmul.mubr.f32.gmra.mrb[0].mxu0 %v6782
        %v6888 = vpop.f32.mrb[0].mxu0
        %v6889 = vadd.f32 %v6741, %v6888
        %v6890 = vpop.f32.mrb[0].mxu0
        %6891 = vdwg.mxu0
        %v6892 = vld [vmem:[#allocation2 + $0x2] sm:$0xff]
        %v6893 = vld [vmem:[#allocation2 + $0x12] sm:$0xff]
        %v6894 = vld [vmem:[#allocation2 + $0x22] sm:$0xff]
        %v6895 = vld [vmem:[#allocation2 + $0x32] sm:$0xff]
        %v6896 = vld [vmem:[#allocation2 + $0x42] sm:$0xff]
        %v6897 = vld [vmem:[#allocation2 + $0x52] sm:$0xff]
        %v6898 = vld [vmem:[#allocation2 + $0x62] sm:$0xff]
        %v6899 = vld [vmem:[#allocation2 + $0x72] sm:$0xff]
        %v6900 = vld [vmem:[%s1961] sm:$0xff]
        %v6901 = vld [vmem:[%s1961 + $0x8] sm:$0xf]
        %6910 = vrot.lane.b32.xlu0 %v6892, 116
        %v6911 = vpop.permute.xlu0 %6910
        %6912 = vrot.lane.b32.xlu0 %v6893, 116
        %v6913 = vpop.permute.xlu0 %6912
        %6914 = vrot.lane.b32.xlu0 %v6894, 116
        %v6915 = vpop.permute.xlu0 %6914
        %6916 = vrot.lane.b32.xlu0 %v6895, 116
        %v6917 = vpop.permute.xlu0 %6916
        %6918 = vrot.lane.b32.xlu0 %v6896, 116
        %v6919 = vpop.permute.xlu0 %6918
        %6920 = vrot.lane.b32.xlu0 %v6897, 116
        %v6921 = vpop.permute.xlu0 %6920
        %6922 = vrot.lane.b32.xlu0 %v6898, 116
        %v6923 = vpop.permute.xlu0 %6922
        %6924 = vrot.lane.b32.xlu0 %v6899, 116
        %v6925 = vpop.permute.xlu0 %6924
        %v6926 = vsel %vm1687, %v6911, 0
        %v6928 = vsel %vm1687, %v6913, 0
        %v6930 = vsel %vm1687, %v6915, 0
        %v6932 = vsel %vm1687, %v6917, 0
        %v6934 = vsel %vm1687, %v6919, 0
        %v6936 = vsel %vm1687, %v6921, 0
        %v6938 = vsel %vm1687, %v6923, 0
        %v6940 = vsel %vm1687, %v6925, 0
        %v6943 = vsel %vm1712, %v6901, 0
        %6945 = vmatprep.subr.mxu0 0.0
        %6946 = vmatpush1.msra.mxu0 %v6900
        %6947 = vmatprep.subr.mxu0 0.0
        %6948 = vmatpush1.msra.mxu0 %v6943
        %6949 = vmatprep.subr.mxu0 0.0
        %6950 = vmatpush1.msra.mxu0 0.0
        %6951 = vmatprep.subr.mxu0 0.0
        %6952 = vmatpush1.msra.mxu0 0.0
        %6953 = vmatprep.subr.mxu0 0.0
        %6954 = vmatpush1.msra.mxu0 0.0
        %6955 = vmatprep.subr.mxu0 0.0
        %6956 = vmatpush1.msra.mxu0 0.0
        %6957 = vmatprep.subr.mxu0 0.0
        %6958 = vmatpush1.msra.mxu0 0.0
        %6959 = vmatprep.subr.mxu0 0.0
        %6960 = vmatpush1.msra.mxu0 0.0
        %6961 = vmatprep.subr.mxu0 0.0
        %6962 = vmatpush1.msra.mxu0 0.0
        %6963 = vmatprep.subr.mxu0 0.0
        %6964 = vmatpush1.msra.mxu0 0.0
        %6965 = vmatprep.subr.mxu0 0.0
        %6966 = vmatpush1.msra.mxu0 0.0
        %6967 = vmatprep.subr.mxu0 0.0
        %6968 = vmatpush1.msra.mxu0 0.0
        %6969 = vmatprep.subr.mxu0 0.0
        %6970 = vmatpush1.msra.mxu0 0.0
        %6971 = vmatprep.subr.mxu0 0.0
        %6972 = vmatpush1.msra.mxu0 0.0
        %6973 = vmatprep.subr.mxu0 0.0
        %6974 = vmatpush1.msra.mxu0 0.0
        %6975 = vmatprep.subr.mxu0 0.0
        %6976 = vmatpush1.msra.mxu0 0.0
        %6977 = vmatprep.subr.mxu0 0.0
        %6978 = vmatpush1.msra.mxu0 0.0
        %6979 = vmatprep.subr.mxu0 0.0
        %6980 = vmatpush1.msra.mxu0 0.0
        %6981 = vmatprep.subr.mxu0 0.0
        %6982 = vmatpush1.msra.mxu0 0.0
        %6983 = vmatprep.subr.mxu0 0.0
        %6984 = vmatpush1.msra.mxu0 0.0
        %6985 = vmatprep.subr.mxu0 0.0
        %6986 = vmatpush1.msra.mxu0 0.0
        %6987 = vmatprep.subr.mxu0 0.0
        %6988 = vmatpush1.msra.mxu0 0.0
        %6989 = vmatprep.subr.mxu0 0.0
        %6990 = vmatpush1.msra.mxu0 0.0
        %6991 = vmatprep.subr.mxu0 0.0
        %6992 = vmatpush1.msra.mxu0 0.0
        %6993 = vmatprep.subr.mxu0 0.0
        %6994 = vmatpush1.msra.mxu0 0.0
        %6995 = vmatprep.subr.mxu0 0.0
        %6996 = vmatpush1.msra.mxu0 0.0
        %6997 = vmatprep.subr.mxu0 0.0
        %6998 = vmatpush1.msra.mxu0 0.0
        %6999 = vmatprep.subr.mxu0 0.0
        %7000 = vmatpush1.msra.mxu0 0.0
        %7001 = vmatprep.subr.mxu0 0.0
        %7002 = vmatpush1.msra.mxu0 0.0
        %7003 = vmatprep.subr.mxu0 0.0
        %7004 = vmatpush1.msra.mxu0 0.0
        %7005 = vmatprep.subr.mxu0 0.0
        %7006 = vmatpush1.msra.mxu0 0.0
        %7007 = vmatprep.subr.mxu0 0.0
        %7008 = vmatpush1.msra.mxu0 0.0
        %7009 = vmatprep.mubr.f32.mxu0 0.0
        %7010 = vmatmul.mubr.f32.gmra.mrb[0].mxu0 %v6926
        %v7011 = vpop.f32.mrb[0].mxu0
        %v7012 = vadd.f32 0.0, %v7011
        %v7013 = vpop.f32.mrb[0].mxu0
        %7014 = vmatprep.mubr.f32.mxu0 0.0
        %7015 = vmatmul.mubr.f32.gmra.mrb[0].mxu0 %v6928
        %v7016 = vpop.f32.mrb[0].mxu0
        %v7017 = vadd.f32 0.0, %v7016
        %v7018 = vpop.f32.mrb[0].mxu0
        %7019 = vmatprep.mubr.f32.mxu0 0.0
        %7020 = vmatmul.mubr.f32.gmra.mrb[0].mxu0 %v6930
        %v7021 = vpop.f32.mrb[0].mxu0
        %v7022 = vadd.f32 0.0, %v7021
        %v7023 = vpop.f32.mrb[0].mxu0
        %7024 = vmatprep.mubr.f32.mxu0 0.0
        %7025 = vmatmul.mubr.f32.gmra.mrb[0].mxu0 %v6932
        %v7026 = vpop.f32.mrb[0].mxu0
        %v7027 = vadd.f32 0.0, %v7026
        %v7028 = vpop.f32.mrb[0].mxu0
        %7029 = vmatprep.mubr.f32.mxu0 0.0
        %7030 = vmatmul.mubr.f32.gmra.mrb[0].mxu0 %v6934
        %v7031 = vpop.f32.mrb[0].mxu0
        %v7032 = vadd.f32 0.0, %v7031
        %v7033 = vpop.f32.mrb[0].mxu0
        %7034 = vmatprep.mubr.f32.mxu0 0.0
        %7035 = vmatmul.mubr.f32.gmra.mrb[0].mxu0 %v6936
        %v7036 = vpop.f32.mrb[0].mxu0
        %v7037 = vadd.f32 0.0, %v7036
        %v7038 = vpop.f32.mrb[0].mxu0
        %7039 = vmatprep.mubr.f32.mxu0 0.0
        %7040 = vmatmul.mubr.f32.gmra.mrb[0].mxu0 %v6938
        %v7041 = vpop.f32.mrb[0].mxu0
        %v7042 = vadd.f32 0.0, %v7041
        %v7043 = vpop.f32.mrb[0].mxu0
        %7044 = vmatprep.mubr.f32.mxu0 0.0
        %7045 = vmatmul.mubr.f32.gmra.mrb[0].mxu0 %v6940
        %v7046 = vpop.f32.mrb[0].mxu0
        %v7047 = vadd.f32 0.0, %v7046
        %v7048 = vpop.f32.mrb[0].mxu0
        %7049 = vdwg.mxu0
        %v7050 = vadd.f32 %v6854, %v7012
        %v7051 = vadd.f32 %v6859, %v7017
        %v7052 = vadd.f32 %v6864, %v7022
        %v7053 = vadd.f32 %v6869, %v7027
        %v7054 = vadd.f32 %v6874, %v7032
        %v7055 = vadd.f32 %v6879, %v7037
        %v7056 = vadd.f32 %v6884, %v7042
        %v7057 = vadd.f32 %v6889, %v7047
        %v7058 = vld [vmem:[%s1096] sm:$0xff]
        %v7059 = vld [vmem:[%s1096 + $0x10] sm:$0xff]
        %v7060 = vld [vmem:[%s1096 + $0x20] sm:$0xff]
        %v7061 = vld [vmem:[%s1096 + $0x30] sm:$0xff]
        %v7062 = vld [vmem:[%s1096 + $0x40] sm:$0xff]
        %v7063 = vld [vmem:[%s1096 + $0x50] sm:$0xff]
        %v7064 = vld [vmem:[%s1096 + $0x60] sm:$0xff]
        %v7065 = vld [vmem:[%s1096 + $0x70] sm:$0xff]
        %v7066 = vld [vmem:[%s2112] sm:$0xff]
        %v7067 = vld [vmem:[%s2112 + $0x8] sm:$0xf]
        %7076 = vrot.lane.b32.xlu0 %v7058, 116
        %v7077 = vpop.permute.xlu0 %7076
        %7078 = vrot.lane.b32.xlu0 %v7059, 116
        %v7079 = vpop.permute.xlu0 %7078
        %7080 = vrot.lane.b32.xlu0 %v7060, 116
        %v7081 = vpop.permute.xlu0 %7080
        %7082 = vrot.lane.b32.xlu0 %v7061, 116
        %v7083 = vpop.permute.xlu0 %7082
        %7084 = vrot.lane.b32.xlu0 %v7062, 116
        %v7085 = vpop.permute.xlu0 %7084
        %7086 = vrot.lane.b32.xlu0 %v7063, 116
        %v7087 = vpop.permute.xlu0 %7086
        %7088 = vrot.lane.b32.xlu0 %v7064, 116
        %v7089 = vpop.permute.xlu0 %7088
        %7090 = vrot.lane.b32.xlu0 %v7065, 116
        %v7091 = vpop.permute.xlu0 %7090
        %v7092 = vsel %vm1687, %v7077, 0
        %v7094 = vsel %vm1687, %v7079, 0
        %v7096 = vsel %vm1687, %v7081, 0
        %v7098 = vsel %vm1687, %v7083, 0
        %v7100 = vsel %vm1687, %v7085, 0
        %v7102 = vsel %vm1687, %v7087, 0
        %v7104 = vsel %vm1687, %v7089, 0
        %v7106 = vsel %vm1687, %v7091, 0
        %v7109 = vsel %vm1712, %v7067, 0
        %7111 = vmatprep.subr.mxu0 0.0
        %7112 = vmatpush1.msra.mxu0 %v7066
        %7113 = vmatprep.subr.mxu0 0.0
        %7114 = vmatpush1.msra.mxu0 %v7109
        %7115 = vmatprep.subr.mxu0 0.0
        %7116 = vmatpush1.msra.mxu0 0.0
        %7117 = vmatprep.subr.mxu0 0.0
        %7118 = vmatpush1.msra.mxu0 0.0
        %7119 = vmatprep.subr.mxu0 0.0
        %7120 = vmatpush1.msra.mxu0 0.0
        %7121 = vmatprep.subr.mxu0 0.0
        %7122 = vmatpush1.msra.mxu0 0.0
        %7123 = vmatprep.subr.mxu0 0.0
        %7124 = vmatpush1.msra.mxu0 0.0
        %7125 = vmatprep.subr.mxu0 0.0
        %7126 = vmatpush1.msra.mxu0 0.0
        %7127 = vmatprep.subr.mxu0 0.0
        %7128 = vmatpush1.msra.mxu0 0.0
        %7129 = vmatprep.subr.mxu0 0.0
        %7130 = vmatpush1.msra.mxu0 0.0
        %7131 = vmatprep.subr.mxu0 0.0
        %7132 = vmatpush1.msra.mxu0 0.0
        %7133 = vmatprep.subr.mxu0 0.0
        %7134 = vmatpush1.msra.mxu0 0.0
        %7135 = vmatprep.subr.mxu0 0.0
        %7136 = vmatpush1.msra.mxu0 0.0
        %7137 = vmatprep.subr.mxu0 0.0
        %7138 = vmatpush1.msra.mxu0 0.0
        %7139 = vmatprep.subr.mxu0 0.0
        %7140 = vmatpush1.msra.mxu0 0.0
        %7141 = vmatprep.subr.mxu0 0.0
        %7142 = vmatpush1.msra.mxu0 0.0
        %7143 = vmatprep.subr.mxu0 0.0
        %7144 = vmatpush1.msra.mxu0 0.0
        %7145 = vmatprep.subr.mxu0 0.0
        %7146 = vmatpush1.msra.mxu0 0.0
        %7147 = vmatprep.subr.mxu0 0.0
        %7148 = vmatpush1.msra.mxu0 0.0
        %7149 = vmatprep.subr.mxu0 0.0
        %7150 = vmatpush1.msra.mxu0 0.0
        %7151 = vmatprep.subr.mxu0 0.0
        %7152 = vmatpush1.msra.mxu0 0.0
        %7153 = vmatprep.subr.mxu0 0.0
        %7154 = vmatpush1.msra.mxu0 0.0
        %7155 = vmatprep.subr.mxu0 0.0
        %7156 = vmatpush1.msra.mxu0 0.0
        %7157 = vmatprep.subr.mxu0 0.0
        %7158 = vmatpush1.msra.mxu0 0.0
        %7159 = vmatprep.subr.mxu0 0.0
        %7160 = vmatpush1.msra.mxu0 0.0
        %7161 = vmatprep.subr.mxu0 0.0
        %7162 = vmatpush1.msra.mxu0 0.0
        %7163 = vmatprep.subr.mxu0 0.0
        %7164 = vmatpush1.msra.mxu0 0.0
        %7165 = vmatprep.subr.mxu0 0.0
        %7166 = vmatpush1.msra.mxu0 0.0
        %7167 = vmatprep.subr.mxu0 0.0
        %7168 = vmatpush1.msra.mxu0 0.0
        %7169 = vmatprep.subr.mxu0 0.0
        %7170 = vmatpush1.msra.mxu0 0.0
        %7171 = vmatprep.subr.mxu0 0.0
        %7172 = vmatpush1.msra.mxu0 0.0
        %7173 = vmatprep.subr.mxu0 0.0
        %7174 = vmatpush1.msra.mxu0 0.0
        %7175 = vmatprep.mubr.f32.mxu0 0.0
        %7176 = vmatmul.mubr.f32.gmra.mrb[0].mxu0 %v7092
        %v7177 = vpop.f32.mrb[0].mxu0
        %v7178 = vadd.f32 0.0, %v7177
        %v7179 = vpop.f32.mrb[0].mxu0
        %7180 = vmatprep.mubr.f32.mxu0 0.0
        %7181 = vmatmul.mubr.f32.gmra.mrb[0].mxu0 %v7094
        %v7182 = vpop.f32.mrb[0].mxu0
        %v7183 = vadd.f32 0.0, %v7182
        %v7184 = vpop.f32.mrb[0].mxu0
        %7185 = vmatprep.mubr.f32.mxu0 0.0
        %7186 = vmatmul.mubr.f32.gmra.mrb[0].mxu0 %v7096
        %v7187 = vpop.f32.mrb[0].mxu0
        %v7188 = vadd.f32 0.0, %v7187
        %v7189 = vpop.f32.mrb[0].mxu0
        %7190 = vmatprep.mubr.f32.mxu0 0.0
        %7191 = vmatmul.mubr.f32.gmra.mrb[0].mxu0 %v7098
        %v7192 = vpop.f32.mrb[0].mxu0
        %v7193 = vadd.f32 0.0, %v7192
        %v7194 = vpop.f32.mrb[0].mxu0
        %7195 = vmatprep.mubr.f32.mxu0 0.0
        %7196 = vmatmul.mubr.f32.gmra.mrb[0].mxu0 %v7100
        %v7197 = vpop.f32.mrb[0].mxu0
        %v7198 = vadd.f32 0.0, %v7197
        %v7199 = vpop.f32.mrb[0].mxu0
        %7200 = vmatprep.mubr.f32.mxu0 0.0
        %7201 = vmatmul.mubr.f32.gmra.mrb[0].mxu0 %v7102
        %v7202 = vpop.f32.mrb[0].mxu0
        %v7203 = vadd.f32 0.0, %v7202
        %v7204 = vpop.f32.mrb[0].mxu0
        %7205 = vmatprep.mubr.f32.mxu0 0.0
        %7206 = vmatmul.mubr.f32.gmra.mrb[0].mxu0 %v7104
        %v7207 = vpop.f32.mrb[0].mxu0
        %v7208 = vadd.f32 0.0, %v7207
        %v7209 = vpop.f32.mrb[0].mxu0
        %7210 = vmatprep.mubr.f32.mxu0 0.0
        %7211 = vmatmul.mubr.f32.gmra.mrb[0].mxu0 %v7106
        %v7212 = vpop.f32.mrb[0].mxu0
        %v7213 = vadd.f32 0.0, %v7212
        %v7214 = vpop.f32.mrb[0].mxu0
        %7215 = vdwg.mxu0
        %v7216 = vadd.f32 %v7050, %v7178
        %v7217 = vadd.f32 %v7051, %v7183
        %v7218 = vadd.f32 %v7052, %v7188
        %v7219 = vadd.f32 %v7053, %v7193
        %v7220 = vadd.f32 %v7054, %v7198
        %v7221 = vadd.f32 %v7055, %v7203
        %v7222 = vadd.f32 %v7056, %v7208
        %v7223 = vadd.f32 %v7057, %v7213
        %v7224 = vld [vmem:[%s1096 + $0x1] sm:$0xff]
        %v7225 = vld [vmem:[%s1096 + $0x11] sm:$0xff]
        %v7226 = vld [vmem:[%s1096 + $0x21] sm:$0xff]
        %v7227 = vld [vmem:[%s1096 + $0x31] sm:$0xff]
        %v7228 = vld [vmem:[%s1096 + $0x41] sm:$0xff]
        %v7229 = vld [vmem:[%s1096 + $0x51] sm:$0xff]
        %v7230 = vld [vmem:[%s1096 + $0x61] sm:$0xff]
        %v7231 = vld [vmem:[%s1096 + $0x71] sm:$0xff]
        %v7232 = vld [vmem:[%s2263] sm:$0xff]
        %v7233 = vld [vmem:[%s2263 + $0x8] sm:$0xf]
        %7242 = vrot.lane.b32.xlu0 %v7224, 116
        %v7243 = vpop.permute.xlu0 %7242
        %7244 = vrot.lane.b32.xlu0 %v7225, 116
        %v7245 = vpop.permute.xlu0 %7244
        %7246 = vrot.lane.b32.xlu0 %v7226, 116
        %v7247 = vpop.permute.xlu0 %7246
        %7248 = vrot.lane.b32.xlu0 %v7227, 116
        %v7249 = vpop.permute.xlu0 %7248
        %7250 = vrot.lane.b32.xlu0 %v7228, 116
        %v7251 = vpop.permute.xlu0 %7250
        %7252 = vrot.lane.b32.xlu0 %v7229, 116
        %v7253 = vpop.permute.xlu0 %7252
        %7254 = vrot.lane.b32.xlu0 %v7230, 116
        %v7255 = vpop.permute.xlu0 %7254
        %7256 = vrot.lane.b32.xlu0 %v7231, 116
        %v7257 = vpop.permute.xlu0 %7256
        %v7258 = vsel %vm1687, %v7243, 0
        %v7260 = vsel %vm1687, %v7245, 0
        %v7262 = vsel %vm1687, %v7247, 0
        %v7264 = vsel %vm1687, %v7249, 0
        %v7266 = vsel %vm1687, %v7251, 0
        %v7268 = vsel %vm1687, %v7253, 0
        %v7270 = vsel %vm1687, %v7255, 0
        %v7272 = vsel %vm1687, %v7257, 0
        %v7275 = vsel %vm1712, %v7233, 0
        %7277 = vmatprep.subr.mxu0 0.0
        %7278 = vmatpush1.msra.mxu0 %v7232
        %7279 = vmatprep.subr.mxu0 0.0
        %7280 = vmatpush1.msra.mxu0 %v7275
        %7281 = vmatprep.subr.mxu0 0.0
        %7282 = vmatpush1.msra.mxu0 0.0
        %7283 = vmatprep.subr.mxu0 0.0
        %7284 = vmatpush1.msra.mxu0 0.0
        %7285 = vmatprep.subr.mxu0 0.0
        %7286 = vmatpush1.msra.mxu0 0.0
        %7287 = vmatprep.subr.mxu0 0.0
        %7288 = vmatpush1.msra.mxu0 0.0
        %7289 = vmatprep.subr.mxu0 0.0
        %7290 = vmatpush1.msra.mxu0 0.0
        %7291 = vmatprep.subr.mxu0 0.0
        %7292 = vmatpush1.msra.mxu0 0.0
        %7293 = vmatprep.subr.mxu0 0.0
        %7294 = vmatpush1.msra.mxu0 0.0
        %7295 = vmatprep.subr.mxu0 0.0
        %7296 = vmatpush1.msra.mxu0 0.0
        %7297 = vmatprep.subr.mxu0 0.0
        %7298 = vmatpush1.msra.mxu0 0.0
        %7299 = vmatprep.subr.mxu0 0.0
        %7300 = vmatpush1.msra.mxu0 0.0
        %7301 = vmatprep.subr.mxu0 0.0
        %7302 = vmatpush1.msra.mxu0 0.0
        %7303 = vmatprep.subr.mxu0 0.0
        %7304 = vmatpush1.msra.mxu0 0.0
        %7305 = vmatprep.subr.mxu0 0.0
        %7306 = vmatpush1.msra.mxu0 0.0
        %7307 = vmatprep.subr.mxu0 0.0
        %7308 = vmatpush1.msra.mxu0 0.0
        %7309 = vmatprep.subr.mxu0 0.0
        %7310 = vmatpush1.msra.mxu0 0.0
        %7311 = vmatprep.subr.mxu0 0.0
        %7312 = vmatpush1.msra.mxu0 0.0
        %7313 = vmatprep.subr.mxu0 0.0
        %7314 = vmatpush1.msra.mxu0 0.0
        %7315 = vmatprep.subr.mxu0 0.0
        %7316 = vmatpush1.msra.mxu0 0.0
        %7317 = vmatprep.subr.mxu0 0.0
        %7318 = vmatpush1.msra.mxu0 0.0
        %7319 = vmatprep.subr.mxu0 0.0
        %7320 = vmatpush1.msra.mxu0 0.0
        %7321 = vmatprep.subr.mxu0 0.0
        %7322 = vmatpush1.msra.mxu0 0.0
        %7323 = vmatprep.subr.mxu0 0.0
        %7324 = vmatpush1.msra.mxu0 0.0
        %7325 = vmatprep.subr.mxu0 0.0
        %7326 = vmatpush1.msra.mxu0 0.0
        %7327 = vmatprep.subr.mxu0 0.0
        %7328 = vmatpush1.msra.mxu0 0.0
        %7329 = vmatprep.subr.mxu0 0.0
        %7330 = vmatpush1.msra.mxu0 0.0
        %7331 = vmatprep.subr.mxu0 0.0
        %7332 = vmatpush1.msra.mxu0 0.0
        %7333 = vmatprep.subr.mxu0 0.0
        %7334 = vmatpush1.msra.mxu0 0.0
        %7335 = vmatprep.subr.mxu0 0.0
        %7336 = vmatpush1.msra.mxu0 0.0
        %7337 = vmatprep.subr.mxu0 0.0
        %7338 = vmatpush1.msra.mxu0 0.0
        %7339 = vmatprep.subr.mxu0 0.0
        %7340 = vmatpush1.msra.mxu0 0.0
        %7341 = vmatprep.mubr.f32.mxu0 0.0
        %7342 = vmatmul.mubr.f32.gmra.mrb[0].mxu0 %v7258
        %v7343 = vpop.f32.mrb[0].mxu0
        %v7344 = vadd.f32 0.0, %v7343
        %v7345 = vpop.f32.mrb[0].mxu0
        %7346 = vmatprep.mubr.f32.mxu0 0.0
        %7347 = vmatmul.mubr.f32.gmra.mrb[0].mxu0 %v7260
        %v7348 = vpop.f32.mrb[0].mxu0
        %v7349 = vadd.f32 0.0, %v7348
        %v7350 = vpop.f32.mrb[0].mxu0
        %7351 = vmatprep.mubr.f32.mxu0 0.0
        %7352 = vmatmul.mubr.f32.gmra.mrb[0].mxu0 %v7262
        %v7353 = vpop.f32.mrb[0].mxu0
        %v7354 = vadd.f32 0.0, %v7353
        %v7355 = vpop.f32.mrb[0].mxu0
        %7356 = vmatprep.mubr.f32.mxu0 0.0
        %7357 = vmatmul.mubr.f32.gmra.mrb[0].mxu0 %v7264
        %v7358 = vpop.f32.mrb[0].mxu0
        %v7359 = vadd.f32 0.0, %v7358
        %v7360 = vpop.f32.mrb[0].mxu0
        %7361 = vmatprep.mubr.f32.mxu0 0.0
        %7362 = vmatmul.mubr.f32.gmra.mrb[0].mxu0 %v7266
        %v7363 = vpop.f32.mrb[0].mxu0
        %v7364 = vadd.f32 0.0, %v7363
        %v7365 = vpop.f32.mrb[0].mxu0
        %7366 = vmatprep.mubr.f32.mxu0 0.0
        %7367 = vmatmul.mubr.f32.gmra.mrb[0].mxu0 %v7268
        %v7368 = vpop.f32.mrb[0].mxu0
        %v7369 = vadd.f32 0.0, %v7368
        %v7370 = vpop.f32.mrb[0].mxu0
        %7371 = vmatprep.mubr.f32.mxu0 0.0
        %7372 = vmatmul.mubr.f32.gmra.mrb[0].mxu0 %v7270
        %v7373 = vpop.f32.mrb[0].mxu0
        %v7374 = vadd.f32 0.0, %v7373
        %v7375 = vpop.f32.mrb[0].mxu0
        %7376 = vmatprep.mubr.f32.mxu0 0.0
        %7377 = vmatmul.mubr.f32.gmra.mrb[0].mxu0 %v7272
        %v7378 = vpop.f32.mrb[0].mxu0
        %v7379 = vadd.f32 0.0, %v7378
        %v7380 = vpop.f32.mrb[0].mxu0
        %7381 = vdwg.mxu0
        %v7382 = vadd.f32 %v7216, %v7344
        %v7383 = vadd.f32 %v7217, %v7349
        %v7384 = vadd.f32 %v7218, %v7354
        %v7385 = vadd.f32 %v7219, %v7359
        %v7386 = vadd.f32 %v7220, %v7364
        %v7387 = vadd.f32 %v7221, %v7369
        %v7388 = vadd.f32 %v7222, %v7374
        %v7389 = vadd.f32 %v7223, %v7379
        %v7390 = vld [vmem:[%s1096 + $0x2] sm:$0xff]
        %v7391 = vld [vmem:[%s1096 + $0x12] sm:$0xff]
        %v7392 = vld [vmem:[%s1096 + $0x22] sm:$0xff]
        %v7393 = vld [vmem:[%s1096 + $0x32] sm:$0xff]
        %v7394 = vld [vmem:[%s1096 + $0x42] sm:$0xff]
        %v7395 = vld [vmem:[%s1096 + $0x52] sm:$0xff]
        %v7396 = vld [vmem:[%s1096 + $0x62] sm:$0xff]
        %v7397 = vld [vmem:[%s1096 + $0x72] sm:$0xff]
        %v7398 = vld [vmem:[%s2414] sm:$0xff]
        %v7399 = vld [vmem:[%s2414 + $0x8] sm:$0xf]
        %7408 = vrot.lane.b32.xlu0 %v7390, 116
        %v7409 = vpop.permute.xlu0 %7408
        %7410 = vrot.lane.b32.xlu0 %v7391, 116
        %v7411 = vpop.permute.xlu0 %7410
        %7412 = vrot.lane.b32.xlu0 %v7392, 116
        %v7413 = vpop.permute.xlu0 %7412
        %7414 = vrot.lane.b32.xlu0 %v7393, 116
        %v7415 = vpop.permute.xlu0 %7414
        %7416 = vrot.lane.b32.xlu0 %v7394, 116
        %v7417 = vpop.permute.xlu0 %7416
        %7418 = vrot.lane.b32.xlu0 %v7395, 116
        %v7419 = vpop.permute.xlu0 %7418
        %7420 = vrot.lane.b32.xlu0 %v7396, 116
        %v7421 = vpop.permute.xlu0 %7420
        %7422 = vrot.lane.b32.xlu0 %v7397, 116
        %v7423 = vpop.permute.xlu0 %7422
        %v7424 = vsel %vm1687, %v7409, 0
        %v7426 = vsel %vm1687, %v7411, 0
        %v7428 = vsel %vm1687, %v7413, 0
        %v7430 = vsel %vm1687, %v7415, 0
        %v7432 = vsel %vm1687, %v7417, 0
        %v7434 = vsel %vm1687, %v7419, 0
        %v7436 = vsel %vm1687, %v7421, 0
        %v7438 = vsel %vm1687, %v7423, 0
        %v7441 = vsel %vm1712, %v7399, 0
        %7443 = vmatprep.subr.mxu0 0.0
        %7444 = vmatpush1.msra.mxu0 %v7398
        %7445 = vmatprep.subr.mxu0 0.0
        %7446 = vmatpush1.msra.mxu0 %v7441
        %7447 = vmatprep.subr.mxu0 0.0
        %7448 = vmatpush1.msra.mxu0 0.0
        %7449 = vmatprep.subr.mxu0 0.0
        %7450 = vmatpush1.msra.mxu0 0.0
        %7451 = vmatprep.subr.mxu0 0.0
        %7452 = vmatpush1.msra.mxu0 0.0
        %7453 = vmatprep.subr.mxu0 0.0
        %7454 = vmatpush1.msra.mxu0 0.0
        %7455 = vmatprep.subr.mxu0 0.0
        %7456 = vmatpush1.msra.mxu0 0.0
        %7457 = vmatprep.subr.mxu0 0.0
        %7458 = vmatpush1.msra.mxu0 0.0
        %7459 = vmatprep.subr.mxu0 0.0
        %7460 = vmatpush1.msra.mxu0 0.0
        %7461 = vmatprep.subr.mxu0 0.0
        %7462 = vmatpush1.msra.mxu0 0.0
        %7463 = vmatprep.subr.mxu0 0.0
        %7464 = vmatpush1.msra.mxu0 0.0
        %7465 = vmatprep.subr.mxu0 0.0
        %7466 = vmatpush1.msra.mxu0 0.0
        %7467 = vmatprep.subr.mxu0 0.0
        %7468 = vmatpush1.msra.mxu0 0.0
        %7469 = vmatprep.subr.mxu0 0.0
        %7470 = vmatpush1.msra.mxu0 0.0
        %7471 = vmatprep.subr.mxu0 0.0
        %7472 = vmatpush1.msra.mxu0 0.0
        %7473 = vmatprep.subr.mxu0 0.0
        %7474 = vmatpush1.msra.mxu0 0.0
        %7475 = vmatprep.subr.mxu0 0.0
        %7476 = vmatpush1.msra.mxu0 0.0
        %7477 = vmatprep.subr.mxu0 0.0
        %7478 = vmatpush1.msra.mxu0 0.0
        %7479 = vmatprep.subr.mxu0 0.0
        %7480 = vmatpush1.msra.mxu0 0.0
        %7481 = vmatprep.subr.mxu0 0.0
        %7482 = vmatpush1.msra.mxu0 0.0
        %7483 = vmatprep.subr.mxu0 0.0
        %7484 = vmatpush1.msra.mxu0 0.0
        %7485 = vmatprep.subr.mxu0 0.0
        %7486 = vmatpush1.msra.mxu0 0.0
        %7487 = vmatprep.subr.mxu0 0.0
        %7488 = vmatpush1.msra.mxu0 0.0
        %7489 = vmatprep.subr.mxu0 0.0
        %7490 = vmatpush1.msra.mxu0 0.0
        %7491 = vmatprep.subr.mxu0 0.0
        %7492 = vmatpush1.msra.mxu0 0.0
        %7493 = vmatprep.subr.mxu0 0.0
        %7494 = vmatpush1.msra.mxu0 0.0
        %7495 = vmatprep.subr.mxu0 0.0
        %7496 = vmatpush1.msra.mxu0 0.0
        %7497 = vmatprep.subr.mxu0 0.0
        %7498 = vmatpush1.msra.mxu0 0.0
        %7499 = vmatprep.subr.mxu0 0.0
        %7500 = vmatpush1.msra.mxu0 0.0
        %7501 = vmatprep.subr.mxu0 0.0
        %7502 = vmatpush1.msra.mxu0 0.0
        %7503 = vmatprep.subr.mxu0 0.0
        %7504 = vmatpush1.msra.mxu0 0.0
        %7505 = vmatprep.subr.mxu0 0.0
        %7506 = vmatpush1.msra.mxu0 0.0
        %7507 = vmatprep.mubr.f32.mxu0 0.0
        %7508 = vmatmul.mubr.f32.gmra.mrb[0].mxu0 %v7424
        %v7509 = vpop.f32.mrb[0].mxu0
        %v7510 = vadd.f32 0.0, %v7509
        %v7511 = vpop.f32.mrb[0].mxu0
        %7512 = vmatprep.mubr.f32.mxu0 0.0
        %7513 = vmatmul.mubr.f32.gmra.mrb[0].mxu0 %v7426
        %v7514 = vpop.f32.mrb[0].mxu0
        %v7515 = vadd.f32 0.0, %v7514
        %v7516 = vpop.f32.mrb[0].mxu0
        %7517 = vmatprep.mubr.f32.mxu0 0.0
        %7518 = vmatmul.mubr.f32.gmra.mrb[0].mxu0 %v7428
        %v7519 = vpop.f32.mrb[0].mxu0
        %v7520 = vadd.f32 0.0, %v7519
        %v7521 = vpop.f32.mrb[0].mxu0
        %7522 = vmatprep.mubr.f32.mxu0 0.0
        %7523 = vmatmul.mubr.f32.gmra.mrb[0].mxu0 %v7430
        %v7524 = vpop.f32.mrb[0].mxu0
        %v7525 = vadd.f32 0.0, %v7524
        %v7526 = vpop.f32.mrb[0].mxu0
        %7527 = vmatprep.mubr.f32.mxu0 0.0
        %7528 = vmatmul.mubr.f32.gmra.mrb[0].mxu0 %v7432
        %v7529 = vpop.f32.mrb[0].mxu0
        %v7530 = vadd.f32 0.0, %v7529
        %v7531 = vpop.f32.mrb[0].mxu0
        %7532 = vmatprep.mubr.f32.mxu0 0.0
        %7533 = vmatmul.mubr.f32.gmra.mrb[0].mxu0 %v7434
        %v7534 = vpop.f32.mrb[0].mxu0
        %v7535 = vadd.f32 0.0, %v7534
        %v7536 = vpop.f32.mrb[0].mxu0
        %7537 = vmatprep.mubr.f32.mxu0 0.0
        %7538 = vmatmul.mubr.f32.gmra.mrb[0].mxu0 %v7436
        %v7539 = vpop.f32.mrb[0].mxu0
        %v7540 = vadd.f32 0.0, %v7539
        %v7541 = vpop.f32.mrb[0].mxu0
        %7542 = vmatprep.mubr.f32.mxu0 0.0
        %7543 = vmatmul.mubr.f32.gmra.mrb[0].mxu0 %v7438
        %v7544 = vpop.f32.mrb[0].mxu0
        %v7545 = vadd.f32 0.0, %v7544
        %v7546 = vpop.f32.mrb[0].mxu0
        %7547 = vdwg.mxu0
        %v7548 = vadd.f32 %v7382, %v7510
        %v7549 = vadd.f32 %v7383, %v7515
        %v7550 = vadd.f32 %v7384, %v7520
        %v7551 = vadd.f32 %v7385, %v7525
        %v7552 = vadd.f32 %v7386, %v7530
        %v7553 = vadd.f32 %v7387, %v7535
        %v7554 = vadd.f32 %v7388, %v7540
        %v7555 = vadd.f32 %v7389, %v7545
        %v7556 = vld [vmem:[%s2557] sm:$0xff]
        %v7557 = vld [vmem:[%s2557 + $0x10] sm:$0xff]
        %v7558 = vld [vmem:[%s2557 + $0x20] sm:$0xff]
        %v7559 = vld [vmem:[%s2557 + $0x30] sm:$0xff]
        %v7560 = vld [vmem:[%s2557 + $0x40] sm:$0xff]
        %v7561 = vld [vmem:[%s2557 + $0x50] sm:$0xff]
        %v7562 = vld [vmem:[%s2557 + $0x60] sm:$0xff]
        %v7563 = vld [vmem:[%s2557 + $0x70] sm:$0xff]
        %v7564 = vld [vmem:[%s2566] sm:$0xff]
        %v7565 = vld [vmem:[%s2566 + $0x8] sm:$0xf]
        %7574 = vrot.lane.b32.xlu0 %v7556, 116
        %v7575 = vpop.permute.xlu0 %7574
        %7576 = vrot.lane.b32.xlu0 %v7557, 116
        %v7577 = vpop.permute.xlu0 %7576
        %7578 = vrot.lane.b32.xlu0 %v7558, 116
        %v7579 = vpop.permute.xlu0 %7578
        %7580 = vrot.lane.b32.xlu0 %v7559, 116
        %v7581 = vpop.permute.xlu0 %7580
        %7582 = vrot.lane.b32.xlu0 %v7560, 116
        %v7583 = vpop.permute.xlu0 %7582
        %7584 = vrot.lane.b32.xlu0 %v7561, 116
        %v7585 = vpop.permute.xlu0 %7584
        %7586 = vrot.lane.b32.xlu0 %v7562, 116
        %v7587 = vpop.permute.xlu0 %7586
        %7588 = vrot.lane.b32.xlu0 %v7563, 116
        %v7589 = vpop.permute.xlu0 %7588
        %v7590 = vsel %vm1687, %v7575, 0
        %v7592 = vsel %vm1687, %v7577, 0
        %v7594 = vsel %vm1687, %v7579, 0
        %v7596 = vsel %vm1687, %v7581, 0
        %v7598 = vsel %vm1687, %v7583, 0
        %v7600 = vsel %vm1687, %v7585, 0
        %v7602 = vsel %vm1687, %v7587, 0
        %v7604 = vsel %vm1687, %v7589, 0
        %v7607 = vsel %vm1712, %v7565, 0
        %7609 = vmatprep.subr.mxu0 0.0
        %7610 = vmatpush1.msra.mxu0 %v7564
        %7611 = vmatprep.subr.mxu0 0.0
        %7612 = vmatpush1.msra.mxu0 %v7607
        %7613 = vmatprep.subr.mxu0 0.0
        %7614 = vmatpush1.msra.mxu0 0.0
        %7615 = vmatprep.subr.mxu0 0.0
        %7616 = vmatpush1.msra.mxu0 0.0
        %7617 = vmatprep.subr.mxu0 0.0
        %7618 = vmatpush1.msra.mxu0 0.0
        %7619 = vmatprep.subr.mxu0 0.0
        %7620 = vmatpush1.msra.mxu0 0.0
        %7621 = vmatprep.subr.mxu0 0.0
        %7622 = vmatpush1.msra.mxu0 0.0
        %7623 = vmatprep.subr.mxu0 0.0
        %7624 = vmatpush1.msra.mxu0 0.0
        %7625 = vmatprep.subr.mxu0 0.0
        %7626 = vmatpush1.msra.mxu0 0.0
        %7627 = vmatprep.subr.mxu0 0.0
        %7628 = vmatpush1.msra.mxu0 0.0
        %7629 = vmatprep.subr.mxu0 0.0
        %7630 = vmatpush1.msra.mxu0 0.0
        %7631 = vmatprep.subr.mxu0 0.0
        %7632 = vmatpush1.msra.mxu0 0.0
        %7633 = vmatprep.subr.mxu0 0.0
        %7634 = vmatpush1.msra.mxu0 0.0
        %7635 = vmatprep.subr.mxu0 0.0
        %7636 = vmatpush1.msra.mxu0 0.0
        %7637 = vmatprep.subr.mxu0 0.0
        %7638 = vmatpush1.msra.mxu0 0.0
        %7639 = vmatprep.subr.mxu0 0.0
        %7640 = vmatpush1.msra.mxu0 0.0
        %7641 = vmatprep.subr.mxu0 0.0
        %7642 = vmatpush1.msra.mxu0 0.0
        %7643 = vmatprep.subr.mxu0 0.0
        %7644 = vmatpush1.msra.mxu0 0.0
        %7645 = vmatprep.subr.mxu0 0.0
        %7646 = vmatpush1.msra.mxu0 0.0
        %7647 = vmatprep.subr.mxu0 0.0
        %7648 = vmatpush1.msra.mxu0 0.0
        %7649 = vmatprep.subr.mxu0 0.0
        %7650 = vmatpush1.msra.mxu0 0.0
        %7651 = vmatprep.subr.mxu0 0.0
        %7652 = vmatpush1.msra.mxu0 0.0
        %7653 = vmatprep.subr.mxu0 0.0
        %7654 = vmatpush1.msra.mxu0 0.0
        %7655 = vmatprep.subr.mxu0 0.0
        %7656 = vmatpush1.msra.mxu0 0.0
        %7657 = vmatprep.subr.mxu0 0.0
        %7658 = vmatpush1.msra.mxu0 0.0
        %7659 = vmatprep.subr.mxu0 0.0
        %7660 = vmatpush1.msra.mxu0 0.0
        %7661 = vmatprep.subr.mxu0 0.0
        %7662 = vmatpush1.msra.mxu0 0.0
        %7663 = vmatprep.subr.mxu0 0.0
        %7664 = vmatpush1.msra.mxu0 0.0
        %7665 = vmatprep.subr.mxu0 0.0
        %7666 = vmatpush1.msra.mxu0 0.0
        %7667 = vmatprep.subr.mxu0 0.0
        %7668 = vmatpush1.msra.mxu0 0.0
        %7669 = vmatprep.subr.mxu0 0.0
        %7670 = vmatpush1.msra.mxu0 0.0
        %7671 = vmatprep.subr.mxu0 0.0
        %7672 = vmatpush1.msra.mxu0 0.0
        %7673 = vmatprep.mubr.f32.mxu0 0.0
        %7674 = vmatmul.mubr.f32.gmra.mrb[0].mxu0 %v7590
        %v7675 = vpop.f32.mrb[0].mxu0
        %v7676 = vadd.f32 0.0, %v7675
        %v7677 = vpop.f32.mrb[0].mxu0
        %7678 = vmatprep.mubr.f32.mxu0 0.0
        %7679 = vmatmul.mubr.f32.gmra.mrb[0].mxu0 %v7592
        %v7680 = vpop.f32.mrb[0].mxu0
        %v7681 = vadd.f32 0.0, %v7680
        %v7682 = vpop.f32.mrb[0].mxu0
        %7683 = vmatprep.mubr.f32.mxu0 0.0
        %7684 = vmatmul.mubr.f32.gmra.mrb[0].mxu0 %v7594
        %v7685 = vpop.f32.mrb[0].mxu0
        %v7686 = vadd.f32 0.0, %v7685
        %v7687 = vpop.f32.mrb[0].mxu0
        %7688 = vmatprep.mubr.f32.mxu0 0.0
        %7689 = vmatmul.mubr.f32.gmra.mrb[0].mxu0 %v7596
        %v7690 = vpop.f32.mrb[0].mxu0
        %v7691 = vadd.f32 0.0, %v7690
        %v7692 = vpop.f32.mrb[0].mxu0
        %7693 = vmatprep.mubr.f32.mxu0 0.0
        %7694 = vmatmul.mubr.f32.gmra.mrb[0].mxu0 %v7598
        %v7695 = vpop.f32.mrb[0].mxu0
        %v7696 = vadd.f32 0.0, %v7695
        %v7697 = vpop.f32.mrb[0].mxu0
        %7698 = vmatprep.mubr.f32.mxu0 0.0
        %7699 = vmatmul.mubr.f32.gmra.mrb[0].mxu0 %v7600
        %v7700 = vpop.f32.mrb[0].mxu0
        %v7701 = vadd.f32 0.0, %v7700
        %v7702 = vpop.f32.mrb[0].mxu0
        %7703 = vmatprep.mubr.f32.mxu0 0.0
        %7704 = vmatmul.mubr.f32.gmra.mrb[0].mxu0 %v7602
        %v7705 = vpop.f32.mrb[0].mxu0
        %v7706 = vadd.f32 0.0, %v7705
        %v7707 = vpop.f32.mrb[0].mxu0
        %7708 = vmatprep.mubr.f32.mxu0 0.0
        %7709 = vmatmul.mubr.f32.gmra.mrb[0].mxu0 %v7604
        %v7710 = vpop.f32.mrb[0].mxu0
        %v7711 = vadd.f32 0.0, %v7710
        %v7712 = vpop.f32.mrb[0].mxu0
        %7713 = vdwg.mxu0
        %v7714 = vadd.f32 %v7548, %v7676
        %v7715 = vadd.f32 %v7549, %v7681
        %v7716 = vadd.f32 %v7550, %v7686
        %v7717 = vadd.f32 %v7551, %v7691
        %v7718 = vadd.f32 %v7552, %v7696
        %v7719 = vadd.f32 %v7553, %v7701
        %v7720 = vadd.f32 %v7554, %v7706
        %v7721 = vadd.f32 %v7555, %v7711
        %v7722 = vld [vmem:[%s2557 + $0x1] sm:$0xff]
        %v7723 = vld [vmem:[%s2557 + $0x11] sm:$0xff]
        %v7724 = vld [vmem:[%s2557 + $0x21] sm:$0xff]
        %v7725 = vld [vmem:[%s2557 + $0x31] sm:$0xff]
        %v7726 = vld [vmem:[%s2557 + $0x41] sm:$0xff]
        %v7727 = vld [vmem:[%s2557 + $0x51] sm:$0xff]
        %v7728 = vld [vmem:[%s2557 + $0x61] sm:$0xff]
        %v7729 = vld [vmem:[%s2557 + $0x71] sm:$0xff]
        %v7730 = vld [vmem:[%s2717] sm:$0xff]
        %v7731 = vld [vmem:[%s2717 + $0x8] sm:$0xf]
        %7740 = vrot.lane.b32.xlu0 %v7722, 116
        %v7741 = vpop.permute.xlu0 %7740
        %7742 = vrot.lane.b32.xlu0 %v7723, 116
        %v7743 = vpop.permute.xlu0 %7742
        %7744 = vrot.lane.b32.xlu0 %v7724, 116
        %v7745 = vpop.permute.xlu0 %7744
        %7746 = vrot.lane.b32.xlu0 %v7725, 116
        %v7747 = vpop.permute.xlu0 %7746
        %7748 = vrot.lane.b32.xlu0 %v7726, 116
        %v7749 = vpop.permute.xlu0 %7748
        %7750 = vrot.lane.b32.xlu0 %v7727, 116
        %v7751 = vpop.permute.xlu0 %7750
        %7752 = vrot.lane.b32.xlu0 %v7728, 116
        %v7753 = vpop.permute.xlu0 %7752
        %7754 = vrot.lane.b32.xlu0 %v7729, 116
        %v7755 = vpop.permute.xlu0 %7754
        %v7756 = vsel %vm1687, %v7741, 0
        %v7758 = vsel %vm1687, %v7743, 0
        %v7760 = vsel %vm1687, %v7745, 0
        %v7762 = vsel %vm1687, %v7747, 0
        %v7764 = vsel %vm1687, %v7749, 0
        %v7766 = vsel %vm1687, %v7751, 0
        %v7768 = vsel %vm1687, %v7753, 0
        %v7770 = vsel %vm1687, %v7755, 0
        %v7773 = vsel %vm1712, %v7731, 0
        %7775 = vmatprep.subr.mxu0 0.0
        %7776 = vmatpush1.msra.mxu0 %v7730
        %7777 = vmatprep.subr.mxu0 0.0
        %7778 = vmatpush1.msra.mxu0 %v7773
        %7779 = vmatprep.subr.mxu0 0.0
        %7780 = vmatpush1.msra.mxu0 0.0
        %7781 = vmatprep.subr.mxu0 0.0
        %7782 = vmatpush1.msra.mxu0 0.0
        %7783 = vmatprep.subr.mxu0 0.0
        %7784 = vmatpush1.msra.mxu0 0.0
        %7785 = vmatprep.subr.mxu0 0.0
        %7786 = vmatpush1.msra.mxu0 0.0
        %7787 = vmatprep.subr.mxu0 0.0
        %7788 = vmatpush1.msra.mxu0 0.0
        %7789 = vmatprep.subr.mxu0 0.0
        %7790 = vmatpush1.msra.mxu0 0.0
        %7791 = vmatprep.subr.mxu0 0.0
        %7792 = vmatpush1.msra.mxu0 0.0
        %7793 = vmatprep.subr.mxu0 0.0
        %7794 = vmatpush1.msra.mxu0 0.0
        %7795 = vmatprep.subr.mxu0 0.0
        %7796 = vmatpush1.msra.mxu0 0.0
        %7797 = vmatprep.subr.mxu0 0.0
        %7798 = vmatpush1.msra.mxu0 0.0
        %7799 = vmatprep.subr.mxu0 0.0
        %7800 = vmatpush1.msra.mxu0 0.0
        %7801 = vmatprep.subr.mxu0 0.0
        %7802 = vmatpush1.msra.mxu0 0.0
        %7803 = vmatprep.subr.mxu0 0.0
        %7804 = vmatpush1.msra.mxu0 0.0
        %7805 = vmatprep.subr.mxu0 0.0
        %7806 = vmatpush1.msra.mxu0 0.0
        %7807 = vmatprep.subr.mxu0 0.0
        %7808 = vmatpush1.msra.mxu0 0.0
        %7809 = vmatprep.subr.mxu0 0.0
        %7810 = vmatpush1.msra.mxu0 0.0
        %7811 = vmatprep.subr.mxu0 0.0
        %7812 = vmatpush1.msra.mxu0 0.0
        %7813 = vmatprep.subr.mxu0 0.0
        %7814 = vmatpush1.msra.mxu0 0.0
        %7815 = vmatprep.subr.mxu0 0.0
        %7816 = vmatpush1.msra.mxu0 0.0
        %7817 = vmatprep.subr.mxu0 0.0
        %7818 = vmatpush1.msra.mxu0 0.0
        %7819 = vmatprep.subr.mxu0 0.0
        %7820 = vmatpush1.msra.mxu0 0.0
        %7821 = vmatprep.subr.mxu0 0.0
        %7822 = vmatpush1.msra.mxu0 0.0
        %7823 = vmatprep.subr.mxu0 0.0
        %7824 = vmatpush1.msra.mxu0 0.0
        %7825 = vmatprep.subr.mxu0 0.0
        %7826 = vmatpush1.msra.mxu0 0.0
        %7827 = vmatprep.subr.mxu0 0.0
        %7828 = vmatpush1.msra.mxu0 0.0
        %7829 = vmatprep.subr.mxu0 0.0
        %7830 = vmatpush1.msra.mxu0 0.0
        %7831 = vmatprep.subr.mxu0 0.0
        %7832 = vmatpush1.msra.mxu0 0.0
        %7833 = vmatprep.subr.mxu0 0.0
        %7834 = vmatpush1.msra.mxu0 0.0
        %7835 = vmatprep.subr.mxu0 0.0
        %7836 = vmatpush1.msra.mxu0 0.0
        %7837 = vmatprep.subr.mxu0 0.0
        %7838 = vmatpush1.msra.mxu0 0.0
        %7839 = vmatprep.mubr.f32.mxu0 0.0
        %7840 = vmatmul.mubr.f32.gmra.mrb[0].mxu0 %v7756
        %v7841 = vpop.f32.mrb[0].mxu0
        %v7842 = vadd.f32 0.0, %v7841
        %v7843 = vpop.f32.mrb[0].mxu0
        %7844 = vmatprep.mubr.f32.mxu0 0.0
        %7845 = vmatmul.mubr.f32.gmra.mrb[0].mxu0 %v7758
        %v7846 = vpop.f32.mrb[0].mxu0
        %v7847 = vadd.f32 0.0, %v7846
        %v7848 = vpop.f32.mrb[0].mxu0
        %7849 = vmatprep.mubr.f32.mxu0 0.0
        %7850 = vmatmul.mubr.f32.gmra.mrb[0].mxu0 %v7760
        %v7851 = vpop.f32.mrb[0].mxu0
        %v7852 = vadd.f32 0.0, %v7851
        %v7853 = vpop.f32.mrb[0].mxu0
        %7854 = vmatprep.mubr.f32.mxu0 0.0
        %7855 = vmatmul.mubr.f32.gmra.mrb[0].mxu0 %v7762
        %v7856 = vpop.f32.mrb[0].mxu0
        %v7857 = vadd.f32 0.0, %v7856
        %v7858 = vpop.f32.mrb[0].mxu0
        %7859 = vmatprep.mubr.f32.mxu0 0.0
        %7860 = vmatmul.mubr.f32.gmra.mrb[0].mxu0 %v7764
        %v7861 = vpop.f32.mrb[0].mxu0
        %v7862 = vadd.f32 0.0, %v7861
        %v7863 = vpop.f32.mrb[0].mxu0
        %7864 = vmatprep.mubr.f32.mxu0 0.0
        %7865 = vmatmul.mubr.f32.gmra.mrb[0].mxu0 %v7766
        %v7866 = vpop.f32.mrb[0].mxu0
        %v7867 = vadd.f32 0.0, %v7866
        %v7868 = vpop.f32.mrb[0].mxu0
        %7869 = vmatprep.mubr.f32.mxu0 0.0
        %7870 = vmatmul.mubr.f32.gmra.mrb[0].mxu0 %v7768
        %v7871 = vpop.f32.mrb[0].mxu0
        %v7872 = vadd.f32 0.0, %v7871
        %v7873 = vpop.f32.mrb[0].mxu0
        %7874 = vmatprep.mubr.f32.mxu0 0.0
        %7875 = vmatmul.mubr.f32.gmra.mrb[0].mxu0 %v7770
        %v7876 = vpop.f32.mrb[0].mxu0
        %v7877 = vadd.f32 0.0, %v7876
        %v7878 = vpop.f32.mrb[0].mxu0
        %7879 = vdwg.mxu0
        %v7880 = vadd.f32 %v7714, %v7842
        %v7881 = vadd.f32 %v7715, %v7847
        %v7882 = vadd.f32 %v7716, %v7852
        %v7883 = vadd.f32 %v7717, %v7857
        %v7884 = vadd.f32 %v7718, %v7862
        %v7885 = vadd.f32 %v7719, %v7867
        %v7886 = vadd.f32 %v7720, %v7872
        %v7887 = vadd.f32 %v7721, %v7877
        %v7888 = vld [vmem:[%s2557 + $0x2] sm:$0xff]
        %v7889 = vld [vmem:[%s2557 + $0x12] sm:$0xff]
        %v7890 = vld [vmem:[%s2557 + $0x22] sm:$0xff]
        %v7891 = vld [vmem:[%s2557 + $0x32] sm:$0xff]
        %v7892 = vld [vmem:[%s2557 + $0x42] sm:$0xff]
        %v7893 = vld [vmem:[%s2557 + $0x52] sm:$0xff]
        %v7894 = vld [vmem:[%s2557 + $0x62] sm:$0xff]
        %v7895 = vld [vmem:[%s2557 + $0x72] sm:$0xff]
        %v7896 = vld [vmem:[%s2868] sm:$0xff]
        %v7897 = vld [vmem:[%s2868 + $0x8] sm:$0xf]
        %7906 = vrot.lane.b32.xlu0 %v7888, 116
        %v7907 = vpop.permute.xlu0 %7906
        %7908 = vrot.lane.b32.xlu0 %v7889, 116
        %v7909 = vpop.permute.xlu0 %7908
        %7910 = vrot.lane.b32.xlu0 %v7890, 116
        %v7911 = vpop.permute.xlu0 %7910
        %7912 = vrot.lane.b32.xlu0 %v7891, 116
        %v7913 = vpop.permute.xlu0 %7912
        %7914 = vrot.lane.b32.xlu0 %v7892, 116
        %v7915 = vpop.permute.xlu0 %7914
        %7916 = vrot.lane.b32.xlu0 %v7893, 116
        %v7917 = vpop.permute.xlu0 %7916
        %7918 = vrot.lane.b32.xlu0 %v7894, 116
        %v7919 = vpop.permute.xlu0 %7918
        %7920 = vrot.lane.b32.xlu0 %v7895, 116
        %v7921 = vpop.permute.xlu0 %7920
        %v7922 = vsel %vm1687, %v7907, 0
        %v7924 = vsel %vm1687, %v7909, 0
        %v7926 = vsel %vm1687, %v7911, 0
        %v7928 = vsel %vm1687, %v7913, 0
        %v7930 = vsel %vm1687, %v7915, 0
        %v7932 = vsel %vm1687, %v7917, 0
        %v7934 = vsel %vm1687, %v7919, 0
        %v7936 = vsel %vm1687, %v7921, 0
        %v7939 = vsel %vm1712, %v7897, 0
        %7941 = vmatprep.subr.mxu0 0.0
        %7942 = vmatpush1.msra.mxu0 %v7896
        %7943 = vmatprep.subr.mxu0 0.0
        %7944 = vmatpush1.msra.mxu0 %v7939
        %7945 = vmatprep.subr.mxu0 0.0
        %7946 = vmatpush1.msra.mxu0 0.0
        %7947 = vmatprep.subr.mxu0 0.0
        %7948 = vmatpush1.msra.mxu0 0.0
        %7949 = vmatprep.subr.mxu0 0.0
        %7950 = vmatpush1.msra.mxu0 0.0
        %7951 = vmatprep.subr.mxu0 0.0
        %7952 = vmatpush1.msra.mxu0 0.0
        %7953 = vmatprep.subr.mxu0 0.0
        %7954 = vmatpush1.msra.mxu0 0.0
        %7955 = vmatprep.subr.mxu0 0.0
        %7956 = vmatpush1.msra.mxu0 0.0
        %7957 = vmatprep.subr.mxu0 0.0
        %7958 = vmatpush1.msra.mxu0 0.0
        %7959 = vmatprep.subr.mxu0 0.0
        %7960 = vmatpush1.msra.mxu0 0.0
        %7961 = vmatprep.subr.mxu0 0.0
        %7962 = vmatpush1.msra.mxu0 0.0
        %7963 = vmatprep.subr.mxu0 0.0
        %7964 = vmatpush1.msra.mxu0 0.0
        %7965 = vmatprep.subr.mxu0 0.0
        %7966 = vmatpush1.msra.mxu0 0.0
        %7967 = vmatprep.subr.mxu0 0.0
        %7968 = vmatpush1.msra.mxu0 0.0
        %7969 = vmatprep.subr.mxu0 0.0
        %7970 = vmatpush1.msra.mxu0 0.0
        %7971 = vmatprep.subr.mxu0 0.0
        %7972 = vmatpush1.msra.mxu0 0.0
        %7973 = vmatprep.subr.mxu0 0.0
        %7974 = vmatpush1.msra.mxu0 0.0
        %7975 = vmatprep.subr.mxu0 0.0
        %7976 = vmatpush1.msra.mxu0 0.0
        %7977 = vmatprep.subr.mxu0 0.0
        %7978 = vmatpush1.msra.mxu0 0.0
        %7979 = vmatprep.subr.mxu0 0.0
        %7980 = vmatpush1.msra.mxu0 0.0
        %7981 = vmatprep.subr.mxu0 0.0
        %7982 = vmatpush1.msra.mxu0 0.0
        %7983 = vmatprep.subr.mxu0 0.0
        %7984 = vmatpush1.msra.mxu0 0.0
        %7985 = vmatprep.subr.mxu0 0.0
        %7986 = vmatpush1.msra.mxu0 0.0
        %7987 = vmatprep.subr.mxu0 0.0
        %7988 = vmatpush1.msra.mxu0 0.0
        %7989 = vmatprep.subr.mxu0 0.0
        %7990 = vmatpush1.msra.mxu0 0.0
        %7991 = vmatprep.subr.mxu0 0.0
        %7992 = vmatpush1.msra.mxu0 0.0
        %7993 = vmatprep.subr.mxu0 0.0
        %7994 = vmatpush1.msra.mxu0 0.0
        %7995 = vmatprep.subr.mxu0 0.0
        %7996 = vmatpush1.msra.mxu0 0.0
        %7997 = vmatprep.subr.mxu0 0.0
        %7998 = vmatpush1.msra.mxu0 0.0
        %7999 = vmatprep.subr.mxu0 0.0
        %8000 = vmatpush1.msra.mxu0 0.0
        %8001 = vmatprep.subr.mxu0 0.0
        %8002 = vmatpush1.msra.mxu0 0.0
        %8003 = vmatprep.subr.mxu0 0.0
        %8004 = vmatpush1.msra.mxu0 0.0
        %8005 = vmatprep.mubr.f32.mxu0 0.0
        %8006 = vmatmul.mubr.f32.gmra.mrb[0].mxu0 %v7922
        %v8007 = vpop.f32.mrb[0].mxu0
        %v8008 = vadd.f32 0.0, %v8007
        %v8009 = vpop.f32.mrb[0].mxu0
        %8010 = vmatprep.mubr.f32.mxu0 0.0
        %8011 = vmatmul.mubr.f32.gmra.mrb[0].mxu0 %v7924
        %v8012 = vpop.f32.mrb[0].mxu0
        %v8013 = vadd.f32 0.0, %v8012
        %v8014 = vpop.f32.mrb[0].mxu0
        %8015 = vmatprep.mubr.f32.mxu0 0.0
        %8016 = vmatmul.mubr.f32.gmra.mrb[0].mxu0 %v7926
        %v8017 = vpop.f32.mrb[0].mxu0
        %v8018 = vadd.f32 0.0, %v8017
        %v8019 = vpop.f32.mrb[0].mxu0
        %8020 = vmatprep.mubr.f32.mxu0 0.0
        %8021 = vmatmul.mubr.f32.gmra.mrb[0].mxu0 %v7928
        %v8022 = vpop.f32.mrb[0].mxu0
        %v8023 = vadd.f32 0.0, %v8022
        %v8024 = vpop.f32.mrb[0].mxu0
        %8025 = vmatprep.mubr.f32.mxu0 0.0
        %8026 = vmatmul.mubr.f32.gmra.mrb[0].mxu0 %v7930
        %v8027 = vpop.f32.mrb[0].mxu0
        %v8028 = vadd.f32 0.0, %v8027
        %v8029 = vpop.f32.mrb[0].mxu0
        %8030 = vmatprep.mubr.f32.mxu0 0.0
        %8031 = vmatmul.mubr.f32.gmra.mrb[0].mxu0 %v7932
        %v8032 = vpop.f32.mrb[0].mxu0
        %v8033 = vadd.f32 0.0, %v8032
        %v8034 = vpop.f32.mrb[0].mxu0
        %8035 = vmatprep.mubr.f32.mxu0 0.0
        %8036 = vmatmul.mubr.f32.gmra.mrb[0].mxu0 %v7934
        %v8037 = vpop.f32.mrb[0].mxu0
        %v8038 = vadd.f32 0.0, %v8037
        %v8039 = vpop.f32.mrb[0].mxu0
        %8040 = vmatprep.mubr.f32.mxu0 0.0
        %8041 = vmatmul.mubr.f32.gmra.mrb[0].mxu0 %v7936
        %v8042 = vpop.f32.mrb[0].mxu0
        %v8043 = vadd.f32 0.0, %v8042
        %v8044 = vpop.f32.mrb[0].mxu0
        %8045 = vdwg.mxu0
        %v8046 = vadd.f32 %v7880, %v8008
        %v8047 = vadd.f32 %v7881, %v8013
        %v8048 = vadd.f32 %v7882, %v8018
        %v8049 = vadd.f32 %v7883, %v8023
        %v8050 = vadd.f32 %v7884, %v8028
        %v8051 = vadd.f32 %v7885, %v8033
        %v8052 = vadd.f32 %v7886, %v8038
        %v8053 = vadd.f32 %v7887, %v8043
        %v8054 = vmul.f32 %v8046, %v3015
        %v8055 = vmul.f32 %v8047, %v3015
        %v8056 = vmul.f32 %v8048, %v3015
        %v8057 = vmul.f32 %v8049, %v3015
        %v8058 = vmul.f32 %v8050, %v3015
        %v8059 = vmul.f32 %v8051, %v3015
        %v8060 = vmul.f32 %v8052, %v3015
        %v8061 = vmul.f32 %v8053, %v3015
        %v8062 = vadd.f32 %v8054, %v3029
        %v8063 = vadd.f32 %v8055, %v3029
        %v8064 = vadd.f32 %v8056, %v3029
        %v8065 = vadd.f32 %v8057, %v3029
        %v8066 = vadd.f32 %v8058, %v3029
        %v8067 = vadd.f32 %v8059, %v3029
        %v8068 = vadd.f32 %v8060, %v3029
        %v8069 = vadd.f32 %v8061, %v3029
        %v8070 = vmax.f32 %v8062, 0.0
        %v8071 = vmax.f32 %v8063, 0.0
        %v8072 = vmax.f32 %v8064, 0.0
        %v8073 = vmax.f32 %v8065, 0.0
        %v8074 = vmax.f32 %v8066, 0.0
        %v8075 = vmax.f32 %v8067, 0.0
        %v8076 = vmax.f32 %v8068, 0.0
        %v8077 = vmax.f32 %v8069, 0.0
        %v8079 = vsel %vm3047, %v8070, 0
        %v8082 = vsel %vm3047, %v8071, 0
        %v8085 = vsel %vm3047, %v8072, 0
        %v8088 = vsel %vm3047, %v8073, 0
        %v8091 = vsel %vm3047, %v8074, 0
        %v8094 = vsel %vm3047, %v8075, 0
        %v8097 = vsel %vm3047, %v8076, 0
        %v8100 = vsel %vm3047, %v8077, 0
        %8102 = vmatprep.subr.mxu0 0.0
        %8103 = vmatpush1.msra.mxu0 %v3073
        %8104 = vmatprep.subr.mxu0 0.0
        %8105 = vmatpush1.msra.mxu0 0.0
        %8106 = vmatprep.subr.mxu0 0.0
        %8107 = vmatpush1.msra.mxu0 0.0
        %8108 = vmatprep.subr.mxu0 0.0
        %8109 = vmatpush1.msra.mxu0 0.0
        %8110 = vmatprep.subr.mxu0 0.0
        %8111 = vmatpush1.msra.mxu0 0.0
        %8112 = vmatprep.subr.mxu0 0.0
        %8113 = vmatpush1.msra.mxu0 0.0
        %8114 = vmatprep.subr.mxu0 0.0
        %8115 = vmatpush1.msra.mxu0 0.0
        %8116 = vmatprep.subr.mxu0 0.0
        %8117 = vmatpush1.msra.mxu0 0.0
        %8118 = vmatprep.subr.mxu0 0.0
        %8119 = vmatpush1.msra.mxu0 0.0
        %8120 = vmatprep.subr.mxu0 0.0
        %8121 = vmatpush1.msra.mxu0 0.0
        %8122 = vmatprep.subr.mxu0 0.0
        %8123 = vmatpush1.msra.mxu0 0.0
        %8124 = vmatprep.subr.mxu0 0.0
        %8125 = vmatpush1.msra.mxu0 0.0
        %8126 = vmatprep.subr.mxu0 0.0
        %8127 = vmatpush1.msra.mxu0 0.0
        %8128 = vmatprep.subr.mxu0 0.0
        %8129 = vmatpush1.msra.mxu0 0.0
        %8130 = vmatprep.subr.mxu0 0.0
        %8131 = vmatpush1.msra.mxu0 0.0
        %8132 = vmatprep.subr.mxu0 0.0
        %8133 = vmatpush1.msra.mxu0 0.0
        %8134 = vmatprep.subr.mxu0 0.0
        %8135 = vmatpush1.msra.mxu0 0.0
        %8136 = vmatprep.subr.mxu0 0.0
        %8137 = vmatpush1.msra.mxu0 0.0
        %8138 = vmatprep.subr.mxu0 0.0
        %8139 = vmatpush1.msra.mxu0 0.0
        %8140 = vmatprep.subr.mxu0 0.0
        %8141 = vmatpush1.msra.mxu0 0.0
        %8142 = vmatprep.subr.mxu0 0.0
        %8143 = vmatpush1.msra.mxu0 0.0
        %8144 = vmatprep.subr.mxu0 0.0
        %8145 = vmatpush1.msra.mxu0 0.0
        %8146 = vmatprep.subr.mxu0 0.0
        %8147 = vmatpush1.msra.mxu0 0.0
        %8148 = vmatprep.subr.mxu0 0.0
        %8149 = vmatpush1.msra.mxu0 0.0
        %8150 = vmatprep.subr.mxu0 0.0
        %8151 = vmatpush1.msra.mxu0 0.0
        %8152 = vmatprep.subr.mxu0 0.0
        %8153 = vmatpush1.msra.mxu0 0.0
        %8154 = vmatprep.subr.mxu0 0.0
        %8155 = vmatpush1.msra.mxu0 0.0
        %8156 = vmatprep.subr.mxu0 0.0
        %8157 = vmatpush1.msra.mxu0 0.0
        %8158 = vmatprep.subr.mxu0 0.0
        %8159 = vmatpush1.msra.mxu0 0.0
        %8160 = vmatprep.subr.mxu0 0.0
        %8161 = vmatpush1.msra.mxu0 0.0
        %8162 = vmatprep.subr.mxu0 0.0
        %8163 = vmatpush1.msra.mxu0 0.0
        %8164 = vmatprep.subr.mxu0 0.0
        %8165 = vmatpush1.msra.mxu0 0.0
        %8166 = vmatprep.mubr.f32.mxu0 0.0
        %8167 = vmatmul.mubr.f32.gmra.mrb[0].mxu0 %v8079
        %v8168 = vpop.f32.mrb[0].mxu0
        %v8169 = vadd.f32 0.0, %v8168
        %v8170 = vpop.f32.mrb[0].mxu0
        %8171 = vmatprep.mubr.f32.mxu0 0.0
        %8172 = vmatmul.mubr.f32.gmra.mrb[0].mxu0 %v8082
        %v8173 = vpop.f32.mrb[0].mxu0
        %v8174 = vadd.f32 0.0, %v8173
        %v8175 = vpop.f32.mrb[0].mxu0
        %8176 = vmatprep.mubr.f32.mxu0 0.0
        %8177 = vmatmul.mubr.f32.gmra.mrb[0].mxu0 %v8085
        %v8178 = vpop.f32.mrb[0].mxu0
        %v8179 = vadd.f32 0.0, %v8178
        %v8180 = vpop.f32.mrb[0].mxu0
        %8181 = vmatprep.mubr.f32.mxu0 0.0
        %8182 = vmatmul.mubr.f32.gmra.mrb[0].mxu0 %v8088
        %v8183 = vpop.f32.mrb[0].mxu0
        %v8184 = vadd.f32 0.0, %v8183
        %v8185 = vpop.f32.mrb[0].mxu0
        %8186 = vmatprep.mubr.f32.mxu0 0.0
        %8187 = vmatmul.mubr.f32.gmra.mrb[0].mxu0 %v8091
        %v8188 = vpop.f32.mrb[0].mxu0
        %v8189 = vadd.f32 0.0, %v8188
        %v8190 = vpop.f32.mrb[0].mxu0
        %8191 = vmatprep.mubr.f32.mxu0 0.0
        %8192 = vmatmul.mubr.f32.gmra.mrb[0].mxu0 %v8094
        %v8193 = vpop.f32.mrb[0].mxu0
        %v8194 = vadd.f32 0.0, %v8193
        %v8195 = vpop.f32.mrb[0].mxu0
        %8196 = vmatprep.mubr.f32.mxu0 0.0
        %8197 = vmatmul.mubr.f32.gmra.mrb[0].mxu0 %v8097
        %v8198 = vpop.f32.mrb[0].mxu0
        %v8199 = vadd.f32 0.0, %v8198
        %v8200 = vpop.f32.mrb[0].mxu0
        %8201 = vmatprep.mubr.f32.mxu0 0.0
        %8202 = vmatmul.mubr.f32.gmra.mrb[0].mxu0 %v8100
        %v8203 = vpop.f32.mrb[0].mxu0
        %v8204 = vadd.f32 0.0, %v8203
        %v8205 = vpop.f32.mrb[0].mxu0
        %8206 = vdwg.mxu0
        %v8207 = vmul.f32 %v8169, %v3184
        %v8208 = vmul.f32 %v8174, %v3184
        %v8209 = vmul.f32 %v8179, %v3184
        %v8210 = vmul.f32 %v8184, %v3184
        %v8211 = vmul.f32 %v8189, %v3184
        %v8212 = vmul.f32 %v8194, %v3184
        %v8213 = vmul.f32 %v8199, %v3184
        %v8214 = vmul.f32 %v8204, %v3184
        %v8215 = vadd.f32 %v8207, %v3198
        %v8216 = vadd.f32 %v8208, %v3198
        %v8217 = vadd.f32 %v8209, %v3198
        %v8218 = vadd.f32 %v8210, %v3198
        %v8219 = vadd.f32 %v8211, %v3198
        %v8220 = vadd.f32 %v8212, %v3198
        %v8221 = vadd.f32 %v8213, %v3198
        %v8222 = vadd.f32 %v8214, %v3198
        %v8223 = vadd.f32 %v8215, %v626
        %v8224 = vadd.f32 %v8216, %v627
        %v8225 = vadd.f32 %v8217, %v628
        %v8226 = vadd.f32 %v8218, %v629
        %v8227 = vadd.f32 %v8219, %v630
        %v8228 = vadd.f32 %v8220, %v631
        %v8229 = vadd.f32 %v8221, %v632
        %v8230 = vadd.f32 %v8222, %v633
        %v8231 = vmax.f32 %v8223, 0.0
        %v8232 = vmax.f32 %v8224, 0.0
        %v8233 = vmax.f32 %v8225, 0.0
        %v8234 = vmax.f32 %v8226, 0.0
        %v8235 = vmax.f32 %v8227, 0.0
        %v8236 = vmax.f32 %v8228, 0.0
        %v8237 = vmax.f32 %v8229, 0.0
        %v8238 = vmax.f32 %v8230, 0.0
        %s8239 = scalar_lea.vmem %s559, 192 [#allocation9]
        %8240 = vst.msk [vmem:[%s8239] sm:$0xff] %vm634, %v8231
        %8241 = vst.msk [vmem:[%s8239 + $0x8] sm:$0xff] %vm634, %v8232
        %8242 = vst.msk [vmem:[%s8239 + $0x10] sm:$0xff] %vm634, %v8233
        %8243 = vst.msk [vmem:[%s8239 + $0x18] sm:$0xff] %vm634, %v8234
        %8244 = vst.msk [vmem:[%s8239 + $0x20] sm:$0xff] %vm634, %v8235
        %8245 = vst.msk [vmem:[%s8239 + $0x28] sm:$0xff] %vm634, %v8236
        %8246 = vst.msk [vmem:[%s8239 + $0x30] sm:$0xff] %vm634, %v8237
        %8247 = vst.msk [vmem:[%s8239 + $0x38] sm:$0xff] %vm634, %v8238
        %s8248 = sand.u32 %s343, 1
        %s8249 = scalar_lea.sflag [#allocation5], %s8248
        %s8250 = sand.u32 %s343, 1
        %s8251 = smul.addr %s8250, 256
        %s8252 = scalar_lea.vmem [#allocation9], %s8251
        // Predicated region
        $region97: #{tpu_custom_call.1} parent=67 // pred_check
          %p8253 = pneg %p353
        $region98: #{tpu_custom_call.1} parent=67 // pred_check_branch
          %8255 = sbr.rel (%p8253) target = $region100
        $region99: #{tpu_custom_call.1} parent=67 // pred_region
          %s8256 = smul.u32 4, %s37
          %s8258 = ssub.s32 4096, 4096
          %8259 = vsyncadd %s8249, %s8258
          %s8260 = smul.addr %s8256, 8
          %s8261 = smul.addr %s36, 64
          %s8262 = sadd.s32 %s8260, %s8261
          %s8263 = smul.addr %s8262, 128
          %s8264 = scalar_lea.hbm %s12, %s8263
          %s8265 = sshll.u32 %s8252, 4
          %s8266 = int_to_ptr.vmem [resolvable:$true] %s8265
          %8271 = dma.vmem_to_hbm [thread:$0]  %s8266, 4096, %s8264, %s8249, 128, 128, 8
        $region100: #{tpu_custom_call.1} parent=67 // pred_fallthru
          _
      $region68: #{tpu_custom_call.1} parent=5 // pred_fallthru
        _
      %p8272 = scmp.le.s32.totalorder 2, %s27
      // Predicated region
      $region101: #{tpu_custom_call.1} parent=5 // pred_check
        %p8273 = pneg %p8272
      $region102: #{tpu_custom_call.1} parent=5 // pred_check_branch
        %8275 = sbr.rel (%p8273) target = $region104
      $region103: #{tpu_custom_call.1} parent=5 // pred_region
        %s8276 = ssub.s32 %s27, 2
        // Predicated region
        $region105: #{tpu_custom_call.1} parent=103 // pred_check
          %p8277 = pneg %p359
        $region106: #{tpu_custom_call.1} parent=103 // pred_check_branch
          %8279 = sbr.rel (%p8277) target = $region108
        $region107: #{tpu_custom_call.1} parent=103 // pred_region
          %s8280 = sand.u32 %s344, 1
          %s8281 = scalar_lea.sflag [#allocation5], %s8280
          %s8282 = sand.u32 %s344, 1
          %s8283 = smul.addr %s8282, 256
          %s8284 = scalar_lea.vmem [#allocation9], %s8283
          %8285 = dma.done %s8281, 4096
        $region108: #{tpu_custom_call.1} parent=103 // pred_fallthru
          _
      $region104: #{tpu_custom_call.1} parent=5 // pred_fallthru
        _
    $region6: #{tpu_custom_call.1} parent=1 // loop_footer
      %s31 = sadd.s32 1, %s27
    $region7: #{tpu_custom_call.1} parent=1 // loop_footer_branch
      %26 = sbr.rel target = $region3
    $region8: #{tpu_custom_call.1} parent=1 // loop_exit
      _
    %8286 = vsyncpa [#allocation4], 1
    %s8287 = scalar_lea.sflag [#allocation4], 1
    %8288 = vsyncpa %s8287, 1
    %8289 = vsyncpa [#allocation7], 1
    %s8290 = scalar_lea.sflag [#allocation7], 1
    %8291 = vsyncpa %s8290, 1
    %8292 = vsyncpa [#allocation5], 1
    %s8293 = scalar_lea.sflag [#allocation5], 1
    %8294 = vsyncpa %s8293, 1

</llo_original>
